<compile_context>
chip_gen: v7x
topology: tpu7x:2x2x1
jax: 0.10.0
libtpu: 0.0.40
codegen_flags: <defaults>
</compile_context>

<pallas_src>
import math
from functools import partial

import numpy as np
import jax
import jax.numpy as jnp
from jax import lax
from jax.experimental import pallas as pl
from jax.experimental.pallas import tpu as pltpu


# ----------------------------- in-kernel helpers -----------------------------
def _layernorm(z, g, b, eps):
    mu = jnp.mean(z, axis=-1, keepdims=True)
    var = jnp.mean(jnp.square(z - mu), axis=-1, keepdims=True)
    return (z - mu) * lax.rsqrt(var + eps) * g + b


def _erf(z):
    # Abramowitz & Stegun 7.1.26 polynomial (|err| <= 1.5e-7), built only from
    # ops with guaranteed Mosaic lowerings (exp + VPU arithmetic).
    a1, a2, a3, a4, a5 = (0.254829592, -0.284496736, 1.421413741,
                          -1.453152027, 1.061405429)
    p = 0.3275911
    az = jnp.abs(z)
    t = 1.0 / (1.0 + p * az)
    poly = ((((a5 * t + a4) * t + a3) * t + a2) * t + a1) * t
    y = 1.0 - poly * jnp.exp(-az * az)
    return jnp.where(z >= 0, y, -y)


def _gelu(z):  # exact (erf-based) GELU, matching nn.GELU()
    return 0.5 * z * (1.0 + _erf(z * 0.7071067811865476))


# ------------------------------- Pallas kernel --------------------------------
def _block_kernel(x_ref,
                  g1_ref, b1_ref,
                  wq_ref, wsr_ref, bsr_ref, gsr_ref, bsrn_ref,
                  wkv_ref, wproj_ref, bproj_ref,
                  g2_ref, b2_ref,
                  w1_ref, bfc1_ref, wdw_ref, bdw_ref, w2_ref, bfc2_ref,
                  o_ref,
                  *, num_heads, H, W, sr, eps):
    f32, bf16 = jnp.float32, jnp.bfloat16
    x = x_ref[0]                                # (N, C) raw residual stream
    N, C = x.shape
    d = C // num_heads
    Hr, Wr = H // sr, W // sr
    Nr = Hr * Wr

    g1 = g1_ref[...]
    b1 = b1_ref[...]

    # ---------------- norm1 (once, over all tokens) + q projection -------------
    x1 = _layernorm(x, g1, b1, eps)                                     # (N, C)
    x1_bf = x1.astype(bf16)
    # softmax scale is pre-folded into wq on the host.
    q = jnp.dot(x1_bf, wq_ref[...], preferred_element_type=f32).astype(bf16)

    # ---------------- spatial reduction conv (kernel = stride = sr) ------------
    # Patch token (kh, kw) of patch m is gathered from x1 with a tiny 0/1
    # selection matmul built from iotas (no second HBM read of x, no re-LN,
    # rides the otherwise-idle MXU at these shapes).
    # TODO(synk): for production N replace this gather with a strided/packed DMA.
    m_i = lax.broadcasted_iota(jnp.int32, (Nr, N), 0)
    n_i = lax.broadcasted_iota(jnp.int32, (Nr, N), 1)
    # hr = m // Wr, wr = m % Wr, built without vector integer division.
    hr_i = sum((m_i >= j * Wr).astype(jnp.int32) for j in range(1, Hr))
    wr_i = m_i - hr_i * Wr
    chunks = []
    for kh in range(sr):
        for kw in range(sr):
            src = (hr_i * sr + kh) * W + wr_i * sr + kw                 # (Nr, N)
            sel = (n_i == src).astype(f32).astype(bf16)
            chunks.append(jnp.dot(sel, x1_bf, preferred_element_type=f32))
    patches = jnp.concatenate(chunks, axis=-1)                          # (Nr, sr*sr*C)
    xr = jnp.dot(patches.astype(bf16), wsr_ref[...],
                 preferred_element_type=f32) + bsr_ref[...]             # (Nr, C)
    xr = _layernorm(xr, gsr_ref[...], bsrn_ref[...], eps)               # Attention.norm

    # ---------------- kv projection --------------------------------------------
    kv = jnp.dot(xr.astype(bf16), wkv_ref[...], preferred_element_type=f32)
    k = kv[:, :C]                                                       # (Nr, C)
    v = kv[:, C:]                                                       # (Nr, C)

    # ---------------- multi-head attention: all heads in 2 MXU matmuls ---------
    # Block-diagonal head mask (num_heads*Nr, C): row block h only keeps head
    # h's d lanes.  Built from iotas, no HBM constant, no per-head concats.
    row_i = lax.broadcasted_iota(jnp.int32, (num_heads * Nr, C), 0)
    lane_i = lax.broadcasted_iota(jnp.int32, (num_heads * Nr, C), 1)
    rh = sum((row_i >= h * Nr).astype(jnp.int32) for h in range(1, num_heads))
    bd = ((lane_i >= rh * d) & (lane_i < rh * d + d)).astype(f32)       # (nh*Nr, C)

    k_rep = jnp.broadcast_to(k[None], (num_heads, Nr, C)).reshape(num_heads * Nr, C)
    v_rep = jnp.broadcast_to(v[None], (num_heads, Nr, C)).reshape(num_heads * Nr, C)
    k_bd = (k_rep * bd).astype(bf16)                                    # (nh*Nr, C)
    v_bd = v_rep * bd
    # [V | ones]: the "ones" block (== bd) gives per-head softmax denominators
    # already broadcast to each head's lanes.
    vones = jnp.concatenate([v_bd, bd], axis=-1).astype(bf16)           # (nh*Nr, 2C)

    s = jnp.einsum("nc,mc->nm", q, k_bd,
                   preferred_element_type=f32)                          # (N, nh*Nr)
    # Per-head max (exact softmax, and no cross-head underflow); denominator
    # is then >= 1 so the approx reciprocal below is safe.
    e_parts = []
    for h in range(num_heads):
        sh = s[:, h * Nr:(h + 1) * Nr]
        e_parts.append(jnp.exp(sh - jnp.max(sh, axis=-1, keepdims=True)))
    e = jnp.concatenate(e_parts, axis=-1).astype(bf16)                  # (N, nh*Nr)

    t = jnp.dot(e, vones, preferred_element_type=f32)                   # (N, 2C)
    ctx = t[:, :C] * pl.reciprocal(t[:, C:], approx=True)               # (N, C)

    attn_out = jnp.dot(ctx.astype(bf16), wproj_ref[...],
                       preferred_element_type=f32) + bproj_ref[...]
    y = x + attn_out                                                    # residual 1

    # ---------------- norm2 + Mlp (fc1 -> dwconv 3x3 -> GELU -> fc2) -----------
    y2 = _layernorm(y, g2_ref[...], b2_ref[...], eps)
    h1 = jnp.dot(y2.astype(bf16), w1_ref[...],
                 preferred_element_type=f32) + bfc1_ref[...]            # (N, Cm)

    wd = wdw_ref[...]                                                   # (9, Cm)
    # Row/col coordinates for boundary masks (no vector integer division).
    ridx = lax.broadcasted_iota(jnp.int32, (N, 1), 0)
    hh = sum((ridx >= j * W).astype(jnp.int32) for j in range(1, H))    # h = n // W
    ww = ridx - hh * W                                                  # w = n %  W
    rpos = ridx.astype(f32)

    def _valid(dh, dw):
        ok = ((hh + dh >= 0) & (hh + dh <= H - 1) &
              (ww + dw >= 0) & (ww + dw <= W - 1))
        return ok.astype(f32)                                           # (N, 1)

    # 3x3 depthwise conv: XLU rolls + masks (no zero-padded concats).  The
    # row-index array is rolled together with the data; matching it against the
    # wanted neighbour index picks the correct rotation direction and also
    # zeroes wrapped rows, independent of the rotate-direction convention.
    hd = h1 * wd[4:5, :]                                                # centre tap (0,0)
    for (dh, dw) in ((0, 1), (1, -1), (1, 0), (1, 1)):                  # +/- pairs
        off = dh * W + dw                                               # > 0
        s_f, s_b = (-off) % N, off % N
        rv_f, ri_f = pltpu.roll(h1, s_f, 0), pltpu.roll(rpos, s_f, 0)
        rv_b, ri_b = pltpu.roll(h1, s_b, 0), pltpu.roll(rpos, s_b, 0)
        for sgn in (1, -1):
            want = rpos + float(sgn * off)
            nb = jnp.where(ri_f == want, rv_f,
                           jnp.where(ri_b == want, rv_b, 0.0))          # (N, Cm)
            tap = (sgn * dh + 1) * 3 + (sgn * dw + 1)
            hd = hd + nb * _valid(sgn * dh, sgn * dw) * wd[tap:tap + 1, :]
    hd = hd + bdw_ref[...]

    ha = _gelu(hd)
    mlp_out = jnp.dot(ha.astype(bf16), w2_ref[...],
                      preferred_element_type=f32) + bfc2_ref[...]       # (N, C)

    # TODO(synk): emit a lane-packed (or bf16) output so the final (N, C=32)
    # stores are unmasked; kept f32 (B, N, C) to preserve the module interface.
    o_ref[0] = (y + mlp_out).astype(o_ref.dtype)                        # residual 2


# --------------------------------- wrappers ------------------------------------
def prepare_params(params, *, num_heads):
    """One-time (outside the jitted call path) weight prep: fold the softmax
    scale into wq and cast all matmul weights to bf16."""
    C = params["wq"].shape[0]
    scale = (C // num_heads) ** -0.5
    bf16 = jnp.bfloat16
    p = dict(params)
    p["wq"] = (params["wq"] * scale).astype(bf16)
    for name in ("wsr", "wkv", "wproj", "w1", "w2"):
        p[name] = params[name].astype(bf16)
    return p


@partial(jax.jit, static_argnames=("H", "W", "num_heads", "sr_ratio"))
def segformer_block(x, params, *, H, W, num_heads, sr_ratio):
    """x: (B, N, C) float32 with N = H*W.  params from prepare_params()."""
    B, N, C = x.shape
    sr = sr_ratio
    assert N == H * W and H % sr == 0 and W % sr == 0 and C % num_heads == 0
    Cm = params["w1"].shape[1]

    kernel = partial(_block_kernel, num_heads=num_heads, H=H, W=W, sr=sr,
                     eps=1e-5)

    def full(shape):
        return pl.BlockSpec(shape, lambda b, _n=len(shape): (0,) * _n)

    in_specs = [
        pl.BlockSpec((1, N, C), lambda b: (b, 0, 0)),            # x (only activation read)
        full((1, C)), full((1, C)),                              # norm1 g, b
        full((C, C)),                                            # wq (bf16, scale folded)
        full((sr * sr * C, C)), full((1, C)),                    # sr conv (as matmul), bias
        full((1, C)), full((1, C)),                              # Attention.norm g, b
        full((C, 2 * C)),                                        # wkv
        full((C, C)), full((1, C)),                              # proj, bias
        full((1, C)), full((1, C)),                              # norm2 g, b
        full((C, Cm)), full((1, Cm)),                            # fc1, bias
        full((9, Cm)), full((1, Cm)),                            # dwconv taps, bias
        full((Cm, C)), full((1, C)),                             # fc2, bias
    ]

    return pl.pallas_call(
        kernel,
        out_shape=jax.ShapeDtypeStruct((B, N, C), x.dtype),
        grid=(B,),
        in_specs=in_specs,
        out_specs=pl.BlockSpec((1, N, C), lambda b: (b, 0, 0)),
        compiler_params=pltpu.CompilerParams(
            dimension_semantics=("parallel",),      # megacore: batch across TCs
            vmem_limit_bytes=32 * 1024 * 1024),     # toy sizes; re-derive for v7x tiles
    )(x,
      params["g1"], params["b1"],
      params["wq"],
      params["wsr"], params["bsr"], params["gsr"], params["bsrn"],
      params["wkv"], params["wproj"], params["bproj"],
      params["g2"], params["b2"],
      params["w1"], params["bfc1"],
      params["wdw"], params["bdw"],
      params["w2"], params["bfc2"])


# ----------------------------- pure-JAX reference ------------------------------
def reference_block(x, params, *, H, W, num_heads, sr_ratio):
    B, N, C = x.shape
    d = C // num_heads
    scale = d ** -0.5
    sr = sr_ratio
    Hr, Wr = H // sr, W // sr
    Nr = Hr * Wr
    eps = 1e-5

    def ln(z, g, b):
        mu = z.mean(-1, keepdims=True)
        var = jnp.square(z - mu).mean(-1, keepdims=True)
        return (z - mu) * lax.rsqrt(var + eps) * g + b

    # attention branch
    x1 = ln(x, params["g1"], params["b1"])
    q = (x1 @ params["wq"]).reshape(B, N, num_heads, d).transpose(0, 2, 1, 3)
    patches = (x1.reshape(B, Hr, sr, Wr, sr, C)
                 .transpose(0, 1, 3, 2, 4, 5)
                 .reshape(B, Nr, sr * sr * C))
    xr = ln(patches @ params["wsr"] + params["bsr"], params["gsr"], params["bsrn"])
    kv = (xr @ params["wkv"]).reshape(B, Nr, 2, num_heads, d).transpose(2, 0, 3, 1, 4)
    k, v = (kv[0], kv[1])
    att = jax.nn.softmax(jnp.einsum("bhnd,bhmd->bhnm", q, k) * scale, axis=-1)
    ctx = jnp.einsum("bhnm,bhmd->bhnd", att, v).transpose(0, 2, 1, 3).reshape(B, N, C)
    y = x + (ctx @ params["wproj"] + params["bproj"])

    # mlp branch
    y2 = ln(y, params["g2"], params["b2"])
    h1 = y2 @ params["w1"] + params["bfc1"]
    Cm = h1.shape[-1]
    him = h1.reshape(B, H, W, Cm)
    hp = jnp.pad(him, ((0, 0), (1, 1), (1, 1), (0, 0)))
    hd = sum(hp[:, 1 + dh:1 + dh + H, 1 + dw:1 + dw + W, :]
             * params["wdw"][(dh + 1) * 3 + (dw + 1)]
             for dh in (-1, 0, 1) for dw in (-1, 0, 1)) + params["bdw"]
    ha = jax.nn.gelu(hd, approximate=False)
    mlp_out = ha.reshape(B, N, Cm) @ params["w2"] + params["bfc2"]
    return y + mlp_out


# ------------------------------------ main -------------------------------------
if __name__ == "__main__":
    B, H, W = 2, 8, 8
    C, num_heads, sr, mlp_ratio = 32, 8, 2, 4
    N = H * W
    Cm = C * mlp_ratio

    key = jax.random.PRNGKey(0)
    ks = jax.random.split(key, 20)

    def nrm(i, shape, s=0.02):
        return jax.random.normal(ks[i], shape, jnp.float32) * s

    # Conv weights in PyTorch layouts, flattened to the matmul layouts the
    # kernel expects.
    conv_sr = jax.random.normal(ks[0], (C, C, sr, sr), jnp.float32) * \
        math.sqrt(2.0 / (sr * sr * C))                       # (Cout, Cin, kh, kw)
    conv_dw = jax.random.normal(ks[1], (Cm, 1, 3, 3), jnp.float32) * \
        math.sqrt(2.0 / 9.0)                                 # depthwise, fan_out = 9

    params = {
        "g1":    1.0 + nrm(2, (1, C), 0.05), "b1": nrm(3, (1, C)),
        "wq":    nrm(4, (C, C)),
        "wsr":   conv_sr.transpose(2, 3, 1, 0).reshape(sr * sr * C, C),  # (kh,kw,cin)->cout
        "bsr":   nrm(5, (1, C)),
        "gsr":   1.0 + nrm(6, (1, C), 0.05), "bsrn": nrm(7, (1, C)),
        "wkv":   nrm(8, (C, 2 * C)),
        "wproj": nrm(9, (C, C)), "bproj": nrm(10, (1, C)),
        "g2":    1.0 + nrm(11, (1, C), 0.05), "b2": nrm(12, (1, C)),
        "w1":    nrm(13, (C, Cm)), "bfc1": nrm(14, (1, Cm)),
        "wdw":   conv_dw.reshape(Cm, 9).T,                   # (9, Cm), tap = kh*3 + kw
        "bdw":   nrm(15, (1, Cm)),
        "w2":    nrm(16, (Cm, C)), "bfc2": nrm(17, (1, C)),
    }
    x = jax.random.normal(ks[18], (B, N, C), jnp.float32)

    prepared = prepare_params(params, num_heads=num_heads)   # one-time bf16 cast / scale fold
    out = segformer_block(x, prepared, H=H, W=W, num_heads=num_heads, sr_ratio=sr)
    out = jax.block_until_ready(out)

    ref = reference_block(x, params, H=H, W=W, num_heads=num_heads, sr_ratio=sr)
    # bf16 MXU operands in the kernel -> relaxed tolerance vs. the f32 reference.
    np.testing.assert_allclose(np.asarray(out), np.asarray(ref),
                               rtol=2e-2, atol=2e-2)
    print("KERNEL_OK")
</pallas_src>

<mosaic_0001>
module attributes {stable_mosaic.version = 11 : i64} {
  func.func @_block_kernel(%arg0: i32, %arg1: memref<1x64x32xf32, #tpu.memory_space<vmem>>, %arg2: memref<1x32xf32, #tpu.memory_space<vmem>>, %arg3: memref<1x32xf32, #tpu.memory_space<vmem>>, %arg4: memref<32x32xbf16, #tpu.memory_space<vmem>>, %arg5: memref<128x32xbf16, #tpu.memory_space<vmem>>, %arg6: memref<1x32xf32, #tpu.memory_space<vmem>>, %arg7: memref<1x32xf32, #tpu.memory_space<vmem>>, %arg8: memref<1x32xf32, #tpu.memory_space<vmem>>, %arg9: memref<32x64xbf16, #tpu.memory_space<vmem>>, %arg10: memref<32x32xbf16, #tpu.memory_space<vmem>>, %arg11: memref<1x32xf32, #tpu.memory_space<vmem>>, %arg12: memref<1x32xf32, #tpu.memory_space<vmem>>, %arg13: memref<1x32xf32, #tpu.memory_space<vmem>>, %arg14: memref<32x128xbf16, #tpu.memory_space<vmem>>, %arg15: memref<1x128xf32, #tpu.memory_space<vmem>>, %arg16: memref<9x128xf32, #tpu.memory_space<vmem>>, %arg17: memref<1x128xf32, #tpu.memory_space<vmem>>, %arg18: memref<128x32xbf16, #tpu.memory_space<vmem>>, %arg19: memref<1x32xf32, #tpu.memory_space<vmem>>, %arg20: memref<1x64x32xf32, #tpu.memory_space<vmem>>) attributes {dimension_semantics = [#tpu.dimension_semantics<parallel>], iteration_bounds = array<i64: 2>, scalar_prefetch = 0 : i64, scratch_operands = 0 : i64, tpu.core_type = #tpu.core_type<tc>, window_params = [{transform_indices = @transform_0, window_bounds = array<i64: 1, 64, 32>}, {pipeline_mode = #tpu.pipeline_mode<synchronous>, transform_indices = @transform_1, window_bounds = array<i64: 1, 32>}, {pipeline_mode = #tpu.pipeline_mode<synchronous>, transform_indices = @transform_2, window_bounds = array<i64: 1, 32>}, {pipeline_mode = #tpu.pipeline_mode<synchronous>, transform_indices = @transform_3, window_bounds = array<i64: 32, 32>}, {pipeline_mode = #tpu.pipeline_mode<synchronous>, transform_indices = @transform_4, window_bounds = array<i64: 128, 32>}, {pipeline_mode = #tpu.pipeline_mode<synchronous>, transform_indices = @transform_5, window_bounds = array<i64: 1, 32>}, {pipeline_mode = #tpu.pipeline_mode<synchronous>, transform_indices = @transform_6, window_bounds = array<i64: 1, 32>}, {pipeline_mode = #tpu.pipeline_mode<synchronous>, transform_indices = @transform_7, window_bounds = array<i64: 1, 32>}, {pipeline_mode = #tpu.pipeline_mode<synchronous>, transform_indices = @transform_8, window_bounds = array<i64: 32, 64>}, {pipeline_mode = #tpu.pipeline_mode<synchronous>, transform_indices = @transform_9, window_bounds = array<i64: 32, 32>}, {pipeline_mode = #tpu.pipeline_mode<synchronous>, transform_indices = @transform_10, window_bounds = array<i64: 1, 32>}, {pipeline_mode = #tpu.pipeline_mode<synchronous>, transform_indices = @transform_11, window_bounds = array<i64: 1, 32>}, {pipeline_mode = #tpu.pipeline_mode<synchronous>, transform_indices = @transform_12, window_bounds = array<i64: 1, 32>}, {pipeline_mode = #tpu.pipeline_mode<synchronous>, transform_indices = @transform_13, window_bounds = array<i64: 32, 128>}, {pipeline_mode = #tpu.pipeline_mode<synchronous>, transform_indices = @transform_14, window_bounds = array<i64: 1, 128>}, {pipeline_mode = #tpu.pipeline_mode<synchronous>, transform_indices = @transform_15, window_bounds = array<i64: 9, 128>}, {pipeline_mode = #tpu.pipeline_mode<synchronous>, transform_indices = @transform_16, window_bounds = array<i64: 1, 128>}, {pipeline_mode = #tpu.pipeline_mode<synchronous>, transform_indices = @transform_17, window_bounds = array<i64: 128, 32>}, {pipeline_mode = #tpu.pipeline_mode<synchronous>, transform_indices = @transform_18, window_bounds = array<i64: 1, 32>}, {transform_indices = @transform_19, window_bounds = array<i64: 1, 64, 32>}]} {
    %c0 = arith.constant 0 : index
    %c0_0 = arith.constant 0 : index
    %c0_1 = arith.constant 0 : index
    %0 = vector.load %arg1[%c0, %c0_0, %c0_1] : memref<1x64x32xf32, #tpu.memory_space<vmem>>, vector<1x64x32xf32>
    %1 = vector.shape_cast %0 : vector<1x64x32xf32> to vector<64x32xf32>
    %c0_2 = arith.constant 0 : index
    %c0_3 = arith.constant 0 : index
    %2 = vector.load %arg2[%c0_2, %c0_3] : memref<1x32xf32, #tpu.memory_space<vmem>>, vector<1x32xf32>
    %c0_4 = arith.constant 0 : index
    %c0_5 = arith.constant 0 : index
    %3 = vector.load %arg3[%c0_4, %c0_5] : memref<1x32xf32, #tpu.memory_space<vmem>>, vector<1x32xf32>
    %cst = arith.constant dense<0.000000e+00> : vector<64xf32>
    %4 = vector.multi_reduction <add>, %1, %cst [1] : vector<64x32xf32> to vector<64xf32>
    %5 = vector.shape_cast %4 : vector<64xf32> to vector<64x1xf32>
    %cst_6 = arith.constant 3.200000e+01 : f32
    %6 = vector.broadcast %cst_6 : f32 to vector<64x1xf32>
    %7 = arith.divf %5, %6 : vector<64x1xf32>
    %8 = vector.broadcast %7 : vector<64x1xf32> to vector<64x32xf32>
    %9 = arith.subf %1, %8 : vector<64x32xf32>
    %10 = arith.mulf %9, %9 : vector<64x32xf32>
    %cst_7 = arith.constant dense<0.000000e+00> : vector<64xf32>
    %11 = vector.multi_reduction <add>, %10, %cst_7 [1] : vector<64x32xf32> to vector<64xf32>
    %12 = vector.shape_cast %11 : vector<64xf32> to vector<64x1xf32>
    %cst_8 = arith.constant 3.200000e+01 : f32
    %13 = vector.broadcast %cst_8 : f32 to vector<64x1xf32>
    %14 = arith.divf %12, %13 : vector<64x1xf32>
    %15 = vector.broadcast %7 : vector<64x1xf32> to vector<64x32xf32>
    %16 = arith.subf %1, %15 : vector<64x32xf32>
    %cst_9 = arith.constant 9.99999974E-6 : f32
    %17 = vector.broadcast %cst_9 : f32 to vector<64x1xf32>
    %18 = arith.addf %14, %17 : vector<64x1xf32>
    %19 = math.rsqrt %18 : vector<64x1xf32>
    %20 = vector.broadcast %19 : vector<64x1xf32> to vector<64x32xf32>
    %21 = arith.mulf %16, %20 : vector<64x32xf32>
    %22 = vector.broadcast %2 : vector<1x32xf32> to vector<64x32xf32>
    %23 = arith.mulf %21, %22 : vector<64x32xf32>
    %24 = vector.broadcast %3 : vector<1x32xf32> to vector<64x32xf32>
    %25 = arith.addf %23, %24 : vector<64x32xf32>
    %26 = arith.truncf %25 : vector<64x32xf32> to vector<64x32xbf16>
    %c0_10 = arith.constant 0 : index
    %c0_11 = arith.constant 0 : index
    %27 = vector.load %arg4[%c0_10, %c0_11] : memref<32x32xbf16, #tpu.memory_space<vmem>>, vector<32x32xbf16>
    %cst_12 = arith.constant dense<0.000000e+00> : vector<64x32xf32>
    %28 = tpu.matmul %26, %27, %cst_12 {dimension_numbers = #tpu.dot_dimension_numbers<[1], [0], [0], [1], [0, 0, 1, 1], [], []>} : vector<64x32xbf16>, vector<32x32xbf16>, vector<64x32xf32> -> vector<64x32xf32>
    %29 = arith.truncf %28 : vector<64x32xf32> to vector<64x32xbf16>
    %30 = tpu.iota {dimensions = array<i32: 0>} : vector<16x64xi32>
    %31 = tpu.iota {dimensions = array<i32: 1>} : vector<16x64xi32>
    %c4_i32 = arith.constant 4 : i32
    %32 = vector.broadcast %c4_i32 : i32 to vector<16x64xi32>
    %33 = arith.cmpi sge, %30, %32 : vector<16x64xi32>
    %34 = arith.extui %33 : vector<16x64xi1> to vector<16x64xi32>
    %c0_i32 = arith.constant 0 : i32
    %35 = vector.broadcast %c0_i32 : i32 to vector<16x64xi32>
    %36 = arith.addi %35, %34 : vector<16x64xi32>
    %c8_i32 = arith.constant 8 : i32
    %37 = vector.broadcast %c8_i32 : i32 to vector<16x64xi32>
    %38 = arith.cmpi sge, %30, %37 : vector<16x64xi32>
    %39 = arith.extui %38 : vector<16x64xi1> to vector<16x64xi32>
    %40 = arith.addi %36, %39 : vector<16x64xi32>
    %c12_i32 = arith.constant 12 : i32
    %41 = vector.broadcast %c12_i32 : i32 to vector<16x64xi32>
    %42 = arith.cmpi sge, %30, %41 : vector<16x64xi32>
    %43 = arith.extui %42 : vector<16x64xi1> to vector<16x64xi32>
    %44 = arith.addi %40, %43 : vector<16x64xi32>
    %c4_i32_13 = arith.constant 4 : i32
    %45 = vector.broadcast %c4_i32_13 : i32 to vector<16x64xi32>
    %46 = arith.muli %44, %45 : vector<16x64xi32>
    %47 = arith.subi %30, %46 : vector<16x64xi32>
    %c2_i32 = arith.constant 2 : i32
    %48 = vector.broadcast %c2_i32 : i32 to vector<16x64xi32>
    %49 = arith.muli %44, %48 : vector<16x64xi32>
    %c0_i32_14 = arith.constant 0 : i32
    %50 = vector.broadcast %c0_i32_14 : i32 to vector<16x64xi32>
    %51 = arith.addi %49, %50 : vector<16x64xi32>
    %c8_i32_15 = arith.constant 8 : i32
    %52 = vector.broadcast %c8_i32_15 : i32 to vector<16x64xi32>
    %53 = arith.muli %51, %52 : vector<16x64xi32>
    %c2_i32_16 = arith.constant 2 : i32
    %54 = vector.broadcast %c2_i32_16 : i32 to vector<16x64xi32>
    %55 = arith.muli %47, %54 : vector<16x64xi32>
    %56 = arith.addi %53, %55 : vector<16x64xi32>
    %c0_i32_17 = arith.constant 0 : i32
    %57 = vector.broadcast %c0_i32_17 : i32 to vector<16x64xi32>
    %58 = arith.addi %56, %57 : vector<16x64xi32>
    %59 = arith.cmpi eq, %31, %58 : vector<16x64xi32>
    %60 = arith.extui %59 : vector<16x64xi1> to vector<16x64xi32>
    %61 = arith.sitofp %60 : vector<16x64xi32> to vector<16x64xf32>
    %62 = arith.truncf %61 : vector<16x64xf32> to vector<16x64xbf16>
    %cst_18 = arith.constant dense<0.000000e+00> : vector<16x32xf32>
    %63 = tpu.matmul %62, %26, %cst_18 {dimension_numbers = #tpu.dot_dimension_numbers<[1], [0], [0], [1], [0, 0, 1, 1], [], []>} : vector<16x64xbf16>, vector<64x32xbf16>, vector<16x32xf32> -> vector<16x32xf32>
    %c2_i32_19 = arith.constant 2 : i32
    %64 = vector.broadcast %c2_i32_19 : i32 to vector<16x64xi32>
    %65 = arith.muli %44, %64 : vector<16x64xi32>
    %c0_i32_20 = arith.constant 0 : i32
    %66 = vector.broadcast %c0_i32_20 : i32 to vector<16x64xi32>
    %67 = arith.addi %65, %66 : vector<16x64xi32>
    %c8_i32_21 = arith.constant 8 : i32
    %68 = vector.broadcast %c8_i32_21 : i32 to vector<16x64xi32>
    %69 = arith.muli %67, %68 : vector<16x64xi32>
    %c2_i32_22 = arith.constant 2 : i32
    %70 = vector.broadcast %c2_i32_22 : i32 to vector<16x64xi32>
    %71 = arith.muli %47, %70 : vector<16x64xi32>
    %72 = arith.addi %69, %71 : vector<16x64xi32>
    %c1_i32 = arith.constant 1 : i32
    %73 = vector.broadcast %c1_i32 : i32 to vector<16x64xi32>
    %74 = arith.addi %72, %73 : vector<16x64xi32>
    %75 = arith.cmpi eq, %31, %74 : vector<16x64xi32>
    %76 = arith.extui %75 : vector<16x64xi1> to vector<16x64xi32>
    %77 = arith.sitofp %76 : vector<16x64xi32> to vector<16x64xf32>
    %78 = arith.truncf %77 : vector<16x64xf32> to vector<16x64xbf16>
    %cst_23 = arith.constant dense<0.000000e+00> : vector<16x32xf32>
    %79 = tpu.matmul %78, %26, %cst_23 {dimension_numbers = #tpu.dot_dimension_numbers<[1], [0], [0], [1], [0, 0, 1, 1], [], []>} : vector<16x64xbf16>, vector<64x32xbf16>, vector<16x32xf32> -> vector<16x32xf32>
    %c2_i32_24 = arith.constant 2 : i32
    %80 = vector.broadcast %c2_i32_24 : i32 to vector<16x64xi32>
    %81 = arith.muli %44, %80 : vector<16x64xi32>
    %c1_i32_25 = arith.constant 1 : i32
    %82 = vector.broadcast %c1_i32_25 : i32 to vector<16x64xi32>
    %83 = arith.addi %81, %82 : vector<16x64xi32>
    %c8_i32_26 = arith.constant 8 : i32
    %84 = vector.broadcast %c8_i32_26 : i32 to vector<16x64xi32>
    %85 = arith.muli %83, %84 : vector<16x64xi32>
    %c2_i32_27 = arith.constant 2 : i32
    %86 = vector.broadcast %c2_i32_27 : i32 to vector<16x64xi32>
    %87 = arith.muli %47, %86 : vector<16x64xi32>
    %88 = arith.addi %85, %87 : vector<16x64xi32>
    %c0_i32_28 = arith.constant 0 : i32
    %89 = vector.broadcast %c0_i32_28 : i32 to vector<16x64xi32>
    %90 = arith.addi %88, %89 : vector<16x64xi32>
    %91 = arith.cmpi eq, %31, %90 : vector<16x64xi32>
    %92 = arith.extui %91 : vector<16x64xi1> to vector<16x64xi32>
    %93 = arith.sitofp %92 : vector<16x64xi32> to vector<16x64xf32>
    %94 = arith.truncf %93 : vector<16x64xf32> to vector<16x64xbf16>
    %cst_29 = arith.constant dense<0.000000e+00> : vector<16x32xf32>
    %95 = tpu.matmul %94, %26, %cst_29 {dimension_numbers = #tpu.dot_dimension_numbers<[1], [0], [0], [1], [0, 0, 1, 1], [], []>} : vector<16x64xbf16>, vector<64x32xbf16>, vector<16x32xf32> -> vector<16x32xf32>
    %c2_i32_30 = arith.constant 2 : i32
    %96 = vector.broadcast %c2_i32_30 : i32 to vector<16x64xi32>
    %97 = arith.muli %44, %96 : vector<16x64xi32>
    %c1_i32_31 = arith.constant 1 : i32
    %98 = vector.broadcast %c1_i32_31 : i32 to vector<16x64xi32>
    %99 = arith.addi %97, %98 : vector<16x64xi32>
    %c8_i32_32 = arith.constant 8 : i32
    %100 = vector.broadcast %c8_i32_32 : i32 to vector<16x64xi32>
    %101 = arith.muli %99, %100 : vector<16x64xi32>
    %c2_i32_33 = arith.constant 2 : i32
    %102 = vector.broadcast %c2_i32_33 : i32 to vector<16x64xi32>
    %103 = arith.muli %47, %102 : vector<16x64xi32>
    %104 = arith.addi %101, %103 : vector<16x64xi32>
    %c1_i32_34 = arith.constant 1 : i32
    %105 = vector.broadcast %c1_i32_34 : i32 to vector<16x64xi32>
    %106 = arith.addi %104, %105 : vector<16x64xi32>
    %107 = arith.cmpi eq, %31, %106 : vector<16x64xi32>
    %108 = arith.extui %107 : vector<16x64xi1> to vector<16x64xi32>
    %109 = arith.sitofp %108 : vector<16x64xi32> to vector<16x64xf32>
    %110 = arith.truncf %109 : vector<16x64xf32> to vector<16x64xbf16>
    %cst_35 = arith.constant dense<0.000000e+00> : vector<16x32xf32>
    %111 = tpu.matmul %110, %26, %cst_35 {dimension_numbers = #tpu.dot_dimension_numbers<[1], [0], [0], [1], [0, 0, 1, 1], [], []>} : vector<16x64xbf16>, vector<64x32xbf16>, vector<16x32xf32> -> vector<16x32xf32>
    %112 = tpu.concatenate %63, %79, %95, %111 in 1 : vector<16x32xf32>, vector<16x32xf32>, vector<16x32xf32>, vector<16x32xf32> -> vector<16x128xf32>
    %113 = arith.truncf %112 : vector<16x128xf32> to vector<16x128xbf16>
    %c0_36 = arith.constant 0 : index
    %c0_37 = arith.constant 0 : index
    %114 = vector.load %arg5[%c0_36, %c0_37] : memref<128x32xbf16, #tpu.memory_space<vmem>>, vector<128x32xbf16>
    %cst_38 = arith.constant dense<0.000000e+00> : vector<16x32xf32>
    %115 = tpu.matmul %113, %114, %cst_38 {dimension_numbers = #tpu.dot_dimension_numbers<[1], [0], [0], [1], [0, 0, 1, 1], [], []>} : vector<16x128xbf16>, vector<128x32xbf16>, vector<16x32xf32> -> vector<16x32xf32>
    %c0_39 = arith.constant 0 : index
    %c0_40 = arith.constant 0 : index
    %116 = vector.load %arg6[%c0_39, %c0_40] : memref<1x32xf32, #tpu.memory_space<vmem>>, vector<1x32xf32>
    %117 = vector.broadcast %116 : vector<1x32xf32> to vector<16x32xf32>
    %118 = arith.addf %115, %117 : vector<16x32xf32>
    %c0_41 = arith.constant 0 : index
    %c0_42 = arith.constant 0 : index
    %119 = vector.load %arg7[%c0_41, %c0_42] : memref<1x32xf32, #tpu.memory_space<vmem>>, vector<1x32xf32>
    %c0_43 = arith.constant 0 : index
    %c0_44 = arith.constant 0 : index
    %120 = vector.load %arg8[%c0_43, %c0_44] : memref<1x32xf32, #tpu.memory_space<vmem>>, vector<1x32xf32>
    %cst_45 = arith.constant dense<0.000000e+00> : vector<16xf32>
    %121 = vector.multi_reduction <add>, %118, %cst_45 [1] : vector<16x32xf32> to vector<16xf32>
    %122 = vector.shape_cast %121 : vector<16xf32> to vector<16x1xf32>
    %cst_46 = arith.constant 3.200000e+01 : f32
    %123 = vector.broadcast %cst_46 : f32 to vector<16x1xf32>
    %124 = arith.divf %122, %123 : vector<16x1xf32>
    %125 = vector.broadcast %124 : vector<16x1xf32> to vector<16x32xf32>
    %126 = arith.subf %118, %125 : vector<16x32xf32>
    %127 = arith.mulf %126, %126 : vector<16x32xf32>
    %cst_47 = arith.constant dense<0.000000e+00> : vector<16xf32>
    %128 = vector.multi_reduction <add>, %127, %cst_47 [1] : vector<16x32xf32> to vector<16xf32>
    %129 = vector.shape_cast %128 : vector<16xf32> to vector<16x1xf32>
    %cst_48 = arith.constant 3.200000e+01 : f32
    %130 = vector.broadcast %cst_48 : f32 to vector<16x1xf32>
    %131 = arith.divf %129, %130 : vector<16x1xf32>
    %132 = vector.broadcast %124 : vector<16x1xf32> to vector<16x32xf32>
    %133 = arith.subf %118, %132 : vector<16x32xf32>
    %cst_49 = arith.constant 9.99999974E-6 : f32
    %134 = vector.broadcast %cst_49 : f32 to vector<16x1xf32>
    %135 = arith.addf %131, %134 : vector<16x1xf32>
    %136 = math.rsqrt %135 : vector<16x1xf32>
    %137 = vector.broadcast %136 : vector<16x1xf32> to vector<16x32xf32>
    %138 = arith.mulf %133, %137 : vector<16x32xf32>
    %139 = vector.broadcast %119 : vector<1x32xf32> to vector<16x32xf32>
    %140 = arith.mulf %138, %139 : vector<16x32xf32>
    %141 = vector.broadcast %120 : vector<1x32xf32> to vector<16x32xf32>
    %142 = arith.addf %140, %141 : vector<16x32xf32>
    %143 = arith.truncf %142 : vector<16x32xf32> to vector<16x32xbf16>
    %c0_50 = arith.constant 0 : index
    %c0_51 = arith.constant 0 : index
    %144 = vector.load %arg9[%c0_50, %c0_51] : memref<32x64xbf16, #tpu.memory_space<vmem>>, vector<32x64xbf16>
    %cst_52 = arith.constant dense<0.000000e+00> : vector<16x64xf32>
    %145 = tpu.matmul %143, %144, %cst_52 {dimension_numbers = #tpu.dot_dimension_numbers<[1], [0], [0], [1], [0, 0, 1, 1], [], []>} : vector<16x32xbf16>, vector<32x64xbf16>, vector<16x64xf32> -> vector<16x64xf32>
    %146 = vector.extract_strided_slice %145 {offsets = [0, 0], sizes = [16, 32], strides = [1, 1]} : vector<16x64xf32> to vector<16x32xf32>
    %147 = vector.extract_strided_slice %145 {offsets = [0, 32], sizes = [16, 32], strides = [1, 1]} : vector<16x64xf32> to vector<16x32xf32>
    %148 = tpu.iota {dimensions = array<i32: 0>} : vector<128x32xi32>
    %149 = tpu.iota {dimensions = array<i32: 1>} : vector<128x32xi32>
    %c16_i32 = arith.constant 16 : i32
    %150 = vector.broadcast %c16_i32 : i32 to vector<128x32xi32>
    %151 = arith.cmpi sge, %148, %150 : vector<128x32xi32>
    %152 = arith.extui %151 : vector<128x32xi1> to vector<128x32xi32>
    %c0_i32_53 = arith.constant 0 : i32
    %153 = vector.broadcast %c0_i32_53 : i32 to vector<128x32xi32>
    %154 = arith.addi %153, %152 : vector<128x32xi32>
    %c32_i32 = arith.constant 32 : i32
    %155 = vector.broadcast %c32_i32 : i32 to vector<128x32xi32>
    %156 = arith.cmpi sge, %148, %155 : vector<128x32xi32>
    %157 = arith.extui %156 : vector<128x32xi1> to vector<128x32xi32>
    %158 = arith.addi %154, %157 : vector<128x32xi32>
    %c48_i32 = arith.constant 48 : i32
    %159 = vector.broadcast %c48_i32 : i32 to vector<128x32xi32>
    %160 = arith.cmpi sge, %148, %159 : vector<128x32xi32>
    %161 = arith.extui %160 : vector<128x32xi1> to vector<128x32xi32>
    %162 = arith.addi %158, %161 : vector<128x32xi32>
    %c64_i32 = arith.constant 64 : i32
    %163 = vector.broadcast %c64_i32 : i32 to vector<128x32xi32>
    %164 = arith.cmpi sge, %148, %163 : vector<128x32xi32>
    %165 = arith.extui %164 : vector<128x32xi1> to vector<128x32xi32>
    %166 = arith.addi %162, %165 : vector<128x32xi32>
    %c80_i32 = arith.constant 80 : i32
    %167 = vector.broadcast %c80_i32 : i32 to vector<128x32xi32>
    %168 = arith.cmpi sge, %148, %167 : vector<128x32xi32>
    %169 = arith.extui %168 : vector<128x32xi1> to vector<128x32xi32>
    %170 = arith.addi %166, %169 : vector<128x32xi32>
    %c96_i32 = arith.constant 96 : i32
    %171 = vector.broadcast %c96_i32 : i32 to vector<128x32xi32>
    %172 = arith.cmpi sge, %148, %171 : vector<128x32xi32>
    %173 = arith.extui %172 : vector<128x32xi1> to vector<128x32xi32>
    %174 = arith.addi %170, %173 : vector<128x32xi32>
    %c112_i32 = arith.constant 112 : i32
    %175 = vector.broadcast %c112_i32 : i32 to vector<128x32xi32>
    %176 = arith.cmpi sge, %148, %175 : vector<128x32xi32>
    %177 = arith.extui %176 : vector<128x32xi1> to vector<128x32xi32>
    %178 = arith.addi %174, %177 : vector<128x32xi32>
    %c4_i32_54 = arith.constant 4 : i32
    %179 = vector.broadcast %c4_i32_54 : i32 to vector<128x32xi32>
    %180 = arith.muli %178, %179 : vector<128x32xi32>
    %181 = arith.cmpi sge, %149, %180 : vector<128x32xi32>
    %c4_i32_55 = arith.constant 4 : i32
    %182 = vector.broadcast %c4_i32_55 : i32 to vector<128x32xi32>
    %183 = arith.muli %178, %182 : vector<128x32xi32>
    %c4_i32_56 = arith.constant 4 : i32
    %184 = vector.broadcast %c4_i32_56 : i32 to vector<128x32xi32>
    %185 = arith.addi %183, %184 : vector<128x32xi32>
    %186 = arith.cmpi slt, %149, %185 : vector<128x32xi32>
    %187 = arith.andi %181, %186 : vector<128x32xi1>
    %188 = arith.extui %187 : vector<128x32xi1> to vector<128x32xi32>
    %189 = arith.sitofp %188 : vector<128x32xi32> to vector<128x32xf32>
    %190 = vector.shape_cast %146 : vector<16x32xf32> to vector<1x16x32xf32>
    %191 = vector.shape_cast %190 : vector<1x16x32xf32> to vector<1x16x32xf32>
    %192 = vector.broadcast %191 : vector<1x16x32xf32> to vector<8x16x32xf32>
    %193 = vector.shape_cast %192 : vector<8x16x32xf32> to vector<128x32xf32>
    %194 = vector.shape_cast %147 : vector<16x32xf32> to vector<1x16x32xf32>
    %195 = vector.shape_cast %194 : vector<1x16x32xf32> to vector<1x16x32xf32>
    %196 = vector.broadcast %195 : vector<1x16x32xf32> to vector<8x16x32xf32>
    %197 = vector.shape_cast %196 : vector<8x16x32xf32> to vector<128x32xf32>
    %198 = arith.mulf %193, %189 : vector<128x32xf32>
    %199 = arith.truncf %198 : vector<128x32xf32> to vector<128x32xbf16>
    %200 = arith.mulf %197, %189 : vector<128x32xf32>
    %201 = tpu.concatenate %200, %189 in 1 : vector<128x32xf32>, vector<128x32xf32> -> vector<128x64xf32>
    %202 = arith.truncf %201 : vector<128x64xf32> to vector<128x64xbf16>
    "tpu.trace_start"() <{level = 10 : i32, message = "nc,mc->nm"}> : () -> ()
    %cst_57 = arith.constant dense<0.000000e+00> : vector<64x128xf32>
    %203 = tpu.matmul %29, %199, %cst_57 {dimension_numbers = #tpu.dot_dimension_numbers<[1], [1], [0], [0], [0, 0, 1, 0], [], []>} : vector<64x32xbf16>, vector<128x32xbf16>, vector<64x128xf32> -> vector<64x128xf32>
    "tpu.trace_stop"() : () -> ()
    %204 = vector.extract_strided_slice %203 {offsets = [0, 0], sizes = [64, 16], strides = [1, 1]} : vector<64x128xf32> to vector<64x16xf32>
    %cst_58 = arith.constant dense<0xFF800000> : vector<64xf32>
    %205 = vector.multi_reduction <maximumf>, %204, %cst_58 [1] : vector<64x16xf32> to vector<64xf32>
    %206 = vector.shape_cast %205 : vector<64xf32> to vector<64x1xf32>
    %207 = vector.broadcast %206 : vector<64x1xf32> to vector<64x16xf32>
    %208 = arith.subf %204, %207 : vector<64x16xf32>
    %209 = math.exp %208 : vector<64x16xf32>
    %210 = vector.extract_strided_slice %203 {offsets = [0, 16], sizes = [64, 16], strides = [1, 1]} : vector<64x128xf32> to vector<64x16xf32>
    %cst_59 = arith.constant dense<0xFF800000> : vector<64xf32>
    %211 = vector.multi_reduction <maximumf>, %210, %cst_59 [1] : vector<64x16xf32> to vector<64xf32>
    %212 = vector.shape_cast %211 : vector<64xf32> to vector<64x1xf32>
    %213 = vector.broadcast %212 : vector<64x1xf32> to vector<64x16xf32>
    %214 = arith.subf %210, %213 : vector<64x16xf32>
    %215 = math.exp %214 : vector<64x16xf32>
    %216 = vector.extract_strided_slice %203 {offsets = [0, 32], sizes = [64, 16], strides = [1, 1]} : vector<64x128xf32> to vector<64x16xf32>
    %cst_60 = arith.constant dense<0xFF800000> : vector<64xf32>
    %217 = vector.multi_reduction <maximumf>, %216, %cst_60 [1] : vector<64x16xf32> to vector<64xf32>
    %218 = vector.shape_cast %217 : vector<64xf32> to vector<64x1xf32>
    %219 = vector.broadcast %218 : vector<64x1xf32> to vector<64x16xf32>
    %220 = arith.subf %216, %219 : vector<64x16xf32>
    %221 = math.exp %220 : vector<64x16xf32>
    %222 = vector.extract_strided_slice %203 {offsets = [0, 48], sizes = [64, 16], strides = [1, 1]} : vector<64x128xf32> to vector<64x16xf32>
    %cst_61 = arith.constant dense<0xFF800000> : vector<64xf32>
    %223 = vector.multi_reduction <maximumf>, %222, %cst_61 [1] : vector<64x16xf32> to vector<64xf32>
    %224 = vector.shape_cast %223 : vector<64xf32> to vector<64x1xf32>
    %225 = vector.broadcast %224 : vector<64x1xf32> to vector<64x16xf32>
    %226 = arith.subf %222, %225 : vector<64x16xf32>
    %227 = math.exp %226 : vector<64x16xf32>
    %228 = vector.extract_strided_slice %203 {offsets = [0, 64], sizes = [64, 16], strides = [1, 1]} : vector<64x128xf32> to vector<64x16xf32>
    %cst_62 = arith.constant dense<0xFF800000> : vector<64xf32>
    %229 = vector.multi_reduction <maximumf>, %228, %cst_62 [1] : vector<64x16xf32> to vector<64xf32>
    %230 = vector.shape_cast %229 : vector<64xf32> to vector<64x1xf32>
    %231 = vector.broadcast %230 : vector<64x1xf32> to vector<64x16xf32>
    %232 = arith.subf %228, %231 : vector<64x16xf32>
    %233 = math.exp %232 : vector<64x16xf32>
    %234 = vector.extract_strided_slice %203 {offsets = [0, 80], sizes = [64, 16], strides = [1, 1]} : vector<64x128xf32> to vector<64x16xf32>
    %cst_63 = arith.constant dense<0xFF800000> : vector<64xf32>
    %235 = vector.multi_reduction <maximumf>, %234, %cst_63 [1] : vector<64x16xf32> to vector<64xf32>
    %236 = vector.shape_cast %235 : vector<64xf32> to vector<64x1xf32>
    %237 = vector.broadcast %236 : vector<64x1xf32> to vector<64x16xf32>
    %238 = arith.subf %234, %237 : vector<64x16xf32>
    %239 = math.exp %238 : vector<64x16xf32>
    %240 = vector.extract_strided_slice %203 {offsets = [0, 96], sizes = [64, 16], strides = [1, 1]} : vector<64x128xf32> to vector<64x16xf32>
    %cst_64 = arith.constant dense<0xFF800000> : vector<64xf32>
    %241 = vector.multi_reduction <maximumf>, %240, %cst_64 [1] : vector<64x16xf32> to vector<64xf32>
    %242 = vector.shape_cast %241 : vector<64xf32> to vector<64x1xf32>
    %243 = vector.broadcast %242 : vector<64x1xf32> to vector<64x16xf32>
    %244 = arith.subf %240, %243 : vector<64x16xf32>
    %245 = math.exp %244 : vector<64x16xf32>
    %246 = vector.extract_strided_slice %203 {offsets = [0, 112], sizes = [64, 16], strides = [1, 1]} : vector<64x128xf32> to vector<64x16xf32>
    %cst_65 = arith.constant dense<0xFF800000> : vector<64xf32>
    %247 = vector.multi_reduction <maximumf>, %246, %cst_65 [1] : vector<64x16xf32> to vector<64xf32>
    %248 = vector.shape_cast %247 : vector<64xf32> to vector<64x1xf32>
    %249 = vector.broadcast %248 : vector<64x1xf32> to vector<64x16xf32>
    %250 = arith.subf %246, %249 : vector<64x16xf32>
    %251 = math.exp %250 : vector<64x16xf32>
    %252 = tpu.concatenate %209, %215, %221, %227, %233, %239, %245, %251 in 1 : vector<64x16xf32>, vector<64x16xf32>, vector<64x16xf32>, vector<64x16xf32>, vector<64x16xf32>, vector<64x16xf32>, vector<64x16xf32>, vector<64x16xf32> -> vector<64x128xf32>
    %253 = arith.truncf %252 : vector<64x128xf32> to vector<64x128xbf16>
    %cst_66 = arith.constant dense<0.000000e+00> : vector<64x64xf32>
    %254 = tpu.matmul %253, %202, %cst_66 {dimension_numbers = #tpu.dot_dimension_numbers<[1], [0], [0], [1], [0, 0, 1, 1], [], []>} : vector<64x128xbf16>, vector<128x64xbf16>, vector<64x64xf32> -> vector<64x64xf32>
    %255 = vector.extract_strided_slice %254 {offsets = [0, 0], sizes = [64, 32], strides = [1, 1]} : vector<64x64xf32> to vector<64x32xf32>
    %256 = vector.extract_strided_slice %254 {offsets = [0, 32], sizes = [64, 32], strides = [1, 1]} : vector<64x64xf32> to vector<64x32xf32>
    %257 = tpu.reciprocal %256 {approx = true} : vector<64x32xf32> -> vector<64x32xf32>
    %258 = arith.mulf %255, %257 : vector<64x32xf32>
    %259 = arith.truncf %258 : vector<64x32xf32> to vector<64x32xbf16>
    %c0_67 = arith.constant 0 : index
    %c0_68 = arith.constant 0 : index
    %260 = vector.load %arg10[%c0_67, %c0_68] : memref<32x32xbf16, #tpu.memory_space<vmem>>, vector<32x32xbf16>
    %cst_69 = arith.constant dense<0.000000e+00> : vector<64x32xf32>
    %261 = tpu.matmul %259, %260, %cst_69 {dimension_numbers = #tpu.dot_dimension_numbers<[1], [0], [0], [1], [0, 0, 1, 1], [], []>} : vector<64x32xbf16>, vector<32x32xbf16>, vector<64x32xf32> -> vector<64x32xf32>
    %c0_70 = arith.constant 0 : index
    %c0_71 = arith.constant 0 : index
    %262 = vector.load %arg11[%c0_70, %c0_71] : memref<1x32xf32, #tpu.memory_space<vmem>>, vector<1x32xf32>
    %263 = vector.broadcast %262 : vector<1x32xf32> to vector<64x32xf32>
    %264 = arith.addf %261, %263 : vector<64x32xf32>
    %265 = arith.addf %1, %264 : vector<64x32xf32>
    %c0_72 = arith.constant 0 : index
    %c0_73 = arith.constant 0 : index
    %266 = vector.load %arg12[%c0_72, %c0_73] : memref<1x32xf32, #tpu.memory_space<vmem>>, vector<1x32xf32>
    %c0_74 = arith.constant 0 : index
    %c0_75 = arith.constant 0 : index
    %267 = vector.load %arg13[%c0_74, %c0_75] : memref<1x32xf32, #tpu.memory_space<vmem>>, vector<1x32xf32>
    %cst_76 = arith.constant dense<0.000000e+00> : vector<64xf32>
    %268 = vector.multi_reduction <add>, %265, %cst_76 [1] : vector<64x32xf32> to vector<64xf32>
    %269 = vector.shape_cast %268 : vector<64xf32> to vector<64x1xf32>
    %cst_77 = arith.constant 3.200000e+01 : f32
    %270 = vector.broadcast %cst_77 : f32 to vector<64x1xf32>
    %271 = arith.divf %269, %270 : vector<64x1xf32>
    %272 = vector.broadcast %271 : vector<64x1xf32> to vector<64x32xf32>
    %273 = arith.subf %265, %272 : vector<64x32xf32>
    %274 = arith.mulf %273, %273 : vector<64x32xf32>
    %cst_78 = arith.constant dense<0.000000e+00> : vector<64xf32>
    %275 = vector.multi_reduction <add>, %274, %cst_78 [1] : vector<64x32xf32> to vector<64xf32>
    %276 = vector.shape_cast %275 : vector<64xf32> to vector<64x1xf32>
    %cst_79 = arith.constant 3.200000e+01 : f32
    %277 = vector.broadcast %cst_79 : f32 to vector<64x1xf32>
    %278 = arith.divf %276, %277 : vector<64x1xf32>
    %279 = vector.broadcast %271 : vector<64x1xf32> to vector<64x32xf32>
    %280 = arith.subf %265, %279 : vector<64x32xf32>
    %cst_80 = arith.constant 9.99999974E-6 : f32
    %281 = vector.broadcast %cst_80 : f32 to vector<64x1xf32>
    %282 = arith.addf %278, %281 : vector<64x1xf32>
    %283 = math.rsqrt %282 : vector<64x1xf32>
    %284 = vector.broadcast %283 : vector<64x1xf32> to vector<64x32xf32>
    %285 = arith.mulf %280, %284 : vector<64x32xf32>
    %286 = vector.broadcast %266 : vector<1x32xf32> to vector<64x32xf32>
    %287 = arith.mulf %285, %286 : vector<64x32xf32>
    %288 = vector.broadcast %267 : vector<1x32xf32> to vector<64x32xf32>
    %289 = arith.addf %287, %288 : vector<64x32xf32>
    %290 = arith.truncf %289 : vector<64x32xf32> to vector<64x32xbf16>
    %c0_81 = arith.constant 0 : index
    %c0_82 = arith.constant 0 : index
    %291 = vector.load %arg14[%c0_81, %c0_82] : memref<32x128xbf16, #tpu.memory_space<vmem>>, vector<32x128xbf16>
    %cst_83 = arith.constant dense<0.000000e+00> : vector<64x128xf32>
    %292 = tpu.matmul %290, %291, %cst_83 {dimension_numbers = #tpu.dot_dimension_numbers<[1], [0], [0], [1], [0, 0, 1, 1], [], []>} : vector<64x32xbf16>, vector<32x128xbf16>, vector<64x128xf32> -> vector<64x128xf32>
    %c0_84 = arith.constant 0 : index
    %c0_85 = arith.constant 0 : index
    %293 = vector.load %arg15[%c0_84, %c0_85] : memref<1x128xf32, #tpu.memory_space<vmem>>, vector<1x128xf32>
    %294 = vector.broadcast %293 : vector<1x128xf32> to vector<64x128xf32>
    %295 = arith.addf %292, %294 : vector<64x128xf32>
    %c0_86 = arith.constant 0 : index
    %c0_87 = arith.constant 0 : index
    %296 = vector.load %arg16[%c0_86, %c0_87] : memref<9x128xf32, #tpu.memory_space<vmem>>, vector<9x128xf32>
    %297 = tpu.iota {dimensions = array<i32: 0>} : vector<64x1xi32>
    %c8_i32_88 = arith.constant 8 : i32
    %298 = vector.broadcast %c8_i32_88 : i32 to vector<64x1xi32>
    %299 = arith.cmpi sge, %297, %298 : vector<64x1xi32>
    %300 = arith.extui %299 : vector<64x1xi1> to vector<64x1xi32>
    %c0_i32_89 = arith.constant 0 : i32
    %301 = vector.broadcast %c0_i32_89 : i32 to vector<64x1xi32>
    %302 = arith.addi %301, %300 : vector<64x1xi32>
    %c16_i32_90 = arith.constant 16 : i32
    %303 = vector.broadcast %c16_i32_90 : i32 to vector<64x1xi32>
    %304 = arith.cmpi sge, %297, %303 : vector<64x1xi32>
    %305 = arith.extui %304 : vector<64x1xi1> to vector<64x1xi32>
    %306 = arith.addi %302, %305 : vector<64x1xi32>
    %c24_i32 = arith.constant 24 : i32
    %307 = vector.broadcast %c24_i32 : i32 to vector<64x1xi32>
    %308 = arith.cmpi sge, %297, %307 : vector<64x1xi32>
    %309 = arith.extui %308 : vector<64x1xi1> to vector<64x1xi32>
    %310 = arith.addi %306, %309 : vector<64x1xi32>
    %c32_i32_91 = arith.constant 32 : i32
    %311 = vector.broadcast %c32_i32_91 : i32 to vector<64x1xi32>
    %312 = arith.cmpi sge, %297, %311 : vector<64x1xi32>
    %313 = arith.extui %312 : vector<64x1xi1> to vector<64x1xi32>
    %314 = arith.addi %310, %313 : vector<64x1xi32>
    %c40_i32 = arith.constant 40 : i32
    %315 = vector.broadcast %c40_i32 : i32 to vector<64x1xi32>
    %316 = arith.cmpi sge, %297, %315 : vector<64x1xi32>
    %317 = arith.extui %316 : vector<64x1xi1> to vector<64x1xi32>
    %318 = arith.addi %314, %317 : vector<64x1xi32>
    %c48_i32_92 = arith.constant 48 : i32
    %319 = vector.broadcast %c48_i32_92 : i32 to vector<64x1xi32>
    %320 = arith.cmpi sge, %297, %319 : vector<64x1xi32>
    %321 = arith.extui %320 : vector<64x1xi1> to vector<64x1xi32>
    %322 = arith.addi %318, %321 : vector<64x1xi32>
    %c56_i32 = arith.constant 56 : i32
    %323 = vector.broadcast %c56_i32 : i32 to vector<64x1xi32>
    %324 = arith.cmpi sge, %297, %323 : vector<64x1xi32>
    %325 = arith.extui %324 : vector<64x1xi1> to vector<64x1xi32>
    %326 = arith.addi %322, %325 : vector<64x1xi32>
    %c8_i32_93 = arith.constant 8 : i32
    %327 = vector.broadcast %c8_i32_93 : i32 to vector<64x1xi32>
    %328 = arith.muli %326, %327 : vector<64x1xi32>
    %329 = arith.subi %297, %328 : vector<64x1xi32>
    %330 = arith.sitofp %297 : vector<64x1xi32> to vector<64x1xf32>
    %331 = vector.extract_strided_slice %296 {offsets = [4, 0], sizes = [1, 128], strides = [1, 1]} : vector<9x128xf32> to vector<1x128xf32>
    %332 = vector.broadcast %331 : vector<1x128xf32> to vector<64x128xf32>
    %333 = arith.mulf %295, %332 : vector<64x128xf32>
    %c63_i32 = arith.constant 63 : i32
    %334 = tpu.dynamic_rotate %295 by %c63_i32 dim 0 : vector<64x128xf32>, i32 -> vector<64x128xf32>
    %c63_i32_94 = arith.constant 63 : i32
    %335 = tpu.dynamic_rotate %330 by %c63_i32_94 dim 0 : vector<64x1xf32>, i32 -> vector<64x1xf32>
    %c1_i32_95 = arith.constant 1 : i32
    %336 = tpu.dynamic_rotate %295 by %c1_i32_95 dim 0 : vector<64x128xf32>, i32 -> vector<64x128xf32>
    %c1_i32_96 = arith.constant 1 : i32
    %337 = tpu.dynamic_rotate %330 by %c1_i32_96 dim 0 : vector<64x1xf32>, i32 -> vector<64x1xf32>
    %cst_97 = arith.constant 1.000000e+00 : f32
    %338 = vector.broadcast %cst_97 : f32 to vector<64x1xf32>
    %339 = arith.addf %330, %338 : vector<64x1xf32>
    %340 = arith.cmpf oeq, %335, %339 : vector<64x1xf32>
    %341 = arith.cmpf oeq, %337, %339 : vector<64x1xf32>
    %cst_98 = arith.constant 0.000000e+00 : f32
    %342 = vector.shape_cast %341 : vector<64x1xi1> to vector<64x1xi1>
    %343 = vector.broadcast %342 : vector<64x1xi1> to vector<64x128xi1>
    %344 = vector.broadcast %cst_98 : f32 to vector<64x128xf32>
    %345 = arith.select %343, %336, %344 : vector<64x128xi1>, vector<64x128xf32>
    %346 = vector.shape_cast %340 : vector<64x1xi1> to vector<64x1xi1>
    %347 = vector.broadcast %346 : vector<64x1xi1> to vector<64x128xi1>
    %348 = arith.select %347, %334, %345 : vector<64x128xi1>, vector<64x128xf32>
    %c0_i32_99 = arith.constant 0 : i32
    %349 = vector.broadcast %c0_i32_99 : i32 to vector<64x1xi32>
    %350 = arith.addi %326, %349 : vector<64x1xi32>
    %c0_i32_100 = arith.constant 0 : i32
    %351 = vector.broadcast %c0_i32_100 : i32 to vector<64x1xi32>
    %352 = arith.cmpi sge, %350, %351 : vector<64x1xi32>
    %c0_i32_101 = arith.constant 0 : i32
    %353 = vector.broadcast %c0_i32_101 : i32 to vector<64x1xi32>
    %354 = arith.addi %326, %353 : vector<64x1xi32>
    %c7_i32 = arith.constant 7 : i32
    %355 = vector.broadcast %c7_i32 : i32 to vector<64x1xi32>
    %356 = arith.cmpi sle, %354, %355 : vector<64x1xi32>
    %357 = arith.andi %352, %356 : vector<64x1xi1>
    %c1_i32_102 = arith.constant 1 : i32
    %358 = vector.broadcast %c1_i32_102 : i32 to vector<64x1xi32>
    %359 = arith.addi %329, %358 : vector<64x1xi32>
    %c0_i32_103 = arith.constant 0 : i32
    %360 = vector.broadcast %c0_i32_103 : i32 to vector<64x1xi32>
    %361 = arith.cmpi sge, %359, %360 : vector<64x1xi32>
    %362 = arith.andi %357, %361 : vector<64x1xi1>
    %c1_i32_104 = arith.constant 1 : i32
    %363 = vector.broadcast %c1_i32_104 : i32 to vector<64x1xi32>
    %364 = arith.addi %329, %363 : vector<64x1xi32>
    %c7_i32_105 = arith.constant 7 : i32
    %365 = vector.broadcast %c7_i32_105 : i32 to vector<64x1xi32>
    %366 = arith.cmpi sle, %364, %365 : vector<64x1xi32>
    %367 = arith.andi %362, %366 : vector<64x1xi1>
    %368 = arith.extui %367 : vector<64x1xi1> to vector<64x1xi32>
    %369 = arith.sitofp %368 : vector<64x1xi32> to vector<64x1xf32>
    %370 = vector.broadcast %369 : vector<64x1xf32> to vector<64x128xf32>
    %371 = arith.mulf %348, %370 : vector<64x128xf32>
    %372 = vector.extract_strided_slice %296 {offsets = [5, 0], sizes = [1, 128], strides = [1, 1]} : vector<9x128xf32> to vector<1x128xf32>
    %373 = vector.broadcast %372 : vector<1x128xf32> to vector<64x128xf32>
    %374 = arith.mulf %371, %373 : vector<64x128xf32>
    %375 = arith.addf %333, %374 : vector<64x128xf32>
    %cst_106 = arith.constant -1.000000e+00 : f32
    %376 = vector.broadcast %cst_106 : f32 to vector<64x1xf32>
    %377 = arith.addf %330, %376 : vector<64x1xf32>
    %378 = arith.cmpf oeq, %335, %377 : vector<64x1xf32>
    %379 = arith.cmpf oeq, %337, %377 : vector<64x1xf32>
    %cst_107 = arith.constant 0.000000e+00 : f32
    %380 = vector.shape_cast %379 : vector<64x1xi1> to vector<64x1xi1>
    %381 = vector.broadcast %380 : vector<64x1xi1> to vector<64x128xi1>
    %382 = vector.broadcast %cst_107 : f32 to vector<64x128xf32>
    %383 = arith.select %381, %336, %382 : vector<64x128xi1>, vector<64x128xf32>
    %384 = vector.shape_cast %378 : vector<64x1xi1> to vector<64x1xi1>
    %385 = vector.broadcast %384 : vector<64x1xi1> to vector<64x128xi1>
    %386 = arith.select %385, %334, %383 : vector<64x128xi1>, vector<64x128xf32>
    %c0_i32_108 = arith.constant 0 : i32
    %387 = vector.broadcast %c0_i32_108 : i32 to vector<64x1xi32>
    %388 = arith.addi %326, %387 : vector<64x1xi32>
    %c0_i32_109 = arith.constant 0 : i32
    %389 = vector.broadcast %c0_i32_109 : i32 to vector<64x1xi32>
    %390 = arith.cmpi sge, %388, %389 : vector<64x1xi32>
    %c0_i32_110 = arith.constant 0 : i32
    %391 = vector.broadcast %c0_i32_110 : i32 to vector<64x1xi32>
    %392 = arith.addi %326, %391 : vector<64x1xi32>
    %c7_i32_111 = arith.constant 7 : i32
    %393 = vector.broadcast %c7_i32_111 : i32 to vector<64x1xi32>
    %394 = arith.cmpi sle, %392, %393 : vector<64x1xi32>
    %395 = arith.andi %390, %394 : vector<64x1xi1>
    %c-1_i32 = arith.constant -1 : i32
    %396 = vector.broadcast %c-1_i32 : i32 to vector<64x1xi32>
    %397 = arith.addi %329, %396 : vector<64x1xi32>
    %c0_i32_112 = arith.constant 0 : i32
    %398 = vector.broadcast %c0_i32_112 : i32 to vector<64x1xi32>
    %399 = arith.cmpi sge, %397, %398 : vector<64x1xi32>
    %400 = arith.andi %395, %399 : vector<64x1xi1>
    %c-1_i32_113 = arith.constant -1 : i32
    %401 = vector.broadcast %c-1_i32_113 : i32 to vector<64x1xi32>
    %402 = arith.addi %329, %401 : vector<64x1xi32>
    %c7_i32_114 = arith.constant 7 : i32
    %403 = vector.broadcast %c7_i32_114 : i32 to vector<64x1xi32>
    %404 = arith.cmpi sle, %402, %403 : vector<64x1xi32>
    %405 = arith.andi %400, %404 : vector<64x1xi1>
    %406 = arith.extui %405 : vector<64x1xi1> to vector<64x1xi32>
    %407 = arith.sitofp %406 : vector<64x1xi32> to vector<64x1xf32>
    %408 = vector.broadcast %407 : vector<64x1xf32> to vector<64x128xf32>
    %409 = arith.mulf %386, %408 : vector<64x128xf32>
    %410 = vector.extract_strided_slice %296 {offsets = [3, 0], sizes = [1, 128], strides = [1, 1]} : vector<9x128xf32> to vector<1x128xf32>
    %411 = vector.broadcast %410 : vector<1x128xf32> to vector<64x128xf32>
    %412 = arith.mulf %409, %411 : vector<64x128xf32>
    %413 = arith.addf %375, %412 : vector<64x128xf32>
    %c57_i32 = arith.constant 57 : i32
    %414 = tpu.dynamic_rotate %295 by %c57_i32 dim 0 : vector<64x128xf32>, i32 -> vector<64x128xf32>
    %c57_i32_115 = arith.constant 57 : i32
    %415 = tpu.dynamic_rotate %330 by %c57_i32_115 dim 0 : vector<64x1xf32>, i32 -> vector<64x1xf32>
    %c7_i32_116 = arith.constant 7 : i32
    %416 = tpu.dynamic_rotate %295 by %c7_i32_116 dim 0 : vector<64x128xf32>, i32 -> vector<64x128xf32>
    %c7_i32_117 = arith.constant 7 : i32
    %417 = tpu.dynamic_rotate %330 by %c7_i32_117 dim 0 : vector<64x1xf32>, i32 -> vector<64x1xf32>
    %cst_118 = arith.constant 7.000000e+00 : f32
    %418 = vector.broadcast %cst_118 : f32 to vector<64x1xf32>
    %419 = arith.addf %330, %418 : vector<64x1xf32>
    %420 = arith.cmpf oeq, %415, %419 : vector<64x1xf32>
    %421 = arith.cmpf oeq, %417, %419 : vector<64x1xf32>
    %cst_119 = arith.constant 0.000000e+00 : f32
    %422 = vector.shape_cast %421 : vector<64x1xi1> to vector<64x1xi1>
    %423 = vector.broadcast %422 : vector<64x1xi1> to vector<64x128xi1>
    %424 = vector.broadcast %cst_119 : f32 to vector<64x128xf32>
    %425 = arith.select %423, %416, %424 : vector<64x128xi1>, vector<64x128xf32>
    %426 = vector.shape_cast %420 : vector<64x1xi1> to vector<64x1xi1>
    %427 = vector.broadcast %426 : vector<64x1xi1> to vector<64x128xi1>
    %428 = arith.select %427, %414, %425 : vector<64x128xi1>, vector<64x128xf32>
    %c1_i32_120 = arith.constant 1 : i32
    %429 = vector.broadcast %c1_i32_120 : i32 to vector<64x1xi32>
    %430 = arith.addi %326, %429 : vector<64x1xi32>
    %c0_i32_121 = arith.constant 0 : i32
    %431 = vector.broadcast %c0_i32_121 : i32 to vector<64x1xi32>
    %432 = arith.cmpi sge, %430, %431 : vector<64x1xi32>
    %c1_i32_122 = arith.constant 1 : i32
    %433 = vector.broadcast %c1_i32_122 : i32 to vector<64x1xi32>
    %434 = arith.addi %326, %433 : vector<64x1xi32>
    %c7_i32_123 = arith.constant 7 : i32
    %435 = vector.broadcast %c7_i32_123 : i32 to vector<64x1xi32>
    %436 = arith.cmpi sle, %434, %435 : vector<64x1xi32>
    %437 = arith.andi %432, %436 : vector<64x1xi1>
    %c-1_i32_124 = arith.constant -1 : i32
    %438 = vector.broadcast %c-1_i32_124 : i32 to vector<64x1xi32>
    %439 = arith.addi %329, %438 : vector<64x1xi32>
    %c0_i32_125 = arith.constant 0 : i32
    %440 = vector.broadcast %c0_i32_125 : i32 to vector<64x1xi32>
    %441 = arith.cmpi sge, %439, %440 : vector<64x1xi32>
    %442 = arith.andi %437, %441 : vector<64x1xi1>
    %c-1_i32_126 = arith.constant -1 : i32
    %443 = vector.broadcast %c-1_i32_126 : i32 to vector<64x1xi32>
    %444 = arith.addi %329, %443 : vector<64x1xi32>
    %c7_i32_127 = arith.constant 7 : i32
    %445 = vector.broadcast %c7_i32_127 : i32 to vector<64x1xi32>
    %446 = arith.cmpi sle, %444, %445 : vector<64x1xi32>
    %447 = arith.andi %442, %446 : vector<64x1xi1>
    %448 = arith.extui %447 : vector<64x1xi1> to vector<64x1xi32>
    %449 = arith.sitofp %448 : vector<64x1xi32> to vector<64x1xf32>
    %450 = vector.broadcast %449 : vector<64x1xf32> to vector<64x128xf32>
    %451 = arith.mulf %428, %450 : vector<64x128xf32>
    %452 = vector.extract_strided_slice %296 {offsets = [6, 0], sizes = [1, 128], strides = [1, 1]} : vector<9x128xf32> to vector<1x128xf32>
    %453 = vector.broadcast %452 : vector<1x128xf32> to vector<64x128xf32>
    %454 = arith.mulf %451, %453 : vector<64x128xf32>
    %455 = arith.addf %413, %454 : vector<64x128xf32>
    %cst_128 = arith.constant -7.000000e+00 : f32
    %456 = vector.broadcast %cst_128 : f32 to vector<64x1xf32>
    %457 = arith.addf %330, %456 : vector<64x1xf32>
    %458 = arith.cmpf oeq, %415, %457 : vector<64x1xf32>
    %459 = arith.cmpf oeq, %417, %457 : vector<64x1xf32>
    %cst_129 = arith.constant 0.000000e+00 : f32
    %460 = vector.shape_cast %459 : vector<64x1xi1> to vector<64x1xi1>
    %461 = vector.broadcast %460 : vector<64x1xi1> to vector<64x128xi1>
    %462 = vector.broadcast %cst_129 : f32 to vector<64x128xf32>
    %463 = arith.select %461, %416, %462 : vector<64x128xi1>, vector<64x128xf32>
    %464 = vector.shape_cast %458 : vector<64x1xi1> to vector<64x1xi1>
    %465 = vector.broadcast %464 : vector<64x1xi1> to vector<64x128xi1>
    %466 = arith.select %465, %414, %463 : vector<64x128xi1>, vector<64x128xf32>
    %c-1_i32_130 = arith.constant -1 : i32
    %467 = vector.broadcast %c-1_i32_130 : i32 to vector<64x1xi32>
    %468 = arith.addi %326, %467 : vector<64x1xi32>
    %c0_i32_131 = arith.constant 0 : i32
    %469 = vector.broadcast %c0_i32_131 : i32 to vector<64x1xi32>
    %470 = arith.cmpi sge, %468, %469 : vector<64x1xi32>
    %c-1_i32_132 = arith.constant -1 : i32
    %471 = vector.broadcast %c-1_i32_132 : i32 to vector<64x1xi32>
    %472 = arith.addi %326, %471 : vector<64x1xi32>
    %c7_i32_133 = arith.constant 7 : i32
    %473 = vector.broadcast %c7_i32_133 : i32 to vector<64x1xi32>
    %474 = arith.cmpi sle, %472, %473 : vector<64x1xi32>
    %475 = arith.andi %470, %474 : vector<64x1xi1>
    %c1_i32_134 = arith.constant 1 : i32
    %476 = vector.broadcast %c1_i32_134 : i32 to vector<64x1xi32>
    %477 = arith.addi %329, %476 : vector<64x1xi32>
    %c0_i32_135 = arith.constant 0 : i32
    %478 = vector.broadcast %c0_i32_135 : i32 to vector<64x1xi32>
    %479 = arith.cmpi sge, %477, %478 : vector<64x1xi32>
    %480 = arith.andi %475, %479 : vector<64x1xi1>
    %c1_i32_136 = arith.constant 1 : i32
    %481 = vector.broadcast %c1_i32_136 : i32 to vector<64x1xi32>
    %482 = arith.addi %329, %481 : vector<64x1xi32>
    %c7_i32_137 = arith.constant 7 : i32
    %483 = vector.broadcast %c7_i32_137 : i32 to vector<64x1xi32>
    %484 = arith.cmpi sle, %482, %483 : vector<64x1xi32>
    %485 = arith.andi %480, %484 : vector<64x1xi1>
    %486 = arith.extui %485 : vector<64x1xi1> to vector<64x1xi32>
    %487 = arith.sitofp %486 : vector<64x1xi32> to vector<64x1xf32>
    %488 = vector.broadcast %487 : vector<64x1xf32> to vector<64x128xf32>
    %489 = arith.mulf %466, %488 : vector<64x128xf32>
    %490 = vector.extract_strided_slice %296 {offsets = [2, 0], sizes = [1, 128], strides = [1, 1]} : vector<9x128xf32> to vector<1x128xf32>
    %491 = vector.broadcast %490 : vector<1x128xf32> to vector<64x128xf32>
    %492 = arith.mulf %489, %491 : vector<64x128xf32>
    %493 = arith.addf %455, %492 : vector<64x128xf32>
    %c56_i32_138 = arith.constant 56 : i32
    %494 = tpu.dynamic_rotate %295 by %c56_i32_138 dim 0 : vector<64x128xf32>, i32 -> vector<64x128xf32>
    %c56_i32_139 = arith.constant 56 : i32
    %495 = tpu.dynamic_rotate %330 by %c56_i32_139 dim 0 : vector<64x1xf32>, i32 -> vector<64x1xf32>
    %c8_i32_140 = arith.constant 8 : i32
    %496 = tpu.dynamic_rotate %295 by %c8_i32_140 dim 0 : vector<64x128xf32>, i32 -> vector<64x128xf32>
    %c8_i32_141 = arith.constant 8 : i32
    %497 = tpu.dynamic_rotate %330 by %c8_i32_141 dim 0 : vector<64x1xf32>, i32 -> vector<64x1xf32>
    %cst_142 = arith.constant 8.000000e+00 : f32
    %498 = vector.broadcast %cst_142 : f32 to vector<64x1xf32>
    %499 = arith.addf %330, %498 : vector<64x1xf32>
    %500 = arith.cmpf oeq, %495, %499 : vector<64x1xf32>
    %501 = arith.cmpf oeq, %497, %499 : vector<64x1xf32>
    %cst_143 = arith.constant 0.000000e+00 : f32
    %502 = vector.shape_cast %501 : vector<64x1xi1> to vector<64x1xi1>
    %503 = vector.broadcast %502 : vector<64x1xi1> to vector<64x128xi1>
    %504 = vector.broadcast %cst_143 : f32 to vector<64x128xf32>
    %505 = arith.select %503, %496, %504 : vector<64x128xi1>, vector<64x128xf32>
    %506 = vector.shape_cast %500 : vector<64x1xi1> to vector<64x1xi1>
    %507 = vector.broadcast %506 : vector<64x1xi1> to vector<64x128xi1>
    %508 = arith.select %507, %494, %505 : vector<64x128xi1>, vector<64x128xf32>
    %c1_i32_144 = arith.constant 1 : i32
    %509 = vector.broadcast %c1_i32_144 : i32 to vector<64x1xi32>
    %510 = arith.addi %326, %509 : vector<64x1xi32>
    %c0_i32_145 = arith.constant 0 : i32
    %511 = vector.broadcast %c0_i32_145 : i32 to vector<64x1xi32>
    %512 = arith.cmpi sge, %510, %511 : vector<64x1xi32>
    %c1_i32_146 = arith.constant 1 : i32
    %513 = vector.broadcast %c1_i32_146 : i32 to vector<64x1xi32>
    %514 = arith.addi %326, %513 : vector<64x1xi32>
    %c7_i32_147 = arith.constant 7 : i32
    %515 = vector.broadcast %c7_i32_147 : i32 to vector<64x1xi32>
    %516 = arith.cmpi sle, %514, %515 : vector<64x1xi32>
    %517 = arith.andi %512, %516 : vector<64x1xi1>
    %c0_i32_148 = arith.constant 0 : i32
    %518 = vector.broadcast %c0_i32_148 : i32 to vector<64x1xi32>
    %519 = arith.addi %329, %518 : vector<64x1xi32>
    %c0_i32_149 = arith.constant 0 : i32
    %520 = vector.broadcast %c0_i32_149 : i32 to vector<64x1xi32>
    %521 = arith.cmpi sge, %519, %520 : vector<64x1xi32>
    %522 = arith.andi %517, %521 : vector<64x1xi1>
    %c0_i32_150 = arith.constant 0 : i32
    %523 = vector.broadcast %c0_i32_150 : i32 to vector<64x1xi32>
    %524 = arith.addi %329, %523 : vector<64x1xi32>
    %c7_i32_151 = arith.constant 7 : i32
    %525 = vector.broadcast %c7_i32_151 : i32 to vector<64x1xi32>
    %526 = arith.cmpi sle, %524, %525 : vector<64x1xi32>
    %527 = arith.andi %522, %526 : vector<64x1xi1>
    %528 = arith.extui %527 : vector<64x1xi1> to vector<64x1xi32>
    %529 = arith.sitofp %528 : vector<64x1xi32> to vector<64x1xf32>
    %530 = vector.broadcast %529 : vector<64x1xf32> to vector<64x128xf32>
    %531 = arith.mulf %508, %530 : vector<64x128xf32>
    %532 = vector.extract_strided_slice %296 {offsets = [7, 0], sizes = [1, 128], strides = [1, 1]} : vector<9x128xf32> to vector<1x128xf32>
    %533 = vector.broadcast %532 : vector<1x128xf32> to vector<64x128xf32>
    %534 = arith.mulf %531, %533 : vector<64x128xf32>
    %535 = arith.addf %493, %534 : vector<64x128xf32>
    %cst_152 = arith.constant -8.000000e+00 : f32
    %536 = vector.broadcast %cst_152 : f32 to vector<64x1xf32>
    %537 = arith.addf %330, %536 : vector<64x1xf32>
    %538 = arith.cmpf oeq, %495, %537 : vector<64x1xf32>
    %539 = arith.cmpf oeq, %497, %537 : vector<64x1xf32>
    %cst_153 = arith.constant 0.000000e+00 : f32
    %540 = vector.shape_cast %539 : vector<64x1xi1> to vector<64x1xi1>
    %541 = vector.broadcast %540 : vector<64x1xi1> to vector<64x128xi1>
    %542 = vector.broadcast %cst_153 : f32 to vector<64x128xf32>
    %543 = arith.select %541, %496, %542 : vector<64x128xi1>, vector<64x128xf32>
    %544 = vector.shape_cast %538 : vector<64x1xi1> to vector<64x1xi1>
    %545 = vector.broadcast %544 : vector<64x1xi1> to vector<64x128xi1>
    %546 = arith.select %545, %494, %543 : vector<64x128xi1>, vector<64x128xf32>
    %c-1_i32_154 = arith.constant -1 : i32
    %547 = vector.broadcast %c-1_i32_154 : i32 to vector<64x1xi32>
    %548 = arith.addi %326, %547 : vector<64x1xi32>
    %c0_i32_155 = arith.constant 0 : i32
    %549 = vector.broadcast %c0_i32_155 : i32 to vector<64x1xi32>
    %550 = arith.cmpi sge, %548, %549 : vector<64x1xi32>
    %c-1_i32_156 = arith.constant -1 : i32
    %551 = vector.broadcast %c-1_i32_156 : i32 to vector<64x1xi32>
    %552 = arith.addi %326, %551 : vector<64x1xi32>
    %c7_i32_157 = arith.constant 7 : i32
    %553 = vector.broadcast %c7_i32_157 : i32 to vector<64x1xi32>
    %554 = arith.cmpi sle, %552, %553 : vector<64x1xi32>
    %555 = arith.andi %550, %554 : vector<64x1xi1>
    %c0_i32_158 = arith.constant 0 : i32
    %556 = vector.broadcast %c0_i32_158 : i32 to vector<64x1xi32>
    %557 = arith.addi %329, %556 : vector<64x1xi32>
    %c0_i32_159 = arith.constant 0 : i32
    %558 = vector.broadcast %c0_i32_159 : i32 to vector<64x1xi32>
    %559 = arith.cmpi sge, %557, %558 : vector<64x1xi32>
    %560 = arith.andi %555, %559 : vector<64x1xi1>
    %c0_i32_160 = arith.constant 0 : i32
    %561 = vector.broadcast %c0_i32_160 : i32 to vector<64x1xi32>
    %562 = arith.addi %329, %561 : vector<64x1xi32>
    %c7_i32_161 = arith.constant 7 : i32
    %563 = vector.broadcast %c7_i32_161 : i32 to vector<64x1xi32>
    %564 = arith.cmpi sle, %562, %563 : vector<64x1xi32>
    %565 = arith.andi %560, %564 : vector<64x1xi1>
    %566 = arith.extui %565 : vector<64x1xi1> to vector<64x1xi32>
    %567 = arith.sitofp %566 : vector<64x1xi32> to vector<64x1xf32>
    %568 = vector.broadcast %567 : vector<64x1xf32> to vector<64x128xf32>
    %569 = arith.mulf %546, %568 : vector<64x128xf32>
    %570 = vector.extract_strided_slice %296 {offsets = [1, 0], sizes = [1, 128], strides = [1, 1]} : vector<9x128xf32> to vector<1x128xf32>
    %571 = vector.broadcast %570 : vector<1x128xf32> to vector<64x128xf32>
    %572 = arith.mulf %569, %571 : vector<64x128xf32>
    %573 = arith.addf %535, %572 : vector<64x128xf32>
    %c55_i32 = arith.constant 55 : i32
    %574 = tpu.dynamic_rotate %295 by %c55_i32 dim 0 : vector<64x128xf32>, i32 -> vector<64x128xf32>
    %c55_i32_162 = arith.constant 55 : i32
    %575 = tpu.dynamic_rotate %330 by %c55_i32_162 dim 0 : vector<64x1xf32>, i32 -> vector<64x1xf32>
    %c9_i32 = arith.constant 9 : i32
    %576 = tpu.dynamic_rotate %295 by %c9_i32 dim 0 : vector<64x128xf32>, i32 -> vector<64x128xf32>
    %c9_i32_163 = arith.constant 9 : i32
    %577 = tpu.dynamic_rotate %330 by %c9_i32_163 dim 0 : vector<64x1xf32>, i32 -> vector<64x1xf32>
    %cst_164 = arith.constant 9.000000e+00 : f32
    %578 = vector.broadcast %cst_164 : f32 to vector<64x1xf32>
    %579 = arith.addf %330, %578 : vector<64x1xf32>
    %580 = arith.cmpf oeq, %575, %579 : vector<64x1xf32>
    %581 = arith.cmpf oeq, %577, %579 : vector<64x1xf32>
    %cst_165 = arith.constant 0.000000e+00 : f32
    %582 = vector.shape_cast %581 : vector<64x1xi1> to vector<64x1xi1>
    %583 = vector.broadcast %582 : vector<64x1xi1> to vector<64x128xi1>
    %584 = vector.broadcast %cst_165 : f32 to vector<64x128xf32>
    %585 = arith.select %583, %576, %584 : vector<64x128xi1>, vector<64x128xf32>
    %586 = vector.shape_cast %580 : vector<64x1xi1> to vector<64x1xi1>
    %587 = vector.broadcast %586 : vector<64x1xi1> to vector<64x128xi1>
    %588 = arith.select %587, %574, %585 : vector<64x128xi1>, vector<64x128xf32>
    %c1_i32_166 = arith.constant 1 : i32
    %589 = vector.broadcast %c1_i32_166 : i32 to vector<64x1xi32>
    %590 = arith.addi %326, %589 : vector<64x1xi32>
    %c0_i32_167 = arith.constant 0 : i32
    %591 = vector.broadcast %c0_i32_167 : i32 to vector<64x1xi32>
    %592 = arith.cmpi sge, %590, %591 : vector<64x1xi32>
    %c1_i32_168 = arith.constant 1 : i32
    %593 = vector.broadcast %c1_i32_168 : i32 to vector<64x1xi32>
    %594 = arith.addi %326, %593 : vector<64x1xi32>
    %c7_i32_169 = arith.constant 7 : i32
    %595 = vector.broadcast %c7_i32_169 : i32 to vector<64x1xi32>
    %596 = arith.cmpi sle, %594, %595 : vector<64x1xi32>
    %597 = arith.andi %592, %596 : vector<64x1xi1>
    %c1_i32_170 = arith.constant 1 : i32
    %598 = vector.broadcast %c1_i32_170 : i32 to vector<64x1xi32>
    %599 = arith.addi %329, %598 : vector<64x1xi32>
    %c0_i32_171 = arith.constant 0 : i32
    %600 = vector.broadcast %c0_i32_171 : i32 to vector<64x1xi32>
    %601 = arith.cmpi sge, %599, %600 : vector<64x1xi32>
    %602 = arith.andi %597, %601 : vector<64x1xi1>
    %c1_i32_172 = arith.constant 1 : i32
    %603 = vector.broadcast %c1_i32_172 : i32 to vector<64x1xi32>
    %604 = arith.addi %329, %603 : vector<64x1xi32>
    %c7_i32_173 = arith.constant 7 : i32
    %605 = vector.broadcast %c7_i32_173 : i32 to vector<64x1xi32>
    %606 = arith.cmpi sle, %604, %605 : vector<64x1xi32>
    %607 = arith.andi %602, %606 : vector<64x1xi1>
    %608 = arith.extui %607 : vector<64x1xi1> to vector<64x1xi32>
    %609 = arith.sitofp %608 : vector<64x1xi32> to vector<64x1xf32>
    %610 = vector.broadcast %609 : vector<64x1xf32> to vector<64x128xf32>
    %611 = arith.mulf %588, %610 : vector<64x128xf32>
    %612 = vector.extract_strided_slice %296 {offsets = [8, 0], sizes = [1, 128], strides = [1, 1]} : vector<9x128xf32> to vector<1x128xf32>
    %613 = vector.broadcast %612 : vector<1x128xf32> to vector<64x128xf32>
    %614 = arith.mulf %611, %613 : vector<64x128xf32>
    %615 = arith.addf %573, %614 : vector<64x128xf32>
    %cst_174 = arith.constant -9.000000e+00 : f32
    %616 = vector.broadcast %cst_174 : f32 to vector<64x1xf32>
    %617 = arith.addf %330, %616 : vector<64x1xf32>
    %618 = arith.cmpf oeq, %575, %617 : vector<64x1xf32>
    %619 = arith.cmpf oeq, %577, %617 : vector<64x1xf32>
    %cst_175 = arith.constant 0.000000e+00 : f32
    %620 = vector.shape_cast %619 : vector<64x1xi1> to vector<64x1xi1>
    %621 = vector.broadcast %620 : vector<64x1xi1> to vector<64x128xi1>
    %622 = vector.broadcast %cst_175 : f32 to vector<64x128xf32>
    %623 = arith.select %621, %576, %622 : vector<64x128xi1>, vector<64x128xf32>
    %624 = vector.shape_cast %618 : vector<64x1xi1> to vector<64x1xi1>
    %625 = vector.broadcast %624 : vector<64x1xi1> to vector<64x128xi1>
    %626 = arith.select %625, %574, %623 : vector<64x128xi1>, vector<64x128xf32>
    %c-1_i32_176 = arith.constant -1 : i32
    %627 = vector.broadcast %c-1_i32_176 : i32 to vector<64x1xi32>
    %628 = arith.addi %326, %627 : vector<64x1xi32>
    %c0_i32_177 = arith.constant 0 : i32
    %629 = vector.broadcast %c0_i32_177 : i32 to vector<64x1xi32>
    %630 = arith.cmpi sge, %628, %629 : vector<64x1xi32>
    %c-1_i32_178 = arith.constant -1 : i32
    %631 = vector.broadcast %c-1_i32_178 : i32 to vector<64x1xi32>
    %632 = arith.addi %326, %631 : vector<64x1xi32>
    %c7_i32_179 = arith.constant 7 : i32
    %633 = vector.broadcast %c7_i32_179 : i32 to vector<64x1xi32>
    %634 = arith.cmpi sle, %632, %633 : vector<64x1xi32>
    %635 = arith.andi %630, %634 : vector<64x1xi1>
    %c-1_i32_180 = arith.constant -1 : i32
    %636 = vector.broadcast %c-1_i32_180 : i32 to vector<64x1xi32>
    %637 = arith.addi %329, %636 : vector<64x1xi32>
    %c0_i32_181 = arith.constant 0 : i32
    %638 = vector.broadcast %c0_i32_181 : i32 to vector<64x1xi32>
    %639 = arith.cmpi sge, %637, %638 : vector<64x1xi32>
    %640 = arith.andi %635, %639 : vector<64x1xi1>
    %c-1_i32_182 = arith.constant -1 : i32
    %641 = vector.broadcast %c-1_i32_182 : i32 to vector<64x1xi32>
    %642 = arith.addi %329, %641 : vector<64x1xi32>
    %c7_i32_183 = arith.constant 7 : i32
    %643 = vector.broadcast %c7_i32_183 : i32 to vector<64x1xi32>
    %644 = arith.cmpi sle, %642, %643 : vector<64x1xi32>
    %645 = arith.andi %640, %644 : vector<64x1xi1>
    %646 = arith.extui %645 : vector<64x1xi1> to vector<64x1xi32>
    %647 = arith.sitofp %646 : vector<64x1xi32> to vector<64x1xf32>
    %648 = vector.broadcast %647 : vector<64x1xf32> to vector<64x128xf32>
    %649 = arith.mulf %626, %648 : vector<64x128xf32>
    %650 = vector.extract_strided_slice %296 {offsets = [0, 0], sizes = [1, 128], strides = [1, 1]} : vector<9x128xf32> to vector<1x128xf32>
    %651 = vector.broadcast %650 : vector<1x128xf32> to vector<64x128xf32>
    %652 = arith.mulf %649, %651 : vector<64x128xf32>
    %653 = arith.addf %615, %652 : vector<64x128xf32>
    %c0_184 = arith.constant 0 : index
    %c0_185 = arith.constant 0 : index
    %654 = vector.load %arg17[%c0_184, %c0_185] : memref<1x128xf32, #tpu.memory_space<vmem>>, vector<1x128xf32>
    %655 = vector.broadcast %654 : vector<1x128xf32> to vector<64x128xf32>
    %656 = arith.addf %653, %655 : vector<64x128xf32>
    %cst_186 = arith.constant 5.000000e-01 : f32
    %657 = vector.broadcast %cst_186 : f32 to vector<64x128xf32>
    %658 = arith.mulf %657, %656 : vector<64x128xf32>
    %cst_187 = arith.constant 0.707106769 : f32
    %659 = vector.broadcast %cst_187 : f32 to vector<64x128xf32>
    %660 = arith.mulf %656, %659 : vector<64x128xf32>
    %661 = math.absf %660 : vector<64x128xf32>
    %cst_188 = arith.constant 0.327591091 : f32
    %662 = vector.broadcast %cst_188 : f32 to vector<64x128xf32>
    %663 = arith.mulf %662, %661 : vector<64x128xf32>
    %cst_189 = arith.constant 1.000000e+00 : f32
    %664 = vector.broadcast %cst_189 : f32 to vector<64x128xf32>
    %665 = arith.addf %664, %663 : vector<64x128xf32>
    %cst_190 = arith.constant 1.000000e+00 : f32
    %666 = vector.broadcast %cst_190 : f32 to vector<64x128xf32>
    %667 = arith.divf %666, %665 : vector<64x128xf32>
    %cst_191 = arith.constant 1.06140542 : f32
    %668 = vector.broadcast %cst_191 : f32 to vector<64x128xf32>
    %669 = arith.mulf %668, %667 : vector<64x128xf32>
    %cst_192 = arith.constant -1.45315206 : f32
    %670 = vector.broadcast %cst_192 : f32 to vector<64x128xf32>
    %671 = arith.addf %669, %670 : vector<64x128xf32>
    %672 = arith.mulf %671, %667 : vector<64x128xf32>
    %cst_193 = arith.constant 1.42141378 : f32
    %673 = vector.broadcast %cst_193 : f32 to vector<64x128xf32>
    %674 = arith.addf %672, %673 : vector<64x128xf32>
    %675 = arith.mulf %674, %667 : vector<64x128xf32>
    %cst_194 = arith.constant -0.284496725 : f32
    %676 = vector.broadcast %cst_194 : f32 to vector<64x128xf32>
    %677 = arith.addf %675, %676 : vector<64x128xf32>
    %678 = arith.mulf %677, %667 : vector<64x128xf32>
    %cst_195 = arith.constant 0.254829586 : f32
    %679 = vector.broadcast %cst_195 : f32 to vector<64x128xf32>
    %680 = arith.addf %678, %679 : vector<64x128xf32>
    %681 = arith.mulf %680, %667 : vector<64x128xf32>
    %cst_196 = arith.constant 0.000000e+00 : f32
    %682 = vector.broadcast %cst_196 : f32 to vector<64x128xf32>
    %683 = arith.subf %682, %661 : vector<64x128xf32>
    %684 = arith.mulf %683, %661 : vector<64x128xf32>
    %685 = math.exp %684 : vector<64x128xf32>
    %686 = arith.mulf %681, %685 : vector<64x128xf32>
    %cst_197 = arith.constant 1.000000e+00 : f32
    %687 = vector.broadcast %cst_197 : f32 to vector<64x128xf32>
    %688 = arith.subf %687, %686 : vector<64x128xf32>
    %cst_198 = arith.constant 0.000000e+00 : f32
    %689 = vector.broadcast %cst_198 : f32 to vector<64x128xf32>
    %690 = arith.cmpf oge, %660, %689 : vector<64x128xf32>
    %cst_199 = arith.constant 0.000000e+00 : f32
    %691 = vector.broadcast %cst_199 : f32 to vector<64x128xf32>
    %692 = arith.subf %691, %688 : vector<64x128xf32>
    %693 = arith.select %690, %688, %692 : vector<64x128xi1>, vector<64x128xf32>
    %cst_200 = arith.constant 1.000000e+00 : f32
    %694 = vector.broadcast %cst_200 : f32 to vector<64x128xf32>
    %695 = arith.addf %694, %693 : vector<64x128xf32>
    %696 = arith.mulf %658, %695 : vector<64x128xf32>
    %697 = arith.truncf %696 : vector<64x128xf32> to vector<64x128xbf16>
    %c0_201 = arith.constant 0 : index
    %c0_202 = arith.constant 0 : index
    %698 = vector.load %arg18[%c0_201, %c0_202] : memref<128x32xbf16, #tpu.memory_space<vmem>>, vector<128x32xbf16>
    %cst_203 = arith.constant dense<0.000000e+00> : vector<64x32xf32>
    %699 = tpu.matmul %697, %698, %cst_203 {dimension_numbers = #tpu.dot_dimension_numbers<[1], [0], [0], [1], [0, 0, 1, 1], [], []>} : vector<64x128xbf16>, vector<128x32xbf16>, vector<64x32xf32> -> vector<64x32xf32>
    %c0_204 = arith.constant 0 : index
    %c0_205 = arith.constant 0 : index
    %700 = vector.load %arg19[%c0_204, %c0_205] : memref<1x32xf32, #tpu.memory_space<vmem>>, vector<1x32xf32>
    %701 = vector.broadcast %700 : vector<1x32xf32> to vector<64x32xf32>
    %702 = arith.addf %699, %701 : vector<64x32xf32>
    %703 = arith.addf %265, %702 : vector<64x32xf32>
    %c0_206 = arith.constant 0 : index
    %c0_207 = arith.constant 0 : index
    %c0_208 = arith.constant 0 : index
    %704 = vector.load %arg20[%c0_206, %c0_207, %c0_208] : memref<1x64x32xf32, #tpu.memory_space<vmem>>, vector<1x64x32xf32>
    %705 = vector.shape_cast %704 : vector<1x64x32xf32> to vector<64x32xf32>
    %706 = vector.shape_cast %703 : vector<64x32xf32> to vector<1x64x32xf32>
    tpu.vector_store %arg20[%c0_206, %c0_207, %c0_208], %706 {strides = array<i32>} : memref<1x64x32xf32, #tpu.memory_space<vmem>>, vector<1x64x32xf32>,
    return
  }
  func.func @transform_0(%arg0: i32) -> (i32, i32, i32) {
    %c0_i32 = arith.constant 0 : i32
    %c0_i32_0 = arith.constant 0 : i32
    %c0_i32_1 = arith.constant 0 : i32
    return %arg0, %c0_i32, %c0_i32_0 : i32, i32, i32
  }
  func.func @transform_1(%arg0: i32) -> (i32, i32) {
    %c0_i32 = arith.constant 0 : i32
    %c0_i32_0 = arith.constant 0 : i32
    %c0_i32_1 = arith.constant 0 : i32
    return %c0_i32, %c0_i32_0 : i32, i32
  }
  func.func @transform_2(%arg0: i32) -> (i32, i32) {
    %c0_i32 = arith.constant 0 : i32
    %c0_i32_0 = arith.constant 0 : i32
    %c0_i32_1 = arith.constant 0 : i32
    return %c0_i32, %c0_i32_0 : i32, i32
  }
  func.func @transform_3(%arg0: i32) -> (i32, i32) {
    %c0_i32 = arith.constant 0 : i32
    %c0_i32_0 = arith.constant 0 : i32
    %c0_i32_1 = arith.constant 0 : i32
    return %c0_i32, %c0_i32_0 : i32, i32
  }
  func.func @transform_4(%arg0: i32) -> (i32, i32) {
    %c0_i32 = arith.constant 0 : i32
    %c0_i32_0 = arith.constant 0 : i32
    %c0_i32_1 = arith.constant 0 : i32
    return %c0_i32, %c0_i32_0 : i32, i32
  }
  func.func @transform_5(%arg0: i32) -> (i32, i32) {
    %c0_i32 = arith.constant 0 : i32
    %c0_i32_0 = arith.constant 0 : i32
    %c0_i32_1 = arith.constant 0 : i32
    return %c0_i32, %c0_i32_0 : i32, i32
  }
  func.func @transform_6(%arg0: i32) -> (i32, i32) {
    %c0_i32 = arith.constant 0 : i32
    %c0_i32_0 = arith.constant 0 : i32
    %c0_i32_1 = arith.constant 0 : i32
    return %c0_i32, %c0_i32_0 : i32, i32
  }
  func.func @transform_7(%arg0: i32) -> (i32, i32) {
    %c0_i32 = arith.constant 0 : i32
    %c0_i32_0 = arith.constant 0 : i32
    %c0_i32_1 = arith.constant 0 : i32
    return %c0_i32, %c0_i32_0 : i32, i32
  }
  func.func @transform_8(%arg0: i32) -> (i32, i32) {
    %c0_i32 = arith.constant 0 : i32
    %c0_i32_0 = arith.constant 0 : i32
    %c0_i32_1 = arith.constant 0 : i32
    return %c0_i32, %c0_i32_0 : i32, i32
  }
  func.func @transform_9(%arg0: i32) -> (i32, i32) {
    %c0_i32 = arith.constant 0 : i32
    %c0_i32_0 = arith.constant 0 : i32
    %c0_i32_1 = arith.constant 0 : i32
    return %c0_i32, %c0_i32_0 : i32, i32
  }
  func.func @transform_10(%arg0: i32) -> (i32, i32) {
    %c0_i32 = arith.constant 0 : i32
    %c0_i32_0 = arith.constant 0 : i32
    %c0_i32_1 = arith.constant 0 : i32
    return %c0_i32, %c0_i32_0 : i32, i32
  }
  func.func @transform_11(%arg0: i32) -> (i32, i32) {
    %c0_i32 = arith.constant 0 : i32
    %c0_i32_0 = arith.constant 0 : i32
    %c0_i32_1 = arith.constant 0 : i32
    return %c0_i32, %c0_i32_0 : i32, i32
  }
  func.func @transform_12(%arg0: i32) -> (i32, i32) {
    %c0_i32 = arith.constant 0 : i32
    %c0_i32_0 = arith.constant 0 : i32
    %c0_i32_1 = arith.constant 0 : i32
    return %c0_i32, %c0_i32_0 : i32, i32
  }
  func.func @transform_13(%arg0: i32) -> (i32, i32) {
    %c0_i32 = arith.constant 0 : i32
    %c0_i32_0 = arith.constant 0 : i32
    %c0_i32_1 = arith.constant 0 : i32
    return %c0_i32, %c0_i32_0 : i32, i32
  }
  func.func @transform_14(%arg0: i32) -> (i32, i32) {
    %c0_i32 = arith.constant 0 : i32
    %c0_i32_0 = arith.constant 0 : i32
    %c0_i32_1 = arith.constant 0 : i32
    return %c0_i32, %c0_i32_0 : i32, i32
  }
  func.func @transform_15(%arg0: i32) -> (i32, i32) {
    %c0_i32 = arith.constant 0 : i32
    %c0_i32_0 = arith.constant 0 : i32
    %c0_i32_1 = arith.constant 0 : i32
    return %c0_i32, %c0_i32_0 : i32, i32
  }
  func.func @transform_16(%arg0: i32) -> (i32, i32) {
    %c0_i32 = arith.constant 0 : i32
    %c0_i32_0 = arith.constant 0 : i32
    %c0_i32_1 = arith.constant 0 : i32
    return %c0_i32, %c0_i32_0 : i32, i32
  }
  func.func @transform_17(%arg0: i32) -> (i32, i32) {
    %c0_i32 = arith.constant 0 : i32
    %c0_i32_0 = arith.constant 0 : i32
    %c0_i32_1 = arith.constant 0 : i32
    return %c0_i32, %c0_i32_0 : i32, i32
  }
  func.func @transform_18(%arg0: i32) -> (i32, i32) {
    %c0_i32 = arith.constant 0 : i32
    %c0_i32_0 = arith.constant 0 : i32
    %c0_i32_1 = arith.constant 0 : i32
    return %c0_i32, %c0_i32_0 : i32, i32
  }
  func.func @transform_19(%arg0: i32) -> (i32, i32, i32) {
    %c0_i32 = arith.constant 0 : i32
    %c0_i32_0 = arith.constant 0 : i32
    %c0_i32_1 = arith.constant 0 : i32
    return %arg0, %c0_i32, %c0_i32_0 : i32, i32, i32
  }
}

</mosaic_0001>

<llo_original>
// kernel: segformer_block.1
$region0: #{segformer_block.1}
  #allocation0 [shape = 'u32[]', space=smem, size = 0x4, offset = 0x4, fixed_abs, tag = 'smem constant byte address 0x4 - core index']
  #allocation1 [shape = 'u32[144,128]{1,0:T(1,128)}', space=vmem, size = 0x12000, scoped, tag = 'internal scratch']
  %s0 = inlined_call_operand.vmem [shape: f32[2,64,32], index: 0, kind: input, shape index: {}]
  %s1 = inlined_call_operand.vmem [shape: f32[1,32], index: 1, kind: input, shape index: {}]
  %s2 = inlined_call_operand.vmem [shape: f32[1,32], index: 2, kind: input, shape index: {}]
  %s3 = inlined_call_operand.vmem [shape: bf16[32,32], index: 3, kind: input, shape index: {}]
  %s4 = inlined_call_operand.vmem [shape: bf16[128,32], index: 4, kind: input, shape index: {}]
  %s5 = inlined_call_operand.vmem [shape: f32[1,32], index: 5, kind: input, shape index: {}]
  %s6 = inlined_call_operand.vmem [shape: f32[1,32], index: 6, kind: input, shape index: {}]
  %s7 = inlined_call_operand.vmem [shape: f32[1,32], index: 7, kind: input, shape index: {}]
  %s8 = inlined_call_operand.vmem [shape: bf16[32,64], index: 8, kind: input, shape index: {}]
  %s9 = inlined_call_operand.vmem [shape: bf16[32,32], index: 9, kind: input, shape index: {}]
  %s10 = inlined_call_operand.vmem [shape: f32[1,32], index: 10, kind: input, shape index: {}]
  %s11 = inlined_call_operand.vmem [shape: f32[1,32], index: 11, kind: input, shape index: {}]
  %s12 = inlined_call_operand.vmem [shape: f32[1,32], index: 12, kind: input, shape index: {}]
  %s13 = inlined_call_operand.vmem [shape: bf16[32,128], index: 13, kind: input, shape index: {}]
  %s14 = inlined_call_operand.vmem [shape: f32[1,128], index: 14, kind: input, shape index: {}]
  %s15 = inlined_call_operand.vmem [shape: f32[9,128], index: 15, kind: input, shape index: {}]
  %s16 = inlined_call_operand.vmem [shape: f32[1,128], index: 16, kind: input, shape index: {}]
  %s17 = inlined_call_operand.vmem [shape: bf16[128,32], index: 17, kind: input, shape index: {}]
  %s18 = inlined_call_operand.vmem [shape: f32[1,32], index: 18, kind: input, shape index: {}]
  %s19 = inlined_call_operand.vmem [shape: f32[2,64,32], index: 19, kind: output, shape index: {}]
  %s20 = sld [smem:[#allocation0]]
  $region109: #{segformer_block.1} parent=0
    _
  %s22 = ssub.s32 1, %s20
  %s23 = scalar_select 0, %s22, %s20
  loop: start=0, step=1, limit=4
  $region2: #{segformer_block.1} parent=0 // loop_pre_header
    _
  $region3: #{segformer_block.1} parent=0 // loop_header
    %s25 = sphi 0, %s29
    %p26 = scmp.ge.s32.totalorder %s25, 4
    %s35 = sphi 0, %s37
    %s38 = sphi 0, %s35
    %s39 = sphi 0, %s38
    %s55 = sphi 0, %s39
    %s59 = sphi 0, %s59
    %s61 = sphi 0, %s59
    %s62 = sphi 0, %s61
    %s76 = sphi 0, %s62
    %s80 = sphi 0, %s80
    %s82 = sphi 0, %s80
    %s83 = sphi 0, %s82
    %s97 = sphi 0, %s83
    %s101 = sphi 0, %s101
    %s103 = sphi 0, %s101
    %s104 = sphi 0, %s103
    %s118 = sphi 0, %s104
    %s122 = sphi 0, %s122
    %s124 = sphi 0, %s122
    %s125 = sphi 0, %s124
    %s139 = sphi 0, %s125
    %s143 = sphi 0, %s143
    %s145 = sphi 0, %s143
    %s146 = sphi 0, %s145
    %s160 = sphi 0, %s146
    %s164 = sphi 0, %s164
    %s166 = sphi 0, %s164
    %s167 = sphi 0, %s166
    %s181 = sphi 0, %s167
    %s185 = sphi 0, %s185
    %s187 = sphi 0, %s185
    %s188 = sphi 0, %s187
    %s202 = sphi 0, %s188
    %s206 = sphi 0, %s206
    %s208 = sphi 0, %s206
    %s209 = sphi 0, %s208
    %s223 = sphi 0, %s209
    %s227 = sphi 0, %s227
    %s229 = sphi 0, %s227
    %s230 = sphi 0, %s229
    %s244 = sphi 0, %s230
    %s248 = sphi 0, %s248
    %s250 = sphi 0, %s248
    %s251 = sphi 0, %s250
    %s265 = sphi 0, %s251
    %s269 = sphi 0, %s269
    %s271 = sphi 0, %s269
    %s272 = sphi 0, %s271
    %s286 = sphi 0, %s272
    %s290 = sphi 0, %s290
    %s292 = sphi 0, %s290
    %s293 = sphi 0, %s292
    %s307 = sphi 0, %s293
    %s311 = sphi 0, %s311
    %s313 = sphi 0, %s311
    %s314 = sphi 0, %s313
    %s328 = sphi 0, %s314
    %s332 = sphi 0, %s332
    %s334 = sphi 0, %s332
    %s335 = sphi 0, %s334
    %s349 = sphi 0, %s335
    %s353 = sphi 0, %s353
    %s355 = sphi 0, %s353
    %s356 = sphi 0, %s355
    %s370 = sphi 0, %s356
    %s374 = sphi 0, %s374
    %s376 = sphi 0, %s374
    %s377 = sphi 0, %s376
    %s391 = sphi 0, %s377
    %s395 = sphi 0, %s395
    %s397 = sphi 0, %s395
    %s398 = sphi 0, %s397
    %s412 = sphi 0, %s398
    %s416 = sphi 0, %s416
    %s418 = sphi 0, %s416
    %s419 = sphi 0, %s418
    %s433 = sphi 0, %s419
    %s439 = sphi 0, %s441
    %s442 = sphi 0, %s439
    %s443 = sphi 0, %s442
    %s459 = sphi 0, %s443
  $region4: #{segformer_block.1} parent=0 // loop_header_branch
    %28 = sbr.rel (%p26) target = $region8
  $region5: #{segformer_block.1} parent=0 // loop_body
    %s30 = ssub.s32 %s25, 1
    %s31 = ssub.s32 %s25, 2
    %s32 = sadd.s32 %s25, 1
    %s33 = ssub.s32 %s25, %s32
    %p34 = scmp.eq.s32.totalorder %s33, 0
    %s36 = sadd.s32 %s35, 1
    %s37 = scalar_select %p34, %s35, %s36
    %p40 = pneg %p34
    %p41 = scmp.eq.s32.totalorder %s25, 1
    %p42 = por %p40, %p41
    %p43 = scmp.ne.s32.totalorder %s35, %s38
    %p44 = scmp.eq.s32.totalorder %s25, 0
    %p45 = por %p43, %p44
    %p46 = scmp.ne.s32.totalorder %s35, %s38
    %p47 = scmp.eq.s32.totalorder %s30, 1
    %p48 = por %p46, %p47
    %p49 = scmp.ne.s32.totalorder %s38, %s39
    %p50 = scmp.eq.s32.totalorder %s30, 0
    %p51 = por %p49, %p50
    %p52 = scmp.ne.s32.totalorder %s38, %s39
    %p53 = scmp.eq.s32.totalorder %s31, 1
    %p54 = por %p52, %p53
    %p56 = scmp.ne.s32.totalorder %s39, %s55
    %p57 = scmp.eq.s32.totalorder %s31, 0
    %p58 = por %p56, %p57
    %s60 = sadd.s32 %s59, 1
    %p63 = scmp.eq.s32.totalorder %s25, 1
    %p64 = scmp.ne.s32.totalorder %s59, %s61
    %p65 = scmp.eq.s32.totalorder %s25, 0
    %p66 = por %p64, %p65
    %p67 = scmp.ne.s32.totalorder %s59, %s61
    %p68 = scmp.eq.s32.totalorder %s30, 1
    %p69 = por %p67, %p68
    %p70 = scmp.ne.s32.totalorder %s61, %s62
    %p71 = scmp.eq.s32.totalorder %s30, 0
    %p72 = por %p70, %p71
    %p73 = scmp.ne.s32.totalorder %s61, %s62
    %p74 = scmp.eq.s32.totalorder %s31, 1
    %p75 = por %p73, %p74
    %p77 = scmp.ne.s32.totalorder %s62, %s76
    %p78 = scmp.eq.s32.totalorder %s31, 0
    %p79 = por %p77, %p78
    %s81 = sadd.s32 %s80, 1
    %p84 = scmp.eq.s32.totalorder %s25, 1
    %p85 = scmp.ne.s32.totalorder %s80, %s82
    %p86 = scmp.eq.s32.totalorder %s25, 0
    %p87 = por %p85, %p86
    %p88 = scmp.ne.s32.totalorder %s80, %s82
    %p89 = scmp.eq.s32.totalorder %s30, 1
    %p90 = por %p88, %p89
    %p91 = scmp.ne.s32.totalorder %s82, %s83
    %p92 = scmp.eq.s32.totalorder %s30, 0
    %p93 = por %p91, %p92
    %p94 = scmp.ne.s32.totalorder %s82, %s83
    %p95 = scmp.eq.s32.totalorder %s31, 1
    %p96 = por %p94, %p95
    %p98 = scmp.ne.s32.totalorder %s83, %s97
    %p99 = scmp.eq.s32.totalorder %s31, 0
    %p100 = por %p98, %p99
    %s102 = sadd.s32 %s101, 1
    %p105 = scmp.eq.s32.totalorder %s25, 1
    %p106 = scmp.ne.s32.totalorder %s101, %s103
    %p107 = scmp.eq.s32.totalorder %s25, 0
    %p108 = por %p106, %p107
    %p109 = scmp.ne.s32.totalorder %s101, %s103
    %p110 = scmp.eq.s32.totalorder %s30, 1
    %p111 = por %p109, %p110
    %p112 = scmp.ne.s32.totalorder %s103, %s104
    %p113 = scmp.eq.s32.totalorder %s30, 0
    %p114 = por %p112, %p113
    %p115 = scmp.ne.s32.totalorder %s103, %s104
    %p116 = scmp.eq.s32.totalorder %s31, 1
    %p117 = por %p115, %p116
    %p119 = scmp.ne.s32.totalorder %s104, %s118
    %p120 = scmp.eq.s32.totalorder %s31, 0
    %p121 = por %p119, %p120
    %s123 = sadd.s32 %s122, 1
    %p126 = scmp.eq.s32.totalorder %s25, 1
    %p127 = scmp.ne.s32.totalorder %s122, %s124
    %p128 = scmp.eq.s32.totalorder %s25, 0
    %p129 = por %p127, %p128
    %p130 = scmp.ne.s32.totalorder %s122, %s124
    %p131 = scmp.eq.s32.totalorder %s30, 1
    %p132 = por %p130, %p131
    %p133 = scmp.ne.s32.totalorder %s124, %s125
    %p134 = scmp.eq.s32.totalorder %s30, 0
    %p135 = por %p133, %p134
    %p136 = scmp.ne.s32.totalorder %s124, %s125
    %p137 = scmp.eq.s32.totalorder %s31, 1
    %p138 = por %p136, %p137
    %p140 = scmp.ne.s32.totalorder %s125, %s139
    %p141 = scmp.eq.s32.totalorder %s31, 0
    %p142 = por %p140, %p141
    %s144 = sadd.s32 %s143, 1
    %p147 = scmp.eq.s32.totalorder %s25, 1
    %p148 = scmp.ne.s32.totalorder %s143, %s145
    %p149 = scmp.eq.s32.totalorder %s25, 0
    %p150 = por %p148, %p149
    %p151 = scmp.ne.s32.totalorder %s143, %s145
    %p152 = scmp.eq.s32.totalorder %s30, 1
    %p153 = por %p151, %p152
    %p154 = scmp.ne.s32.totalorder %s145, %s146
    %p155 = scmp.eq.s32.totalorder %s30, 0
    %p156 = por %p154, %p155
    %p157 = scmp.ne.s32.totalorder %s145, %s146
    %p158 = scmp.eq.s32.totalorder %s31, 1
    %p159 = por %p157, %p158
    %p161 = scmp.ne.s32.totalorder %s146, %s160
    %p162 = scmp.eq.s32.totalorder %s31, 0
    %p163 = por %p161, %p162
    %s165 = sadd.s32 %s164, 1
    %p168 = scmp.eq.s32.totalorder %s25, 1
    %p169 = scmp.ne.s32.totalorder %s164, %s166
    %p170 = scmp.eq.s32.totalorder %s25, 0
    %p171 = por %p169, %p170
    %p172 = scmp.ne.s32.totalorder %s164, %s166
    %p173 = scmp.eq.s32.totalorder %s30, 1
    %p174 = por %p172, %p173
    %p175 = scmp.ne.s32.totalorder %s166, %s167
    %p176 = scmp.eq.s32.totalorder %s30, 0
    %p177 = por %p175, %p176
    %p178 = scmp.ne.s32.totalorder %s166, %s167
    %p179 = scmp.eq.s32.totalorder %s31, 1
    %p180 = por %p178, %p179
    %p182 = scmp.ne.s32.totalorder %s167, %s181
    %p183 = scmp.eq.s32.totalorder %s31, 0
    %p184 = por %p182, %p183
    %s186 = sadd.s32 %s185, 1
    %p189 = scmp.eq.s32.totalorder %s25, 1
    %p190 = scmp.ne.s32.totalorder %s185, %s187
    %p191 = scmp.eq.s32.totalorder %s25, 0
    %p192 = por %p190, %p191
    %p193 = scmp.ne.s32.totalorder %s185, %s187
    %p194 = scmp.eq.s32.totalorder %s30, 1
    %p195 = por %p193, %p194
    %p196 = scmp.ne.s32.totalorder %s187, %s188
    %p197 = scmp.eq.s32.totalorder %s30, 0
    %p198 = por %p196, %p197
    %p199 = scmp.ne.s32.totalorder %s187, %s188
    %p200 = scmp.eq.s32.totalorder %s31, 1
    %p201 = por %p199, %p200
    %p203 = scmp.ne.s32.totalorder %s188, %s202
    %p204 = scmp.eq.s32.totalorder %s31, 0
    %p205 = por %p203, %p204
    %s207 = sadd.s32 %s206, 1
    %p210 = scmp.eq.s32.totalorder %s25, 1
    %p211 = scmp.ne.s32.totalorder %s206, %s208
    %p212 = scmp.eq.s32.totalorder %s25, 0
    %p213 = por %p211, %p212
    %p214 = scmp.ne.s32.totalorder %s206, %s208
    %p215 = scmp.eq.s32.totalorder %s30, 1
    %p216 = por %p214, %p215
    %p217 = scmp.ne.s32.totalorder %s208, %s209
    %p218 = scmp.eq.s32.totalorder %s30, 0
    %p219 = por %p217, %p218
    %p220 = scmp.ne.s32.totalorder %s208, %s209
    %p221 = scmp.eq.s32.totalorder %s31, 1
    %p222 = por %p220, %p221
    %p224 = scmp.ne.s32.totalorder %s209, %s223
    %p225 = scmp.eq.s32.totalorder %s31, 0
    %p226 = por %p224, %p225
    %s228 = sadd.s32 %s227, 1
    %p231 = scmp.eq.s32.totalorder %s25, 1
    %p232 = scmp.ne.s32.totalorder %s227, %s229
    %p233 = scmp.eq.s32.totalorder %s25, 0
    %p234 = por %p232, %p233
    %p235 = scmp.ne.s32.totalorder %s227, %s229
    %p236 = scmp.eq.s32.totalorder %s30, 1
    %p237 = por %p235, %p236
    %p238 = scmp.ne.s32.totalorder %s229, %s230
    %p239 = scmp.eq.s32.totalorder %s30, 0
    %p240 = por %p238, %p239
    %p241 = scmp.ne.s32.totalorder %s229, %s230
    %p242 = scmp.eq.s32.totalorder %s31, 1
    %p243 = por %p241, %p242
    %p245 = scmp.ne.s32.totalorder %s230, %s244
    %p246 = scmp.eq.s32.totalorder %s31, 0
    %p247 = por %p245, %p246
    %s249 = sadd.s32 %s248, 1
    %p252 = scmp.eq.s32.totalorder %s25, 1
    %p253 = scmp.ne.s32.totalorder %s248, %s250
    %p254 = scmp.eq.s32.totalorder %s25, 0
    %p255 = por %p253, %p254
    %p256 = scmp.ne.s32.totalorder %s248, %s250
    %p257 = scmp.eq.s32.totalorder %s30, 1
    %p258 = por %p256, %p257
    %p259 = scmp.ne.s32.totalorder %s250, %s251
    %p260 = scmp.eq.s32.totalorder %s30, 0
    %p261 = por %p259, %p260
    %p262 = scmp.ne.s32.totalorder %s250, %s251
    %p263 = scmp.eq.s32.totalorder %s31, 1
    %p264 = por %p262, %p263
    %p266 = scmp.ne.s32.totalorder %s251, %s265
    %p267 = scmp.eq.s32.totalorder %s31, 0
    %p268 = por %p266, %p267
    %s270 = sadd.s32 %s269, 1
    %p273 = scmp.eq.s32.totalorder %s25, 1
    %p274 = scmp.ne.s32.totalorder %s269, %s271
    %p275 = scmp.eq.s32.totalorder %s25, 0
    %p276 = por %p274, %p275
    %p277 = scmp.ne.s32.totalorder %s269, %s271
    %p278 = scmp.eq.s32.totalorder %s30, 1
    %p279 = por %p277, %p278
    %p280 = scmp.ne.s32.totalorder %s271, %s272
    %p281 = scmp.eq.s32.totalorder %s30, 0
    %p282 = por %p280, %p281
    %p283 = scmp.ne.s32.totalorder %s271, %s272
    %p284 = scmp.eq.s32.totalorder %s31, 1
    %p285 = por %p283, %p284
    %p287 = scmp.ne.s32.totalorder %s272, %s286
    %p288 = scmp.eq.s32.totalorder %s31, 0
    %p289 = por %p287, %p288
    %s291 = sadd.s32 %s290, 1
    %p294 = scmp.eq.s32.totalorder %s25, 1
    %p295 = scmp.ne.s32.totalorder %s290, %s292
    %p296 = scmp.eq.s32.totalorder %s25, 0
    %p297 = por %p295, %p296
    %p298 = scmp.ne.s32.totalorder %s290, %s292
    %p299 = scmp.eq.s32.totalorder %s30, 1
    %p300 = por %p298, %p299
    %p301 = scmp.ne.s32.totalorder %s292, %s293
    %p302 = scmp.eq.s32.totalorder %s30, 0
    %p303 = por %p301, %p302
    %p304 = scmp.ne.s32.totalorder %s292, %s293
    %p305 = scmp.eq.s32.totalorder %s31, 1
    %p306 = por %p304, %p305
    %p308 = scmp.ne.s32.totalorder %s293, %s307
    %p309 = scmp.eq.s32.totalorder %s31, 0
    %p310 = por %p308, %p309
    %s312 = sadd.s32 %s311, 1
    %p315 = scmp.eq.s32.totalorder %s25, 1
    %p316 = scmp.ne.s32.totalorder %s311, %s313
    %p317 = scmp.eq.s32.totalorder %s25, 0
    %p318 = por %p316, %p317
    %p319 = scmp.ne.s32.totalorder %s311, %s313
    %p320 = scmp.eq.s32.totalorder %s30, 1
    %p321 = por %p319, %p320
    %p322 = scmp.ne.s32.totalorder %s313, %s314
    %p323 = scmp.eq.s32.totalorder %s30, 0
    %p324 = por %p322, %p323
    %p325 = scmp.ne.s32.totalorder %s313, %s314
    %p326 = scmp.eq.s32.totalorder %s31, 1
    %p327 = por %p325, %p326
    %p329 = scmp.ne.s32.totalorder %s314, %s328
    %p330 = scmp.eq.s32.totalorder %s31, 0
    %p331 = por %p329, %p330
    %s333 = sadd.s32 %s332, 1
    %p336 = scmp.eq.s32.totalorder %s25, 1
    %p337 = scmp.ne.s32.totalorder %s332, %s334
    %p338 = scmp.eq.s32.totalorder %s25, 0
    %p339 = por %p337, %p338
    %p340 = scmp.ne.s32.totalorder %s332, %s334
    %p341 = scmp.eq.s32.totalorder %s30, 1
    %p342 = por %p340, %p341
    %p343 = scmp.ne.s32.totalorder %s334, %s335
    %p344 = scmp.eq.s32.totalorder %s30, 0
    %p345 = por %p343, %p344
    %p346 = scmp.ne.s32.totalorder %s334, %s335
    %p347 = scmp.eq.s32.totalorder %s31, 1
    %p348 = por %p346, %p347
    %p350 = scmp.ne.s32.totalorder %s335, %s349
    %p351 = scmp.eq.s32.totalorder %s31, 0
    %p352 = por %p350, %p351
    %s354 = sadd.s32 %s353, 1
    %p357 = scmp.eq.s32.totalorder %s25, 1
    %p358 = scmp.ne.s32.totalorder %s353, %s355
    %p359 = scmp.eq.s32.totalorder %s25, 0
    %p360 = por %p358, %p359
    %p361 = scmp.ne.s32.totalorder %s353, %s355
    %p362 = scmp.eq.s32.totalorder %s30, 1
    %p363 = por %p361, %p362
    %p364 = scmp.ne.s32.totalorder %s355, %s356
    %p365 = scmp.eq.s32.totalorder %s30, 0
    %p366 = por %p364, %p365
    %p367 = scmp.ne.s32.totalorder %s355, %s356
    %p368 = scmp.eq.s32.totalorder %s31, 1
    %p369 = por %p367, %p368
    %p371 = scmp.ne.s32.totalorder %s356, %s370
    %p372 = scmp.eq.s32.totalorder %s31, 0
    %p373 = por %p371, %p372
    %s375 = sadd.s32 %s374, 1
    %p378 = scmp.eq.s32.totalorder %s25, 1
    %p379 = scmp.ne.s32.totalorder %s374, %s376
    %p380 = scmp.eq.s32.totalorder %s25, 0
    %p381 = por %p379, %p380
    %p382 = scmp.ne.s32.totalorder %s374, %s376
    %p383 = scmp.eq.s32.totalorder %s30, 1
    %p384 = por %p382, %p383
    %p385 = scmp.ne.s32.totalorder %s376, %s377
    %p386 = scmp.eq.s32.totalorder %s30, 0
    %p387 = por %p385, %p386
    %p388 = scmp.ne.s32.totalorder %s376, %s377
    %p389 = scmp.eq.s32.totalorder %s31, 1
    %p390 = por %p388, %p389
    %p392 = scmp.ne.s32.totalorder %s377, %s391
    %p393 = scmp.eq.s32.totalorder %s31, 0
    %p394 = por %p392, %p393
    %s396 = sadd.s32 %s395, 1
    %p399 = scmp.eq.s32.totalorder %s25, 1
    %p400 = scmp.ne.s32.totalorder %s395, %s397
    %p401 = scmp.eq.s32.totalorder %s25, 0
    %p402 = por %p400, %p401
    %p403 = scmp.ne.s32.totalorder %s395, %s397
    %p404 = scmp.eq.s32.totalorder %s30, 1
    %p405 = por %p403, %p404
    %p406 = scmp.ne.s32.totalorder %s397, %s398
    %p407 = scmp.eq.s32.totalorder %s30, 0
    %p408 = por %p406, %p407
    %p409 = scmp.ne.s32.totalorder %s397, %s398
    %p410 = scmp.eq.s32.totalorder %s31, 1
    %p411 = por %p409, %p410
    %p413 = scmp.ne.s32.totalorder %s398, %s412
    %p414 = scmp.eq.s32.totalorder %s31, 0
    %p415 = por %p413, %p414
    %s417 = sadd.s32 %s416, 1
    %p420 = scmp.eq.s32.totalorder %s25, 1
    %p421 = scmp.ne.s32.totalorder %s416, %s418
    %p422 = scmp.eq.s32.totalorder %s25, 0
    %p423 = por %p421, %p422
    %p424 = scmp.ne.s32.totalorder %s416, %s418
    %p425 = scmp.eq.s32.totalorder %s30, 1
    %p426 = por %p424, %p425
    %p427 = scmp.ne.s32.totalorder %s418, %s419
    %p428 = scmp.eq.s32.totalorder %s30, 0
    %p429 = por %p427, %p428
    %p430 = scmp.ne.s32.totalorder %s418, %s419
    %p431 = scmp.eq.s32.totalorder %s31, 1
    %p432 = por %p430, %p431
    %p434 = scmp.ne.s32.totalorder %s419, %s433
    %p435 = scmp.eq.s32.totalorder %s31, 0
    %p436 = por %p434, %p435
    %s437 = ssub.s32 %s25, %s32
    %p438 = scmp.eq.s32.totalorder %s437, 0
    %s440 = sadd.s32 %s439, 1
    %s441 = scalar_select %p438, %s439, %s440
    %p444 = pneg %p438
    %p445 = scmp.eq.s32.totalorder %s25, 1
    %p446 = por %p444, %p445
    %p447 = scmp.ne.s32.totalorder %s439, %s442
    %p448 = scmp.eq.s32.totalorder %s25, 0
    %p449 = por %p447, %p448
    %p450 = scmp.ne.s32.totalorder %s439, %s442
    %p451 = scmp.eq.s32.totalorder %s30, 1
    %p452 = por %p450, %p451
    %p453 = scmp.ne.s32.totalorder %s442, %s443
    %p454 = scmp.eq.s32.totalorder %s30, 0
    %p455 = por %p453, %p454
    %p456 = scmp.ne.s32.totalorder %s442, %s443
    %p457 = scmp.eq.s32.totalorder %s31, 1
    %p458 = por %p456, %p457
    %p460 = scmp.ne.s32.totalorder %s443, %s459
    %p461 = scmp.eq.s32.totalorder %s31, 0
    %p462 = por %p460, %p461
    %p463 = scmp.le.s32.totalorder 1, %s25
    %p464 = scmp.lt.s32.totalorder %s25, 3
    %p465 = pnand %p463, %p464
    %p466 = pneg %p465
    // Predicated region
    $region9: #{segformer_block.1} parent=5 // pred_check
      _
    $region10: #{segformer_block.1} parent=5 // pred_check_branch
      %468 = sbr.rel (%p465) target = $region12
    $region11: #{segformer_block.1} parent=5 // pred_region
      %s469 = ssub.s32 %s25, 1
      // Predicated region
      $region13: #{segformer_block.1} parent=11 // pred_check
        %p470 = pneg %p72
      $region14: #{segformer_block.1} parent=11 // pred_check_branch
        %472 = sbr.rel (%p470) target = $region16
      $region15: #{segformer_block.1} parent=11 // pred_region
        _
      $region16: #{segformer_block.1} parent=11 // pred_fallthru
        _
      // Predicated region
      $region17: #{segformer_block.1} parent=11 // pred_check
        %p473 = pneg %p93
      $region18: #{segformer_block.1} parent=11 // pred_check_branch
        %475 = sbr.rel (%p473) target = $region20
      $region19: #{segformer_block.1} parent=11 // pred_region
        _
      $region20: #{segformer_block.1} parent=11 // pred_fallthru
        _
      // Predicated region
      $region21: #{segformer_block.1} parent=11 // pred_check
        %p476 = pneg %p114
      $region22: #{segformer_block.1} parent=11 // pred_check_branch
        %478 = sbr.rel (%p476) target = $region24
      $region23: #{segformer_block.1} parent=11 // pred_region
        _
      $region24: #{segformer_block.1} parent=11 // pred_fallthru
        _
      // Predicated region
      $region25: #{segformer_block.1} parent=11 // pred_check
        %p479 = pneg %p135
      $region26: #{segformer_block.1} parent=11 // pred_check_branch
        %481 = sbr.rel (%p479) target = $region28
      $region27: #{segformer_block.1} parent=11 // pred_region
        _
      $region28: #{segformer_block.1} parent=11 // pred_fallthru
        _
      // Predicated region
      $region29: #{segformer_block.1} parent=11 // pred_check
        %p482 = pneg %p156
      $region30: #{segformer_block.1} parent=11 // pred_check_branch
        %484 = sbr.rel (%p482) target = $region32
      $region31: #{segformer_block.1} parent=11 // pred_region
        _
      $region32: #{segformer_block.1} parent=11 // pred_fallthru
        _
      // Predicated region
      $region33: #{segformer_block.1} parent=11 // pred_check
        %p485 = pneg %p177
      $region34: #{segformer_block.1} parent=11 // pred_check_branch
        %487 = sbr.rel (%p485) target = $region36
      $region35: #{segformer_block.1} parent=11 // pred_region
        _
      $region36: #{segformer_block.1} parent=11 // pred_fallthru
        _
      // Predicated region
      $region37: #{segformer_block.1} parent=11 // pred_check
        %p488 = pneg %p198
      $region38: #{segformer_block.1} parent=11 // pred_check_branch
        %490 = sbr.rel (%p488) target = $region40
      $region39: #{segformer_block.1} parent=11 // pred_region
        _
      $region40: #{segformer_block.1} parent=11 // pred_fallthru
        _
      // Predicated region
      $region41: #{segformer_block.1} parent=11 // pred_check
        %p491 = pneg %p219
      $region42: #{segformer_block.1} parent=11 // pred_check_branch
        %493 = sbr.rel (%p491) target = $region44
      $region43: #{segformer_block.1} parent=11 // pred_region
        _
      $region44: #{segformer_block.1} parent=11 // pred_fallthru
        _
      // Predicated region
      $region45: #{segformer_block.1} parent=11 // pred_check
        %p494 = pneg %p240
      $region46: #{segformer_block.1} parent=11 // pred_check_branch
        %496 = sbr.rel (%p494) target = $region48
      $region47: #{segformer_block.1} parent=11 // pred_region
        _
      $region48: #{segformer_block.1} parent=11 // pred_fallthru
        _
      // Predicated region
      $region49: #{segformer_block.1} parent=11 // pred_check
        %p497 = pneg %p261
      $region50: #{segformer_block.1} parent=11 // pred_check_branch
        %499 = sbr.rel (%p497) target = $region52
      $region51: #{segformer_block.1} parent=11 // pred_region
        _
      $region52: #{segformer_block.1} parent=11 // pred_fallthru
        _
      // Predicated region
      $region53: #{segformer_block.1} parent=11 // pred_check
        %p500 = pneg %p282
      $region54: #{segformer_block.1} parent=11 // pred_check_branch
        %502 = sbr.rel (%p500) target = $region56
      $region55: #{segformer_block.1} parent=11 // pred_region
        _
      $region56: #{segformer_block.1} parent=11 // pred_fallthru
        _
      // Predicated region
      $region57: #{segformer_block.1} parent=11 // pred_check
        %p503 = pneg %p303
      $region58: #{segformer_block.1} parent=11 // pred_check_branch
        %505 = sbr.rel (%p503) target = $region60
      $region59: #{segformer_block.1} parent=11 // pred_region
        _
      $region60: #{segformer_block.1} parent=11 // pred_fallthru
        _
      // Predicated region
      $region61: #{segformer_block.1} parent=11 // pred_check
        %p506 = pneg %p324
      $region62: #{segformer_block.1} parent=11 // pred_check_branch
        %508 = sbr.rel (%p506) target = $region64
      $region63: #{segformer_block.1} parent=11 // pred_region
        _
      $region64: #{segformer_block.1} parent=11 // pred_fallthru
        _
      // Predicated region
      $region65: #{segformer_block.1} parent=11 // pred_check
        %p509 = pneg %p345
      $region66: #{segformer_block.1} parent=11 // pred_check_branch
        %511 = sbr.rel (%p509) target = $region68
      $region67: #{segformer_block.1} parent=11 // pred_region
        _
      $region68: #{segformer_block.1} parent=11 // pred_fallthru
        _
      // Predicated region
      $region69: #{segformer_block.1} parent=11 // pred_check
        %p512 = pneg %p366
      $region70: #{segformer_block.1} parent=11 // pred_check_branch
        %514 = sbr.rel (%p512) target = $region72
      $region71: #{segformer_block.1} parent=11 // pred_region
        _
      $region72: #{segformer_block.1} parent=11 // pred_fallthru
        _
      // Predicated region
      $region73: #{segformer_block.1} parent=11 // pred_check
        %p515 = pneg %p387
      $region74: #{segformer_block.1} parent=11 // pred_check_branch
        %517 = sbr.rel (%p515) target = $region76
      $region75: #{segformer_block.1} parent=11 // pred_region
        _
      $region76: #{segformer_block.1} parent=11 // pred_fallthru
        _
      // Predicated region
      $region77: #{segformer_block.1} parent=11 // pred_check
        %p518 = pneg %p408
      $region78: #{segformer_block.1} parent=11 // pred_check_branch
        %520 = sbr.rel (%p518) target = $region80
      $region79: #{segformer_block.1} parent=11 // pred_region
        _
      $region80: #{segformer_block.1} parent=11 // pred_fallthru
        _
      // Predicated region
      $region81: #{segformer_block.1} parent=11 // pred_check
        %p521 = pneg %p429
      $region82: #{segformer_block.1} parent=11 // pred_check_branch
        %523 = sbr.rel (%p521) target = $region84
      $region83: #{segformer_block.1} parent=11 // pred_region
        _
      $region84: #{segformer_block.1} parent=11 // pred_fallthru
        _
    $region12: #{segformer_block.1} parent=5 // pred_fallthru
      _
    %p524 = scmp.lt.s32.totalorder %s25, 2
    // Predicated region
    $region85: #{segformer_block.1} parent=5 // pred_check
      %p525 = pneg %p524
    $region86: #{segformer_block.1} parent=5 // pred_check_branch
      %527 = sbr.rel (%p525) target = $region88
    $region87: #{segformer_block.1} parent=5 // pred_region
      // Predicated region
      $region89: #{segformer_block.1} parent=87 // pred_check
        %p528 = pneg %p45
      $region90: #{segformer_block.1} parent=87 // pred_check_branch
        %530 = sbr.rel (%p528) target = $region92
      $region91: #{segformer_block.1} parent=87 // pred_region
        %p531 = scmp.lt.s32.totalorder %s25, 1
        %s532 = scalar_select %p531, %s25, 1
        %s533 = smul.addr %s532, 8
        %s534 = smul.addr %s533, 8
        %s535 = scalar_lea.vmem %s0, %s534
      $region92: #{segformer_block.1} parent=87 // pred_fallthru
        _
    $region88: #{segformer_block.1} parent=5 // pred_fallthru
      _
    %p536 = scmp.le.s32.totalorder 1, %s25
    %p537 = scmp.lt.s32.totalorder %s25, 3
    %p538 = pnand %p536, %p537
    %p539 = pneg %p538
    // Predicated region
    $region93: #{segformer_block.1} parent=5 // pred_check
      _
    $region94: #{segformer_block.1} parent=5 // pred_check_branch
      %541 = sbr.rel (%p538) target = $region96
    $region95: #{segformer_block.1} parent=5 // pred_region
      %s542 = ssub.s32 %s25, 1
      %p543 = scmp.lt.s32.totalorder %s30, 1
      %s544 = scalar_select %p543, %s30, 1
      %s545 = smul.addr %s544, 8
      %s546 = smul.addr %s545, 8
      %s547 = scalar_lea.vmem %s0, %s546
      %p548 = pneg %p51
      %p549 = pneg %p48
      %p550 = pneg %p72
      %p551 = pneg %p69
      %p552 = pneg %p93
      %p553 = pneg %p90
      %p554 = pneg %p114
      %p555 = pneg %p111
      %p556 = pneg %p135
      %p557 = pneg %p132
      %p558 = pneg %p156
      %p559 = pneg %p153
      %p560 = pneg %p177
      %p561 = pneg %p174
      %p562 = pneg %p198
      %p563 = pneg %p195
      %p564 = pneg %p219
      %p565 = pneg %p216
      %p566 = pneg %p240
      %p567 = pneg %p237
      %p568 = pneg %p261
      %p569 = pneg %p258
      %p570 = pneg %p282
      %p571 = pneg %p279
      %p572 = pneg %p303
      %p573 = pneg %p300
      %p574 = pneg %p324
      %p575 = pneg %p321
      %p576 = pneg %p345
      %p577 = pneg %p342
      %p578 = pneg %p366
      %p579 = pneg %p363
      %p580 = pneg %p387
      %p581 = pneg %p384
      %p582 = pneg %p408
      %p583 = pneg %p405
      %p584 = pneg %p429
      %p585 = pneg %p426
      %p586 = pneg %p455
      %p587 = pneg %p452
      %p588 = scmp.lt.s32.totalorder %s30, 1
      %s589 = scalar_select %p588, %s30, 1
      %s590 = smul.addr %s589, 8
      %s591 = smul.addr %s590, 8
      %s592 = scalar_lea.vmem %s19, %s591
      %p593 = scmp.lt.s32.totalorder %s30, 1
      %s594 = scalar_select %p593, %s30, 1
      %s595 = smul.addr %s594, 8
      %s596 = smul.addr %s595, 8
      %s597 = scalar_lea.vmem %s0, %s596
      %p598 = scmp.lt.s32.totalorder %s30, 1
      %s599 = scalar_select %p598, %s30, 1
      %s600 = smul.addr %s599, 8
      %s601 = smul.addr %s600, 8
      %s602 = scalar_lea.vmem %s19, %s601
      %v604 = vld [vmem:[%s597] sm:$0xff]
      %v605 = vld [vmem:[%s597 + $0x8] sm:$0xff]
      %v606 = vld [vmem:[%s597 + $0x10] sm:$0xff]
      %v607 = vld [vmem:[%s597 + $0x18] sm:$0xff]
      %v608 = vld [vmem:[%s597 + $0x20] sm:$0xff]
      %v609 = vld [vmem:[%s597 + $0x28] sm:$0xff]
      %v610 = vld [vmem:[%s597 + $0x30] sm:$0xff]
      %v611 = vld [vmem:[%s597 + $0x38] sm:$0xff]
      %v612 = vld [vmem:[%s1] sm:$0x1]
      %v613 = vld [vmem:[%s2] sm:$0x1]
      %vm614 = vcmask 261120
      %v615 = vsel %vm614, %v604, 0.0
      %616 = vadd.xlane.f32.xlu0 %v615
      %v617 = vpop.xlane.xlu0 %616
      %v618 = vsel %vm614, %v605, 0.0
      %619 = vadd.xlane.f32.xlu0 %v618
      %v620 = vpop.xlane.xlu0 %619
      %v621 = vsel %vm614, %v606, 0.0
      %622 = vadd.xlane.f32.xlu0 %v621
      %v623 = vpop.xlane.xlu0 %622
      %v624 = vsel %vm614, %v607, 0.0
      %625 = vadd.xlane.f32.xlu0 %v624
      %v626 = vpop.xlane.xlu0 %625
      %v627 = vsel %vm614, %v608, 0.0
      %628 = vadd.xlane.f32.xlu0 %v627
      %v629 = vpop.xlane.xlu0 %628
      %v630 = vsel %vm614, %v609, 0.0
      %631 = vadd.xlane.f32.xlu0 %v630
      %v632 = vpop.xlane.xlu0 %631
      %v633 = vsel %vm614, %v610, 0.0
      %634 = vadd.xlane.f32.xlu0 %v633
      %v635 = vpop.xlane.xlu0 %634
      %v636 = vsel %vm614, %v611, 0.0
      %637 = vadd.xlane.f32.xlu0 %v636
      %v638 = vpop.xlane.xlu0 %637
      %v639 = vrcp.pop 32.0
      %v640 = vmul.f32 %v617, %v639
      %v641 = vmul.f32 %v620, %v639
      %v642 = vmul.f32 %v623, %v639
      %v643 = vmul.f32 %v626, %v639
      %v644 = vmul.f32 %v629, %v639
      %v645 = vmul.f32 %v632, %v639
      %v646 = vmul.f32 %v635, %v639
      %v647 = vmul.f32 %v638, %v639
      %v648 = vsub.f32 %v604, %v640
      %v649 = vsub.f32 %v605, %v641
      %v650 = vsub.f32 %v606, %v642
      %v651 = vsub.f32 %v607, %v643
      %v652 = vsub.f32 %v608, %v644
      %v653 = vsub.f32 %v609, %v645
      %v654 = vsub.f32 %v610, %v646
      %v655 = vsub.f32 %v611, %v647
      %v656 = vmul.f32 %v648, %v648
      %v657 = vmul.f32 %v649, %v649
      %v658 = vmul.f32 %v650, %v650
      %v659 = vmul.f32 %v651, %v651
      %v660 = vmul.f32 %v652, %v652
      %v661 = vmul.f32 %v653, %v653
      %v662 = vmul.f32 %v654, %v654
      %v663 = vmul.f32 %v655, %v655
      %v664 = vsel %vm614, %v656, 0.0
      %665 = vadd.xlane.f32.xlu0 %v664
      %v666 = vpop.xlane.xlu0 %665
      %v667 = vsel %vm614, %v657, 0.0
      %668 = vadd.xlane.f32.xlu0 %v667
      %v669 = vpop.xlane.xlu0 %668
      %v670 = vsel %vm614, %v658, 0.0
      %671 = vadd.xlane.f32.xlu0 %v670
      %v672 = vpop.xlane.xlu0 %671
      %v673 = vsel %vm614, %v659, 0.0
      %674 = vadd.xlane.f32.xlu0 %v673
      %v675 = vpop.xlane.xlu0 %674
      %v676 = vsel %vm614, %v660, 0.0
      %677 = vadd.xlane.f32.xlu0 %v676
      %v678 = vpop.xlane.xlu0 %677
      %v679 = vsel %vm614, %v661, 0.0
      %680 = vadd.xlane.f32.xlu0 %v679
      %v681 = vpop.xlane.xlu0 %680
      %v682 = vsel %vm614, %v662, 0.0
      %683 = vadd.xlane.f32.xlu0 %v682
      %v684 = vpop.xlane.xlu0 %683
      %v685 = vsel %vm614, %v663, 0.0
      %686 = vadd.xlane.f32.xlu0 %v685
      %v687 = vpop.xlane.xlu0 %686
      %v688 = vmul.f32 %v666, %v639
      %v689 = vmul.f32 %v669, %v639
      %v690 = vmul.f32 %v672, %v639
      %v691 = vmul.f32 %v675, %v639
      %v692 = vmul.f32 %v678, %v639
      %v693 = vmul.f32 %v681, %v639
      %v694 = vmul.f32 %v684, %v639
      %v695 = vmul.f32 %v687, %v639
      %v696 = vadd.f32 %v688, 1e-05
      %v697 = vadd.f32 %v689, 1e-05
      %v698 = vadd.f32 %v690, 1e-05
      %v699 = vadd.f32 %v691, 1e-05
      %v700 = vadd.f32 %v692, 1e-05
      %v701 = vadd.f32 %v693, 1e-05
      %v702 = vadd.f32 %v694, 1e-05
      %v703 = vadd.f32 %v695, 1e-05
      %v704 = vrsqrt.pop %v696
      %v705 = vrsqrt.pop %v697
      %v706 = vrsqrt.pop %v698
      %v707 = vrsqrt.pop %v699
      %v708 = vrsqrt.pop %v700
      %v709 = vrsqrt.pop %v701
      %v710 = vrsqrt.pop %v702
      %v711 = vrsqrt.pop %v703
      %v712 = vmul.f32 %v648, %v704
      %v713 = vmul.f32 %v649, %v705
      %v714 = vmul.f32 %v650, %v706
      %v715 = vmul.f32 %v651, %v707
      %v716 = vmul.f32 %v652, %v708
      %v717 = vmul.f32 %v653, %v709
      %v718 = vmul.f32 %v654, %v710
      %v719 = vmul.f32 %v655, %v711
      %v721 = vlaneseq
      %v722 = vshrl.u32 %v721, 7
      %v723 = vsub.s32 0, %v722
      %v724 = vrot.slane %v612, %v723
      %v726 = vmul.f32 %v712, %v724
      %v727 = vmul.f32 %v713, %v724
      %v728 = vmul.f32 %v714, %v724
      %v729 = vmul.f32 %v715, %v724
      %v730 = vmul.f32 %v716, %v724
      %v731 = vmul.f32 %v717, %v724
      %v732 = vmul.f32 %v718, %v724
      %v733 = vmul.f32 %v719, %v724
      %v735 = vlaneseq
      %v736 = vshrl.u32 %v735, 7
      %v737 = vsub.s32 0, %v736
      %v738 = vrot.slane %v613, %v737
      %v740 = vadd.f32 %v726, %v738
      %v741 = vadd.f32 %v727, %v738
      %v742 = vadd.f32 %v728, %v738
      %v743 = vadd.f32 %v729, %v738
      %v744 = vadd.f32 %v730, %v738
      %v745 = vadd.f32 %v731, %v738
      %v746 = vadd.f32 %v732, %v738
      %v747 = vadd.f32 %v733, %v738
      %v748 = vpack.c.bf16 %v741, %v740
      %v749 = vpack.c.bf16 %v743, %v742
      %v750 = vpack.c.bf16 %v745, %v744
      %v751 = vpack.c.bf16 %v747, %v746
      %v752 = vld [vmem:[%s3] sm:$0xf]
      %v753 = vld [vmem:[%s3 + $0x4] sm:$0xf]
      %v754 = vld [vmem:[%s3 + $0x8] sm:$0xf]
      %v755 = vld [vmem:[%s3 + $0xc] sm:$0xf]
      %v760 = vunpack.c.l.b16 %v752
      %v761 = vunpack.c.l.b16 %v753
      %v762 = vunpack.c.l.b16 %v754
      %v763 = vunpack.c.l.b16 %v755
      %v764 = vpack.c.b16 %v761, %v760
      %v765 = vpack.c.b16 %v763, %v762
      %v769 = vsel %vm614, %v748, 0
      %v772 = vsel %vm614, %v749, 0
      %v775 = vsel %vm614, %v750, 0
      %v778 = vsel %vm614, %v751, 0
      %780 = vmatprep.subr.bf16.mxu0 0
      %781 = vmatpush1.bf16.msra.mxu0 %v764
      %782 = vmatprep.subr.bf16.mxu0 0
      %783 = vmatpush1.bf16.msra.mxu0 %v765
      %784 = vmatprep.subr.bf16.mxu0 0
      %785 = vmatpush1.bf16.msra.mxu0 0
      %786 = vmatprep.subr.bf16.mxu0 0
      %787 = vmatpush1.bf16.msra.mxu0 0
      %788 = vmatprep.subr.bf16.mxu0 0
      %789 = vmatpush1.bf16.msra.mxu0 0
      %790 = vmatprep.subr.bf16.mxu0 0
      %791 = vmatpush1.bf16.msra.mxu0 0
      %792 = vmatprep.subr.bf16.mxu0 0
      %793 = vmatpush1.bf16.msra.mxu0 0
      %794 = vmatprep.subr.bf16.mxu0 0
      %795 = vmatpush1.bf16.msra.mxu0 0
      %796 = vmatprep.subr.bf16.mxu0 0
      %797 = vmatpush1.bf16.msra.mxu0 0
      %798 = vmatprep.subr.bf16.mxu0 0
      %799 = vmatpush1.bf16.msra.mxu0 0
      %800 = vmatprep.subr.bf16.mxu0 0
      %801 = vmatpush1.bf16.msra.mxu0 0
      %802 = vmatprep.subr.bf16.mxu0 0
      %803 = vmatpush1.bf16.msra.mxu0 0
      %804 = vmatprep.subr.bf16.mxu0 0
      %805 = vmatpush1.bf16.msra.mxu0 0
      %806 = vmatprep.subr.bf16.mxu0 0
      %807 = vmatpush1.bf16.msra.mxu0 0
      %808 = vmatprep.subr.bf16.mxu0 0
      %809 = vmatpush1.bf16.msra.mxu0 0
      %810 = vmatprep.subr.bf16.mxu0 0
      %811 = vmatpush1.bf16.msra.mxu0 0
      %812 = vmatprep.mubr.bf16.mxu0 0
      %813 = vmatmul.mubr.bf16.gmra.mrb[0].mxu0 %v769
      %v814 = vpop.f32.mrb[0].mxu0
      %v815 = vadd.f32 0.0, %v814
      %v816 = vpop.f32.mrb[0].mxu0
      %v817 = vpop.f32.mrb[0].mxu0
      %v818 = vadd.f32 0.0, %v817
      %v819 = vpop.f32.mrb[0].mxu0
      %820 = vmatprep.mubr.bf16.mxu0 0
      %821 = vmatmul.mubr.bf16.gmra.mrb[0].mxu0 %v772
      %v822 = vpop.f32.mrb[0].mxu0
      %v823 = vadd.f32 0.0, %v822
      %v824 = vpop.f32.mrb[0].mxu0
      %v825 = vpop.f32.mrb[0].mxu0
      %v826 = vadd.f32 0.0, %v825
      %v827 = vpop.f32.mrb[0].mxu0
      %828 = vmatprep.mubr.bf16.mxu0 0
      %829 = vmatmul.mubr.bf16.gmra.mrb[0].mxu0 %v775
      %v830 = vpop.f32.mrb[0].mxu0
      %v831 = vadd.f32 0.0, %v830
      %v832 = vpop.f32.mrb[0].mxu0
      %v833 = vpop.f32.mrb[0].mxu0
      %v834 = vadd.f32 0.0, %v833
      %v835 = vpop.f32.mrb[0].mxu0
      %836 = vmatprep.mubr.bf16.mxu0 0
      %837 = vmatmul.mubr.bf16.gmra.mrb[0].mxu0 %v778
      %v838 = vpop.f32.mrb[0].mxu0
      %v839 = vadd.f32 0.0, %v838
      %v840 = vpop.f32.mrb[0].mxu0
      %v841 = vpop.f32.mrb[0].mxu0
      %v842 = vadd.f32 0.0, %v841
      %v843 = vpop.f32.mrb[0].mxu0
      %844 = vdwg.mxu0
      %v845 = vpack.c.bf16 %v818, %v815
      %v846 = vpack.c.bf16 %v826, %v823
      %v847 = vpack.c.bf16 %v834, %v831
      %v848 = vpack.c.bf16 %v842, %v839
      %v849 = vlaneseq
      %v850 = vshrl.u32 %v849, 7
      %v851 = vadd.s32 %v850, 8
      %v852 = vlaneseq
      %v853 = vand.u32 %v852, 127
      %vm854 = vcmp.ge.s32.totalorder %v850, 4
      %vm855 = vcmp.ge.s32.totalorder %v851, 4
      %v856 = vsel %vm854, 1, 0
      %v857 = vsel %vm855, 1, 0
      %vm858 = vcmp.ge.s32.totalorder %v850, 8
      %vm859 = vcmp.ge.s32.totalorder %v851, 8
      %v860 = vsel %vm858, 1, 0
      %v861 = vsel %vm859, 1, 0
      %v862 = vadd.s32 %v856, %v860
      %v863 = vadd.s32 %v857, %v861
      %vm864 = vcmp.ge.s32.totalorder %v850, 12
      %vm865 = vcmp.ge.s32.totalorder %v851, 12
      %v866 = vsel %vm864, 1, 0
      %v867 = vsel %vm865, 1, 0
      %v868 = vadd.s32 %v862, %v866
      %v869 = vadd.s32 %v863, %v867
      %v870 = vmul.u32 %v868, 4
      %v871 = vmul.u32 %v869, 4
      %v872 = vsub.s32 %v850, %v870
      %v873 = vsub.s32 %v851, %v871
      %v874 = vmul.u32 %v868, 2
      %v875 = vmul.u32 %v869, 2
      %v876 = vmul.u32 %v874, 8
      %v877 = vmul.u32 %v875, 8
      %v878 = vmul.u32 %v872, 2
      %v879 = vmul.u32 %v873, 2
      %v880 = vadd.s32 %v876, %v878
      %v881 = vadd.s32 %v877, %v879
      %vm882 = vcmp.eq.s32.totalorder %v853, %v880
      %vm883 = vcmp.eq.s32.totalorder %v853, %v881
      %v884 = vsel %vm882, 1, 0
      %v885 = vsel %vm883, 1, 0
      %v886 = vcvt.s32.f32 %v884
      %v887 = vcvt.s32.f32 %v885
      %v888 = vpack.c.bf16 %v887, %v886
      %vm889 = vcmask 523264
      %v891 = vsel %vm889, %v888, 0
      %893 = vmatprep.subr.bf16.mxu0 0
      %894 = vmatpush1.bf16.msra.mxu0 %v748
      %895 = vmatprep.subr.bf16.mxu0 0
      %896 = vmatpush1.bf16.msra.mxu0 %v749
      %897 = vmatprep.subr.bf16.mxu0 0
      %898 = vmatpush1.bf16.msra.mxu0 %v750
      %899 = vmatprep.subr.bf16.mxu0 0
      %900 = vmatpush1.bf16.msra.mxu0 %v751
      %901 = vmatprep.subr.bf16.mxu0 0
      %902 = vmatpush1.bf16.msra.mxu0 0
      %903 = vmatprep.subr.bf16.mxu0 0
      %904 = vmatpush1.bf16.msra.mxu0 0
      %905 = vmatprep.subr.bf16.mxu0 0
      %906 = vmatpush1.bf16.msra.mxu0 0
      %907 = vmatprep.subr.bf16.mxu0 0
      %908 = vmatpush1.bf16.msra.mxu0 0
      %909 = vmatprep.subr.bf16.mxu0 0
      %910 = vmatpush1.bf16.msra.mxu0 0
      %911 = vmatprep.subr.bf16.mxu0 0
      %912 = vmatpush1.bf16.msra.mxu0 0
      %913 = vmatprep.subr.bf16.mxu0 0
      %914 = vmatpush1.bf16.msra.mxu0 0
      %915 = vmatprep.subr.bf16.mxu0 0
      %916 = vmatpush1.bf16.msra.mxu0 0
      %917 = vmatprep.subr.bf16.mxu0 0
      %918 = vmatpush1.bf16.msra.mxu0 0
      %919 = vmatprep.subr.bf16.mxu0 0
      %920 = vmatpush1.bf16.msra.mxu0 0
      %921 = vmatprep.subr.bf16.mxu0 0
      %922 = vmatpush1.bf16.msra.mxu0 0
      %923 = vmatprep.subr.bf16.mxu0 0
      %924 = vmatpush1.bf16.msra.mxu0 0
      %925 = vmatprep.mubr.bf16.mxu0 0
      %926 = vmatmul.mubr.bf16.gmra.mrb[0].mxu0 %v891
      %v927 = vpop.f32.mrb[0].mxu0
      %v928 = vadd.f32 0.0, %v927
      %v929 = vpop.f32.mrb[0].mxu0
      %v930 = vpop.f32.mrb[0].mxu0
      %v931 = vadd.f32 0.0, %v930
      %v932 = vpop.f32.mrb[0].mxu0
      %933 = vdwg.mxu0
      %v934 = vadd.s32 %v880, 1
      %v935 = vadd.s32 %v881, 1
      %vm936 = vcmp.eq.s32.totalorder %v853, %v934
      %vm937 = vcmp.eq.s32.totalorder %v853, %v935
      %v938 = vsel %vm936, 1, 0
      %v939 = vsel %vm937, 1, 0
      %v940 = vcvt.s32.f32 %v938
      %v941 = vcvt.s32.f32 %v939
      %v942 = vpack.c.bf16 %v941, %v940
      %v944 = vsel %vm889, %v942, 0
      %946 = vmatprep.subr.bf16.mxu0 0
      %947 = vmatpush1.bf16.msra.mxu0 %v748
      %948 = vmatprep.subr.bf16.mxu0 0
      %949 = vmatpush1.bf16.msra.mxu0 %v749
      %950 = vmatprep.subr.bf16.mxu0 0
      %951 = vmatpush1.bf16.msra.mxu0 %v750
      %952 = vmatprep.subr.bf16.mxu0 0
      %953 = vmatpush1.bf16.msra.mxu0 %v751
      %954 = vmatprep.subr.bf16.mxu0 0
      %955 = vmatpush1.bf16.msra.mxu0 0
      %956 = vmatprep.subr.bf16.mxu0 0
      %957 = vmatpush1.bf16.msra.mxu0 0
      %958 = vmatprep.subr.bf16.mxu0 0
      %959 = vmatpush1.bf16.msra.mxu0 0
      %960 = vmatprep.subr.bf16.mxu0 0
      %961 = vmatpush1.bf16.msra.mxu0 0
      %962 = vmatprep.subr.bf16.mxu0 0
      %963 = vmatpush1.bf16.msra.mxu0 0
      %964 = vmatprep.subr.bf16.mxu0 0
      %965 = vmatpush1.bf16.msra.mxu0 0
      %966 = vmatprep.subr.bf16.mxu0 0
      %967 = vmatpush1.bf16.msra.mxu0 0
      %968 = vmatprep.subr.bf16.mxu0 0
      %969 = vmatpush1.bf16.msra.mxu0 0
      %970 = vmatprep.subr.bf16.mxu0 0
      %971 = vmatpush1.bf16.msra.mxu0 0
      %972 = vmatprep.subr.bf16.mxu0 0
      %973 = vmatpush1.bf16.msra.mxu0 0
      %974 = vmatprep.subr.bf16.mxu0 0
      %975 = vmatpush1.bf16.msra.mxu0 0
      %976 = vmatprep.subr.bf16.mxu0 0
      %977 = vmatpush1.bf16.msra.mxu0 0
      %978 = vmatprep.mubr.bf16.mxu0 0
      %979 = vmatmul.mubr.bf16.gmra.mrb[0].mxu0 %v944
      %v980 = vpop.f32.mrb[0].mxu0
      %v981 = vadd.f32 0.0, %v980
      %v982 = vpop.f32.mrb[0].mxu0
      %v983 = vpop.f32.mrb[0].mxu0
      %v984 = vadd.f32 0.0, %v983
      %v985 = vpop.f32.mrb[0].mxu0
      %986 = vdwg.mxu0
      %v987 = vadd.s32 %v874, 1
      %v988 = vadd.s32 %v875, 1
      %v989 = vmul.u32 %v987, 8
      %v990 = vmul.u32 %v988, 8
      %v991 = vadd.s32 %v989, %v878
      %v992 = vadd.s32 %v990, %v879
      %vm993 = vcmp.eq.s32.totalorder %v853, %v991
      %vm994 = vcmp.eq.s32.totalorder %v853, %v992
      %v995 = vsel %vm993, 1, 0
      %v996 = vsel %vm994, 1, 0
      %v997 = vcvt.s32.f32 %v995
      %v998 = vcvt.s32.f32 %v996
      %v999 = vpack.c.bf16 %v998, %v997
      %v1001 = vsel %vm889, %v999, 0
      %1003 = vmatprep.subr.bf16.mxu0 0
      %1004 = vmatpush1.bf16.msra.mxu0 %v748
      %1005 = vmatprep.subr.bf16.mxu0 0
      %1006 = vmatpush1.bf16.msra.mxu0 %v749
      %1007 = vmatprep.subr.bf16.mxu0 0
      %1008 = vmatpush1.bf16.msra.mxu0 %v750
      %1009 = vmatprep.subr.bf16.mxu0 0
      %1010 = vmatpush1.bf16.msra.mxu0 %v751
      %1011 = vmatprep.subr.bf16.mxu0 0
      %1012 = vmatpush1.bf16.msra.mxu0 0
      %1013 = vmatprep.subr.bf16.mxu0 0
      %1014 = vmatpush1.bf16.msra.mxu0 0
      %1015 = vmatprep.subr.bf16.mxu0 0
      %1016 = vmatpush1.bf16.msra.mxu0 0
      %1017 = vmatprep.subr.bf16.mxu0 0
      %1018 = vmatpush1.bf16.msra.mxu0 0
      %1019 = vmatprep.subr.bf16.mxu0 0
      %1020 = vmatpush1.bf16.msra.mxu0 0
      %1021 = vmatprep.subr.bf16.mxu0 0
      %1022 = vmatpush1.bf16.msra.mxu0 0
      %1023 = vmatprep.subr.bf16.mxu0 0
      %1024 = vmatpush1.bf16.msra.mxu0 0
      %1025 = vmatprep.subr.bf16.mxu0 0
      %1026 = vmatpush1.bf16.msra.mxu0 0
      %1027 = vmatprep.subr.bf16.mxu0 0
      %1028 = vmatpush1.bf16.msra.mxu0 0
      %1029 = vmatprep.subr.bf16.mxu0 0
      %1030 = vmatpush1.bf16.msra.mxu0 0
      %1031 = vmatprep.subr.bf16.mxu0 0
      %1032 = vmatpush1.bf16.msra.mxu0 0
      %1033 = vmatprep.subr.bf16.mxu0 0
      %1034 = vmatpush1.bf16.msra.mxu0 0
      %1035 = vmatprep.mubr.bf16.mxu0 0
      %1036 = vmatmul.mubr.bf16.gmra.mrb[0].mxu0 %v1001
      %v1037 = vpop.f32.mrb[0].mxu0
      %v1038 = vadd.f32 0.0, %v1037
      %v1039 = vpop.f32.mrb[0].mxu0
      %v1040 = vpop.f32.mrb[0].mxu0
      %v1041 = vadd.f32 0.0, %v1040
      %v1042 = vpop.f32.mrb[0].mxu0
      %1043 = vdwg.mxu0
      %v1044 = vadd.s32 %v991, 1
      %v1045 = vadd.s32 %v992, 1
      %vm1046 = vcmp.eq.s32.totalorder %v853, %v1044
      %vm1047 = vcmp.eq.s32.totalorder %v853, %v1045
      %v1048 = vsel %vm1046, 1, 0
      %v1049 = vsel %vm1047, 1, 0
      %v1050 = vcvt.s32.f32 %v1048
      %v1051 = vcvt.s32.f32 %v1049
      %v1052 = vpack.c.bf16 %v1051, %v1050
      %v1054 = vsel %vm889, %v1052, 0
      %1056 = vmatprep.subr.bf16.mxu0 0
      %1057 = vmatpush1.bf16.msra.mxu0 %v748
      %1058 = vmatprep.subr.bf16.mxu0 0
      %1059 = vmatpush1.bf16.msra.mxu0 %v749
      %1060 = vmatprep.subr.bf16.mxu0 0
      %1061 = vmatpush1.bf16.msra.mxu0 %v750
      %1062 = vmatprep.subr.bf16.mxu0 0
      %1063 = vmatpush1.bf16.msra.mxu0 %v751
      %1064 = vmatprep.subr.bf16.mxu0 0
      %1065 = vmatpush1.bf16.msra.mxu0 0
      %1066 = vmatprep.subr.bf16.mxu0 0
      %1067 = vmatpush1.bf16.msra.mxu0 0
      %1068 = vmatprep.subr.bf16.mxu0 0
      %1069 = vmatpush1.bf16.msra.mxu0 0
      %1070 = vmatprep.subr.bf16.mxu0 0
      %1071 = vmatpush1.bf16.msra.mxu0 0
      %1072 = vmatprep.subr.bf16.mxu0 0
      %1073 = vmatpush1.bf16.msra.mxu0 0
      %1074 = vmatprep.subr.bf16.mxu0 0
      %1075 = vmatpush1.bf16.msra.mxu0 0
      %1076 = vmatprep.subr.bf16.mxu0 0
      %1077 = vmatpush1.bf16.msra.mxu0 0
      %1078 = vmatprep.subr.bf16.mxu0 0
      %1079 = vmatpush1.bf16.msra.mxu0 0
      %1080 = vmatprep.subr.bf16.mxu0 0
      %1081 = vmatpush1.bf16.msra.mxu0 0
      %1082 = vmatprep.subr.bf16.mxu0 0
      %1083 = vmatpush1.bf16.msra.mxu0 0
      %1084 = vmatprep.subr.bf16.mxu0 0
      %1085 = vmatpush1.bf16.msra.mxu0 0
      %1086 = vmatprep.subr.bf16.mxu0 0
      %1087 = vmatpush1.bf16.msra.mxu0 0
      %1088 = vmatprep.mubr.bf16.mxu0 0
      %1089 = vmatmul.mubr.bf16.gmra.mrb[0].mxu0 %v1054
      %v1090 = vpop.f32.mrb[0].mxu0
      %v1091 = vadd.f32 0.0, %v1090
      %v1092 = vpop.f32.mrb[0].mxu0
      %v1093 = vpop.f32.mrb[0].mxu0
      %v1094 = vadd.f32 0.0, %v1093
      %v1095 = vpop.f32.mrb[0].mxu0
      %1096 = vdwg.mxu0
      %1099 = vrot.lane.b32.xlu0 %v981, 32
      %v1100 = vpop.permute.xlu0 %1099
      %1101 = vrot.lane.b32.xlu0 %v984, 32
      %v1102 = vpop.permute.xlu0 %1101
      %1107 = vrot.lane.b32.xlu0 %v1038, 64
      %v1108 = vpop.permute.xlu0 %1107
      %1109 = vrot.lane.b32.xlu0 %v1041, 64
      %v1110 = vpop.permute.xlu0 %1109
      %1115 = vrot.lane.b32.xlu0 %v1091, 96
      %v1116 = vpop.permute.xlu0 %1115
      %1117 = vrot.lane.b32.xlu0 %v1094, 96
      %v1118 = vpop.permute.xlu0 %1117
      %v1121 = vsel %vm614, %v928, %v1100
      %v1122 = vsel %vm614, %v931, %v1102
      %v1123 = vsel %vm889, %v1121, %v1108
      %v1124 = vsel %vm889, %v1122, %v1110
      %vm1125 = vcmask 785408
      %v1126 = vsel %vm1125, %v1123, %v1116
      %v1127 = vsel %vm1125, %v1124, %v1118
      %v1128 = vpack.c.bf16 %v1127, %v1126
      %v1129 = vld [vmem:[%s4] sm:$0xf]
      %v1130 = vld [vmem:[%s4 + $0x4] sm:$0xf]
      %v1131 = vld [vmem:[%s4 + $0x8] sm:$0xf]
      %v1132 = vld [vmem:[%s4 + $0xc] sm:$0xf]
      %v1133 = vld [vmem:[%s4 + $0x10] sm:$0xf]
      %v1134 = vld [vmem:[%s4 + $0x14] sm:$0xf]
      %v1135 = vld [vmem:[%s4 + $0x18] sm:$0xf]
      %v1136 = vld [vmem:[%s4 + $0x1c] sm:$0xf]
      %v1137 = vld [vmem:[%s4 + $0x20] sm:$0xf]
      %v1138 = vld [vmem:[%s4 + $0x24] sm:$0xf]
      %v1139 = vld [vmem:[%s4 + $0x28] sm:$0xf]
      %v1140 = vld [vmem:[%s4 + $0x2c] sm:$0xf]
      %v1141 = vld [vmem:[%s4 + $0x30] sm:$0xf]
      %v1142 = vld [vmem:[%s4 + $0x34] sm:$0xf]
      %v1143 = vld [vmem:[%s4 + $0x38] sm:$0xf]
      %v1144 = vld [vmem:[%s4 + $0x3c] sm:$0xf]
      %v1145 = vld [vmem:[%s5] sm:$0x1]
      %v1147 = vlaneseq
      %v1148 = vshrl.u32 %v1147, 7
      %v1149 = vsub.s32 0, %v1148
      %v1150 = vrot.slane %v1145, %v1149
      %v1168 = vunpack.c.l.b16 %v1129
      %v1169 = vunpack.c.l.b16 %v1130
      %v1170 = vunpack.c.l.b16 %v1131
      %v1171 = vunpack.c.l.b16 %v1132
      %v1172 = vunpack.c.l.b16 %v1133
      %v1173 = vunpack.c.l.b16 %v1134
      %v1174 = vunpack.c.l.b16 %v1135
      %v1175 = vunpack.c.l.b16 %v1136
      %v1176 = vunpack.c.l.b16 %v1137
      %v1177 = vunpack.c.l.b16 %v1138
      %v1178 = vunpack.c.l.b16 %v1139
      %v1179 = vunpack.c.l.b16 %v1140
      %v1180 = vunpack.c.l.b16 %v1141
      %v1181 = vunpack.c.l.b16 %v1142
      %v1182 = vunpack.c.l.b16 %v1143
      %v1183 = vunpack.c.l.b16 %v1144
      %v1184 = vpack.c.b16 %v1169, %v1168
      %v1185 = vpack.c.b16 %v1171, %v1170
      %v1186 = vpack.c.b16 %v1173, %v1172
      %v1187 = vpack.c.b16 %v1175, %v1174
      %v1188 = vpack.c.b16 %v1177, %v1176
      %v1189 = vpack.c.b16 %v1179, %v1178
      %v1190 = vpack.c.b16 %v1181, %v1180
      %v1191 = vpack.c.b16 %v1183, %v1182
      %1200 = vmatprep.subr.bf16.mxu0 0
      %1201 = vmatpush1.bf16.msra.mxu0 %v1184
      %1202 = vmatprep.subr.bf16.mxu0 0
      %1203 = vmatpush1.bf16.msra.mxu0 %v1185
      %1204 = vmatprep.subr.bf16.mxu0 0
      %1205 = vmatpush1.bf16.msra.mxu0 %v1186
      %1206 = vmatprep.subr.bf16.mxu0 0
      %1207 = vmatpush1.bf16.msra.mxu0 %v1187
      %1208 = vmatprep.subr.bf16.mxu0 0
      %1209 = vmatpush1.bf16.msra.mxu0 %v1188
      %1210 = vmatprep.subr.bf16.mxu0 0
      %1211 = vmatpush1.bf16.msra.mxu0 %v1189
      %1212 = vmatprep.subr.bf16.mxu0 0
      %1213 = vmatpush1.bf16.msra.mxu0 %v1190
      %1214 = vmatprep.subr.bf16.mxu0 0
      %1215 = vmatpush1.bf16.msra.mxu0 %v1191
      %1216 = vmatprep.subr.bf16.mxu0 0
      %1217 = vmatpush1.bf16.msra.mxu0 0
      %1218 = vmatprep.subr.bf16.mxu0 0
      %1219 = vmatpush1.bf16.msra.mxu0 0
      %1220 = vmatprep.subr.bf16.mxu0 0
      %1221 = vmatpush1.bf16.msra.mxu0 0
      %1222 = vmatprep.subr.bf16.mxu0 0
      %1223 = vmatpush1.bf16.msra.mxu0 0
      %1224 = vmatprep.subr.bf16.mxu0 0
      %1225 = vmatpush1.bf16.msra.mxu0 0
      %1226 = vmatprep.subr.bf16.mxu0 0
      %1227 = vmatpush1.bf16.msra.mxu0 0
      %1228 = vmatprep.subr.bf16.mxu0 0
      %1229 = vmatpush1.bf16.msra.mxu0 0
      %1230 = vmatprep.subr.bf16.mxu0 0
      %1231 = vmatpush1.bf16.msra.mxu0 0
      %1232 = vmatprep.mubr.bf16.mxu0 0
      %1233 = vmatmul.mubr.bf16.gmra.mrb[0].mxu0 %v1128
      %v1234 = vpop.f32.mrb[0].mxu0
      %v1235 = vadd.f32 %v1150, %v1234
      %v1236 = vpop.f32.mrb[0].mxu0
      %v1237 = vpop.f32.mrb[0].mxu0
      %v1238 = vadd.f32 %v1150, %v1237
      %v1239 = vpop.f32.mrb[0].mxu0
      %1240 = vdwg.mxu0
      %v1241 = vld [vmem:[%s6] sm:$0x1]
      %v1242 = vld [vmem:[%s7] sm:$0x1]
      %v1243 = vsel %vm614, %v1235, 0.0
      %1244 = vadd.xlane.f32.xlu0 %v1243
      %v1245 = vpop.xlane.xlu0 %1244
      %v1246 = vsel %vm614, %v1238, 0.0
      %1247 = vadd.xlane.f32.xlu0 %v1246
      %v1248 = vpop.xlane.xlu0 %1247
      %v1249 = vmul.f32 %v1245, %v639
      %v1250 = vmul.f32 %v1248, %v639
      %v1251 = vsub.f32 %v1235, %v1249
      %v1252 = vsub.f32 %v1238, %v1250
      %v1253 = vmul.f32 %v1251, %v1251
      %v1254 = vmul.f32 %v1252, %v1252
      %v1255 = vsel %vm614, %v1253, 0.0
      %1256 = vadd.xlane.f32.xlu0 %v1255
      %v1257 = vpop.xlane.xlu0 %1256
      %v1258 = vsel %vm614, %v1254, 0.0
      %1259 = vadd.xlane.f32.xlu0 %v1258
      %v1260 = vpop.xlane.xlu0 %1259
      %v1261 = vmul.f32 %v1257, %v639
      %v1262 = vmul.f32 %v1260, %v639
      %v1263 = vadd.f32 %v1261, 1e-05
      %v1264 = vadd.f32 %v1262, 1e-05
      %v1265 = vrsqrt.pop %v1263
      %v1266 = vrsqrt.pop %v1264
      %v1267 = vmul.f32 %v1251, %v1265
      %v1268 = vmul.f32 %v1252, %v1266
      %v1270 = vlaneseq
      %v1271 = vshrl.u32 %v1270, 7
      %v1272 = vsub.s32 0, %v1271
      %v1273 = vrot.slane %v1241, %v1272
      %v1275 = vmul.f32 %v1267, %v1273
      %v1276 = vmul.f32 %v1268, %v1273
      %v1278 = vlaneseq
      %v1279 = vshrl.u32 %v1278, 7
      %v1280 = vsub.s32 0, %v1279
      %v1281 = vrot.slane %v1242, %v1280
      %v1283 = vadd.f32 %v1275, %v1281
      %v1284 = vadd.f32 %v1276, %v1281
      %v1285 = vpack.c.bf16 %v1284, %v1283
      %v1286 = vld [vmem:[%s8] sm:$0xf]
      %v1287 = vld [vmem:[%s8 + $0x4] sm:$0xf]
      %v1288 = vld [vmem:[%s8 + $0x8] sm:$0xf]
      %v1289 = vld [vmem:[%s8 + $0xc] sm:$0xf]
      %v1294 = vunpack.c.l.b16 %v1286
      %v1295 = vunpack.c.l.b16 %v1287
      %v1296 = vunpack.c.l.b16 %v1288
      %v1297 = vunpack.c.l.b16 %v1289
      %v1298 = vpack.c.b16 %v1295, %v1294
      %v1299 = vpack.c.b16 %v1297, %v1296
      %v1303 = vsel %vm614, %v1285, 0
      %1305 = vmatprep.subr.bf16.mxu0 0
      %1306 = vmatpush1.bf16.msra.mxu0 %v1298
      %1307 = vmatprep.subr.bf16.mxu0 0
      %1308 = vmatpush1.bf16.msra.mxu0 %v1299
      %1309 = vmatprep.subr.bf16.mxu0 0
      %1310 = vmatpush1.bf16.msra.mxu0 0
      %1311 = vmatprep.subr.bf16.mxu0 0
      %1312 = vmatpush1.bf16.msra.mxu0 0
      %1313 = vmatprep.subr.bf16.mxu0 0
      %1314 = vmatpush1.bf16.msra.mxu0 0
      %1315 = vmatprep.subr.bf16.mxu0 0
      %1316 = vmatpush1.bf16.msra.mxu0 0
      %1317 = vmatprep.subr.bf16.mxu0 0
      %1318 = vmatpush1.bf16.msra.mxu0 0
      %1319 = vmatprep.subr.bf16.mxu0 0
      %1320 = vmatpush1.bf16.msra.mxu0 0
      %1321 = vmatprep.subr.bf16.mxu0 0
      %1322 = vmatpush1.bf16.msra.mxu0 0
      %1323 = vmatprep.subr.bf16.mxu0 0
      %1324 = vmatpush1.bf16.msra.mxu0 0
      %1325 = vmatprep.subr.bf16.mxu0 0
      %1326 = vmatpush1.bf16.msra.mxu0 0
      %1327 = vmatprep.subr.bf16.mxu0 0
      %1328 = vmatpush1.bf16.msra.mxu0 0
      %1329 = vmatprep.subr.bf16.mxu0 0
      %1330 = vmatpush1.bf16.msra.mxu0 0
      %1331 = vmatprep.subr.bf16.mxu0 0
      %1332 = vmatpush1.bf16.msra.mxu0 0
      %1333 = vmatprep.subr.bf16.mxu0 0
      %1334 = vmatpush1.bf16.msra.mxu0 0
      %1335 = vmatprep.subr.bf16.mxu0 0
      %1336 = vmatpush1.bf16.msra.mxu0 0
      %1337 = vmatprep.mubr.bf16.mxu0 0
      %1338 = vmatmul.mubr.bf16.gmra.mrb[0].mxu0 %v1303
      %v1339 = vpop.f32.mrb[0].mxu0
      %v1340 = vadd.f32 0.0, %v1339
      %v1341 = vpop.f32.mrb[0].mxu0
      %v1342 = vpop.f32.mrb[0].mxu0
      %v1343 = vadd.f32 0.0, %v1342
      %v1344 = vpop.f32.mrb[0].mxu0
      %1345 = vdwg.mxu0
      %v1346 = vadd.s32 %v850, 16
      %v1347 = vadd.s32 %v850, 24
      %v1348 = vadd.s32 %v850, 32
      %v1349 = vadd.s32 %v850, 40
      %v1350 = vadd.s32 %v850, 48
      %v1351 = vadd.s32 %v850, 56
      %v1352 = vadd.s32 %v850, 64
      %v1353 = vadd.s32 %v850, 72
      %v1354 = vadd.s32 %v850, 80
      %v1355 = vadd.s32 %v850, 88
      %v1356 = vadd.s32 %v850, 96
      %v1357 = vadd.s32 %v850, 104
      %v1358 = vadd.s32 %v850, 112
      %v1359 = vadd.s32 %v850, 120
      %vm1360 = vcmp.ge.s32.totalorder %v850, 16
      %vm1361 = vcmp.ge.s32.totalorder %v851, 16
      %vm1362 = vcmp.ge.s32.totalorder %v1346, 16
      %vm1363 = vcmp.ge.s32.totalorder %v1347, 16
      %vm1364 = vcmp.ge.s32.totalorder %v1348, 16
      %vm1365 = vcmp.ge.s32.totalorder %v1349, 16
      %vm1366 = vcmp.ge.s32.totalorder %v1350, 16
      %vm1367 = vcmp.ge.s32.totalorder %v1351, 16
      %vm1368 = vcmp.ge.s32.totalorder %v1352, 16
      %vm1369 = vcmp.ge.s32.totalorder %v1353, 16
      %vm1370 = vcmp.ge.s32.totalorder %v1354, 16
      %vm1371 = vcmp.ge.s32.totalorder %v1355, 16
      %vm1372 = vcmp.ge.s32.totalorder %v1356, 16
      %vm1373 = vcmp.ge.s32.totalorder %v1357, 16
      %vm1374 = vcmp.ge.s32.totalorder %v1358, 16
      %vm1375 = vcmp.ge.s32.totalorder %v1359, 16
      %v1376 = vsel %vm1360, 1, 0
      %v1377 = vsel %vm1361, 1, 0
      %v1378 = vsel %vm1362, 1, 0
      %v1379 = vsel %vm1363, 1, 0
      %v1380 = vsel %vm1364, 1, 0
      %v1381 = vsel %vm1365, 1, 0
      %v1382 = vsel %vm1366, 1, 0
      %v1383 = vsel %vm1367, 1, 0
      %v1384 = vsel %vm1368, 1, 0
      %v1385 = vsel %vm1369, 1, 0
      %v1386 = vsel %vm1370, 1, 0
      %v1387 = vsel %vm1371, 1, 0
      %v1388 = vsel %vm1372, 1, 0
      %v1389 = vsel %vm1373, 1, 0
      %v1390 = vsel %vm1374, 1, 0
      %v1391 = vsel %vm1375, 1, 0
      %vm1392 = vcmp.ge.s32.totalorder %v850, 32
      %vm1393 = vcmp.ge.s32.totalorder %v851, 32
      %vm1394 = vcmp.ge.s32.totalorder %v1346, 32
      %vm1395 = vcmp.ge.s32.totalorder %v1347, 32
      %vm1396 = vcmp.ge.s32.totalorder %v1348, 32
      %vm1397 = vcmp.ge.s32.totalorder %v1349, 32
      %vm1398 = vcmp.ge.s32.totalorder %v1350, 32
      %vm1399 = vcmp.ge.s32.totalorder %v1351, 32
      %vm1400 = vcmp.ge.s32.totalorder %v1352, 32
      %vm1401 = vcmp.ge.s32.totalorder %v1353, 32
      %vm1402 = vcmp.ge.s32.totalorder %v1354, 32
      %vm1403 = vcmp.ge.s32.totalorder %v1355, 32
      %vm1404 = vcmp.ge.s32.totalorder %v1356, 32
      %vm1405 = vcmp.ge.s32.totalorder %v1357, 32
      %vm1406 = vcmp.ge.s32.totalorder %v1358, 32
      %vm1407 = vcmp.ge.s32.totalorder %v1359, 32
      %v1408 = vsel %vm1392, 1, 0
      %v1409 = vsel %vm1393, 1, 0
      %v1410 = vsel %vm1394, 1, 0
      %v1411 = vsel %vm1395, 1, 0
      %v1412 = vsel %vm1396, 1, 0
      %v1413 = vsel %vm1397, 1, 0
      %v1414 = vsel %vm1398, 1, 0
      %v1415 = vsel %vm1399, 1, 0
      %v1416 = vsel %vm1400, 1, 0
      %v1417 = vsel %vm1401, 1, 0
      %v1418 = vsel %vm1402, 1, 0
      %v1419 = vsel %vm1403, 1, 0
      %v1420 = vsel %vm1404, 1, 0
      %v1421 = vsel %vm1405, 1, 0
      %v1422 = vsel %vm1406, 1, 0
      %v1423 = vsel %vm1407, 1, 0
      %v1424 = vadd.s32 %v1376, %v1408
      %v1425 = vadd.s32 %v1377, %v1409
      %v1426 = vadd.s32 %v1378, %v1410
      %v1427 = vadd.s32 %v1379, %v1411
      %v1428 = vadd.s32 %v1380, %v1412
      %v1429 = vadd.s32 %v1381, %v1413
      %v1430 = vadd.s32 %v1382, %v1414
      %v1431 = vadd.s32 %v1383, %v1415
      %v1432 = vadd.s32 %v1384, %v1416
      %v1433 = vadd.s32 %v1385, %v1417
      %v1434 = vadd.s32 %v1386, %v1418
      %v1435 = vadd.s32 %v1387, %v1419
      %v1436 = vadd.s32 %v1388, %v1420
      %v1437 = vadd.s32 %v1389, %v1421
      %v1438 = vadd.s32 %v1390, %v1422
      %v1439 = vadd.s32 %v1391, %v1423
      %vm1440 = vcmp.ge.s32.totalorder %v850, 48
      %vm1441 = vcmp.ge.s32.totalorder %v851, 48
      %vm1442 = vcmp.ge.s32.totalorder %v1346, 48
      %vm1443 = vcmp.ge.s32.totalorder %v1347, 48
      %vm1444 = vcmp.ge.s32.totalorder %v1348, 48
      %vm1445 = vcmp.ge.s32.totalorder %v1349, 48
      %vm1446 = vcmp.ge.s32.totalorder %v1350, 48
      %vm1447 = vcmp.ge.s32.totalorder %v1351, 48
      %vm1448 = vcmp.ge.s32.totalorder %v1352, 48
      %vm1449 = vcmp.ge.s32.totalorder %v1353, 48
      %vm1450 = vcmp.ge.s32.totalorder %v1354, 48
      %vm1451 = vcmp.ge.s32.totalorder %v1355, 48
      %vm1452 = vcmp.ge.s32.totalorder %v1356, 48
      %vm1453 = vcmp.ge.s32.totalorder %v1357, 48
      %vm1454 = vcmp.ge.s32.totalorder %v1358, 48
      %vm1455 = vcmp.ge.s32.totalorder %v1359, 48
      %v1456 = vsel %vm1440, 1, 0
      %v1457 = vsel %vm1441, 1, 0
      %v1458 = vsel %vm1442, 1, 0
      %v1459 = vsel %vm1443, 1, 0
      %v1460 = vsel %vm1444, 1, 0
      %v1461 = vsel %vm1445, 1, 0
      %v1462 = vsel %vm1446, 1, 0
      %v1463 = vsel %vm1447, 1, 0
      %v1464 = vsel %vm1448, 1, 0
      %v1465 = vsel %vm1449, 1, 0
      %v1466 = vsel %vm1450, 1, 0
      %v1467 = vsel %vm1451, 1, 0
      %v1468 = vsel %vm1452, 1, 0
      %v1469 = vsel %vm1453, 1, 0
      %v1470 = vsel %vm1454, 1, 0
      %v1471 = vsel %vm1455, 1, 0
      %v1472 = vadd.s32 %v1424, %v1456
      %v1473 = vadd.s32 %v1425, %v1457
      %v1474 = vadd.s32 %v1426, %v1458
      %v1475 = vadd.s32 %v1427, %v1459
      %v1476 = vadd.s32 %v1428, %v1460
      %v1477 = vadd.s32 %v1429, %v1461
      %v1478 = vadd.s32 %v1430, %v1462
      %v1479 = vadd.s32 %v1431, %v1463
      %v1480 = vadd.s32 %v1432, %v1464
      %v1481 = vadd.s32 %v1433, %v1465
      %v1482 = vadd.s32 %v1434, %v1466
      %v1483 = vadd.s32 %v1435, %v1467
      %v1484 = vadd.s32 %v1436, %v1468
      %v1485 = vadd.s32 %v1437, %v1469
      %v1486 = vadd.s32 %v1438, %v1470
      %v1487 = vadd.s32 %v1439, %v1471
      %vm1488 = vcmp.ge.s32.totalorder %v850, 64
      %vm1489 = vcmp.ge.s32.totalorder %v851, 64
      %vm1490 = vcmp.ge.s32.totalorder %v1346, 64
      %vm1491 = vcmp.ge.s32.totalorder %v1347, 64
      %vm1492 = vcmp.ge.s32.totalorder %v1348, 64
      %vm1493 = vcmp.ge.s32.totalorder %v1349, 64
      %vm1494 = vcmp.ge.s32.totalorder %v1350, 64
      %vm1495 = vcmp.ge.s32.totalorder %v1351, 64
      %vm1496 = vcmp.ge.s32.totalorder %v1352, 64
      %vm1497 = vcmp.ge.s32.totalorder %v1353, 64
      %vm1498 = vcmp.ge.s32.totalorder %v1354, 64
      %vm1499 = vcmp.ge.s32.totalorder %v1355, 64
      %vm1500 = vcmp.ge.s32.totalorder %v1356, 64
      %vm1501 = vcmp.ge.s32.totalorder %v1357, 64
      %vm1502 = vcmp.ge.s32.totalorder %v1358, 64
      %vm1503 = vcmp.ge.s32.totalorder %v1359, 64
      %v1504 = vsel %vm1488, 1, 0
      %v1505 = vsel %vm1489, 1, 0
      %v1506 = vsel %vm1490, 1, 0
      %v1507 = vsel %vm1491, 1, 0
      %v1508 = vsel %vm1492, 1, 0
      %v1509 = vsel %vm1493, 1, 0
      %v1510 = vsel %vm1494, 1, 0
      %v1511 = vsel %vm1495, 1, 0
      %v1512 = vsel %vm1496, 1, 0
      %v1513 = vsel %vm1497, 1, 0
      %v1514 = vsel %vm1498, 1, 0
      %v1515 = vsel %vm1499, 1, 0
      %v1516 = vsel %vm1500, 1, 0
      %v1517 = vsel %vm1501, 1, 0
      %v1518 = vsel %vm1502, 1, 0
      %v1519 = vsel %vm1503, 1, 0
      %v1520 = vadd.s32 %v1472, %v1504
      %v1521 = vadd.s32 %v1473, %v1505
      %v1522 = vadd.s32 %v1474, %v1506
      %v1523 = vadd.s32 %v1475, %v1507
      %v1524 = vadd.s32 %v1476, %v1508
      %v1525 = vadd.s32 %v1477, %v1509
      %v1526 = vadd.s32 %v1478, %v1510
      %v1527 = vadd.s32 %v1479, %v1511
      %v1528 = vadd.s32 %v1480, %v1512
      %v1529 = vadd.s32 %v1481, %v1513
      %v1530 = vadd.s32 %v1482, %v1514
      %v1531 = vadd.s32 %v1483, %v1515
      %v1532 = vadd.s32 %v1484, %v1516
      %v1533 = vadd.s32 %v1485, %v1517
      %v1534 = vadd.s32 %v1486, %v1518
      %v1535 = vadd.s32 %v1487, %v1519
      %vm1536 = vcmp.ge.s32.totalorder %v850, 80
      %vm1537 = vcmp.ge.s32.totalorder %v851, 80
      %vm1538 = vcmp.ge.s32.totalorder %v1346, 80
      %vm1539 = vcmp.ge.s32.totalorder %v1347, 80
      %vm1540 = vcmp.ge.s32.totalorder %v1348, 80
      %vm1541 = vcmp.ge.s32.totalorder %v1349, 80
      %vm1542 = vcmp.ge.s32.totalorder %v1350, 80
      %vm1543 = vcmp.ge.s32.totalorder %v1351, 80
      %vm1544 = vcmp.ge.s32.totalorder %v1352, 80
      %vm1545 = vcmp.ge.s32.totalorder %v1353, 80
      %vm1546 = vcmp.ge.s32.totalorder %v1354, 80
      %vm1547 = vcmp.ge.s32.totalorder %v1355, 80
      %vm1548 = vcmp.ge.s32.totalorder %v1356, 80
      %vm1549 = vcmp.ge.s32.totalorder %v1357, 80
      %vm1550 = vcmp.ge.s32.totalorder %v1358, 80
      %vm1551 = vcmp.ge.s32.totalorder %v1359, 80
      %v1552 = vsel %vm1536, 1, 0
      %v1553 = vsel %vm1537, 1, 0
      %v1554 = vsel %vm1538, 1, 0
      %v1555 = vsel %vm1539, 1, 0
      %v1556 = vsel %vm1540, 1, 0
      %v1557 = vsel %vm1541, 1, 0
      %v1558 = vsel %vm1542, 1, 0
      %v1559 = vsel %vm1543, 1, 0
      %v1560 = vsel %vm1544, 1, 0
      %v1561 = vsel %vm1545, 1, 0
      %v1562 = vsel %vm1546, 1, 0
      %v1563 = vsel %vm1547, 1, 0
      %v1564 = vsel %vm1548, 1, 0
      %v1565 = vsel %vm1549, 1, 0
      %v1566 = vsel %vm1550, 1, 0
      %v1567 = vsel %vm1551, 1, 0
      %v1568 = vadd.s32 %v1520, %v1552
      %v1569 = vadd.s32 %v1521, %v1553
      %v1570 = vadd.s32 %v1522, %v1554
      %v1571 = vadd.s32 %v1523, %v1555
      %v1572 = vadd.s32 %v1524, %v1556
      %v1573 = vadd.s32 %v1525, %v1557
      %v1574 = vadd.s32 %v1526, %v1558
      %v1575 = vadd.s32 %v1527, %v1559
      %v1576 = vadd.s32 %v1528, %v1560
      %v1577 = vadd.s32 %v1529, %v1561
      %v1578 = vadd.s32 %v1530, %v1562
      %v1579 = vadd.s32 %v1531, %v1563
      %v1580 = vadd.s32 %v1532, %v1564
      %v1581 = vadd.s32 %v1533, %v1565
      %v1582 = vadd.s32 %v1534, %v1566
      %v1583 = vadd.s32 %v1535, %v1567
      %vm1584 = vcmp.ge.s32.totalorder %v850, 96
      %vm1585 = vcmp.ge.s32.totalorder %v851, 96
      %vm1586 = vcmp.ge.s32.totalorder %v1346, 96
      %vm1587 = vcmp.ge.s32.totalorder %v1347, 96
      %vm1588 = vcmp.ge.s32.totalorder %v1348, 96
      %vm1589 = vcmp.ge.s32.totalorder %v1349, 96
      %vm1590 = vcmp.ge.s32.totalorder %v1350, 96
      %vm1591 = vcmp.ge.s32.totalorder %v1351, 96
      %vm1592 = vcmp.ge.s32.totalorder %v1352, 96
      %vm1593 = vcmp.ge.s32.totalorder %v1353, 96
      %vm1594 = vcmp.ge.s32.totalorder %v1354, 96
      %vm1595 = vcmp.ge.s32.totalorder %v1355, 96
      %vm1596 = vcmp.ge.s32.totalorder %v1356, 96
      %vm1597 = vcmp.ge.s32.totalorder %v1357, 96
      %vm1598 = vcmp.ge.s32.totalorder %v1358, 96
      %vm1599 = vcmp.ge.s32.totalorder %v1359, 96
      %v1600 = vsel %vm1584, 1, 0
      %v1601 = vsel %vm1585, 1, 0
      %v1602 = vsel %vm1586, 1, 0
      %v1603 = vsel %vm1587, 1, 0
      %v1604 = vsel %vm1588, 1, 0
      %v1605 = vsel %vm1589, 1, 0
      %v1606 = vsel %vm1590, 1, 0
      %v1607 = vsel %vm1591, 1, 0
      %v1608 = vsel %vm1592, 1, 0
      %v1609 = vsel %vm1593, 1, 0
      %v1610 = vsel %vm1594, 1, 0
      %v1611 = vsel %vm1595, 1, 0
      %v1612 = vsel %vm1596, 1, 0
      %v1613 = vsel %vm1597, 1, 0
      %v1614 = vsel %vm1598, 1, 0
      %v1615 = vsel %vm1599, 1, 0
      %v1616 = vadd.s32 %v1568, %v1600
      %v1617 = vadd.s32 %v1569, %v1601
      %v1618 = vadd.s32 %v1570, %v1602
      %v1619 = vadd.s32 %v1571, %v1603
      %v1620 = vadd.s32 %v1572, %v1604
      %v1621 = vadd.s32 %v1573, %v1605
      %v1622 = vadd.s32 %v1574, %v1606
      %v1623 = vadd.s32 %v1575, %v1607
      %v1624 = vadd.s32 %v1576, %v1608
      %v1625 = vadd.s32 %v1577, %v1609
      %v1626 = vadd.s32 %v1578, %v1610
      %v1627 = vadd.s32 %v1579, %v1611
      %v1628 = vadd.s32 %v1580, %v1612
      %v1629 = vadd.s32 %v1581, %v1613
      %v1630 = vadd.s32 %v1582, %v1614
      %v1631 = vadd.s32 %v1583, %v1615
      %vm1632 = vcmp.ge.s32.totalorder %v850, 112
      %vm1633 = vcmp.ge.s32.totalorder %v851, 112
      %vm1634 = vcmp.ge.s32.totalorder %v1346, 112
      %vm1635 = vcmp.ge.s32.totalorder %v1347, 112
      %vm1636 = vcmp.ge.s32.totalorder %v1348, 112
      %vm1637 = vcmp.ge.s32.totalorder %v1349, 112
      %vm1638 = vcmp.ge.s32.totalorder %v1350, 112
      %vm1639 = vcmp.ge.s32.totalorder %v1351, 112
      %vm1640 = vcmp.ge.s32.totalorder %v1352, 112
      %vm1641 = vcmp.ge.s32.totalorder %v1353, 112
      %vm1642 = vcmp.ge.s32.totalorder %v1354, 112
      %vm1643 = vcmp.ge.s32.totalorder %v1355, 112
      %vm1644 = vcmp.ge.s32.totalorder %v1356, 112
      %vm1645 = vcmp.ge.s32.totalorder %v1357, 112
      %vm1646 = vcmp.ge.s32.totalorder %v1358, 112
      %vm1647 = vcmp.ge.s32.totalorder %v1359, 112
      %v1648 = vsel %vm1632, 1, 0
      %v1649 = vsel %vm1633, 1, 0
      %v1650 = vsel %vm1634, 1, 0
      %v1651 = vsel %vm1635, 1, 0
      %v1652 = vsel %vm1636, 1, 0
      %v1653 = vsel %vm1637, 1, 0
      %v1654 = vsel %vm1638, 1, 0
      %v1655 = vsel %vm1639, 1, 0
      %v1656 = vsel %vm1640, 1, 0
      %v1657 = vsel %vm1641, 1, 0
      %v1658 = vsel %vm1642, 1, 0
      %v1659 = vsel %vm1643, 1, 0
      %v1660 = vsel %vm1644, 1, 0
      %v1661 = vsel %vm1645, 1, 0
      %v1662 = vsel %vm1646, 1, 0
      %v1663 = vsel %vm1647, 1, 0
      %v1664 = vadd.s32 %v1616, %v1648
      %v1665 = vadd.s32 %v1617, %v1649
      %v1666 = vadd.s32 %v1618, %v1650
      %v1667 = vadd.s32 %v1619, %v1651
      %v1668 = vadd.s32 %v1620, %v1652
      %v1669 = vadd.s32 %v1621, %v1653
      %v1670 = vadd.s32 %v1622, %v1654
      %v1671 = vadd.s32 %v1623, %v1655
      %v1672 = vadd.s32 %v1624, %v1656
      %v1673 = vadd.s32 %v1625, %v1657
      %v1674 = vadd.s32 %v1626, %v1658
      %v1675 = vadd.s32 %v1627, %v1659
      %v1676 = vadd.s32 %v1628, %v1660
      %v1677 = vadd.s32 %v1629, %v1661
      %v1678 = vadd.s32 %v1630, %v1662
      %v1679 = vadd.s32 %v1631, %v1663
      %v1680 = vmul.u32 %v1664, 4
      %v1681 = vmul.u32 %v1665, 4
      %v1682 = vmul.u32 %v1666, 4
      %v1683 = vmul.u32 %v1667, 4
      %v1684 = vmul.u32 %v1668, 4
      %v1685 = vmul.u32 %v1669, 4
      %v1686 = vmul.u32 %v1670, 4
      %v1687 = vmul.u32 %v1671, 4
      %v1688 = vmul.u32 %v1672, 4
      %v1689 = vmul.u32 %v1673, 4
      %v1690 = vmul.u32 %v1674, 4
      %v1691 = vmul.u32 %v1675, 4
      %v1692 = vmul.u32 %v1676, 4
      %v1693 = vmul.u32 %v1677, 4
      %v1694 = vmul.u32 %v1678, 4
      %v1695 = vmul.u32 %v1679, 4
      %vm1696 = vcmp.ge.s32.totalorder %v853, %v1680
      %vm1697 = vcmp.ge.s32.totalorder %v853, %v1681
      %vm1698 = vcmp.ge.s32.totalorder %v853, %v1682
      %vm1699 = vcmp.ge.s32.totalorder %v853, %v1683
      %vm1700 = vcmp.ge.s32.totalorder %v853, %v1684
      %vm1701 = vcmp.ge.s32.totalorder %v853, %v1685
      %vm1702 = vcmp.ge.s32.totalorder %v853, %v1686
      %vm1703 = vcmp.ge.s32.totalorder %v853, %v1687
      %vm1704 = vcmp.ge.s32.totalorder %v853, %v1688
      %vm1705 = vcmp.ge.s32.totalorder %v853, %v1689
      %vm1706 = vcmp.ge.s32.totalorder %v853, %v1690
      %vm1707 = vcmp.ge.s32.totalorder %v853, %v1691
      %vm1708 = vcmp.ge.s32.totalorder %v853, %v1692
      %vm1709 = vcmp.ge.s32.totalorder %v853, %v1693
      %vm1710 = vcmp.ge.s32.totalorder %v853, %v1694
      %vm1711 = vcmp.ge.s32.totalorder %v853, %v1695
      %v1712 = vadd.s32 %v1680, 4
      %v1713 = vadd.s32 %v1681, 4
      %v1714 = vadd.s32 %v1682, 4
      %v1715 = vadd.s32 %v1683, 4
      %v1716 = vadd.s32 %v1684, 4
      %v1717 = vadd.s32 %v1685, 4
      %v1718 = vadd.s32 %v1686, 4
      %v1719 = vadd.s32 %v1687, 4
      %v1720 = vadd.s32 %v1688, 4
      %v1721 = vadd.s32 %v1689, 4
      %v1722 = vadd.s32 %v1690, 4
      %v1723 = vadd.s32 %v1691, 4
      %v1724 = vadd.s32 %v1692, 4
      %v1725 = vadd.s32 %v1693, 4
      %v1726 = vadd.s32 %v1694, 4
      %v1727 = vadd.s32 %v1695, 4
      %vm1728 = vcmp.lt.s32.totalorder %v853, %v1712
      %vm1729 = vcmp.lt.s32.totalorder %v853, %v1713
      %vm1730 = vcmp.lt.s32.totalorder %v853, %v1714
      %vm1731 = vcmp.lt.s32.totalorder %v853, %v1715
      %vm1732 = vcmp.lt.s32.totalorder %v853, %v1716
      %vm1733 = vcmp.lt.s32.totalorder %v853, %v1717
      %vm1734 = vcmp.lt.s32.totalorder %v853, %v1718
      %vm1735 = vcmp.lt.s32.totalorder %v853, %v1719
      %vm1736 = vcmp.lt.s32.totalorder %v853, %v1720
      %vm1737 = vcmp.lt.s32.totalorder %v853, %v1721
      %vm1738 = vcmp.lt.s32.totalorder %v853, %v1722
      %vm1739 = vcmp.lt.s32.totalorder %v853, %v1723
      %vm1740 = vcmp.lt.s32.totalorder %v853, %v1724
      %vm1741 = vcmp.lt.s32.totalorder %v853, %v1725
      %vm1742 = vcmp.lt.s32.totalorder %v853, %v1726
      %vm1743 = vcmp.lt.s32.totalorder %v853, %v1727
      %vm1744 = vmand %vm1696, %vm1728
      %vm1745 = vmand %vm1697, %vm1729
      %vm1746 = vmand %vm1698, %vm1730
      %vm1747 = vmand %vm1699, %vm1731
      %vm1748 = vmand %vm1700, %vm1732
      %vm1749 = vmand %vm1701, %vm1733
      %vm1750 = vmand %vm1702, %vm1734
      %vm1751 = vmand %vm1703, %vm1735
      %vm1752 = vmand %vm1704, %vm1736
      %vm1753 = vmand %vm1705, %vm1737
      %vm1754 = vmand %vm1706, %vm1738
      %vm1755 = vmand %vm1707, %vm1739
      %vm1756 = vmand %vm1708, %vm1740
      %vm1757 = vmand %vm1709, %vm1741
      %vm1758 = vmand %vm1710, %vm1742
      %vm1759 = vmand %vm1711, %vm1743
      %v1760 = vsel %vm1744, 1, 0
      %v1761 = vsel %vm1745, 1, 0
      %v1762 = vsel %vm1746, 1, 0
      %v1763 = vsel %vm1747, 1, 0
      %v1764 = vsel %vm1748, 1, 0
      %v1765 = vsel %vm1749, 1, 0
      %v1766 = vsel %vm1750, 1, 0
      %v1767 = vsel %vm1751, 1, 0
      %v1768 = vsel %vm1752, 1, 0
      %v1769 = vsel %vm1753, 1, 0
      %v1770 = vsel %vm1754, 1, 0
      %v1771 = vsel %vm1755, 1, 0
      %v1772 = vsel %vm1756, 1, 0
      %v1773 = vsel %vm1757, 1, 0
      %v1774 = vsel %vm1758, 1, 0
      %v1775 = vsel %vm1759, 1, 0
      %v1776 = vcvt.s32.f32 %v1760
      %v1777 = vcvt.s32.f32 %v1761
      %v1778 = vcvt.s32.f32 %v1762
      %v1779 = vcvt.s32.f32 %v1763
      %v1780 = vcvt.s32.f32 %v1764
      %v1781 = vcvt.s32.f32 %v1765
      %v1782 = vcvt.s32.f32 %v1766
      %v1783 = vcvt.s32.f32 %v1767
      %v1784 = vcvt.s32.f32 %v1768
      %v1785 = vcvt.s32.f32 %v1769
      %v1786 = vcvt.s32.f32 %v1770
      %v1787 = vcvt.s32.f32 %v1771
      %v1788 = vcvt.s32.f32 %v1772
      %v1789 = vcvt.s32.f32 %v1773
      %v1790 = vcvt.s32.f32 %v1774
      %v1791 = vcvt.s32.f32 %v1775
      %v1792 = vmul.f32 %v1340, %v1776
      %v1793 = vmul.f32 %v1343, %v1777
      %v1794 = vmul.f32 %v1340, %v1778
      %v1795 = vmul.f32 %v1343, %v1779
      %v1796 = vmul.f32 %v1340, %v1780
      %v1797 = vmul.f32 %v1343, %v1781
      %v1798 = vmul.f32 %v1340, %v1782
      %v1799 = vmul.f32 %v1343, %v1783
      %v1800 = vmul.f32 %v1340, %v1784
      %v1801 = vmul.f32 %v1343, %v1785
      %v1802 = vmul.f32 %v1340, %v1786
      %v1803 = vmul.f32 %v1343, %v1787
      %v1804 = vmul.f32 %v1340, %v1788
      %v1805 = vmul.f32 %v1343, %v1789
      %v1806 = vmul.f32 %v1340, %v1790
      %v1807 = vmul.f32 %v1343, %v1791
      %v1808 = vpack.c.bf16 %v1793, %v1792
      %v1809 = vpack.c.bf16 %v1795, %v1794
      %v1810 = vpack.c.bf16 %v1797, %v1796
      %v1811 = vpack.c.bf16 %v1799, %v1798
      %v1812 = vpack.c.bf16 %v1801, %v1800
      %v1813 = vpack.c.bf16 %v1803, %v1802
      %v1814 = vpack.c.bf16 %v1805, %v1804
      %v1815 = vpack.c.bf16 %v1807, %v1806
      %1832 = vrot.lane.b32.xlu0 %v1776, 32
      %v1833 = vpop.permute.xlu0 %1832
      %1834 = vrot.lane.b32.xlu0 %v1777, 32
      %v1835 = vpop.permute.xlu0 %1834
      %1836 = vrot.lane.b32.xlu0 %v1778, 32
      %v1837 = vpop.permute.xlu0 %1836
      %1838 = vrot.lane.b32.xlu0 %v1779, 32
      %v1839 = vpop.permute.xlu0 %1838
      %1840 = vrot.lane.b32.xlu0 %v1780, 32
      %v1841 = vpop.permute.xlu0 %1840
      %1842 = vrot.lane.b32.xlu0 %v1781, 32
      %v1843 = vpop.permute.xlu0 %1842
      %1844 = vrot.lane.b32.xlu0 %v1782, 32
      %v1845 = vpop.permute.xlu0 %1844
      %1846 = vrot.lane.b32.xlu0 %v1783, 32
      %v1847 = vpop.permute.xlu0 %1846
      %1848 = vrot.lane.b32.xlu0 %v1784, 32
      %v1849 = vpop.permute.xlu0 %1848
      %1850 = vrot.lane.b32.xlu0 %v1785, 32
      %v1851 = vpop.permute.xlu0 %1850
      %1852 = vrot.lane.b32.xlu0 %v1786, 32
      %v1853 = vpop.permute.xlu0 %1852
      %1854 = vrot.lane.b32.xlu0 %v1787, 32
      %v1855 = vpop.permute.xlu0 %1854
      %1856 = vrot.lane.b32.xlu0 %v1788, 32
      %v1857 = vpop.permute.xlu0 %1856
      %1858 = vrot.lane.b32.xlu0 %v1789, 32
      %v1859 = vpop.permute.xlu0 %1858
      %1860 = vrot.lane.b32.xlu0 %v1790, 32
      %v1861 = vpop.permute.xlu0 %1860
      %1862 = vrot.lane.b32.xlu0 %v1791, 32
      %v1863 = vpop.permute.xlu0 %1862
      %v1880 = vmul.f32 %v1340, %v1833
      %v1881 = vmul.f32 %v1343, %v1835
      %v1882 = vmul.f32 %v1340, %v1837
      %v1883 = vmul.f32 %v1343, %v1839
      %v1884 = vmul.f32 %v1340, %v1841
      %v1885 = vmul.f32 %v1343, %v1843
      %v1886 = vmul.f32 %v1340, %v1845
      %v1887 = vmul.f32 %v1343, %v1847
      %v1888 = vmul.f32 %v1340, %v1849
      %v1889 = vmul.f32 %v1343, %v1851
      %v1890 = vmul.f32 %v1340, %v1853
      %v1891 = vmul.f32 %v1343, %v1855
      %v1892 = vmul.f32 %v1340, %v1857
      %v1893 = vmul.f32 %v1343, %v1859
      %v1894 = vmul.f32 %v1340, %v1861
      %v1895 = vmul.f32 %v1343, %v1863
      %1912 = vrot.lane.b32.xlu0 %v1880, 96
      %v1913 = vpop.permute.xlu0 %1912
      %1914 = vrot.lane.b32.xlu0 %v1881, 96
      %v1915 = vpop.permute.xlu0 %1914
      %1916 = vrot.lane.b32.xlu0 %v1882, 96
      %v1917 = vpop.permute.xlu0 %1916
      %1918 = vrot.lane.b32.xlu0 %v1883, 96
      %v1919 = vpop.permute.xlu0 %1918
      %1920 = vrot.lane.b32.xlu0 %v1884, 96
      %v1921 = vpop.permute.xlu0 %1920
      %1922 = vrot.lane.b32.xlu0 %v1885, 96
      %v1923 = vpop.permute.xlu0 %1922
      %1924 = vrot.lane.b32.xlu0 %v1886, 96
      %v1925 = vpop.permute.xlu0 %1924
      %1926 = vrot.lane.b32.xlu0 %v1887, 96
      %v1927 = vpop.permute.xlu0 %1926
      %1928 = vrot.lane.b32.xlu0 %v1888, 96
      %v1929 = vpop.permute.xlu0 %1928
      %1930 = vrot.lane.b32.xlu0 %v1889, 96
      %v1931 = vpop.permute.xlu0 %1930
      %1932 = vrot.lane.b32.xlu0 %v1890, 96
      %v1933 = vpop.permute.xlu0 %1932
      %1934 = vrot.lane.b32.xlu0 %v1891, 96
      %v1935 = vpop.permute.xlu0 %1934
      %1936 = vrot.lane.b32.xlu0 %v1892, 96
      %v1937 = vpop.permute.xlu0 %1936
      %1938 = vrot.lane.b32.xlu0 %v1893, 96
      %v1939 = vpop.permute.xlu0 %1938
      %1940 = vrot.lane.b32.xlu0 %v1894, 96
      %v1941 = vpop.permute.xlu0 %1940
      %1942 = vrot.lane.b32.xlu0 %v1895, 96
      %v1943 = vpop.permute.xlu0 %1942
      %v1960 = vsel %vm614, %v1913, %v1833
      %v1961 = vsel %vm614, %v1915, %v1835
      %v1962 = vsel %vm614, %v1917, %v1837
      %v1963 = vsel %vm614, %v1919, %v1839
      %v1964 = vsel %vm614, %v1921, %v1841
      %v1965 = vsel %vm614, %v1923, %v1843
      %v1966 = vsel %vm614, %v1925, %v1845
      %v1967 = vsel %vm614, %v1927, %v1847
      %v1968 = vsel %vm614, %v1929, %v1849
      %v1969 = vsel %vm614, %v1931, %v1851
      %v1970 = vsel %vm614, %v1933, %v1853
      %v1971 = vsel %vm614, %v1935, %v1855
      %v1972 = vsel %vm614, %v1937, %v1857
      %v1973 = vsel %vm614, %v1939, %v1859
      %v1974 = vsel %vm614, %v1941, %v1861
      %v1975 = vsel %vm614, %v1943, %v1863
      %v1976 = vpack.c.bf16 %v1961, %v1960
      %v1977 = vpack.c.bf16 %v1963, %v1962
      %v1978 = vpack.c.bf16 %v1965, %v1964
      %v1979 = vpack.c.bf16 %v1967, %v1966
      %v1980 = vpack.c.bf16 %v1969, %v1968
      %v1981 = vpack.c.bf16 %v1971, %v1970
      %v1982 = vpack.c.bf16 %v1973, %v1972
      %v1983 = vpack.c.bf16 %v1975, %v1974
      %v1985 = vsel %vm614, %v845, 0
      %v1988 = vsel %vm614, %v846, 0
      %v1991 = vsel %vm614, %v847, 0
      %v1994 = vsel %vm614, %v848, 0
      %v1997 = vsel %vm614, %v1808, 0
      %v2000 = vsel %vm614, %v1809, 0
      %v2003 = vsel %vm614, %v1810, 0
      %v2006 = vsel %vm614, %v1811, 0
      %v2009 = vsel %vm614, %v1812, 0
      %v2012 = vsel %vm614, %v1813, 0
      %v2015 = vsel %vm614, %v1814, 0
      %v2018 = vsel %vm614, %v1815, 0
      %2020 = vmatprep.subr.bf16.mxu0 0
      %2021 = vmatpush1.bf16.xpose.msra.mxu0 %v1997
      %2022 = vmatprep.subr.bf16.mxu0 0
      %2023 = vmatpush1.bf16.xpose.msra.mxu0 %v2000
      %2024 = vmatprep.subr.bf16.mxu0 0
      %2025 = vmatpush1.bf16.xpose.msra.mxu0 %v2003
      %2026 = vmatprep.subr.bf16.mxu0 0
      %2027 = vmatpush1.bf16.xpose.msra.mxu0 %v2006
      %2028 = vmatprep.subr.bf16.mxu0 0
      %2029 = vmatpush1.bf16.xpose.msra.mxu0 %v2009
      %2030 = vmatprep.subr.bf16.mxu0 0
      %2031 = vmatpush1.bf16.xpose.msra.mxu0 %v2012
      %2032 = vmatprep.subr.bf16.mxu0 0
      %2033 = vmatpush1.bf16.xpose.msra.mxu0 %v2015
      %2034 = vmatprep.subr.bf16.mxu0 0
      %2035 = vmatpush1.bf16.xpose.msra.mxu0 %v2018
      %2036 = vmatprep.subr.bf16.mxu0 0
      %2037 = vmatpush1.bf16.xpose.msra.mxu0 0
      %2038 = vmatprep.subr.bf16.mxu0 0
      %2039 = vmatpush1.bf16.xpose.msra.mxu0 0
      %2040 = vmatprep.subr.bf16.mxu0 0
      %2041 = vmatpush1.bf16.xpose.msra.mxu0 0
      %2042 = vmatprep.subr.bf16.mxu0 0
      %2043 = vmatpush1.bf16.xpose.msra.mxu0 0
      %2044 = vmatprep.subr.bf16.mxu0 0
      %2045 = vmatpush1.bf16.xpose.msra.mxu0 0
      %2046 = vmatprep.subr.bf16.mxu0 0
      %2047 = vmatpush1.bf16.xpose.msra.mxu0 0
      %2048 = vmatprep.subr.bf16.mxu0 0
      %2049 = vmatpush1.bf16.xpose.msra.mxu0 0
      %2050 = vmatprep.subr.bf16.mxu0 0
      %2051 = vmatpush1.bf16.xpose.msra.mxu0 0
      %2052 = vmatprep.mubr.bf16.mxu0 0
      %2053 = vmatmul.mubr.bf16.gmra.mrb[0].mxu0 %v1985
      %v2054 = vpop.f32.mrb[0].mxu0
      %v2055 = vadd.f32 0.0, %v2054
      %v2056 = vpop.f32.mrb[0].mxu0
      %v2057 = vpop.f32.mrb[0].mxu0
      %v2058 = vadd.f32 0.0, %v2057
      %v2059 = vpop.f32.mrb[0].mxu0
      %2060 = vmatprep.mubr.bf16.mxu0 0
      %2061 = vmatmul.mubr.bf16.gmra.mrb[0].mxu0 %v1988
      %v2062 = vpop.f32.mrb[0].mxu0
      %v2063 = vadd.f32 0.0, %v2062
      %v2064 = vpop.f32.mrb[0].mxu0
      %v2065 = vpop.f32.mrb[0].mxu0
      %v2066 = vadd.f32 0.0, %v2065
      %v2067 = vpop.f32.mrb[0].mxu0
      %2068 = vmatprep.mubr.bf16.mxu0 0
      %2069 = vmatmul.mubr.bf16.gmra.mrb[0].mxu0 %v1991
      %v2070 = vpop.f32.mrb[0].mxu0
      %v2071 = vadd.f32 0.0, %v2070
      %v2072 = vpop.f32.mrb[0].mxu0
      %v2073 = vpop.f32.mrb[0].mxu0
      %v2074 = vadd.f32 0.0, %v2073
      %v2075 = vpop.f32.mrb[0].mxu0
      %2076 = vmatprep.mubr.bf16.mxu0 0
      %2077 = vmatmul.mubr.bf16.gmra.mrb[0].mxu0 %v1994
      %v2078 = vpop.f32.mrb[0].mxu0
      %v2079 = vadd.f32 0.0, %v2078
      %v2080 = vpop.f32.mrb[0].mxu0
      %v2081 = vpop.f32.mrb[0].mxu0
      %v2082 = vadd.f32 0.0, %v2081
      %v2083 = vpop.f32.mrb[0].mxu0
      %2084 = vdwg.mxu0
      %vm2085 = vcmask 130048
      %v2086 = vsel %vm2085, %v2055, -inf
      %2087 = vmax.xlane.f32.xlu0 %v2086
      %v2088 = vpop.xlane.xlu0 %2087
      %v2089 = vsel %vm2085, %v2058, -inf
      %2090 = vmax.xlane.f32.xlu0 %v2089
      %v2091 = vpop.xlane.xlu0 %2090
      %v2092 = vsel %vm2085, %v2063, -inf
      %2093 = vmax.xlane.f32.xlu0 %v2092
      %v2094 = vpop.xlane.xlu0 %2093
      %v2095 = vsel %vm2085, %v2066, -inf
      %2096 = vmax.xlane.f32.xlu0 %v2095
      %v2097 = vpop.xlane.xlu0 %2096
      %v2098 = vsel %vm2085, %v2071, -inf
      %2099 = vmax.xlane.f32.xlu0 %v2098
      %v2100 = vpop.xlane.xlu0 %2099
      %v2101 = vsel %vm2085, %v2074, -inf
      %2102 = vmax.xlane.f32.xlu0 %v2101
      %v2103 = vpop.xlane.xlu0 %2102
      %v2104 = vsel %vm2085, %v2079, -inf
      %2105 = vmax.xlane.f32.xlu0 %v2104
      %v2106 = vpop.xlane.xlu0 %2105
      %v2107 = vsel %vm2085, %v2082, -inf
      %2108 = vmax.xlane.f32.xlu0 %v2107
      %v2109 = vpop.xlane.xlu0 %2108
      %v2110 = vsub.f32 %v2055, %v2088
      %v2111 = vsub.f32 %v2058, %v2091
      %v2112 = vsub.f32 %v2063, %v2094
      %v2113 = vsub.f32 %v2066, %v2097
      %v2114 = vsub.f32 %v2071, %v2100
      %v2115 = vsub.f32 %v2074, %v2103
      %v2116 = vsub.f32 %v2079, %v2106
      %v2117 = vsub.f32 %v2082, %v2109
      %v2118 = vmul.f32 %v2110, 1.442695
      %v2119 = vpow.pop %v2118
      %v2120 = vmul.f32 %v2111, 1.442695
      %v2121 = vpow.pop %v2120
      %v2122 = vmul.f32 %v2112, 1.442695
      %v2123 = vpow.pop %v2122
      %v2124 = vmul.f32 %v2113, 1.442695
      %v2125 = vpow.pop %v2124
      %v2126 = vmul.f32 %v2114, 1.442695
      %v2127 = vpow.pop %v2126
      %v2128 = vmul.f32 %v2115, 1.442695
      %v2129 = vpow.pop %v2128
      %v2130 = vmul.f32 %v2116, 1.442695
      %v2131 = vpow.pop %v2130
      %v2132 = vmul.f32 %v2117, 1.442695
      %v2133 = vpow.pop %v2132
      %vm2134 = vcmask 261248
      %v2135 = vsel %vm2134, %v2055, -inf
      %2136 = vmax.xlane.f32.xlu0 %v2135
      %v2137 = vpop.xlane.xlu0 %2136
      %v2138 = vsel %vm2134, %v2058, -inf
      %2139 = vmax.xlane.f32.xlu0 %v2138
      %v2140 = vpop.xlane.xlu0 %2139
      %v2141 = vsel %vm2134, %v2063, -inf
      %2142 = vmax.xlane.f32.xlu0 %v2141
      %v2143 = vpop.xlane.xlu0 %2142
      %v2144 = vsel %vm2134, %v2066, -inf
      %2145 = vmax.xlane.f32.xlu0 %v2144
      %v2146 = vpop.xlane.xlu0 %2145
      %v2147 = vsel %vm2134, %v2071, -inf
      %2148 = vmax.xlane.f32.xlu0 %v2147
      %v2149 = vpop.xlane.xlu0 %2148
      %v2150 = vsel %vm2134, %v2074, -inf
      %2151 = vmax.xlane.f32.xlu0 %v2150
      %v2152 = vpop.xlane.xlu0 %2151
      %v2153 = vsel %vm2134, %v2079, -inf
      %2154 = vmax.xlane.f32.xlu0 %v2153
      %v2155 = vpop.xlane.xlu0 %2154
      %v2156 = vsel %vm2134, %v2082, -inf
      %2157 = vmax.xlane.f32.xlu0 %v2156
      %v2158 = vpop.xlane.xlu0 %2157
      %v2159 = vsub.f32 %v2055, %v2137
      %v2160 = vsub.f32 %v2058, %v2140
      %v2161 = vsub.f32 %v2063, %v2143
      %v2162 = vsub.f32 %v2066, %v2146
      %v2163 = vsub.f32 %v2071, %v2149
      %v2164 = vsub.f32 %v2074, %v2152
      %v2165 = vsub.f32 %v2079, %v2155
      %v2166 = vsub.f32 %v2082, %v2158
      %v2167 = vmul.f32 %v2159, 1.442695
      %v2168 = vpow.pop %v2167
      %v2169 = vmul.f32 %v2160, 1.442695
      %v2170 = vpow.pop %v2169
      %v2171 = vmul.f32 %v2161, 1.442695
      %v2172 = vpow.pop %v2171
      %v2173 = vmul.f32 %v2162, 1.442695
      %v2174 = vpow.pop %v2173
      %v2175 = vmul.f32 %v2163, 1.442695
      %v2176 = vpow.pop %v2175
      %v2177 = vmul.f32 %v2164, 1.442695
      %v2178 = vpow.pop %v2177
      %v2179 = vmul.f32 %v2165, 1.442695
      %v2180 = vpow.pop %v2179
      %v2181 = vmul.f32 %v2166, 1.442695
      %v2182 = vpow.pop %v2181
      %vm2183 = vcmask 392448
      %v2184 = vsel %vm2183, %v2055, -inf
      %2185 = vmax.xlane.f32.xlu0 %v2184
      %v2186 = vpop.xlane.xlu0 %2185
      %v2187 = vsel %vm2183, %v2058, -inf
      %2188 = vmax.xlane.f32.xlu0 %v2187
      %v2189 = vpop.xlane.xlu0 %2188
      %v2190 = vsel %vm2183, %v2063, -inf
      %2191 = vmax.xlane.f32.xlu0 %v2190
      %v2192 = vpop.xlane.xlu0 %2191
      %v2193 = vsel %vm2183, %v2066, -inf
      %2194 = vmax.xlane.f32.xlu0 %v2193
      %v2195 = vpop.xlane.xlu0 %2194
      %v2196 = vsel %vm2183, %v2071, -inf
      %2197 = vmax.xlane.f32.xlu0 %v2196
      %v2198 = vpop.xlane.xlu0 %2197
      %v2199 = vsel %vm2183, %v2074, -inf
      %2200 = vmax.xlane.f32.xlu0 %v2199
      %v2201 = vpop.xlane.xlu0 %2200
      %v2202 = vsel %vm2183, %v2079, -inf
      %2203 = vmax.xlane.f32.xlu0 %v2202
      %v2204 = vpop.xlane.xlu0 %2203
      %v2205 = vsel %vm2183, %v2082, -inf
      %2206 = vmax.xlane.f32.xlu0 %v2205
      %v2207 = vpop.xlane.xlu0 %2206
      %v2208 = vsub.f32 %v2055, %v2186
      %v2209 = vsub.f32 %v2058, %v2189
      %v2210 = vsub.f32 %v2063, %v2192
      %v2211 = vsub.f32 %v2066, %v2195
      %v2212 = vsub.f32 %v2071, %v2198
      %v2213 = vsub.f32 %v2074, %v2201
      %v2214 = vsub.f32 %v2079, %v2204
      %v2215 = vsub.f32 %v2082, %v2207
      %v2216 = vmul.f32 %v2208, 1.442695
      %v2217 = vpow.pop %v2216
      %v2218 = vmul.f32 %v2209, 1.442695
      %v2219 = vpow.pop %v2218
      %v2220 = vmul.f32 %v2210, 1.442695
      %v2221 = vpow.pop %v2220
      %v2222 = vmul.f32 %v2211, 1.442695
      %v2223 = vpow.pop %v2222
      %v2224 = vmul.f32 %v2212, 1.442695
      %v2225 = vpow.pop %v2224
      %v2226 = vmul.f32 %v2213, 1.442695
      %v2227 = vpow.pop %v2226
      %v2228 = vmul.f32 %v2214, 1.442695
      %v2229 = vpow.pop %v2228
      %v2230 = vmul.f32 %v2215, 1.442695
      %v2231 = vpow.pop %v2230
      %vm2232 = vcmask 523648
      %v2233 = vsel %vm2232, %v2055, -inf
      %2234 = vmax.xlane.f32.xlu0 %v2233
      %v2235 = vpop.xlane.xlu0 %2234
      %v2236 = vsel %vm2232, %v2058, -inf
      %2237 = vmax.xlane.f32.xlu0 %v2236
      %v2238 = vpop.xlane.xlu0 %2237
      %v2239 = vsel %vm2232, %v2063, -inf
      %2240 = vmax.xlane.f32.xlu0 %v2239
      %v2241 = vpop.xlane.xlu0 %2240
      %v2242 = vsel %vm2232, %v2066, -inf
      %2243 = vmax.xlane.f32.xlu0 %v2242
      %v2244 = vpop.xlane.xlu0 %2243
      %v2245 = vsel %vm2232, %v2071, -inf
      %2246 = vmax.xlane.f32.xlu0 %v2245
      %v2247 = vpop.xlane.xlu0 %2246
      %v2248 = vsel %vm2232, %v2074, -inf
      %2249 = vmax.xlane.f32.xlu0 %v2248
      %v2250 = vpop.xlane.xlu0 %2249
      %v2251 = vsel %vm2232, %v2079, -inf
      %2252 = vmax.xlane.f32.xlu0 %v2251
      %v2253 = vpop.xlane.xlu0 %2252
      %v2254 = vsel %vm2232, %v2082, -inf
      %2255 = vmax.xlane.f32.xlu0 %v2254
      %v2256 = vpop.xlane.xlu0 %2255
      %v2257 = vsub.f32 %v2055, %v2235
      %v2258 = vsub.f32 %v2058, %v2238
      %v2259 = vsub.f32 %v2063, %v2241
      %v2260 = vsub.f32 %v2066, %v2244
      %v2261 = vsub.f32 %v2071, %v2247
      %v2262 = vsub.f32 %v2074, %v2250
      %v2263 = vsub.f32 %v2079, %v2253
      %v2264 = vsub.f32 %v2082, %v2256
      %v2265 = vmul.f32 %v2257, 1.442695
      %v2266 = vpow.pop %v2265
      %v2267 = vmul.f32 %v2258, 1.442695
      %v2268 = vpow.pop %v2267
      %v2269 = vmul.f32 %v2259, 1.442695
      %v2270 = vpow.pop %v2269
      %v2271 = vmul.f32 %v2260, 1.442695
      %v2272 = vpow.pop %v2271
      %v2273 = vmul.f32 %v2261, 1.442695
      %v2274 = vpow.pop %v2273
      %v2275 = vmul.f32 %v2262, 1.442695
      %v2276 = vpow.pop %v2275
      %v2277 = vmul.f32 %v2263, 1.442695
      %v2278 = vpow.pop %v2277
      %v2279 = vmul.f32 %v2264, 1.442695
      %v2280 = vpow.pop %v2279
      %vm2281 = vcmask 654848
      %v2282 = vsel %vm2281, %v2055, -inf
      %2283 = vmax.xlane.f32.xlu0 %v2282
      %v2284 = vpop.xlane.xlu0 %2283
      %v2285 = vsel %vm2281, %v2058, -inf
      %2286 = vmax.xlane.f32.xlu0 %v2285
      %v2287 = vpop.xlane.xlu0 %2286
      %v2288 = vsel %vm2281, %v2063, -inf
      %2289 = vmax.xlane.f32.xlu0 %v2288
      %v2290 = vpop.xlane.xlu0 %2289
      %v2291 = vsel %vm2281, %v2066, -inf
      %2292 = vmax.xlane.f32.xlu0 %v2291
      %v2293 = vpop.xlane.xlu0 %2292
      %v2294 = vsel %vm2281, %v2071, -inf
      %2295 = vmax.xlane.f32.xlu0 %v2294
      %v2296 = vpop.xlane.xlu0 %2295
      %v2297 = vsel %vm2281, %v2074, -inf
      %2298 = vmax.xlane.f32.xlu0 %v2297
      %v2299 = vpop.xlane.xlu0 %2298
      %v2300 = vsel %vm2281, %v2079, -inf
      %2301 = vmax.xlane.f32.xlu0 %v2300
      %v2302 = vpop.xlane.xlu0 %2301
      %v2303 = vsel %vm2281, %v2082, -inf
      %2304 = vmax.xlane.f32.xlu0 %v2303
      %v2305 = vpop.xlane.xlu0 %2304
      %v2306 = vsub.f32 %v2055, %v2284
      %v2307 = vsub.f32 %v2058, %v2287
      %v2308 = vsub.f32 %v2063, %v2290
      %v2309 = vsub.f32 %v2066, %v2293
      %v2310 = vsub.f32 %v2071, %v2296
      %v2311 = vsub.f32 %v2074, %v2299
      %v2312 = vsub.f32 %v2079, %v2302
      %v2313 = vsub.f32 %v2082, %v2305
      %v2314 = vmul.f32 %v2306, 1.442695
      %v2315 = vpow.pop %v2314
      %v2316 = vmul.f32 %v2307, 1.442695
      %v2317 = vpow.pop %v2316
      %v2318 = vmul.f32 %v2308, 1.442695
      %v2319 = vpow.pop %v2318
      %v2320 = vmul.f32 %v2309, 1.442695
      %v2321 = vpow.pop %v2320
      %v2322 = vmul.f32 %v2310, 1.442695
      %v2323 = vpow.pop %v2322
      %v2324 = vmul.f32 %v2311, 1.442695
      %v2325 = vpow.pop %v2324
      %v2326 = vmul.f32 %v2312, 1.442695
      %v2327 = vpow.pop %v2326
      %v2328 = vmul.f32 %v2313, 1.442695
      %v2329 = vpow.pop %v2328
      %vm2330 = vcmask 786048
      %v2331 = vsel %vm2330, %v2055, -inf
      %2332 = vmax.xlane.f32.xlu0 %v2331
      %v2333 = vpop.xlane.xlu0 %2332
      %v2334 = vsel %vm2330, %v2058, -inf
      %2335 = vmax.xlane.f32.xlu0 %v2334
      %v2336 = vpop.xlane.xlu0 %2335
      %v2337 = vsel %vm2330, %v2063, -inf
      %2338 = vmax.xlane.f32.xlu0 %v2337
      %v2339 = vpop.xlane.xlu0 %2338
      %v2340 = vsel %vm2330, %v2066, -inf
      %2341 = vmax.xlane.f32.xlu0 %v2340
      %v2342 = vpop.xlane.xlu0 %2341
      %v2343 = vsel %vm2330, %v2071, -inf
      %2344 = vmax.xlane.f32.xlu0 %v2343
      %v2345 = vpop.xlane.xlu0 %2344
      %v2346 = vsel %vm2330, %v2074, -inf
      %2347 = vmax.xlane.f32.xlu0 %v2346
      %v2348 = vpop.xlane.xlu0 %2347
      %v2349 = vsel %vm2330, %v2079, -inf
      %2350 = vmax.xlane.f32.xlu0 %v2349
      %v2351 = vpop.xlane.xlu0 %2350
      %v2352 = vsel %vm2330, %v2082, -inf
      %2353 = vmax.xlane.f32.xlu0 %v2352
      %v2354 = vpop.xlane.xlu0 %2353
      %v2355 = vsub.f32 %v2055, %v2333
      %v2356 = vsub.f32 %v2058, %v2336
      %v2357 = vsub.f32 %v2063, %v2339
      %v2358 = vsub.f32 %v2066, %v2342
      %v2359 = vsub.f32 %v2071, %v2345
      %v2360 = vsub.f32 %v2074, %v2348
      %v2361 = vsub.f32 %v2079, %v2351
      %v2362 = vsub.f32 %v2082, %v2354
      %v2363 = vmul.f32 %v2355, 1.442695
      %v2364 = vpow.pop %v2363
      %v2365 = vmul.f32 %v2356, 1.442695
      %v2366 = vpow.pop %v2365
      %v2367 = vmul.f32 %v2357, 1.442695
      %v2368 = vpow.pop %v2367
      %v2369 = vmul.f32 %v2358, 1.442695
      %v2370 = vpow.pop %v2369
      %v2371 = vmul.f32 %v2359, 1.442695
      %v2372 = vpow.pop %v2371
      %v2373 = vmul.f32 %v2360, 1.442695
      %v2374 = vpow.pop %v2373
      %v2375 = vmul.f32 %v2361, 1.442695
      %v2376 = vpow.pop %v2375
      %v2377 = vmul.f32 %v2362, 1.442695
      %v2378 = vpow.pop %v2377
      %vm2379 = vcmask 917248
      %v2380 = vsel %vm2379, %v2055, -inf
      %2381 = vmax.xlane.f32.xlu0 %v2380
      %v2382 = vpop.xlane.xlu0 %2381
      %v2383 = vsel %vm2379, %v2058, -inf
      %2384 = vmax.xlane.f32.xlu0 %v2383
      %v2385 = vpop.xlane.xlu0 %2384
      %v2386 = vsel %vm2379, %v2063, -inf
      %2387 = vmax.xlane.f32.xlu0 %v2386
      %v2388 = vpop.xlane.xlu0 %2387
      %v2389 = vsel %vm2379, %v2066, -inf
      %2390 = vmax.xlane.f32.xlu0 %v2389
      %v2391 = vpop.xlane.xlu0 %2390
      %v2392 = vsel %vm2379, %v2071, -inf
      %2393 = vmax.xlane.f32.xlu0 %v2392
      %v2394 = vpop.xlane.xlu0 %2393
      %v2395 = vsel %vm2379, %v2074, -inf
      %2396 = vmax.xlane.f32.xlu0 %v2395
      %v2397 = vpop.xlane.xlu0 %2396
      %v2398 = vsel %vm2379, %v2079, -inf
      %2399 = vmax.xlane.f32.xlu0 %v2398
      %v2400 = vpop.xlane.xlu0 %2399
      %v2401 = vsel %vm2379, %v2082, -inf
      %2402 = vmax.xlane.f32.xlu0 %v2401
      %v2403 = vpop.xlane.xlu0 %2402
      %v2404 = vsub.f32 %v2055, %v2382
      %v2405 = vsub.f32 %v2058, %v2385
      %v2406 = vsub.f32 %v2063, %v2388
      %v2407 = vsub.f32 %v2066, %v2391
      %v2408 = vsub.f32 %v2071, %v2394
      %v2409 = vsub.f32 %v2074, %v2397
      %v2410 = vsub.f32 %v2079, %v2400
      %v2411 = vsub.f32 %v2082, %v2403
      %v2412 = vmul.f32 %v2404, 1.442695
      %v2413 = vpow.pop %v2412
      %v2414 = vmul.f32 %v2405, 1.442695
      %v2415 = vpow.pop %v2414
      %v2416 = vmul.f32 %v2406, 1.442695
      %v2417 = vpow.pop %v2416
      %v2418 = vmul.f32 %v2407, 1.442695
      %v2419 = vpow.pop %v2418
      %v2420 = vmul.f32 %v2408, 1.442695
      %v2421 = vpow.pop %v2420
      %v2422 = vmul.f32 %v2409, 1.442695
      %v2423 = vpow.pop %v2422
      %v2424 = vmul.f32 %v2410, 1.442695
      %v2425 = vpow.pop %v2424
      %v2426 = vmul.f32 %v2411, 1.442695
      %v2427 = vpow.pop %v2426
      %vm2428 = vcmask 1048448
      %v2429 = vsel %vm2428, %v2055, -inf
      %2430 = vmax.xlane.f32.xlu0 %v2429
      %v2431 = vpop.xlane.xlu0 %2430
      %v2432 = vsel %vm2428, %v2058, -inf
      %2433 = vmax.xlane.f32.xlu0 %v2432
      %v2434 = vpop.xlane.xlu0 %2433
      %v2435 = vsel %vm2428, %v2063, -inf
      %2436 = vmax.xlane.f32.xlu0 %v2435
      %v2437 = vpop.xlane.xlu0 %2436
      %v2438 = vsel %vm2428, %v2066, -inf
      %2439 = vmax.xlane.f32.xlu0 %v2438
      %v2440 = vpop.xlane.xlu0 %2439
      %v2441 = vsel %vm2428, %v2071, -inf
      %2442 = vmax.xlane.f32.xlu0 %v2441
      %v2443 = vpop.xlane.xlu0 %2442
      %v2444 = vsel %vm2428, %v2074, -inf
      %2445 = vmax.xlane.f32.xlu0 %v2444
      %v2446 = vpop.xlane.xlu0 %2445
      %v2447 = vsel %vm2428, %v2079, -inf
      %2448 = vmax.xlane.f32.xlu0 %v2447
      %v2449 = vpop.xlane.xlu0 %2448
      %v2450 = vsel %vm2428, %v2082, -inf
      %2451 = vmax.xlane.f32.xlu0 %v2450
      %v2452 = vpop.xlane.xlu0 %2451
      %v2453 = vsub.f32 %v2055, %v2431
      %v2454 = vsub.f32 %v2058, %v2434
      %v2455 = vsub.f32 %v2063, %v2437
      %v2456 = vsub.f32 %v2066, %v2440
      %v2457 = vsub.f32 %v2071, %v2443
      %v2458 = vsub.f32 %v2074, %v2446
      %v2459 = vsub.f32 %v2079, %v2449
      %v2460 = vsub.f32 %v2082, %v2452
      %v2461 = vmul.f32 %v2453, 1.442695
      %v2462 = vpow.pop %v2461
      %v2463 = vmul.f32 %v2454, 1.442695
      %v2464 = vpow.pop %v2463
      %v2465 = vmul.f32 %v2455, 1.442695
      %v2466 = vpow.pop %v2465
      %v2467 = vmul.f32 %v2456, 1.442695
      %v2468 = vpow.pop %v2467
      %v2469 = vmul.f32 %v2457, 1.442695
      %v2470 = vpow.pop %v2469
      %v2471 = vmul.f32 %v2458, 1.442695
      %v2472 = vpow.pop %v2471
      %v2473 = vmul.f32 %v2459, 1.442695
      %v2474 = vpow.pop %v2473
      %v2475 = vmul.f32 %v2460, 1.442695
      %v2476 = vpow.pop %v2475
      %v2477 = vsel %vm2085, %v2119, %v2168
      %v2478 = vsel %vm2085, %v2121, %v2170
      %v2479 = vsel %vm2085, %v2123, %v2172
      %v2480 = vsel %vm2085, %v2125, %v2174
      %v2481 = vsel %vm2085, %v2127, %v2176
      %v2482 = vsel %vm2085, %v2129, %v2178
      %v2483 = vsel %vm2085, %v2131, %v2180
      %v2484 = vsel %vm2085, %v2133, %v2182
      %v2485 = vsel %vm614, %v2477, %v2217
      %v2486 = vsel %vm614, %v2478, %v2219
      %v2487 = vsel %vm614, %v2479, %v2221
      %v2488 = vsel %vm614, %v2480, %v2223
      %v2489 = vsel %vm614, %v2481, %v2225
      %v2490 = vsel %vm614, %v2482, %v2227
      %v2491 = vsel %vm614, %v2483, %v2229
      %v2492 = vsel %vm614, %v2484, %v2231
      %vm2493 = vcmask 392192
      %v2494 = vsel %vm2493, %v2485, %v2266
      %v2495 = vsel %vm2493, %v2486, %v2268
      %v2496 = vsel %vm2493, %v2487, %v2270
      %v2497 = vsel %vm2493, %v2488, %v2272
      %v2498 = vsel %vm2493, %v2489, %v2274
      %v2499 = vsel %vm2493, %v2490, %v2276
      %v2500 = vsel %vm2493, %v2491, %v2278
      %v2501 = vsel %vm2493, %v2492, %v2280
      %v2502 = vsel %vm889, %v2494, %v2315
      %v2503 = vsel %vm889, %v2495, %v2317
      %v2504 = vsel %vm889, %v2496, %v2319
      %v2505 = vsel %vm889, %v2497, %v2321
      %v2506 = vsel %vm889, %v2498, %v2323
      %v2507 = vsel %vm889, %v2499, %v2325
      %v2508 = vsel %vm889, %v2500, %v2327
      %v2509 = vsel %vm889, %v2501, %v2329
      %vm2510 = vcmask 654336
      %v2511 = vsel %vm2510, %v2502, %v2364
      %v2512 = vsel %vm2510, %v2503, %v2366
      %v2513 = vsel %vm2510, %v2504, %v2368
      %v2514 = vsel %vm2510, %v2505, %v2370
      %v2515 = vsel %vm2510, %v2506, %v2372
      %v2516 = vsel %vm2510, %v2507, %v2374
      %v2517 = vsel %vm2510, %v2508, %v2376
      %v2518 = vsel %vm2510, %v2509, %v2378
      %v2519 = vsel %vm1125, %v2511, %v2413
      %v2520 = vsel %vm1125, %v2512, %v2415
      %v2521 = vsel %vm1125, %v2513, %v2417
      %v2522 = vsel %vm1125, %v2514, %v2419
      %v2523 = vsel %vm1125, %v2515, %v2421
      %v2524 = vsel %vm1125, %v2516, %v2423
      %v2525 = vsel %vm1125, %v2517, %v2425
      %v2526 = vsel %vm1125, %v2518, %v2427
      %vm2527 = vcmask 916480
      %v2528 = vsel %vm2527, %v2519, %v2462
      %v2529 = vsel %vm2527, %v2520, %v2464
      %v2530 = vsel %vm2527, %v2521, %v2466
      %v2531 = vsel %vm2527, %v2522, %v2468
      %v2532 = vsel %vm2527, %v2523, %v2470
      %v2533 = vsel %vm2527, %v2524, %v2472
      %v2534 = vsel %vm2527, %v2525, %v2474
      %v2535 = vsel %vm2527, %v2526, %v2476
      %v2536 = vpack.c.bf16 %v2529, %v2528
      %v2537 = vpack.c.bf16 %v2531, %v2530
      %v2538 = vpack.c.bf16 %v2533, %v2532
      %v2539 = vpack.c.bf16 %v2535, %v2534
      %2540 = vmatprep.subr.bf16.mxu0 0
      %2541 = vmatpush1.bf16.msra.mxu0 %v1976
      %2542 = vmatprep.subr.bf16.mxu0 0
      %2543 = vmatpush1.bf16.msra.mxu0 %v1977
      %2544 = vmatprep.subr.bf16.mxu0 0
      %2545 = vmatpush1.bf16.msra.mxu0 %v1978
      %2546 = vmatprep.subr.bf16.mxu0 0
      %2547 = vmatpush1.bf16.msra.mxu0 %v1979
      %2548 = vmatprep.subr.bf16.mxu0 0
      %2549 = vmatpush1.bf16.msra.mxu0 %v1980
      %2550 = vmatprep.subr.bf16.mxu0 0
      %2551 = vmatpush1.bf16.msra.mxu0 %v1981
      %2552 = vmatprep.subr.bf16.mxu0 0
      %2553 = vmatpush1.bf16.msra.mxu0 %v1982
      %2554 = vmatprep.subr.bf16.mxu0 0
      %2555 = vmatpush1.bf16.msra.mxu0 %v1983
      %2556 = vmatprep.subr.bf16.mxu0 0
      %2557 = vmatpush1.bf16.msra.mxu0 0
      %2558 = vmatprep.subr.bf16.mxu0 0
      %2559 = vmatpush1.bf16.msra.mxu0 0
      %2560 = vmatprep.subr.bf16.mxu0 0
      %2561 = vmatpush1.bf16.msra.mxu0 0
      %2562 = vmatprep.subr.bf16.mxu0 0
      %2563 = vmatpush1.bf16.msra.mxu0 0
      %2564 = vmatprep.subr.bf16.mxu0 0
      %2565 = vmatpush1.bf16.msra.mxu0 0
      %2566 = vmatprep.subr.bf16.mxu0 0
      %2567 = vmatpush1.bf16.msra.mxu0 0
      %2568 = vmatprep.subr.bf16.mxu0 0
      %2569 = vmatpush1.bf16.msra.mxu0 0
      %2570 = vmatprep.subr.bf16.mxu0 0
      %2571 = vmatpush1.bf16.msra.mxu0 0
      %2572 = vmatprep.mubr.bf16.mxu0 0
      %2573 = vmatmul.mubr.bf16.gmra.mrb[0].mxu0 %v2536
      %v2574 = vpop.f32.mrb[0].mxu0
      %v2575 = vadd.f32 0.0, %v2574
      %v2576 = vpop.f32.mrb[0].mxu0
      %v2577 = vpop.f32.mrb[0].mxu0
      %v2578 = vadd.f32 0.0, %v2577
      %v2579 = vpop.f32.mrb[0].mxu0
      %2580 = vmatprep.mubr.bf16.mxu0 0
      %2581 = vmatmul.mubr.bf16.gmra.mrb[0].mxu0 %v2537
      %v2582 = vpop.f32.mrb[0].mxu0
      %v2583 = vadd.f32 0.0, %v2582
      %v2584 = vpop.f32.mrb[0].mxu0
      %v2585 = vpop.f32.mrb[0].mxu0
      %v2586 = vadd.f32 0.0, %v2585
      %v2587 = vpop.f32.mrb[0].mxu0
      %2588 = vmatprep.mubr.bf16.mxu0 0
      %2589 = vmatmul.mubr.bf16.gmra.mrb[0].mxu0 %v2538
      %v2590 = vpop.f32.mrb[0].mxu0
      %v2591 = vadd.f32 0.0, %v2590
      %v2592 = vpop.f32.mrb[0].mxu0
      %v2593 = vpop.f32.mrb[0].mxu0
      %v2594 = vadd.f32 0.0, %v2593
      %v2595 = vpop.f32.mrb[0].mxu0
      %2596 = vmatprep.mubr.bf16.mxu0 0
      %2597 = vmatmul.mubr.bf16.gmra.mrb[0].mxu0 %v2539
      %v2598 = vpop.f32.mrb[0].mxu0
      %v2599 = vadd.f32 0.0, %v2598
      %v2600 = vpop.f32.mrb[0].mxu0
      %v2601 = vpop.f32.mrb[0].mxu0
      %v2602 = vadd.f32 0.0, %v2601
      %v2603 = vpop.f32.mrb[0].mxu0
      %2604 = vdwg.mxu0
      %v2605 = vrcp.pop %v2575
      %v2606 = vrcp.pop %v2578
      %v2607 = vrcp.pop %v2583
      %v2608 = vrcp.pop %v2586
      %v2609 = vrcp.pop %v2591
      %v2610 = vrcp.pop %v2594
      %v2611 = vrcp.pop %v2599
      %v2612 = vrcp.pop %v2602
      %2621 = vrot.lane.b32.xlu0 %v2605, 96
      %v2622 = vpop.permute.xlu0 %2621
      %2623 = vrot.lane.b32.xlu0 %v2606, 96
      %v2624 = vpop.permute.xlu0 %2623
      %2625 = vrot.lane.b32.xlu0 %v2607, 96
      %v2626 = vpop.permute.xlu0 %2625
      %2627 = vrot.lane.b32.xlu0 %v2608, 96
      %v2628 = vpop.permute.xlu0 %2627
      %2629 = vrot.lane.b32.xlu0 %v2609, 96
      %v2630 = vpop.permute.xlu0 %2629
      %2631 = vrot.lane.b32.xlu0 %v2610, 96
      %v2632 = vpop.permute.xlu0 %2631
      %2633 = vrot.lane.b32.xlu0 %v2611, 96
      %v2634 = vpop.permute.xlu0 %2633
      %2635 = vrot.lane.b32.xlu0 %v2612, 96
      %v2636 = vpop.permute.xlu0 %2635
      %v2645 = vmul.f32 %v2575, %v2622
      %v2646 = vmul.f32 %v2578, %v2624
      %v2647 = vmul.f32 %v2583, %v2626
      %v2648 = vmul.f32 %v2586, %v2628
      %v2649 = vmul.f32 %v2591, %v2630
      %v2650 = vmul.f32 %v2594, %v2632
      %v2651 = vmul.f32 %v2599, %v2634
      %v2652 = vmul.f32 %v2602, %v2636
      %v2653 = vpack.c.bf16 %v2646, %v2645
      %v2654 = vpack.c.bf16 %v2648, %v2647
      %v2655 = vpack.c.bf16 %v2650, %v2649
      %v2656 = vpack.c.bf16 %v2652, %v2651
      %v2657 = vld [vmem:[%s9] sm:$0xf]
      %v2658 = vld [vmem:[%s9 + $0x4] sm:$0xf]
      %v2659 = vld [vmem:[%s9 + $0x8] sm:$0xf]
      %v2660 = vld [vmem:[%s9 + $0xc] sm:$0xf]
      %v2661 = vld [vmem:[%s10] sm:$0x1]
      %v2663 = vlaneseq
      %v2664 = vshrl.u32 %v2663, 7
      %v2665 = vsub.s32 0, %v2664
      %v2666 = vrot.slane %v2661, %v2665
      %v2672 = vunpack.c.l.b16 %v2657
      %v2673 = vunpack.c.l.b16 %v2658
      %v2674 = vunpack.c.l.b16 %v2659
      %v2675 = vunpack.c.l.b16 %v2660
      %v2676 = vpack.c.b16 %v2673, %v2672
      %v2677 = vpack.c.b16 %v2675, %v2674
      %v2681 = vsel %vm614, %v2653, 0
      %v2684 = vsel %vm614, %v2654, 0
      %v2687 = vsel %vm614, %v2655, 0
      %v2690 = vsel %vm614, %v2656, 0
      %2692 = vmatprep.subr.bf16.mxu0 0
      %2693 = vmatpush1.bf16.msra.mxu0 %v2676
      %2694 = vmatprep.subr.bf16.mxu0 0
      %2695 = vmatpush1.bf16.msra.mxu0 %v2677
      %2696 = vmatprep.subr.bf16.mxu0 0
      %2697 = vmatpush1.bf16.msra.mxu0 0
      %2698 = vmatprep.subr.bf16.mxu0 0
      %2699 = vmatpush1.bf16.msra.mxu0 0
      %2700 = vmatprep.subr.bf16.mxu0 0
      %2701 = vmatpush1.bf16.msra.mxu0 0
      %2702 = vmatprep.subr.bf16.mxu0 0
      %2703 = vmatpush1.bf16.msra.mxu0 0
      %2704 = vmatprep.subr.bf16.mxu0 0
      %2705 = vmatpush1.bf16.msra.mxu0 0
      %2706 = vmatprep.subr.bf16.mxu0 0
      %2707 = vmatpush1.bf16.msra.mxu0 0
      %2708 = vmatprep.subr.bf16.mxu0 0
      %2709 = vmatpush1.bf16.msra.mxu0 0
      %2710 = vmatprep.subr.bf16.mxu0 0
      %2711 = vmatpush1.bf16.msra.mxu0 0
      %2712 = vmatprep.subr.bf16.mxu0 0
      %2713 = vmatpush1.bf16.msra.mxu0 0
      %2714 = vmatprep.subr.bf16.mxu0 0
      %2715 = vmatpush1.bf16.msra.mxu0 0
      %2716 = vmatprep.subr.bf16.mxu0 0
      %2717 = vmatpush1.bf16.msra.mxu0 0
      %2718 = vmatprep.subr.bf16.mxu0 0
      %2719 = vmatpush1.bf16.msra.mxu0 0
      %2720 = vmatprep.subr.bf16.mxu0 0
      %2721 = vmatpush1.bf16.msra.mxu0 0
      %2722 = vmatprep.subr.bf16.mxu0 0
      %2723 = vmatpush1.bf16.msra.mxu0 0
      %2724 = vmatprep.mubr.bf16.mxu0 0
      %2725 = vmatmul.mubr.bf16.gmra.mrb[0].mxu0 %v2681
      %v2726 = vpop.f32.mrb[0].mxu0
      %v2727 = vadd.f32 %v2666, %v2726
      %v2728 = vpop.f32.mrb[0].mxu0
      %v2729 = vpop.f32.mrb[0].mxu0
      %v2730 = vadd.f32 %v2666, %v2729
      %v2731 = vpop.f32.mrb[0].mxu0
      %2732 = vmatprep.mubr.bf16.mxu0 0
      %2733 = vmatmul.mubr.bf16.gmra.mrb[0].mxu0 %v2684
      %v2734 = vpop.f32.mrb[0].mxu0
      %v2735 = vadd.f32 %v2666, %v2734
      %v2736 = vpop.f32.mrb[0].mxu0
      %v2737 = vpop.f32.mrb[0].mxu0
      %v2738 = vadd.f32 %v2666, %v2737
      %v2739 = vpop.f32.mrb[0].mxu0
      %2740 = vmatprep.mubr.bf16.mxu0 0
      %2741 = vmatmul.mubr.bf16.gmra.mrb[0].mxu0 %v2687
      %v2742 = vpop.f32.mrb[0].mxu0
      %v2743 = vadd.f32 %v2666, %v2742
      %v2744 = vpop.f32.mrb[0].mxu0
      %v2745 = vpop.f32.mrb[0].mxu0
      %v2746 = vadd.f32 %v2666, %v2745
      %v2747 = vpop.f32.mrb[0].mxu0
      %2748 = vmatprep.mubr.bf16.mxu0 0
      %2749 = vmatmul.mubr.bf16.gmra.mrb[0].mxu0 %v2690
      %v2750 = vpop.f32.mrb[0].mxu0
      %v2751 = vadd.f32 %v2666, %v2750
      %v2752 = vpop.f32.mrb[0].mxu0
      %v2753 = vpop.f32.mrb[0].mxu0
      %v2754 = vadd.f32 %v2666, %v2753
      %v2755 = vpop.f32.mrb[0].mxu0
      %2756 = vdwg.mxu0
      %v2757 = vadd.f32 %v604, %v2727
      %v2758 = vadd.f32 %v605, %v2730
      %v2759 = vadd.f32 %v606, %v2735
      %v2760 = vadd.f32 %v607, %v2738
      %v2761 = vadd.f32 %v608, %v2743
      %v2762 = vadd.f32 %v609, %v2746
      %v2763 = vadd.f32 %v610, %v2751
      %v2764 = vadd.f32 %v611, %v2754
      %v2765 = vld [vmem:[%s11] sm:$0x1]
      %v2766 = vld [vmem:[%s12] sm:$0x1]
      %v2767 = vsel %vm614, %v2757, 0.0
      %2768 = vadd.xlane.f32.xlu0 %v2767
      %v2769 = vpop.xlane.xlu0 %2768
      %v2770 = vsel %vm614, %v2758, 0.0
      %2771 = vadd.xlane.f32.xlu0 %v2770
      %v2772 = vpop.xlane.xlu0 %2771
      %v2773 = vsel %vm614, %v2759, 0.0
      %2774 = vadd.xlane.f32.xlu0 %v2773
      %v2775 = vpop.xlane.xlu0 %2774
      %v2776 = vsel %vm614, %v2760, 0.0
      %2777 = vadd.xlane.f32.xlu0 %v2776
      %v2778 = vpop.xlane.xlu0 %2777
      %v2779 = vsel %vm614, %v2761, 0.0
      %2780 = vadd.xlane.f32.xlu0 %v2779
      %v2781 = vpop.xlane.xlu0 %2780
      %v2782 = vsel %vm614, %v2762, 0.0
      %2783 = vadd.xlane.f32.xlu0 %v2782
      %v2784 = vpop.xlane.xlu0 %2783
      %v2785 = vsel %vm614, %v2763, 0.0
      %2786 = vadd.xlane.f32.xlu0 %v2785
      %v2787 = vpop.xlane.xlu0 %2786
      %v2788 = vsel %vm614, %v2764, 0.0
      %2789 = vadd.xlane.f32.xlu0 %v2788
      %v2790 = vpop.xlane.xlu0 %2789
      %v2791 = vmul.f32 %v2769, %v639
      %v2792 = vmul.f32 %v2772, %v639
      %v2793 = vmul.f32 %v2775, %v639
      %v2794 = vmul.f32 %v2778, %v639
      %v2795 = vmul.f32 %v2781, %v639
      %v2796 = vmul.f32 %v2784, %v639
      %v2797 = vmul.f32 %v2787, %v639
      %v2798 = vmul.f32 %v2790, %v639
      %v2799 = vsub.f32 %v2757, %v2791
      %v2800 = vsub.f32 %v2758, %v2792
      %v2801 = vsub.f32 %v2759, %v2793
      %v2802 = vsub.f32 %v2760, %v2794
      %v2803 = vsub.f32 %v2761, %v2795
      %v2804 = vsub.f32 %v2762, %v2796
      %v2805 = vsub.f32 %v2763, %v2797
      %v2806 = vsub.f32 %v2764, %v2798
      %v2807 = vmul.f32 %v2799, %v2799
      %v2808 = vmul.f32 %v2800, %v2800
      %v2809 = vmul.f32 %v2801, %v2801
      %v2810 = vmul.f32 %v2802, %v2802
      %v2811 = vmul.f32 %v2803, %v2803
      %v2812 = vmul.f32 %v2804, %v2804
      %v2813 = vmul.f32 %v2805, %v2805
      %v2814 = vmul.f32 %v2806, %v2806
      %v2815 = vsel %vm614, %v2807, 0.0
      %2816 = vadd.xlane.f32.xlu0 %v2815
      %v2817 = vpop.xlane.xlu0 %2816
      %v2818 = vsel %vm614, %v2808, 0.0
      %2819 = vadd.xlane.f32.xlu0 %v2818
      %v2820 = vpop.xlane.xlu0 %2819
      %v2821 = vsel %vm614, %v2809, 0.0
      %2822 = vadd.xlane.f32.xlu0 %v2821
      %v2823 = vpop.xlane.xlu0 %2822
      %v2824 = vsel %vm614, %v2810, 0.0
      %2825 = vadd.xlane.f32.xlu0 %v2824
      %v2826 = vpop.xlane.xlu0 %2825
      %v2827 = vsel %vm614, %v2811, 0.0
      %2828 = vadd.xlane.f32.xlu0 %v2827
      %v2829 = vpop.xlane.xlu0 %2828
      %v2830 = vsel %vm614, %v2812, 0.0
      %2831 = vadd.xlane.f32.xlu0 %v2830
      %v2832 = vpop.xlane.xlu0 %2831
      %v2833 = vsel %vm614, %v2813, 0.0
      %2834 = vadd.xlane.f32.xlu0 %v2833
      %v2835 = vpop.xlane.xlu0 %2834
      %v2836 = vsel %vm614, %v2814, 0.0
      %2837 = vadd.xlane.f32.xlu0 %v2836
      %v2838 = vpop.xlane.xlu0 %2837
      %v2839 = vmul.f32 %v2817, %v639
      %v2840 = vmul.f32 %v2820, %v639
      %v2841 = vmul.f32 %v2823, %v639
      %v2842 = vmul.f32 %v2826, %v639
      %v2843 = vmul.f32 %v2829, %v639
      %v2844 = vmul.f32 %v2832, %v639
      %v2845 = vmul.f32 %v2835, %v639
      %v2846 = vmul.f32 %v2838, %v639
      %v2847 = vadd.f32 %v2839, 1e-05
      %v2848 = vadd.f32 %v2840, 1e-05
      %v2849 = vadd.f32 %v2841, 1e-05
      %v2850 = vadd.f32 %v2842, 1e-05
      %v2851 = vadd.f32 %v2843, 1e-05
      %v2852 = vadd.f32 %v2844, 1e-05
      %v2853 = vadd.f32 %v2845, 1e-05
      %v2854 = vadd.f32 %v2846, 1e-05
      %v2855 = vrsqrt.pop %v2847
      %v2856 = vrsqrt.pop %v2848
      %v2857 = vrsqrt.pop %v2849
      %v2858 = vrsqrt.pop %v2850
      %v2859 = vrsqrt.pop %v2851
      %v2860 = vrsqrt.pop %v2852
      %v2861 = vrsqrt.pop %v2853
      %v2862 = vrsqrt.pop %v2854
      %v2863 = vmul.f32 %v2799, %v2855
      %v2864 = vmul.f32 %v2800, %v2856
      %v2865 = vmul.f32 %v2801, %v2857
      %v2866 = vmul.f32 %v2802, %v2858
      %v2867 = vmul.f32 %v2803, %v2859
      %v2868 = vmul.f32 %v2804, %v2860
      %v2869 = vmul.f32 %v2805, %v2861
      %v2870 = vmul.f32 %v2806, %v2862
      %v2872 = vlaneseq
      %v2873 = vshrl.u32 %v2872, 7
      %v2874 = vsub.s32 0, %v2873
      %v2875 = vrot.slane %v2765, %v2874
      %v2877 = vmul.f32 %v2863, %v2875
      %v2878 = vmul.f32 %v2864, %v2875
      %v2879 = vmul.f32 %v2865, %v2875
      %v2880 = vmul.f32 %v2866, %v2875
      %v2881 = vmul.f32 %v2867, %v2875
      %v2882 = vmul.f32 %v2868, %v2875
      %v2883 = vmul.f32 %v2869, %v2875
      %v2884 = vmul.f32 %v2870, %v2875
      %v2886 = vlaneseq
      %v2887 = vshrl.u32 %v2886, 7
      %v2888 = vsub.s32 0, %v2887
      %v2889 = vrot.slane %v2766, %v2888
      %v2891 = vadd.f32 %v2877, %v2889
      %v2892 = vadd.f32 %v2878, %v2889
      %v2893 = vadd.f32 %v2879, %v2889
      %v2894 = vadd.f32 %v2880, %v2889
      %v2895 = vadd.f32 %v2881, %v2889
      %v2896 = vadd.f32 %v2882, %v2889
      %v2897 = vadd.f32 %v2883, %v2889
      %v2898 = vadd.f32 %v2884, %v2889
      %v2899 = vpack.c.bf16 %v2892, %v2891
      %v2900 = vpack.c.bf16 %v2894, %v2893
      %v2901 = vpack.c.bf16 %v2896, %v2895
      %v2902 = vpack.c.bf16 %v2898, %v2897
      %v2903 = vld [vmem:[%s13] sm:$0xf]
      %v2904 = vld [vmem:[%s13 + $0x4] sm:$0xf]
      %v2905 = vld [vmem:[%s13 + $0x8] sm:$0xf]
      %v2906 = vld [vmem:[%s13 + $0xc] sm:$0xf]
      %v2907 = vld [vmem:[%s14] sm:$0x1]
      %v2909 = vlaneseq
      %v2910 = vshrl.u32 %v2909, 7
      %v2911 = vsub.s32 0, %v2910
      %v2912 = vrot.slane %v2907, %v2911
      %v2918 = vunpack.c.l.b16 %v2903
      %v2919 = vunpack.c.l.b16 %v2904
      %v2920 = vunpack.c.l.b16 %v2905
      %v2921 = vunpack.c.l.b16 %v2906
      %v2922 = vpack.c.b16 %v2919, %v2918
      %v2923 = vpack.c.b16 %v2921, %v2920
      %v2927 = vsel %vm614, %v2899, 0
      %v2930 = vsel %vm614, %v2900, 0
      %v2933 = vsel %vm614, %v2901, 0
      %v2936 = vsel %vm614, %v2902, 0
      %2938 = vmatprep.subr.bf16.mxu0 0
      %2939 = vmatpush1.bf16.msra.mxu0 %v2922
      %2940 = vmatprep.subr.bf16.mxu0 0
      %2941 = vmatpush1.bf16.msra.mxu0 %v2923
      %2942 = vmatprep.subr.bf16.mxu0 0
      %2943 = vmatpush1.bf16.msra.mxu0 0
      %2944 = vmatprep.subr.bf16.mxu0 0
      %2945 = vmatpush1.bf16.msra.mxu0 0
      %2946 = vmatprep.subr.bf16.mxu0 0
      %2947 = vmatpush1.bf16.msra.mxu0 0
      %2948 = vmatprep.subr.bf16.mxu0 0
      %2949 = vmatpush1.bf16.msra.mxu0 0
      %2950 = vmatprep.subr.bf16.mxu0 0
      %2951 = vmatpush1.bf16.msra.mxu0 0
      %2952 = vmatprep.subr.bf16.mxu0 0
      %2953 = vmatpush1.bf16.msra.mxu0 0
      %2954 = vmatprep.subr.bf16.mxu0 0
      %2955 = vmatpush1.bf16.msra.mxu0 0
      %2956 = vmatprep.subr.bf16.mxu0 0
      %2957 = vmatpush1.bf16.msra.mxu0 0
      %2958 = vmatprep.subr.bf16.mxu0 0
      %2959 = vmatpush1.bf16.msra.mxu0 0
      %2960 = vmatprep.subr.bf16.mxu0 0
      %2961 = vmatpush1.bf16.msra.mxu0 0
      %2962 = vmatprep.subr.bf16.mxu0 0
      %2963 = vmatpush1.bf16.msra.mxu0 0
      %2964 = vmatprep.subr.bf16.mxu0 0
      %2965 = vmatpush1.bf16.msra.mxu0 0
      %2966 = vmatprep.subr.bf16.mxu0 0
      %2967 = vmatpush1.bf16.msra.mxu0 0
      %2968 = vmatprep.subr.bf16.mxu0 0
      %2969 = vmatpush1.bf16.msra.mxu0 0
      %2970 = vmatprep.mubr.bf16.mxu0 0
      %2971 = vmatmul.mubr.bf16.gmra.mrb[0].mxu0 %v2927
      %v2972 = vpop.f32.mrb[0].mxu0
      %v2973 = vadd.f32 %v2912, %v2972
      %v2974 = vpop.f32.mrb[0].mxu0
      %v2975 = vpop.f32.mrb[0].mxu0
      %v2976 = vadd.f32 %v2912, %v2975
      %v2977 = vpop.f32.mrb[0].mxu0
      %2978 = vmatprep.mubr.bf16.mxu0 0
      %2979 = vmatmul.mubr.bf16.gmra.mrb[0].mxu0 %v2930
      %v2980 = vpop.f32.mrb[0].mxu0
      %v2981 = vadd.f32 %v2912, %v2980
      %v2982 = vpop.f32.mrb[0].mxu0
      %v2983 = vpop.f32.mrb[0].mxu0
      %v2984 = vadd.f32 %v2912, %v2983
      %v2985 = vpop.f32.mrb[0].mxu0
      %2986 = vmatprep.mubr.bf16.mxu0 0
      %2987 = vmatmul.mubr.bf16.gmra.mrb[0].mxu0 %v2933
      %v2988 = vpop.f32.mrb[0].mxu0
      %v2989 = vadd.f32 %v2912, %v2988
      %v2990 = vpop.f32.mrb[0].mxu0
      %v2991 = vpop.f32.mrb[0].mxu0
      %v2992 = vadd.f32 %v2912, %v2991
      %v2993 = vpop.f32.mrb[0].mxu0
      %2994 = vmatprep.mubr.bf16.mxu0 0
      %2995 = vmatmul.mubr.bf16.gmra.mrb[0].mxu0 %v2936
      %v2996 = vpop.f32.mrb[0].mxu0
      %v2997 = vadd.f32 %v2912, %v2996
      %v2998 = vpop.f32.mrb[0].mxu0
      %v2999 = vpop.f32.mrb[0].mxu0
      %v3000 = vadd.f32 %v2912, %v2999
      %v3001 = vpop.f32.mrb[0].mxu0
      %3002 = vdwg.mxu0
      %v3003 = vld [vmem:[%s15] sm:$0xff]
      %v3004 = vld [vmem:[%s15 + $0x8] sm:$0x1]
      %vm3005 = vcmp.ge.s32.totalorder %v1346, 8
      %vm3006 = vcmp.ge.s32.totalorder %v1347, 8
      %vm3007 = vcmp.ge.s32.totalorder %v1348, 8
      %vm3008 = vcmp.ge.s32.totalorder %v1349, 8
      %vm3009 = vcmp.ge.s32.totalorder %v1350, 8
      %vm3010 = vcmp.ge.s32.totalorder %v1351, 8
      %v3011 = vsel %vm3005, 1, 0
      %v3012 = vsel %vm3006, 1, 0
      %v3013 = vsel %vm3007, 1, 0
      %v3014 = vsel %vm3008, 1, 0
      %v3015 = vsel %vm3009, 1, 0
      %v3016 = vsel %vm3010, 1, 0
      %v3017 = vadd.s32 %v860, %v1376
      %v3018 = vadd.s32 %v861, %v1377
      %v3019 = vadd.s32 %v3011, %v1378
      %v3020 = vadd.s32 %v3012, %v1379
      %v3021 = vadd.s32 %v3013, %v1380
      %v3022 = vadd.s32 %v3014, %v1381
      %v3023 = vadd.s32 %v3015, %v1382
      %v3024 = vadd.s32 %v3016, %v1383
      %vm3025 = vcmp.ge.s32.totalorder %v850, 24
      %vm3026 = vcmp.ge.s32.totalorder %v851, 24
      %vm3027 = vcmp.ge.s32.totalorder %v1346, 24
      %vm3028 = vcmp.ge.s32.totalorder %v1347, 24
      %vm3029 = vcmp.ge.s32.totalorder %v1348, 24
      %vm3030 = vcmp.ge.s32.totalorder %v1349, 24
      %vm3031 = vcmp.ge.s32.totalorder %v1350, 24
      %vm3032 = vcmp.ge.s32.totalorder %v1351, 24
      %v3033 = vsel %vm3025, 1, 0
      %v3034 = vsel %vm3026, 1, 0
      %v3035 = vsel %vm3027, 1, 0
      %v3036 = vsel %vm3028, 1, 0
      %v3037 = vsel %vm3029, 1, 0
      %v3038 = vsel %vm3030, 1, 0
      %v3039 = vsel %vm3031, 1, 0
      %v3040 = vsel %vm3032, 1, 0
      %v3041 = vadd.s32 %v3017, %v3033
      %v3042 = vadd.s32 %v3018, %v3034
      %v3043 = vadd.s32 %v3019, %v3035
      %v3044 = vadd.s32 %v3020, %v3036
      %v3045 = vadd.s32 %v3021, %v3037
      %v3046 = vadd.s32 %v3022, %v3038
      %v3047 = vadd.s32 %v3023, %v3039
      %v3048 = vadd.s32 %v3024, %v3040
      %v3049 = vadd.s32 %v3041, %v1408
      %v3050 = vadd.s32 %v3042, %v1409
      %v3051 = vadd.s32 %v3043, %v1410
      %v3052 = vadd.s32 %v3044, %v1411
      %v3053 = vadd.s32 %v3045, %v1412
      %v3054 = vadd.s32 %v3046, %v1413
      %v3055 = vadd.s32 %v3047, %v1414
      %v3056 = vadd.s32 %v3048, %v1415
      %vm3057 = vcmp.ge.s32.totalorder %v850, 40
      %vm3058 = vcmp.ge.s32.totalorder %v851, 40
      %vm3059 = vcmp.ge.s32.totalorder %v1346, 40
      %vm3060 = vcmp.ge.s32.totalorder %v1347, 40
      %vm3061 = vcmp.ge.s32.totalorder %v1348, 40
      %vm3062 = vcmp.ge.s32.totalorder %v1349, 40
      %vm3063 = vcmp.ge.s32.totalorder %v1350, 40
      %vm3064 = vcmp.ge.s32.totalorder %v1351, 40
      %v3065 = vsel %vm3057, 1, 0
      %v3066 = vsel %vm3058, 1, 0
      %v3067 = vsel %vm3059, 1, 0
      %v3068 = vsel %vm3060, 1, 0
      %v3069 = vsel %vm3061, 1, 0
      %v3070 = vsel %vm3062, 1, 0
      %v3071 = vsel %vm3063, 1, 0
      %v3072 = vsel %vm3064, 1, 0
      %v3073 = vadd.s32 %v3049, %v3065
      %v3074 = vadd.s32 %v3050, %v3066
      %v3075 = vadd.s32 %v3051, %v3067
      %v3076 = vadd.s32 %v3052, %v3068
      %v3077 = vadd.s32 %v3053, %v3069
      %v3078 = vadd.s32 %v3054, %v3070
      %v3079 = vadd.s32 %v3055, %v3071
      %v3080 = vadd.s32 %v3056, %v3072
      %v3081 = vadd.s32 %v3073, %v1456
      %v3082 = vadd.s32 %v3074, %v1457
      %v3083 = vadd.s32 %v3075, %v1458
      %v3084 = vadd.s32 %v3076, %v1459
      %v3085 = vadd.s32 %v3077, %v1460
      %v3086 = vadd.s32 %v3078, %v1461
      %v3087 = vadd.s32 %v3079, %v1462
      %v3088 = vadd.s32 %v3080, %v1463
      %vm3089 = vcmp.ge.s32.totalorder %v850, 56
      %vm3090 = vcmp.ge.s32.totalorder %v851, 56
      %vm3091 = vcmp.ge.s32.totalorder %v1346, 56
      %vm3092 = vcmp.ge.s32.totalorder %v1347, 56
      %vm3093 = vcmp.ge.s32.totalorder %v1348, 56
      %vm3094 = vcmp.ge.s32.totalorder %v1349, 56
      %vm3095 = vcmp.ge.s32.totalorder %v1350, 56
      %vm3096 = vcmp.ge.s32.totalorder %v1351, 56
      %v3097 = vsel %vm3089, 1, 0
      %v3098 = vsel %vm3090, 1, 0
      %v3099 = vsel %vm3091, 1, 0
      %v3100 = vsel %vm3092, 1, 0
      %v3101 = vsel %vm3093, 1, 0
      %v3102 = vsel %vm3094, 1, 0
      %v3103 = vsel %vm3095, 1, 0
      %v3104 = vsel %vm3096, 1, 0
      %v3105 = vadd.s32 %v3081, %v3097
      %v3106 = vadd.s32 %v3082, %v3098
      %v3107 = vadd.s32 %v3083, %v3099
      %v3108 = vadd.s32 %v3084, %v3100
      %v3109 = vadd.s32 %v3085, %v3101
      %v3110 = vadd.s32 %v3086, %v3102
      %v3111 = vadd.s32 %v3087, %v3103
      %v3112 = vadd.s32 %v3088, %v3104
      %v3113 = vmul.u32 %v3105, 8
      %v3114 = vmul.u32 %v3106, 8
      %v3115 = vmul.u32 %v3107, 8
      %v3116 = vmul.u32 %v3108, 8
      %v3117 = vmul.u32 %v3109, 8
      %v3118 = vmul.u32 %v3110, 8
      %v3119 = vmul.u32 %v3111, 8
      %v3120 = vmul.u32 %v3112, 8
      %v3121 = vsub.s32 %v850, %v3113
      %v3122 = vsub.s32 %v851, %v3114
      %v3123 = vsub.s32 %v1346, %v3115
      %v3124 = vsub.s32 %v1347, %v3116
      %v3125 = vsub.s32 %v1348, %v3117
      %v3126 = vsub.s32 %v1349, %v3118
      %v3127 = vsub.s32 %v1350, %v3119
      %v3128 = vsub.s32 %v1351, %v3120
      %v3129 = vcvt.s32.f32 %v850
      %v3130 = vcvt.s32.f32 %v851
      %v3131 = vcvt.s32.f32 %v1346
      %v3132 = vcvt.s32.f32 %v1347
      %v3133 = vcvt.s32.f32 %v1348
      %v3134 = vcvt.s32.f32 %v1349
      %v3135 = vcvt.s32.f32 %v1350
      %v3136 = vcvt.s32.f32 %v1351
      %v3137 = vlaneseq
      %v3138 = vshrl.u32 %v3137, 7
      %v3139 = vsub.s32 4, %v3138
      %v3140 = vrot.slane %v3003, %v3139
      %v3141 = vmul.f32 %v2973, %v3140
      %v3142 = vmul.f32 %v2976, %v3140
      %v3143 = vmul.f32 %v2981, %v3140
      %v3144 = vmul.f32 %v2984, %v3140
      %v3145 = vmul.f32 %v2989, %v3140
      %v3146 = vmul.f32 %v2992, %v3140
      %v3147 = vmul.f32 %v2997, %v3140
      %v3148 = vmul.f32 %v3000, %v3140
      %v3149 = vrot.slane %v2973, 1
      %v3150 = vrot.slane %v2976, 1
      %v3151 = vrot.slane %v2981, 1
      %v3152 = vrot.slane %v2984, 1
      %v3153 = vrot.slane %v2989, 1
      %v3154 = vrot.slane %v2992, 1
      %v3155 = vrot.slane %v2997, 1
      %v3156 = vrot.slane %v3000, 1
      %vm3157 = vcmp.lt.s32.totalorder %v850, 7
      %v3158 = vsel %vm3157, %v3155, %v3156
      %v3159 = vsel %vm3157, %v3154, %v3155
      %v3160 = vsel %vm3157, %v3153, %v3154
      %v3161 = vsel %vm3157, %v3152, %v3153
      %v3162 = vsel %vm3157, %v3151, %v3152
      %v3163 = vsel %vm3157, %v3150, %v3151
      %v3164 = vsel %vm3157, %v3149, %v3150
      %v3165 = vsel %vm3157, %v3156, %v3149
      %v3166 = vrot.slane %v3129, 1
      %v3167 = vrot.slane %v3130, 1
      %v3168 = vrot.slane %v3131, 1
      %v3169 = vrot.slane %v3132, 1
      %v3170 = vrot.slane %v3133, 1
      %v3171 = vrot.slane %v3134, 1
      %v3172 = vrot.slane %v3135, 1
      %v3173 = vrot.slane %v3136, 1
      %v3174 = vsel %vm3157, %v3172, %v3173
      %v3175 = vsel %vm3157, %v3171, %v3172
      %v3176 = vsel %vm3157, %v3170, %v3171
      %v3177 = vsel %vm3157, %v3169, %v3170
      %v3178 = vsel %vm3157, %v3168, %v3169
      %v3179 = vsel %vm3157, %v3167, %v3168
      %v3180 = vsel %vm3157, %v3166, %v3167
      %v3181 = vsel %vm3157, %v3173, %v3166
      %v3182 = vrot.slane %v2973, 7
      %v3183 = vrot.slane %v2976, 7
      %v3184 = vrot.slane %v2981, 7
      %v3185 = vrot.slane %v2984, 7
      %v3186 = vrot.slane %v2989, 7
      %v3187 = vrot.slane %v2992, 7
      %v3188 = vrot.slane %v2997, 7
      %v3189 = vrot.slane %v3000, 7
      %vm3190 = vcmp.lt.s32.totalorder %v850, 1
      %v3191 = vsel %vm3190, %v3188, %v3189
      %v3192 = vsel %vm3190, %v3187, %v3188
      %v3193 = vsel %vm3190, %v3186, %v3187
      %v3194 = vsel %vm3190, %v3185, %v3186
      %v3195 = vsel %vm3190, %v3184, %v3185
      %v3196 = vsel %vm3190, %v3183, %v3184
      %v3197 = vsel %vm3190, %v3182, %v3183
      %v3198 = vsel %vm3190, %v3189, %v3182
      %v3199 = vrot.slane %v3129, 7
      %v3200 = vrot.slane %v3130, 7
      %v3201 = vrot.slane %v3131, 7
      %v3202 = vrot.slane %v3132, 7
      %v3203 = vrot.slane %v3133, 7
      %v3204 = vrot.slane %v3134, 7
      %v3205 = vrot.slane %v3135, 7
      %v3206 = vrot.slane %v3136, 7
      %v3207 = vsel %vm3190, %v3205, %v3206
      %v3208 = vsel %vm3190, %v3204, %v3205
      %v3209 = vsel %vm3190, %v3203, %v3204
      %v3210 = vsel %vm3190, %v3202, %v3203
      %v3211 = vsel %vm3190, %v3201, %v3202
      %v3212 = vsel %vm3190, %v3200, %v3201
      %v3213 = vsel %vm3190, %v3199, %v3200
      %v3214 = vsel %vm3190, %v3206, %v3199
      %v3215 = vadd.f32 %v3129, 1.0
      %v3216 = vadd.f32 %v3130, 1.0
      %v3217 = vadd.f32 %v3131, 1.0
      %v3218 = vadd.f32 %v3132, 1.0
      %v3219 = vadd.f32 %v3133, 1.0
      %v3220 = vadd.f32 %v3134, 1.0
      %v3221 = vadd.f32 %v3135, 1.0
      %v3222 = vadd.f32 %v3136, 1.0
      %vm3223 = vcmp.eq.f32.partialorder %v3180, %v3215
      %vm3224 = vcmp.eq.f32.partialorder %v3179, %v3216
      %vm3225 = vcmp.eq.f32.partialorder %v3178, %v3217
      %vm3226 = vcmp.eq.f32.partialorder %v3177, %v3218
      %vm3227 = vcmp.eq.f32.partialorder %v3176, %v3219
      %vm3228 = vcmp.eq.f32.partialorder %v3175, %v3220
      %vm3229 = vcmp.eq.f32.partialorder %v3174, %v3221
      %vm3230 = vcmp.eq.f32.partialorder %v3181, %v3222
      %vm3231 = vcmp.eq.f32.partialorder %v3214, %v3215
      %vm3232 = vcmp.eq.f32.partialorder %v3213, %v3216
      %vm3233 = vcmp.eq.f32.partialorder %v3212, %v3217
      %vm3234 = vcmp.eq.f32.partialorder %v3211, %v3218
      %vm3235 = vcmp.eq.f32.partialorder %v3210, %v3219
      %vm3236 = vcmp.eq.f32.partialorder %v3209, %v3220
      %vm3237 = vcmp.eq.f32.partialorder %v3208, %v3221
      %vm3238 = vcmp.eq.f32.partialorder %v3207, %v3222
      %v3239 = vsel %vm3231, 1, 0
      %v3240 = vsel %vm3232, 1, 0
      %v3241 = vsel %vm3233, 1, 0
      %v3242 = vsel %vm3234, 1, 0
      %v3243 = vsel %vm3235, 1, 0
      %v3244 = vsel %vm3236, 1, 0
      %v3245 = vsel %vm3237, 1, 0
      %v3246 = vsel %vm3238, 1, 0
      %3247 = vset.pattern.permute.xlu0 0
      %3248 = vperm.xlu0 %3247, %v3239
      %v3249 = vpop.permute.xlu0 %3248
      %3250 = vset.pattern.permute.xlu0 0
      %3251 = vperm.xlu0 %3250, %v3240
      %v3252 = vpop.permute.xlu0 %3251
      %3253 = vset.pattern.permute.xlu0 0
      %3254 = vperm.xlu0 %3253, %v3241
      %v3255 = vpop.permute.xlu0 %3254
      %3256 = vset.pattern.permute.xlu0 0
      %3257 = vperm.xlu0 %3256, %v3242
      %v3258 = vpop.permute.xlu0 %3257
      %3259 = vset.pattern.permute.xlu0 0
      %3260 = vperm.xlu0 %3259, %v3243
      %v3261 = vpop.permute.xlu0 %3260
      %3262 = vset.pattern.permute.xlu0 0
      %3263 = vperm.xlu0 %3262, %v3244
      %v3264 = vpop.permute.xlu0 %3263
      %3265 = vset.pattern.permute.xlu0 0
      %3266 = vperm.xlu0 %3265, %v3245
      %v3267 = vpop.permute.xlu0 %3266
      %3268 = vset.pattern.permute.xlu0 0
      %3269 = vperm.xlu0 %3268, %v3246
      %v3270 = vpop.permute.xlu0 %3269
      %vm3271 = vcmp.eq.s32.totalorder %v3249, 1
      %vm3272 = vcmp.eq.s32.totalorder %v3252, 1
      %vm3273 = vcmp.eq.s32.totalorder %v3255, 1
      %vm3274 = vcmp.eq.s32.totalorder %v3258, 1
      %vm3275 = vcmp.eq.s32.totalorder %v3261, 1
      %vm3276 = vcmp.eq.s32.totalorder %v3264, 1
      %vm3277 = vcmp.eq.s32.totalorder %v3267, 1
      %vm3278 = vcmp.eq.s32.totalorder %v3270, 1
      %v3279 = vsel %vm3271, %v3198, 0.0
      %v3280 = vsel %vm3272, %v3197, 0.0
      %v3281 = vsel %vm3273, %v3196, 0.0
      %v3282 = vsel %vm3274, %v3195, 0.0
      %v3283 = vsel %vm3275, %v3194, 0.0
      %v3284 = vsel %vm3276, %v3193, 0.0
      %v3285 = vsel %vm3277, %v3192, 0.0
      %v3286 = vsel %vm3278, %v3191, 0.0
      %v3287 = vsel %vm3223, 1, 0
      %v3288 = vsel %vm3224, 1, 0
      %v3289 = vsel %vm3225, 1, 0
      %v3290 = vsel %vm3226, 1, 0
      %v3291 = vsel %vm3227, 1, 0
      %v3292 = vsel %vm3228, 1, 0
      %v3293 = vsel %vm3229, 1, 0
      %v3294 = vsel %vm3230, 1, 0
      %3295 = vset.pattern.permute.xlu0 0
      %3296 = vperm.xlu0 %3295, %v3287
      %v3297 = vpop.permute.xlu0 %3296
      %3298 = vset.pattern.permute.xlu0 0
      %3299 = vperm.xlu0 %3298, %v3288
      %v3300 = vpop.permute.xlu0 %3299
      %3301 = vset.pattern.permute.xlu0 0
      %3302 = vperm.xlu0 %3301, %v3289
      %v3303 = vpop.permute.xlu0 %3302
      %3304 = vset.pattern.permute.xlu0 0
      %3305 = vperm.xlu0 %3304, %v3290
      %v3306 = vpop.permute.xlu0 %3305
      %3307 = vset.pattern.permute.xlu0 0
      %3308 = vperm.xlu0 %3307, %v3291
      %v3309 = vpop.permute.xlu0 %3308
      %3310 = vset.pattern.permute.xlu0 0
      %3311 = vperm.xlu0 %3310, %v3292
      %v3312 = vpop.permute.xlu0 %3311
      %3313 = vset.pattern.permute.xlu0 0
      %3314 = vperm.xlu0 %3313, %v3293
      %v3315 = vpop.permute.xlu0 %3314
      %3316 = vset.pattern.permute.xlu0 0
      %3317 = vperm.xlu0 %3316, %v3294
      %v3318 = vpop.permute.xlu0 %3317
      %vm3319 = vcmp.eq.s32.totalorder %v3297, 1
      %vm3320 = vcmp.eq.s32.totalorder %v3300, 1
      %vm3321 = vcmp.eq.s32.totalorder %v3303, 1
      %vm3322 = vcmp.eq.s32.totalorder %v3306, 1
      %vm3323 = vcmp.eq.s32.totalorder %v3309, 1
      %vm3324 = vcmp.eq.s32.totalorder %v3312, 1
      %vm3325 = vcmp.eq.s32.totalorder %v3315, 1
      %vm3326 = vcmp.eq.s32.totalorder %v3318, 1
      %v3327 = vsel %vm3319, %v3164, %v3279
      %v3328 = vsel %vm3320, %v3163, %v3280
      %v3329 = vsel %vm3321, %v3162, %v3281
      %v3330 = vsel %vm3322, %v3161, %v3282
      %v3331 = vsel %vm3323, %v3160, %v3283
      %v3332 = vsel %vm3324, %v3159, %v3284
      %v3333 = vsel %vm3325, %v3158, %v3285
      %v3334 = vsel %vm3326, %v3165, %v3286
      %vm3335 = vcmp.ge.s32.totalorder %v3105, 0
      %vm3336 = vcmp.ge.s32.totalorder %v3106, 0
      %vm3337 = vcmp.ge.s32.totalorder %v3107, 0
      %vm3338 = vcmp.ge.s32.totalorder %v3108, 0
      %vm3339 = vcmp.ge.s32.totalorder %v3109, 0
      %vm3340 = vcmp.ge.s32.totalorder %v3110, 0
      %vm3341 = vcmp.ge.s32.totalorder %v3111, 0
      %vm3342 = vcmp.ge.s32.totalorder %v3112, 0
      %vm3343 = vcmp.le.s32.totalorder %v3105, 7
      %vm3344 = vcmp.le.s32.totalorder %v3106, 7
      %vm3345 = vcmp.le.s32.totalorder %v3107, 7
      %vm3346 = vcmp.le.s32.totalorder %v3108, 7
      %vm3347 = vcmp.le.s32.totalorder %v3109, 7
      %vm3348 = vcmp.le.s32.totalorder %v3110, 7
      %vm3349 = vcmp.le.s32.totalorder %v3111, 7
      %vm3350 = vcmp.le.s32.totalorder %v3112, 7
      %vm3351 = vmand %vm3335, %vm3343
      %vm3352 = vmand %vm3336, %vm3344
      %vm3353 = vmand %vm3337, %vm3345
      %vm3354 = vmand %vm3338, %vm3346
      %vm3355 = vmand %vm3339, %vm3347
      %vm3356 = vmand %vm3340, %vm3348
      %vm3357 = vmand %vm3341, %vm3349
      %vm3358 = vmand %vm3342, %vm3350
      %v3359 = vadd.s32 %v3121, 1
      %v3360 = vadd.s32 %v3122, 1
      %v3361 = vadd.s32 %v3123, 1
      %v3362 = vadd.s32 %v3124, 1
      %v3363 = vadd.s32 %v3125, 1
      %v3364 = vadd.s32 %v3126, 1
      %v3365 = vadd.s32 %v3127, 1
      %v3366 = vadd.s32 %v3128, 1
      %vm3367 = vcmp.ge.s32.totalorder %v3359, 0
      %vm3368 = vcmp.ge.s32.totalorder %v3360, 0
      %vm3369 = vcmp.ge.s32.totalorder %v3361, 0
      %vm3370 = vcmp.ge.s32.totalorder %v3362, 0
      %vm3371 = vcmp.ge.s32.totalorder %v3363, 0
      %vm3372 = vcmp.ge.s32.totalorder %v3364, 0
      %vm3373 = vcmp.ge.s32.totalorder %v3365, 0
      %vm3374 = vcmp.ge.s32.totalorder %v3366, 0
      %vm3375 = vmand %vm3351, %vm3367
      %vm3376 = vmand %vm3352, %vm3368
      %vm3377 = vmand %vm3353, %vm3369
      %vm3378 = vmand %vm3354, %vm3370
      %vm3379 = vmand %vm3355, %vm3371
      %vm3380 = vmand %vm3356, %vm3372
      %vm3381 = vmand %vm3357, %vm3373
      %vm3382 = vmand %vm3358, %vm3374
      %vm3383 = vcmp.le.s32.totalorder %v3359, 7
      %vm3384 = vcmp.le.s32.totalorder %v3360, 7
      %vm3385 = vcmp.le.s32.totalorder %v3361, 7
      %vm3386 = vcmp.le.s32.totalorder %v3362, 7
      %vm3387 = vcmp.le.s32.totalorder %v3363, 7
      %vm3388 = vcmp.le.s32.totalorder %v3364, 7
      %vm3389 = vcmp.le.s32.totalorder %v3365, 7
      %vm3390 = vcmp.le.s32.totalorder %v3366, 7
      %vm3391 = vmand %vm3375, %vm3383
      %vm3392 = vmand %vm3376, %vm3384
      %vm3393 = vmand %vm3377, %vm3385
      %vm3394 = vmand %vm3378, %vm3386
      %vm3395 = vmand %vm3379, %vm3387
      %vm3396 = vmand %vm3380, %vm3388
      %vm3397 = vmand %vm3381, %vm3389
      %vm3398 = vmand %vm3382, %vm3390
      %v3399 = vsel %vm3391, 1, 0
      %v3400 = vsel %vm3392, 1, 0
      %v3401 = vsel %vm3393, 1, 0
      %v3402 = vsel %vm3394, 1, 0
      %v3403 = vsel %vm3395, 1, 0
      %v3404 = vsel %vm3396, 1, 0
      %v3405 = vsel %vm3397, 1, 0
      %v3406 = vsel %vm3398, 1, 0
      %v3407 = vcvt.s32.f32 %v3399
      %v3408 = vcvt.s32.f32 %v3400
      %v3409 = vcvt.s32.f32 %v3401
      %v3410 = vcvt.s32.f32 %v3402
      %v3411 = vcvt.s32.f32 %v3403
      %v3412 = vcvt.s32.f32 %v3404
      %v3413 = vcvt.s32.f32 %v3405
      %v3414 = vcvt.s32.f32 %v3406
      %v3415 = vmul.f32 %v3327, %v3407
      %v3416 = vmul.f32 %v3328, %v3408
      %v3417 = vmul.f32 %v3329, %v3409
      %v3418 = vmul.f32 %v3330, %v3410
      %v3419 = vmul.f32 %v3331, %v3411
      %v3420 = vmul.f32 %v3332, %v3412
      %v3421 = vmul.f32 %v3333, %v3413
      %v3422 = vmul.f32 %v3334, %v3414
      %v3423 = vlaneseq
      %v3424 = vshrl.u32 %v3423, 7
      %v3425 = vsub.s32 5, %v3424
      %v3426 = vrot.slane %v3003, %v3425
      %v3427 = vmul.f32 %v3415, %v3426
      %v3428 = vmul.f32 %v3416, %v3426
      %v3429 = vmul.f32 %v3417, %v3426
      %v3430 = vmul.f32 %v3418, %v3426
      %v3431 = vmul.f32 %v3419, %v3426
      %v3432 = vmul.f32 %v3420, %v3426
      %v3433 = vmul.f32 %v3421, %v3426
      %v3434 = vmul.f32 %v3422, %v3426
      %v3435 = vadd.f32 %v3141, %v3427
      %v3436 = vadd.f32 %v3142, %v3428
      %v3437 = vadd.f32 %v3143, %v3429
      %v3438 = vadd.f32 %v3144, %v3430
      %v3439 = vadd.f32 %v3145, %v3431
      %v3440 = vadd.f32 %v3146, %v3432
      %v3441 = vadd.f32 %v3147, %v3433
      %v3442 = vadd.f32 %v3148, %v3434
      %v3443 = vadd.f32 %v3129, -1.0
      %v3444 = vadd.f32 %v3130, -1.0
      %v3445 = vadd.f32 %v3131, -1.0
      %v3446 = vadd.f32 %v3132, -1.0
      %v3447 = vadd.f32 %v3133, -1.0
      %v3448 = vadd.f32 %v3134, -1.0
      %v3449 = vadd.f32 %v3135, -1.0
      %v3450 = vadd.f32 %v3136, -1.0
      %vm3451 = vcmp.eq.f32.partialorder %v3180, %v3443
      %vm3452 = vcmp.eq.f32.partialorder %v3179, %v3444
      %vm3453 = vcmp.eq.f32.partialorder %v3178, %v3445
      %vm3454 = vcmp.eq.f32.partialorder %v3177, %v3446
      %vm3455 = vcmp.eq.f32.partialorder %v3176, %v3447
      %vm3456 = vcmp.eq.f32.partialorder %v3175, %v3448
      %vm3457 = vcmp.eq.f32.partialorder %v3174, %v3449
      %vm3458 = vcmp.eq.f32.partialorder %v3181, %v3450
      %vm3459 = vcmp.eq.f32.partialorder %v3214, %v3443
      %vm3460 = vcmp.eq.f32.partialorder %v3213, %v3444
      %vm3461 = vcmp.eq.f32.partialorder %v3212, %v3445
      %vm3462 = vcmp.eq.f32.partialorder %v3211, %v3446
      %vm3463 = vcmp.eq.f32.partialorder %v3210, %v3447
      %vm3464 = vcmp.eq.f32.partialorder %v3209, %v3448
      %vm3465 = vcmp.eq.f32.partialorder %v3208, %v3449
      %vm3466 = vcmp.eq.f32.partialorder %v3207, %v3450
      %v3467 = vsel %vm3459, 1, 0
      %v3468 = vsel %vm3460, 1, 0
      %v3469 = vsel %vm3461, 1, 0
      %v3470 = vsel %vm3462, 1, 0
      %v3471 = vsel %vm3463, 1, 0
      %v3472 = vsel %vm3464, 1, 0
      %v3473 = vsel %vm3465, 1, 0
      %v3474 = vsel %vm3466, 1, 0
      %3475 = vset.pattern.permute.xlu0 0
      %3476 = vperm.xlu0 %3475, %v3467
      %v3477 = vpop.permute.xlu0 %3476
      %3478 = vset.pattern.permute.xlu0 0
      %3479 = vperm.xlu0 %3478, %v3468
      %v3480 = vpop.permute.xlu0 %3479
      %3481 = vset.pattern.permute.xlu0 0
      %3482 = vperm.xlu0 %3481, %v3469
      %v3483 = vpop.permute.xlu0 %3482
      %3484 = vset.pattern.permute.xlu0 0
      %3485 = vperm.xlu0 %3484, %v3470
      %v3486 = vpop.permute.xlu0 %3485
      %3487 = vset.pattern.permute.xlu0 0
      %3488 = vperm.xlu0 %3487, %v3471
      %v3489 = vpop.permute.xlu0 %3488
      %3490 = vset.pattern.permute.xlu0 0
      %3491 = vperm.xlu0 %3490, %v3472
      %v3492 = vpop.permute.xlu0 %3491
      %3493 = vset.pattern.permute.xlu0 0
      %3494 = vperm.xlu0 %3493, %v3473
      %v3495 = vpop.permute.xlu0 %3494
      %3496 = vset.pattern.permute.xlu0 0
      %3497 = vperm.xlu0 %3496, %v3474
      %v3498 = vpop.permute.xlu0 %3497
      %vm3499 = vcmp.eq.s32.totalorder %v3477, 1
      %vm3500 = vcmp.eq.s32.totalorder %v3480, 1
      %vm3501 = vcmp.eq.s32.totalorder %v3483, 1
      %vm3502 = vcmp.eq.s32.totalorder %v3486, 1
      %vm3503 = vcmp.eq.s32.totalorder %v3489, 1
      %vm3504 = vcmp.eq.s32.totalorder %v3492, 1
      %vm3505 = vcmp.eq.s32.totalorder %v3495, 1
      %vm3506 = vcmp.eq.s32.totalorder %v3498, 1
      %v3507 = vsel %vm3499, %v3198, 0.0
      %v3508 = vsel %vm3500, %v3197, 0.0
      %v3509 = vsel %vm3501, %v3196, 0.0
      %v3510 = vsel %vm3502, %v3195, 0.0
      %v3511 = vsel %vm3503, %v3194, 0.0
      %v3512 = vsel %vm3504, %v3193, 0.0
      %v3513 = vsel %vm3505, %v3192, 0.0
      %v3514 = vsel %vm3506, %v3191, 0.0
      %v3515 = vsel %vm3451, 1, 0
      %v3516 = vsel %vm3452, 1, 0
      %v3517 = vsel %vm3453, 1, 0
      %v3518 = vsel %vm3454, 1, 0
      %v3519 = vsel %vm3455, 1, 0
      %v3520 = vsel %vm3456, 1, 0
      %v3521 = vsel %vm3457, 1, 0
      %v3522 = vsel %vm3458, 1, 0
      %3523 = vset.pattern.permute.xlu0 0
      %3524 = vperm.xlu0 %3523, %v3515
      %v3525 = vpop.permute.xlu0 %3524
      %3526 = vset.pattern.permute.xlu0 0
      %3527 = vperm.xlu0 %3526, %v3516
      %v3528 = vpop.permute.xlu0 %3527
      %3529 = vset.pattern.permute.xlu0 0
      %3530 = vperm.xlu0 %3529, %v3517
      %v3531 = vpop.permute.xlu0 %3530
      %3532 = vset.pattern.permute.xlu0 0
      %3533 = vperm.xlu0 %3532, %v3518
      %v3534 = vpop.permute.xlu0 %3533
      %3535 = vset.pattern.permute.xlu0 0
      %3536 = vperm.xlu0 %3535, %v3519
      %v3537 = vpop.permute.xlu0 %3536
      %3538 = vset.pattern.permute.xlu0 0
      %3539 = vperm.xlu0 %3538, %v3520
      %v3540 = vpop.permute.xlu0 %3539
      %3541 = vset.pattern.permute.xlu0 0
      %3542 = vperm.xlu0 %3541, %v3521
      %v3543 = vpop.permute.xlu0 %3542
      %3544 = vset.pattern.permute.xlu0 0
      %3545 = vperm.xlu0 %3544, %v3522
      %v3546 = vpop.permute.xlu0 %3545
      %vm3547 = vcmp.eq.s32.totalorder %v3525, 1
      %vm3548 = vcmp.eq.s32.totalorder %v3528, 1
      %vm3549 = vcmp.eq.s32.totalorder %v3531, 1
      %vm3550 = vcmp.eq.s32.totalorder %v3534, 1
      %vm3551 = vcmp.eq.s32.totalorder %v3537, 1
      %vm3552 = vcmp.eq.s32.totalorder %v3540, 1
      %vm3553 = vcmp.eq.s32.totalorder %v3543, 1
      %vm3554 = vcmp.eq.s32.totalorder %v3546, 1
      %v3555 = vsel %vm3547, %v3164, %v3507
      %v3556 = vsel %vm3548, %v3163, %v3508
      %v3557 = vsel %vm3549, %v3162, %v3509
      %v3558 = vsel %vm3550, %v3161, %v3510
      %v3559 = vsel %vm3551, %v3160, %v3511
      %v3560 = vsel %vm3552, %v3159, %v3512
      %v3561 = vsel %vm3553, %v3158, %v3513
      %v3562 = vsel %vm3554, %v3165, %v3514
      %v3563 = vadd.s32 %v3121, 4294967295
      %v3564 = vadd.s32 %v3122, 4294967295
      %v3565 = vadd.s32 %v3123, 4294967295
      %v3566 = vadd.s32 %v3124, 4294967295
      %v3567 = vadd.s32 %v3125, 4294967295
      %v3568 = vadd.s32 %v3126, 4294967295
      %v3569 = vadd.s32 %v3127, 4294967295
      %v3570 = vadd.s32 %v3128, 4294967295
      %vm3571 = vcmp.ge.s32.totalorder %v3563, 0
      %vm3572 = vcmp.ge.s32.totalorder %v3564, 0
      %vm3573 = vcmp.ge.s32.totalorder %v3565, 0
      %vm3574 = vcmp.ge.s32.totalorder %v3566, 0
      %vm3575 = vcmp.ge.s32.totalorder %v3567, 0
      %vm3576 = vcmp.ge.s32.totalorder %v3568, 0
      %vm3577 = vcmp.ge.s32.totalorder %v3569, 0
      %vm3578 = vcmp.ge.s32.totalorder %v3570, 0
      %vm3579 = vmand %vm3351, %vm3571
      %vm3580 = vmand %vm3352, %vm3572
      %vm3581 = vmand %vm3353, %vm3573
      %vm3582 = vmand %vm3354, %vm3574
      %vm3583 = vmand %vm3355, %vm3575
      %vm3584 = vmand %vm3356, %vm3576
      %vm3585 = vmand %vm3357, %vm3577
      %vm3586 = vmand %vm3358, %vm3578
      %vm3587 = vcmp.le.s32.totalorder %v3563, 7
      %vm3588 = vcmp.le.s32.totalorder %v3564, 7
      %vm3589 = vcmp.le.s32.totalorder %v3565, 7
      %vm3590 = vcmp.le.s32.totalorder %v3566, 7
      %vm3591 = vcmp.le.s32.totalorder %v3567, 7
      %vm3592 = vcmp.le.s32.totalorder %v3568, 7
      %vm3593 = vcmp.le.s32.totalorder %v3569, 7
      %vm3594 = vcmp.le.s32.totalorder %v3570, 7
      %vm3595 = vmand %vm3579, %vm3587
      %vm3596 = vmand %vm3580, %vm3588
      %vm3597 = vmand %vm3581, %vm3589
      %vm3598 = vmand %vm3582, %vm3590
      %vm3599 = vmand %vm3583, %vm3591
      %vm3600 = vmand %vm3584, %vm3592
      %vm3601 = vmand %vm3585, %vm3593
      %vm3602 = vmand %vm3586, %vm3594
      %v3603 = vsel %vm3595, 1, 0
      %v3604 = vsel %vm3596, 1, 0
      %v3605 = vsel %vm3597, 1, 0
      %v3606 = vsel %vm3598, 1, 0
      %v3607 = vsel %vm3599, 1, 0
      %v3608 = vsel %vm3600, 1, 0
      %v3609 = vsel %vm3601, 1, 0
      %v3610 = vsel %vm3602, 1, 0
      %v3611 = vcvt.s32.f32 %v3603
      %v3612 = vcvt.s32.f32 %v3604
      %v3613 = vcvt.s32.f32 %v3605
      %v3614 = vcvt.s32.f32 %v3606
      %v3615 = vcvt.s32.f32 %v3607
      %v3616 = vcvt.s32.f32 %v3608
      %v3617 = vcvt.s32.f32 %v3609
      %v3618 = vcvt.s32.f32 %v3610
      %v3619 = vmul.f32 %v3555, %v3611
      %v3620 = vmul.f32 %v3556, %v3612
      %v3621 = vmul.f32 %v3557, %v3613
      %v3622 = vmul.f32 %v3558, %v3614
      %v3623 = vmul.f32 %v3559, %v3615
      %v3624 = vmul.f32 %v3560, %v3616
      %v3625 = vmul.f32 %v3561, %v3617
      %v3626 = vmul.f32 %v3562, %v3618
      %v3627 = vlaneseq
      %v3628 = vshrl.u32 %v3627, 7
      %v3629 = vsub.s32 3, %v3628
      %v3630 = vrot.slane %v3003, %v3629
      %v3631 = vmul.f32 %v3619, %v3630
      %v3632 = vmul.f32 %v3620, %v3630
      %v3633 = vmul.f32 %v3621, %v3630
      %v3634 = vmul.f32 %v3622, %v3630
      %v3635 = vmul.f32 %v3623, %v3630
      %v3636 = vmul.f32 %v3624, %v3630
      %v3637 = vmul.f32 %v3625, %v3630
      %v3638 = vmul.f32 %v3626, %v3630
      %v3639 = vadd.f32 %v3435, %v3631
      %v3640 = vadd.f32 %v3436, %v3632
      %v3641 = vadd.f32 %v3437, %v3633
      %v3642 = vadd.f32 %v3438, %v3634
      %v3643 = vadd.f32 %v3439, %v3635
      %v3644 = vadd.f32 %v3440, %v3636
      %v3645 = vadd.f32 %v3441, %v3637
      %v3646 = vadd.f32 %v3442, %v3638
      %v3647 = vadd.f32 %v3129, 7.0
      %v3648 = vadd.f32 %v3130, 7.0
      %v3649 = vadd.f32 %v3131, 7.0
      %v3650 = vadd.f32 %v3132, 7.0
      %v3651 = vadd.f32 %v3133, 7.0
      %v3652 = vadd.f32 %v3134, 7.0
      %v3653 = vadd.f32 %v3135, 7.0
      %v3654 = vadd.f32 %v3136, 7.0
      %vm3655 = vcmp.eq.f32.partialorder %v3213, %v3647
      %vm3656 = vcmp.eq.f32.partialorder %v3212, %v3648
      %vm3657 = vcmp.eq.f32.partialorder %v3211, %v3649
      %vm3658 = vcmp.eq.f32.partialorder %v3210, %v3650
      %vm3659 = vcmp.eq.f32.partialorder %v3209, %v3651
      %vm3660 = vcmp.eq.f32.partialorder %v3208, %v3652
      %vm3661 = vcmp.eq.f32.partialorder %v3207, %v3653
      %vm3662 = vcmp.eq.f32.partialorder %v3214, %v3654
      %vm3663 = vcmp.eq.f32.partialorder %v3181, %v3647
      %vm3664 = vcmp.eq.f32.partialorder %v3180, %v3648
      %vm3665 = vcmp.eq.f32.partialorder %v3179, %v3649
      %vm3666 = vcmp.eq.f32.partialorder %v3178, %v3650
      %vm3667 = vcmp.eq.f32.partialorder %v3177, %v3651
      %vm3668 = vcmp.eq.f32.partialorder %v3176, %v3652
      %vm3669 = vcmp.eq.f32.partialorder %v3175, %v3653
      %vm3670 = vcmp.eq.f32.partialorder %v3174, %v3654
      %v3671 = vsel %vm3663, 1, 0
      %v3672 = vsel %vm3664, 1, 0
      %v3673 = vsel %vm3665, 1, 0
      %v3674 = vsel %vm3666, 1, 0
      %v3675 = vsel %vm3667, 1, 0
      %v3676 = vsel %vm3668, 1, 0
      %v3677 = vsel %vm3669, 1, 0
      %v3678 = vsel %vm3670, 1, 0
      %3679 = vset.pattern.permute.xlu0 0
      %3680 = vperm.xlu0 %3679, %v3671
      %v3681 = vpop.permute.xlu0 %3680
      %3682 = vset.pattern.permute.xlu0 0
      %3683 = vperm.xlu0 %3682, %v3672
      %v3684 = vpop.permute.xlu0 %3683
      %3685 = vset.pattern.permute.xlu0 0
      %3686 = vperm.xlu0 %3685, %v3673
      %v3687 = vpop.permute.xlu0 %3686
      %3688 = vset.pattern.permute.xlu0 0
      %3689 = vperm.xlu0 %3688, %v3674
      %v3690 = vpop.permute.xlu0 %3689
      %3691 = vset.pattern.permute.xlu0 0
      %3692 = vperm.xlu0 %3691, %v3675
      %v3693 = vpop.permute.xlu0 %3692
      %3694 = vset.pattern.permute.xlu0 0
      %3695 = vperm.xlu0 %3694, %v3676
      %v3696 = vpop.permute.xlu0 %3695
      %3697 = vset.pattern.permute.xlu0 0
      %3698 = vperm.xlu0 %3697, %v3677
      %v3699 = vpop.permute.xlu0 %3698
      %3700 = vset.pattern.permute.xlu0 0
      %3701 = vperm.xlu0 %3700, %v3678
      %v3702 = vpop.permute.xlu0 %3701
      %vm3703 = vcmp.eq.s32.totalorder %v3681, 1
      %vm3704 = vcmp.eq.s32.totalorder %v3684, 1
      %vm3705 = vcmp.eq.s32.totalorder %v3687, 1
      %vm3706 = vcmp.eq.s32.totalorder %v3690, 1
      %vm3707 = vcmp.eq.s32.totalorder %v3693, 1
      %vm3708 = vcmp.eq.s32.totalorder %v3696, 1
      %vm3709 = vcmp.eq.s32.totalorder %v3699, 1
      %vm3710 = vcmp.eq.s32.totalorder %v3702, 1
      %v3711 = vsel %vm3703, %v3165, 0.0
      %v3712 = vsel %vm3704, %v3164, 0.0
      %v3713 = vsel %vm3705, %v3163, 0.0
      %v3714 = vsel %vm3706, %v3162, 0.0
      %v3715 = vsel %vm3707, %v3161, 0.0
      %v3716 = vsel %vm3708, %v3160, 0.0
      %v3717 = vsel %vm3709, %v3159, 0.0
      %v3718 = vsel %vm3710, %v3158, 0.0
      %v3719 = vsel %vm3655, 1, 0
      %v3720 = vsel %vm3656, 1, 0
      %v3721 = vsel %vm3657, 1, 0
      %v3722 = vsel %vm3658, 1, 0
      %v3723 = vsel %vm3659, 1, 0
      %v3724 = vsel %vm3660, 1, 0
      %v3725 = vsel %vm3661, 1, 0
      %v3726 = vsel %vm3662, 1, 0
      %3727 = vset.pattern.permute.xlu0 0
      %3728 = vperm.xlu0 %3727, %v3719
      %v3729 = vpop.permute.xlu0 %3728
      %3730 = vset.pattern.permute.xlu0 0
      %3731 = vperm.xlu0 %3730, %v3720
      %v3732 = vpop.permute.xlu0 %3731
      %3733 = vset.pattern.permute.xlu0 0
      %3734 = vperm.xlu0 %3733, %v3721
      %v3735 = vpop.permute.xlu0 %3734
      %3736 = vset.pattern.permute.xlu0 0
      %3737 = vperm.xlu0 %3736, %v3722
      %v3738 = vpop.permute.xlu0 %3737
      %3739 = vset.pattern.permute.xlu0 0
      %3740 = vperm.xlu0 %3739, %v3723
      %v3741 = vpop.permute.xlu0 %3740
      %3742 = vset.pattern.permute.xlu0 0
      %3743 = vperm.xlu0 %3742, %v3724
      %v3744 = vpop.permute.xlu0 %3743
      %3745 = vset.pattern.permute.xlu0 0
      %3746 = vperm.xlu0 %3745, %v3725
      %v3747 = vpop.permute.xlu0 %3746
      %3748 = vset.pattern.permute.xlu0 0
      %3749 = vperm.xlu0 %3748, %v3726
      %v3750 = vpop.permute.xlu0 %3749
      %vm3751 = vcmp.eq.s32.totalorder %v3729, 1
      %vm3752 = vcmp.eq.s32.totalorder %v3732, 1
      %vm3753 = vcmp.eq.s32.totalorder %v3735, 1
      %vm3754 = vcmp.eq.s32.totalorder %v3738, 1
      %vm3755 = vcmp.eq.s32.totalorder %v3741, 1
      %vm3756 = vcmp.eq.s32.totalorder %v3744, 1
      %vm3757 = vcmp.eq.s32.totalorder %v3747, 1
      %vm3758 = vcmp.eq.s32.totalorder %v3750, 1
      %v3759 = vsel %vm3751, %v3197, %v3711
      %v3760 = vsel %vm3752, %v3196, %v3712
      %v3761 = vsel %vm3753, %v3195, %v3713
      %v3762 = vsel %vm3754, %v3194, %v3714
      %v3763 = vsel %vm3755, %v3193, %v3715
      %v3764 = vsel %vm3756, %v3192, %v3716
      %v3765 = vsel %vm3757, %v3191, %v3717
      %v3766 = vsel %vm3758, %v3198, %v3718
      %v3767 = vadd.s32 %v3105, 1
      %v3768 = vadd.s32 %v3106, 1
      %v3769 = vadd.s32 %v3107, 1
      %v3770 = vadd.s32 %v3108, 1
      %v3771 = vadd.s32 %v3109, 1
      %v3772 = vadd.s32 %v3110, 1
      %v3773 = vadd.s32 %v3111, 1
      %v3774 = vadd.s32 %v3112, 1
      %vm3775 = vcmp.ge.s32.totalorder %v3767, 0
      %vm3776 = vcmp.ge.s32.totalorder %v3768, 0
      %vm3777 = vcmp.ge.s32.totalorder %v3769, 0
      %vm3778 = vcmp.ge.s32.totalorder %v3770, 0
      %vm3779 = vcmp.ge.s32.totalorder %v3771, 0
      %vm3780 = vcmp.ge.s32.totalorder %v3772, 0
      %vm3781 = vcmp.ge.s32.totalorder %v3773, 0
      %vm3782 = vcmp.ge.s32.totalorder %v3774, 0
      %vm3783 = vcmp.le.s32.totalorder %v3767, 7
      %vm3784 = vcmp.le.s32.totalorder %v3768, 7
      %vm3785 = vcmp.le.s32.totalorder %v3769, 7
      %vm3786 = vcmp.le.s32.totalorder %v3770, 7
      %vm3787 = vcmp.le.s32.totalorder %v3771, 7
      %vm3788 = vcmp.le.s32.totalorder %v3772, 7
      %vm3789 = vcmp.le.s32.totalorder %v3773, 7
      %vm3790 = vcmp.le.s32.totalorder %v3774, 7
      %vm3791 = vmand %vm3775, %vm3783
      %vm3792 = vmand %vm3776, %vm3784
      %vm3793 = vmand %vm3777, %vm3785
      %vm3794 = vmand %vm3778, %vm3786
      %vm3795 = vmand %vm3779, %vm3787
      %vm3796 = vmand %vm3780, %vm3788
      %vm3797 = vmand %vm3781, %vm3789
      %vm3798 = vmand %vm3782, %vm3790
      %vm3799 = vmand %vm3791, %vm3571
      %vm3800 = vmand %vm3792, %vm3572
      %vm3801 = vmand %vm3793, %vm3573
      %vm3802 = vmand %vm3794, %vm3574
      %vm3803 = vmand %vm3795, %vm3575
      %vm3804 = vmand %vm3796, %vm3576
      %vm3805 = vmand %vm3797, %vm3577
      %vm3806 = vmand %vm3798, %vm3578
      %vm3807 = vmand %vm3799, %vm3587
      %vm3808 = vmand %vm3800, %vm3588
      %vm3809 = vmand %vm3801, %vm3589
      %vm3810 = vmand %vm3802, %vm3590
      %vm3811 = vmand %vm3803, %vm3591
      %vm3812 = vmand %vm3804, %vm3592
      %vm3813 = vmand %vm3805, %vm3593
      %vm3814 = vmand %vm3806, %vm3594
      %v3815 = vsel %vm3807, 1, 0
      %v3816 = vsel %vm3808, 1, 0
      %v3817 = vsel %vm3809, 1, 0
      %v3818 = vsel %vm3810, 1, 0
      %v3819 = vsel %vm3811, 1, 0
      %v3820 = vsel %vm3812, 1, 0
      %v3821 = vsel %vm3813, 1, 0
      %v3822 = vsel %vm3814, 1, 0
      %v3823 = vcvt.s32.f32 %v3815
      %v3824 = vcvt.s32.f32 %v3816
      %v3825 = vcvt.s32.f32 %v3817
      %v3826 = vcvt.s32.f32 %v3818
      %v3827 = vcvt.s32.f32 %v3819
      %v3828 = vcvt.s32.f32 %v3820
      %v3829 = vcvt.s32.f32 %v3821
      %v3830 = vcvt.s32.f32 %v3822
      %v3831 = vmul.f32 %v3759, %v3823
      %v3832 = vmul.f32 %v3760, %v3824
      %v3833 = vmul.f32 %v3761, %v3825
      %v3834 = vmul.f32 %v3762, %v3826
      %v3835 = vmul.f32 %v3763, %v3827
      %v3836 = vmul.f32 %v3764, %v3828
      %v3837 = vmul.f32 %v3765, %v3829
      %v3838 = vmul.f32 %v3766, %v3830
      %v3839 = vlaneseq
      %v3840 = vshrl.u32 %v3839, 7
      %v3841 = vsub.s32 6, %v3840
      %v3842 = vrot.slane %v3003, %v3841
      %v3843 = vmul.f32 %v3831, %v3842
      %v3844 = vmul.f32 %v3832, %v3842
      %v3845 = vmul.f32 %v3833, %v3842
      %v3846 = vmul.f32 %v3834, %v3842
      %v3847 = vmul.f32 %v3835, %v3842
      %v3848 = vmul.f32 %v3836, %v3842
      %v3849 = vmul.f32 %v3837, %v3842
      %v3850 = vmul.f32 %v3838, %v3842
      %v3851 = vadd.f32 %v3639, %v3843
      %v3852 = vadd.f32 %v3640, %v3844
      %v3853 = vadd.f32 %v3641, %v3845
      %v3854 = vadd.f32 %v3642, %v3846
      %v3855 = vadd.f32 %v3643, %v3847
      %v3856 = vadd.f32 %v3644, %v3848
      %v3857 = vadd.f32 %v3645, %v3849
      %v3858 = vadd.f32 %v3646, %v3850
      %v3859 = vadd.f32 %v3129, -7.0
      %v3860 = vadd.f32 %v3130, -7.0
      %v3861 = vadd.f32 %v3131, -7.0
      %v3862 = vadd.f32 %v3132, -7.0
      %v3863 = vadd.f32 %v3133, -7.0
      %v3864 = vadd.f32 %v3134, -7.0
      %v3865 = vadd.f32 %v3135, -7.0
      %v3866 = vadd.f32 %v3136, -7.0
      %vm3867 = vcmp.eq.f32.partialorder %v3213, %v3859
      %vm3868 = vcmp.eq.f32.partialorder %v3212, %v3860
      %vm3869 = vcmp.eq.f32.partialorder %v3211, %v3861
      %vm3870 = vcmp.eq.f32.partialorder %v3210, %v3862
      %vm3871 = vcmp.eq.f32.partialorder %v3209, %v3863
      %vm3872 = vcmp.eq.f32.partialorder %v3208, %v3864
      %vm3873 = vcmp.eq.f32.partialorder %v3207, %v3865
      %vm3874 = vcmp.eq.f32.partialorder %v3214, %v3866
      %vm3875 = vcmp.eq.f32.partialorder %v3181, %v3859
      %vm3876 = vcmp.eq.f32.partialorder %v3180, %v3860
      %vm3877 = vcmp.eq.f32.partialorder %v3179, %v3861
      %vm3878 = vcmp.eq.f32.partialorder %v3178, %v3862
      %vm3879 = vcmp.eq.f32.partialorder %v3177, %v3863
      %vm3880 = vcmp.eq.f32.partialorder %v3176, %v3864
      %vm3881 = vcmp.eq.f32.partialorder %v3175, %v3865
      %vm3882 = vcmp.eq.f32.partialorder %v3174, %v3866
      %v3883 = vsel %vm3875, 1, 0
      %v3884 = vsel %vm3876, 1, 0
      %v3885 = vsel %vm3877, 1, 0
      %v3886 = vsel %vm3878, 1, 0
      %v3887 = vsel %vm3879, 1, 0
      %v3888 = vsel %vm3880, 1, 0
      %v3889 = vsel %vm3881, 1, 0
      %v3890 = vsel %vm3882, 1, 0
      %3891 = vset.pattern.permute.xlu0 0
      %3892 = vperm.xlu0 %3891, %v3883
      %v3893 = vpop.permute.xlu0 %3892
      %3894 = vset.pattern.permute.xlu0 0
      %3895 = vperm.xlu0 %3894, %v3884
      %v3896 = vpop.permute.xlu0 %3895
      %3897 = vset.pattern.permute.xlu0 0
      %3898 = vperm.xlu0 %3897, %v3885
      %v3899 = vpop.permute.xlu0 %3898
      %3900 = vset.pattern.permute.xlu0 0
      %3901 = vperm.xlu0 %3900, %v3886
      %v3902 = vpop.permute.xlu0 %3901
      %3903 = vset.pattern.permute.xlu0 0
      %3904 = vperm.xlu0 %3903, %v3887
      %v3905 = vpop.permute.xlu0 %3904
      %3906 = vset.pattern.permute.xlu0 0
      %3907 = vperm.xlu0 %3906, %v3888
      %v3908 = vpop.permute.xlu0 %3907
      %3909 = vset.pattern.permute.xlu0 0
      %3910 = vperm.xlu0 %3909, %v3889
      %v3911 = vpop.permute.xlu0 %3910
      %3912 = vset.pattern.permute.xlu0 0
      %3913 = vperm.xlu0 %3912, %v3890
      %v3914 = vpop.permute.xlu0 %3913
      %vm3915 = vcmp.eq.s32.totalorder %v3893, 1
      %vm3916 = vcmp.eq.s32.totalorder %v3896, 1
      %vm3917 = vcmp.eq.s32.totalorder %v3899, 1
      %vm3918 = vcmp.eq.s32.totalorder %v3902, 1
      %vm3919 = vcmp.eq.s32.totalorder %v3905, 1
      %vm3920 = vcmp.eq.s32.totalorder %v3908, 1
      %vm3921 = vcmp.eq.s32.totalorder %v3911, 1
      %vm3922 = vcmp.eq.s32.totalorder %v3914, 1
      %v3923 = vsel %vm3915, %v3165, 0.0
      %v3924 = vsel %vm3916, %v3164, 0.0
      %v3925 = vsel %vm3917, %v3163, 0.0
      %v3926 = vsel %vm3918, %v3162, 0.0
      %v3927 = vsel %vm3919, %v3161, 0.0
      %v3928 = vsel %vm3920, %v3160, 0.0
      %v3929 = vsel %vm3921, %v3159, 0.0
      %v3930 = vsel %vm3922, %v3158, 0.0
      %v3931 = vsel %vm3867, 1, 0
      %v3932 = vsel %vm3868, 1, 0
      %v3933 = vsel %vm3869, 1, 0
      %v3934 = vsel %vm3870, 1, 0
      %v3935 = vsel %vm3871, 1, 0
      %v3936 = vsel %vm3872, 1, 0
      %v3937 = vsel %vm3873, 1, 0
      %v3938 = vsel %vm3874, 1, 0
      %3939 = vset.pattern.permute.xlu0 0
      %3940 = vperm.xlu0 %3939, %v3931
      %v3941 = vpop.permute.xlu0 %3940
      %3942 = vset.pattern.permute.xlu0 0
      %3943 = vperm.xlu0 %3942, %v3932
      %v3944 = vpop.permute.xlu0 %3943
      %3945 = vset.pattern.permute.xlu0 0
      %3946 = vperm.xlu0 %3945, %v3933
      %v3947 = vpop.permute.xlu0 %3946
      %3948 = vset.pattern.permute.xlu0 0
      %3949 = vperm.xlu0 %3948, %v3934
      %v3950 = vpop.permute.xlu0 %3949
      %3951 = vset.pattern.permute.xlu0 0
      %3952 = vperm.xlu0 %3951, %v3935
      %v3953 = vpop.permute.xlu0 %3952
      %3954 = vset.pattern.permute.xlu0 0
      %3955 = vperm.xlu0 %3954, %v3936
      %v3956 = vpop.permute.xlu0 %3955
      %3957 = vset.pattern.permute.xlu0 0
      %3958 = vperm.xlu0 %3957, %v3937
      %v3959 = vpop.permute.xlu0 %3958
      %3960 = vset.pattern.permute.xlu0 0
      %3961 = vperm.xlu0 %3960, %v3938
      %v3962 = vpop.permute.xlu0 %3961
      %vm3963 = vcmp.eq.s32.totalorder %v3941, 1
      %vm3964 = vcmp.eq.s32.totalorder %v3944, 1
      %vm3965 = vcmp.eq.s32.totalorder %v3947, 1
      %vm3966 = vcmp.eq.s32.totalorder %v3950, 1
      %vm3967 = vcmp.eq.s32.totalorder %v3953, 1
      %vm3968 = vcmp.eq.s32.totalorder %v3956, 1
      %vm3969 = vcmp.eq.s32.totalorder %v3959, 1
      %vm3970 = vcmp.eq.s32.totalorder %v3962, 1
      %v3971 = vsel %vm3963, %v3197, %v3923
      %v3972 = vsel %vm3964, %v3196, %v3924
      %v3973 = vsel %vm3965, %v3195, %v3925
      %v3974 = vsel %vm3966, %v3194, %v3926
      %v3975 = vsel %vm3967, %v3193, %v3927
      %v3976 = vsel %vm3968, %v3192, %v3928
      %v3977 = vsel %vm3969, %v3191, %v3929
      %v3978 = vsel %vm3970, %v3198, %v3930
      %v3979 = vadd.s32 %v3105, 4294967295
      %v3980 = vadd.s32 %v3106, 4294967295
      %v3981 = vadd.s32 %v3107, 4294967295
      %v3982 = vadd.s32 %v3108, 4294967295
      %v3983 = vadd.s32 %v3109, 4294967295
      %v3984 = vadd.s32 %v3110, 4294967295
      %v3985 = vadd.s32 %v3111, 4294967295
      %v3986 = vadd.s32 %v3112, 4294967295
      %vm3987 = vcmp.ge.s32.totalorder %v3979, 0
      %vm3988 = vcmp.ge.s32.totalorder %v3980, 0
      %vm3989 = vcmp.ge.s32.totalorder %v3981, 0
      %vm3990 = vcmp.ge.s32.totalorder %v3982, 0
      %vm3991 = vcmp.ge.s32.totalorder %v3983, 0
      %vm3992 = vcmp.ge.s32.totalorder %v3984, 0
      %vm3993 = vcmp.ge.s32.totalorder %v3985, 0
      %vm3994 = vcmp.ge.s32.totalorder %v3986, 0
      %vm3995 = vcmp.le.s32.totalorder %v3979, 7
      %vm3996 = vcmp.le.s32.totalorder %v3980, 7
      %vm3997 = vcmp.le.s32.totalorder %v3981, 7
      %vm3998 = vcmp.le.s32.totalorder %v3982, 7
      %vm3999 = vcmp.le.s32.totalorder %v3983, 7
      %vm4000 = vcmp.le.s32.totalorder %v3984, 7
      %vm4001 = vcmp.le.s32.totalorder %v3985, 7
      %vm4002 = vcmp.le.s32.totalorder %v3986, 7
      %vm4003 = vmand %vm3987, %vm3995
      %vm4004 = vmand %vm3988, %vm3996
      %vm4005 = vmand %vm3989, %vm3997
      %vm4006 = vmand %vm3990, %vm3998
      %vm4007 = vmand %vm3991, %vm3999
      %vm4008 = vmand %vm3992, %vm4000
      %vm4009 = vmand %vm3993, %vm4001
      %vm4010 = vmand %vm3994, %vm4002
      %vm4011 = vmand %vm4003, %vm3367
      %vm4012 = vmand %vm4004, %vm3368
      %vm4013 = vmand %vm4005, %vm3369
      %vm4014 = vmand %vm4006, %vm3370
      %vm4015 = vmand %vm4007, %vm3371
      %vm4016 = vmand %vm4008, %vm3372
      %vm4017 = vmand %vm4009, %vm3373
      %vm4018 = vmand %vm4010, %vm3374
      %vm4019 = vmand %vm4011, %vm3383
      %vm4020 = vmand %vm4012, %vm3384
      %vm4021 = vmand %vm4013, %vm3385
      %vm4022 = vmand %vm4014, %vm3386
      %vm4023 = vmand %vm4015, %vm3387
      %vm4024 = vmand %vm4016, %vm3388
      %vm4025 = vmand %vm4017, %vm3389
      %vm4026 = vmand %vm4018, %vm3390
      %v4027 = vsel %vm4019, 1, 0
      %v4028 = vsel %vm4020, 1, 0
      %v4029 = vsel %vm4021, 1, 0
      %v4030 = vsel %vm4022, 1, 0
      %v4031 = vsel %vm4023, 1, 0
      %v4032 = vsel %vm4024, 1, 0
      %v4033 = vsel %vm4025, 1, 0
      %v4034 = vsel %vm4026, 1, 0
      %v4035 = vcvt.s32.f32 %v4027
      %v4036 = vcvt.s32.f32 %v4028
      %v4037 = vcvt.s32.f32 %v4029
      %v4038 = vcvt.s32.f32 %v4030
      %v4039 = vcvt.s32.f32 %v4031
      %v4040 = vcvt.s32.f32 %v4032
      %v4041 = vcvt.s32.f32 %v4033
      %v4042 = vcvt.s32.f32 %v4034
      %v4043 = vmul.f32 %v3971, %v4035
      %v4044 = vmul.f32 %v3972, %v4036
      %v4045 = vmul.f32 %v3973, %v4037
      %v4046 = vmul.f32 %v3974, %v4038
      %v4047 = vmul.f32 %v3975, %v4039
      %v4048 = vmul.f32 %v3976, %v4040
      %v4049 = vmul.f32 %v3977, %v4041
      %v4050 = vmul.f32 %v3978, %v4042
      %v4051 = vlaneseq
      %v4052 = vshrl.u32 %v4051, 7
      %v4053 = vsub.s32 2, %v4052
      %v4054 = vrot.slane %v3003, %v4053
      %v4055 = vmul.f32 %v4043, %v4054
      %v4056 = vmul.f32 %v4044, %v4054
      %v4057 = vmul.f32 %v4045, %v4054
      %v4058 = vmul.f32 %v4046, %v4054
      %v4059 = vmul.f32 %v4047, %v4054
      %v4060 = vmul.f32 %v4048, %v4054
      %v4061 = vmul.f32 %v4049, %v4054
      %v4062 = vmul.f32 %v4050, %v4054
      %v4063 = vadd.f32 %v3851, %v4055
      %v4064 = vadd.f32 %v3852, %v4056
      %v4065 = vadd.f32 %v3853, %v4057
      %v4066 = vadd.f32 %v3854, %v4058
      %v4067 = vadd.f32 %v3855, %v4059
      %v4068 = vadd.f32 %v3856, %v4060
      %v4069 = vadd.f32 %v3857, %v4061
      %v4070 = vadd.f32 %v3858, %v4062
      %v4071 = vadd.f32 %v3129, 8.0
      %v4072 = vadd.f32 %v3130, 8.0
      %v4073 = vadd.f32 %v3131, 8.0
      %v4074 = vadd.f32 %v3132, 8.0
      %v4075 = vadd.f32 %v3133, 8.0
      %v4076 = vadd.f32 %v3134, 8.0
      %v4077 = vadd.f32 %v3135, 8.0
      %v4078 = vadd.f32 %v3136, 8.0
      %vm4079 = vcmp.eq.f32.partialorder %v3130, %v4071
      %vm4080 = vcmp.eq.f32.partialorder %v3131, %v4072
      %vm4081 = vcmp.eq.f32.partialorder %v3132, %v4073
      %vm4082 = vcmp.eq.f32.partialorder %v3133, %v4074
      %vm4083 = vcmp.eq.f32.partialorder %v3134, %v4075
      %vm4084 = vcmp.eq.f32.partialorder %v3135, %v4076
      %vm4085 = vcmp.eq.f32.partialorder %v3136, %v4077
      %vm4086 = vcmp.eq.f32.partialorder %v3129, %v4078
      %vm4087 = vcmp.eq.f32.partialorder %v3136, %v4071
      %vm4088 = vcmp.eq.f32.partialorder %v3129, %v4072
      %vm4089 = vcmp.eq.f32.partialorder %v3130, %v4073
      %vm4090 = vcmp.eq.f32.partialorder %v3131, %v4074
      %vm4091 = vcmp.eq.f32.partialorder %v3132, %v4075
      %vm4092 = vcmp.eq.f32.partialorder %v3133, %v4076
      %vm4093 = vcmp.eq.f32.partialorder %v3134, %v4077
      %vm4094 = vcmp.eq.f32.partialorder %v3135, %v4078
      %v4095 = vsel %vm4087, 1, 0
      %v4096 = vsel %vm4088, 1, 0
      %v4097 = vsel %vm4089, 1, 0
      %v4098 = vsel %vm4090, 1, 0
      %v4099 = vsel %vm4091, 1, 0
      %v4100 = vsel %vm4092, 1, 0
      %v4101 = vsel %vm4093, 1, 0
      %v4102 = vsel %vm4094, 1, 0
      %4103 = vset.pattern.permute.xlu0 0
      %4104 = vperm.xlu0 %4103, %v4095
      %v4105 = vpop.permute.xlu0 %4104
      %4106 = vset.pattern.permute.xlu0 0
      %4107 = vperm.xlu0 %4106, %v4096
      %v4108 = vpop.permute.xlu0 %4107
      %4109 = vset.pattern.permute.xlu0 0
      %4110 = vperm.xlu0 %4109, %v4097
      %v4111 = vpop.permute.xlu0 %4110
      %4112 = vset.pattern.permute.xlu0 0
      %4113 = vperm.xlu0 %4112, %v4098
      %v4114 = vpop.permute.xlu0 %4113
      %4115 = vset.pattern.permute.xlu0 0
      %4116 = vperm.xlu0 %4115, %v4099
      %v4117 = vpop.permute.xlu0 %4116
      %4118 = vset.pattern.permute.xlu0 0
      %4119 = vperm.xlu0 %4118, %v4100
      %v4120 = vpop.permute.xlu0 %4119
      %4121 = vset.pattern.permute.xlu0 0
      %4122 = vperm.xlu0 %4121, %v4101
      %v4123 = vpop.permute.xlu0 %4122
      %4124 = vset.pattern.permute.xlu0 0
      %4125 = vperm.xlu0 %4124, %v4102
      %v4126 = vpop.permute.xlu0 %4125
      %vm4127 = vcmp.eq.s32.totalorder %v4105, 1
      %vm4128 = vcmp.eq.s32.totalorder %v4108, 1
      %vm4129 = vcmp.eq.s32.totalorder %v4111, 1
      %vm4130 = vcmp.eq.s32.totalorder %v4114, 1
      %vm4131 = vcmp.eq.s32.totalorder %v4117, 1
      %vm4132 = vcmp.eq.s32.totalorder %v4120, 1
      %vm4133 = vcmp.eq.s32.totalorder %v4123, 1
      %vm4134 = vcmp.eq.s32.totalorder %v4126, 1
      %v4135 = vsel %vm4127, %v3000, 0.0
      %v4136 = vsel %vm4128, %v2973, 0.0
      %v4137 = vsel %vm4129, %v2976, 0.0
      %v4138 = vsel %vm4130, %v2981, 0.0
      %v4139 = vsel %vm4131, %v2984, 0.0
      %v4140 = vsel %vm4132, %v2989, 0.0
      %v4141 = vsel %vm4133, %v2992, 0.0
      %v4142 = vsel %vm4134, %v2997, 0.0
      %v4143 = vsel %vm4079, 1, 0
      %v4144 = vsel %vm4080, 1, 0
      %v4145 = vsel %vm4081, 1, 0
      %v4146 = vsel %vm4082, 1, 0
      %v4147 = vsel %vm4083, 1, 0
      %v4148 = vsel %vm4084, 1, 0
      %v4149 = vsel %vm4085, 1, 0
      %v4150 = vsel %vm4086, 1, 0
      %4151 = vset.pattern.permute.xlu0 0
      %4152 = vperm.xlu0 %4151, %v4143
      %v4153 = vpop.permute.xlu0 %4152
      %4154 = vset.pattern.permute.xlu0 0
      %4155 = vperm.xlu0 %4154, %v4144
      %v4156 = vpop.permute.xlu0 %4155
      %4157 = vset.pattern.permute.xlu0 0
      %4158 = vperm.xlu0 %4157, %v4145
      %v4159 = vpop.permute.xlu0 %4158
      %4160 = vset.pattern.permute.xlu0 0
      %4161 = vperm.xlu0 %4160, %v4146
      %v4162 = vpop.permute.xlu0 %4161
      %4163 = vset.pattern.permute.xlu0 0
      %4164 = vperm.xlu0 %4163, %v4147
      %v4165 = vpop.permute.xlu0 %4164
      %4166 = vset.pattern.permute.xlu0 0
      %4167 = vperm.xlu0 %4166, %v4148
      %v4168 = vpop.permute.xlu0 %4167
      %4169 = vset.pattern.permute.xlu0 0
      %4170 = vperm.xlu0 %4169, %v4149
      %v4171 = vpop.permute.xlu0 %4170
      %4172 = vset.pattern.permute.xlu0 0
      %4173 = vperm.xlu0 %4172, %v4150
      %v4174 = vpop.permute.xlu0 %4173
      %vm4175 = vcmp.eq.s32.totalorder %v4153, 1
      %vm4176 = vcmp.eq.s32.totalorder %v4156, 1
      %vm4177 = vcmp.eq.s32.totalorder %v4159, 1
      %vm4178 = vcmp.eq.s32.totalorder %v4162, 1
      %vm4179 = vcmp.eq.s32.totalorder %v4165, 1
      %vm4180 = vcmp.eq.s32.totalorder %v4168, 1
      %vm4181 = vcmp.eq.s32.totalorder %v4171, 1
      %vm4182 = vcmp.eq.s32.totalorder %v4174, 1
      %v4183 = vsel %vm4175, %v2976, %v4135
      %v4184 = vsel %vm4176, %v2981, %v4136
      %v4185 = vsel %vm4177, %v2984, %v4137
      %v4186 = vsel %vm4178, %v2989, %v4138
      %v4187 = vsel %vm4179, %v2992, %v4139
      %v4188 = vsel %vm4180, %v2997, %v4140
      %v4189 = vsel %vm4181, %v3000, %v4141
      %v4190 = vsel %vm4182, %v2973, %v4142
      %vm4191 = vcmp.ge.s32.totalorder %v3121, 0
      %vm4192 = vcmp.ge.s32.totalorder %v3122, 0
      %vm4193 = vcmp.ge.s32.totalorder %v3123, 0
      %vm4194 = vcmp.ge.s32.totalorder %v3124, 0
      %vm4195 = vcmp.ge.s32.totalorder %v3125, 0
      %vm4196 = vcmp.ge.s32.totalorder %v3126, 0
      %vm4197 = vcmp.ge.s32.totalorder %v3127, 0
      %vm4198 = vcmp.ge.s32.totalorder %v3128, 0
      %vm4199 = vmand %vm3791, %vm4191
      %vm4200 = vmand %vm3792, %vm4192
      %vm4201 = vmand %vm3793, %vm4193
      %vm4202 = vmand %vm3794, %vm4194
      %vm4203 = vmand %vm3795, %vm4195
      %vm4204 = vmand %vm3796, %vm4196
      %vm4205 = vmand %vm3797, %vm4197
      %vm4206 = vmand %vm3798, %vm4198
      %vm4207 = vcmp.le.s32.totalorder %v3121, 7
      %vm4208 = vcmp.le.s32.totalorder %v3122, 7
      %vm4209 = vcmp.le.s32.totalorder %v3123, 7
      %vm4210 = vcmp.le.s32.totalorder %v3124, 7
      %vm4211 = vcmp.le.s32.totalorder %v3125, 7
      %vm4212 = vcmp.le.s32.totalorder %v3126, 7
      %vm4213 = vcmp.le.s32.totalorder %v3127, 7
      %vm4214 = vcmp.le.s32.totalorder %v3128, 7
      %vm4215 = vmand %vm4199, %vm4207
      %vm4216 = vmand %vm4200, %vm4208
      %vm4217 = vmand %vm4201, %vm4209
      %vm4218 = vmand %vm4202, %vm4210
      %vm4219 = vmand %vm4203, %vm4211
      %vm4220 = vmand %vm4204, %vm4212
      %vm4221 = vmand %vm4205, %vm4213
      %vm4222 = vmand %vm4206, %vm4214
      %v4223 = vsel %vm4215, 1, 0
      %v4224 = vsel %vm4216, 1, 0
      %v4225 = vsel %vm4217, 1, 0
      %v4226 = vsel %vm4218, 1, 0
      %v4227 = vsel %vm4219, 1, 0
      %v4228 = vsel %vm4220, 1, 0
      %v4229 = vsel %vm4221, 1, 0
      %v4230 = vsel %vm4222, 1, 0
      %v4231 = vcvt.s32.f32 %v4223
      %v4232 = vcvt.s32.f32 %v4224
      %v4233 = vcvt.s32.f32 %v4225
      %v4234 = vcvt.s32.f32 %v4226
      %v4235 = vcvt.s32.f32 %v4227
      %v4236 = vcvt.s32.f32 %v4228
      %v4237 = vcvt.s32.f32 %v4229
      %v4238 = vcvt.s32.f32 %v4230
      %v4239 = vmul.f32 %v4183, %v4231
      %v4240 = vmul.f32 %v4184, %v4232
      %v4241 = vmul.f32 %v4185, %v4233
      %v4242 = vmul.f32 %v4186, %v4234
      %v4243 = vmul.f32 %v4187, %v4235
      %v4244 = vmul.f32 %v4188, %v4236
      %v4245 = vmul.f32 %v4189, %v4237
      %v4246 = vmul.f32 %v4190, %v4238
      %v4247 = vlaneseq
      %v4248 = vshrl.u32 %v4247, 7
      %v4249 = vsub.s32 7, %v4248
      %v4250 = vrot.slane %v3003, %v4249
      %v4251 = vmul.f32 %v4239, %v4250
      %v4252 = vmul.f32 %v4240, %v4250
      %v4253 = vmul.f32 %v4241, %v4250
      %v4254 = vmul.f32 %v4242, %v4250
      %v4255 = vmul.f32 %v4243, %v4250
      %v4256 = vmul.f32 %v4244, %v4250
      %v4257 = vmul.f32 %v4245, %v4250
      %v4258 = vmul.f32 %v4246, %v4250
      %v4259 = vadd.f32 %v4063, %v4251
      %v4260 = vadd.f32 %v4064, %v4252
      %v4261 = vadd.f32 %v4065, %v4253
      %v4262 = vadd.f32 %v4066, %v4254
      %v4263 = vadd.f32 %v4067, %v4255
      %v4264 = vadd.f32 %v4068, %v4256
      %v4265 = vadd.f32 %v4069, %v4257
      %v4266 = vadd.f32 %v4070, %v4258
      %v4267 = vadd.f32 %v3129, -8.0
      %v4268 = vadd.f32 %v3130, -8.0
      %v4269 = vadd.f32 %v3131, -8.0
      %v4270 = vadd.f32 %v3132, -8.0
      %v4271 = vadd.f32 %v3133, -8.0
      %v4272 = vadd.f32 %v3134, -8.0
      %v4273 = vadd.f32 %v3135, -8.0
      %v4274 = vadd.f32 %v3136, -8.0
      %vm4275 = vcmp.eq.f32.partialorder %v3130, %v4267
      %vm4276 = vcmp.eq.f32.partialorder %v3131, %v4268
      %vm4277 = vcmp.eq.f32.partialorder %v3132, %v4269
      %vm4278 = vcmp.eq.f32.partialorder %v3133, %v4270
      %vm4279 = vcmp.eq.f32.partialorder %v3134, %v4271
      %vm4280 = vcmp.eq.f32.partialorder %v3135, %v4272
      %vm4281 = vcmp.eq.f32.partialorder %v3136, %v4273
      %vm4282 = vcmp.eq.f32.partialorder %v3129, %v4274
      %vm4283 = vcmp.eq.f32.partialorder %v3136, %v4267
      %vm4284 = vcmp.eq.f32.partialorder %v3129, %v4268
      %vm4285 = vcmp.eq.f32.partialorder %v3130, %v4269
      %vm4286 = vcmp.eq.f32.partialorder %v3131, %v4270
      %vm4287 = vcmp.eq.f32.partialorder %v3132, %v4271
      %vm4288 = vcmp.eq.f32.partialorder %v3133, %v4272
      %vm4289 = vcmp.eq.f32.partialorder %v3134, %v4273
      %vm4290 = vcmp.eq.f32.partialorder %v3135, %v4274
      %v4291 = vsel %vm4283, 1, 0
      %v4292 = vsel %vm4284, 1, 0
      %v4293 = vsel %vm4285, 1, 0
      %v4294 = vsel %vm4286, 1, 0
      %v4295 = vsel %vm4287, 1, 0
      %v4296 = vsel %vm4288, 1, 0
      %v4297 = vsel %vm4289, 1, 0
      %v4298 = vsel %vm4290, 1, 0
      %4299 = vset.pattern.permute.xlu0 0
      %4300 = vperm.xlu0 %4299, %v4291
      %v4301 = vpop.permute.xlu0 %4300
      %4302 = vset.pattern.permute.xlu0 0
      %4303 = vperm.xlu0 %4302, %v4292
      %v4304 = vpop.permute.xlu0 %4303
      %4305 = vset.pattern.permute.xlu0 0
      %4306 = vperm.xlu0 %4305, %v4293
      %v4307 = vpop.permute.xlu0 %4306
      %4308 = vset.pattern.permute.xlu0 0
      %4309 = vperm.xlu0 %4308, %v4294
      %v4310 = vpop.permute.xlu0 %4309
      %4311 = vset.pattern.permute.xlu0 0
      %4312 = vperm.xlu0 %4311, %v4295
      %v4313 = vpop.permute.xlu0 %4312
      %4314 = vset.pattern.permute.xlu0 0
      %4315 = vperm.xlu0 %4314, %v4296
      %v4316 = vpop.permute.xlu0 %4315
      %4317 = vset.pattern.permute.xlu0 0
      %4318 = vperm.xlu0 %4317, %v4297
      %v4319 = vpop.permute.xlu0 %4318
      %4320 = vset.pattern.permute.xlu0 0
      %4321 = vperm.xlu0 %4320, %v4298
      %v4322 = vpop.permute.xlu0 %4321
      %vm4323 = vcmp.eq.s32.totalorder %v4301, 1
      %vm4324 = vcmp.eq.s32.totalorder %v4304, 1
      %vm4325 = vcmp.eq.s32.totalorder %v4307, 1
      %vm4326 = vcmp.eq.s32.totalorder %v4310, 1
      %vm4327 = vcmp.eq.s32.totalorder %v4313, 1
      %vm4328 = vcmp.eq.s32.totalorder %v4316, 1
      %vm4329 = vcmp.eq.s32.totalorder %v4319, 1
      %vm4330 = vcmp.eq.s32.totalorder %v4322, 1
      %v4331 = vsel %vm4323, %v3000, 0.0
      %v4332 = vsel %vm4324, %v2973, 0.0
      %v4333 = vsel %vm4325, %v2976, 0.0
      %v4334 = vsel %vm4326, %v2981, 0.0
      %v4335 = vsel %vm4327, %v2984, 0.0
      %v4336 = vsel %vm4328, %v2989, 0.0
      %v4337 = vsel %vm4329, %v2992, 0.0
      %v4338 = vsel %vm4330, %v2997, 0.0
      %v4339 = vsel %vm4275, 1, 0
      %v4340 = vsel %vm4276, 1, 0
      %v4341 = vsel %vm4277, 1, 0
      %v4342 = vsel %vm4278, 1, 0
      %v4343 = vsel %vm4279, 1, 0
      %v4344 = vsel %vm4280, 1, 0
      %v4345 = vsel %vm4281, 1, 0
      %v4346 = vsel %vm4282, 1, 0
      %4347 = vset.pattern.permute.xlu0 0
      %4348 = vperm.xlu0 %4347, %v4339
      %v4349 = vpop.permute.xlu0 %4348
      %4350 = vset.pattern.permute.xlu0 0
      %4351 = vperm.xlu0 %4350, %v4340
      %v4352 = vpop.permute.xlu0 %4351
      %4353 = vset.pattern.permute.xlu0 0
      %4354 = vperm.xlu0 %4353, %v4341
      %v4355 = vpop.permute.xlu0 %4354
      %4356 = vset.pattern.permute.xlu0 0
      %4357 = vperm.xlu0 %4356, %v4342
      %v4358 = vpop.permute.xlu0 %4357
      %4359 = vset.pattern.permute.xlu0 0
      %4360 = vperm.xlu0 %4359, %v4343
      %v4361 = vpop.permute.xlu0 %4360
      %4362 = vset.pattern.permute.xlu0 0
      %4363 = vperm.xlu0 %4362, %v4344
      %v4364 = vpop.permute.xlu0 %4363
      %4365 = vset.pattern.permute.xlu0 0
      %4366 = vperm.xlu0 %4365, %v4345
      %v4367 = vpop.permute.xlu0 %4366
      %4368 = vset.pattern.permute.xlu0 0
      %4369 = vperm.xlu0 %4368, %v4346
      %v4370 = vpop.permute.xlu0 %4369
      %vm4371 = vcmp.eq.s32.totalorder %v4349, 1
      %vm4372 = vcmp.eq.s32.totalorder %v4352, 1
      %vm4373 = vcmp.eq.s32.totalorder %v4355, 1
      %vm4374 = vcmp.eq.s32.totalorder %v4358, 1
      %vm4375 = vcmp.eq.s32.totalorder %v4361, 1
      %vm4376 = vcmp.eq.s32.totalorder %v4364, 1
      %vm4377 = vcmp.eq.s32.totalorder %v4367, 1
      %vm4378 = vcmp.eq.s32.totalorder %v4370, 1
      %v4379 = vsel %vm4371, %v2976, %v4331
      %v4380 = vsel %vm4372, %v2981, %v4332
      %v4381 = vsel %vm4373, %v2984, %v4333
      %v4382 = vsel %vm4374, %v2989, %v4334
      %v4383 = vsel %vm4375, %v2992, %v4335
      %v4384 = vsel %vm4376, %v2997, %v4336
      %v4385 = vsel %vm4377, %v3000, %v4337
      %v4386 = vsel %vm4378, %v2973, %v4338
      %vm4387 = vmand %vm4003, %vm4191
      %vm4388 = vmand %vm4004, %vm4192
      %vm4389 = vmand %vm4005, %vm4193
      %vm4390 = vmand %vm4006, %vm4194
      %vm4391 = vmand %vm4007, %vm4195
      %vm4392 = vmand %vm4008, %vm4196
      %vm4393 = vmand %vm4009, %vm4197
      %vm4394 = vmand %vm4010, %vm4198
      %vm4395 = vmand %vm4387, %vm4207
      %vm4396 = vmand %vm4388, %vm4208
      %vm4397 = vmand %vm4389, %vm4209
      %vm4398 = vmand %vm4390, %vm4210
      %vm4399 = vmand %vm4391, %vm4211
      %vm4400 = vmand %vm4392, %vm4212
      %vm4401 = vmand %vm4393, %vm4213
      %vm4402 = vmand %vm4394, %vm4214
      %v4403 = vsel %vm4395, 1, 0
      %v4404 = vsel %vm4396, 1, 0
      %v4405 = vsel %vm4397, 1, 0
      %v4406 = vsel %vm4398, 1, 0
      %v4407 = vsel %vm4399, 1, 0
      %v4408 = vsel %vm4400, 1, 0
      %v4409 = vsel %vm4401, 1, 0
      %v4410 = vsel %vm4402, 1, 0
      %v4411 = vcvt.s32.f32 %v4403
      %v4412 = vcvt.s32.f32 %v4404
      %v4413 = vcvt.s32.f32 %v4405
      %v4414 = vcvt.s32.f32 %v4406
      %v4415 = vcvt.s32.f32 %v4407
      %v4416 = vcvt.s32.f32 %v4408
      %v4417 = vcvt.s32.f32 %v4409
      %v4418 = vcvt.s32.f32 %v4410
      %v4419 = vmul.f32 %v4379, %v4411
      %v4420 = vmul.f32 %v4380, %v4412
      %v4421 = vmul.f32 %v4381, %v4413
      %v4422 = vmul.f32 %v4382, %v4414
      %v4423 = vmul.f32 %v4383, %v4415
      %v4424 = vmul.f32 %v4384, %v4416
      %v4425 = vmul.f32 %v4385, %v4417
      %v4426 = vmul.f32 %v4386, %v4418
      %v4427 = vlaneseq
      %v4428 = vshrl.u32 %v4427, 7
      %v4429 = vsub.s32 1, %v4428
      %v4430 = vrot.slane %v3003, %v4429
      %v4431 = vmul.f32 %v4419, %v4430
      %v4432 = vmul.f32 %v4420, %v4430
      %v4433 = vmul.f32 %v4421, %v4430
      %v4434 = vmul.f32 %v4422, %v4430
      %v4435 = vmul.f32 %v4423, %v4430
      %v4436 = vmul.f32 %v4424, %v4430
      %v4437 = vmul.f32 %v4425, %v4430
      %v4438 = vmul.f32 %v4426, %v4430
      %v4439 = vadd.f32 %v4259, %v4431
      %v4440 = vadd.f32 %v4260, %v4432
      %v4441 = vadd.f32 %v4261, %v4433
      %v4442 = vadd.f32 %v4262, %v4434
      %v4443 = vadd.f32 %v4263, %v4435
      %v4444 = vadd.f32 %v4264, %v4436
      %v4445 = vadd.f32 %v4265, %v4437
      %v4446 = vadd.f32 %v4266, %v4438
      %v4447 = vadd.f32 %v3129, 9.0
      %v4448 = vadd.f32 %v3130, 9.0
      %v4449 = vadd.f32 %v3131, 9.0
      %v4450 = vadd.f32 %v3132, 9.0
      %v4451 = vadd.f32 %v3133, 9.0
      %v4452 = vadd.f32 %v3134, 9.0
      %v4453 = vadd.f32 %v3135, 9.0
      %v4454 = vadd.f32 %v3136, 9.0
      %vm4455 = vcmp.eq.f32.partialorder %v3179, %v4447
      %vm4456 = vcmp.eq.f32.partialorder %v3178, %v4448
      %vm4457 = vcmp.eq.f32.partialorder %v3177, %v4449
      %vm4458 = vcmp.eq.f32.partialorder %v3176, %v4450
      %vm4459 = vcmp.eq.f32.partialorder %v3175, %v4451
      %vm4460 = vcmp.eq.f32.partialorder %v3174, %v4452
      %vm4461 = vcmp.eq.f32.partialorder %v3181, %v4453
      %vm4462 = vcmp.eq.f32.partialorder %v3180, %v4454
      %vm4463 = vcmp.eq.f32.partialorder %v3207, %v4447
      %vm4464 = vcmp.eq.f32.partialorder %v3214, %v4448
      %vm4465 = vcmp.eq.f32.partialorder %v3213, %v4449
      %vm4466 = vcmp.eq.f32.partialorder %v3212, %v4450
      %vm4467 = vcmp.eq.f32.partialorder %v3211, %v4451
      %vm4468 = vcmp.eq.f32.partialorder %v3210, %v4452
      %vm4469 = vcmp.eq.f32.partialorder %v3209, %v4453
      %vm4470 = vcmp.eq.f32.partialorder %v3208, %v4454
      %v4471 = vsel %vm4463, 1, 0
      %v4472 = vsel %vm4464, 1, 0
      %v4473 = vsel %vm4465, 1, 0
      %v4474 = vsel %vm4466, 1, 0
      %v4475 = vsel %vm4467, 1, 0
      %v4476 = vsel %vm4468, 1, 0
      %v4477 = vsel %vm4469, 1, 0
      %v4478 = vsel %vm4470, 1, 0
      %4479 = vset.pattern.permute.xlu0 0
      %4480 = vperm.xlu0 %4479, %v4471
      %v4481 = vpop.permute.xlu0 %4480
      %4482 = vset.pattern.permute.xlu0 0
      %4483 = vperm.xlu0 %4482, %v4472
      %v4484 = vpop.permute.xlu0 %4483
      %4485 = vset.pattern.permute.xlu0 0
      %4486 = vperm.xlu0 %4485, %v4473
      %v4487 = vpop.permute.xlu0 %4486
      %4488 = vset.pattern.permute.xlu0 0
      %4489 = vperm.xlu0 %4488, %v4474
      %v4490 = vpop.permute.xlu0 %4489
      %4491 = vset.pattern.permute.xlu0 0
      %4492 = vperm.xlu0 %4491, %v4475
      %v4493 = vpop.permute.xlu0 %4492
      %4494 = vset.pattern.permute.xlu0 0
      %4495 = vperm.xlu0 %4494, %v4476
      %v4496 = vpop.permute.xlu0 %4495
      %4497 = vset.pattern.permute.xlu0 0
      %4498 = vperm.xlu0 %4497, %v4477
      %v4499 = vpop.permute.xlu0 %4498
      %4500 = vset.pattern.permute.xlu0 0
      %4501 = vperm.xlu0 %4500, %v4478
      %v4502 = vpop.permute.xlu0 %4501
      %vm4503 = vcmp.eq.s32.totalorder %v4481, 1
      %vm4504 = vcmp.eq.s32.totalorder %v4484, 1
      %vm4505 = vcmp.eq.s32.totalorder %v4487, 1
      %vm4506 = vcmp.eq.s32.totalorder %v4490, 1
      %vm4507 = vcmp.eq.s32.totalorder %v4493, 1
      %vm4508 = vcmp.eq.s32.totalorder %v4496, 1
      %vm4509 = vcmp.eq.s32.totalorder %v4499, 1
      %vm4510 = vcmp.eq.s32.totalorder %v4502, 1
      %v4511 = vsel %vm4503, %v3191, 0.0
      %v4512 = vsel %vm4504, %v3198, 0.0
      %v4513 = vsel %vm4505, %v3197, 0.0
      %v4514 = vsel %vm4506, %v3196, 0.0
      %v4515 = vsel %vm4507, %v3195, 0.0
      %v4516 = vsel %vm4508, %v3194, 0.0
      %v4517 = vsel %vm4509, %v3193, 0.0
      %v4518 = vsel %vm4510, %v3192, 0.0
      %v4519 = vsel %vm4455, 1, 0
      %v4520 = vsel %vm4456, 1, 0
      %v4521 = vsel %vm4457, 1, 0
      %v4522 = vsel %vm4458, 1, 0
      %v4523 = vsel %vm4459, 1, 0
      %v4524 = vsel %vm4460, 1, 0
      %v4525 = vsel %vm4461, 1, 0
      %v4526 = vsel %vm4462, 1, 0
      %4527 = vset.pattern.permute.xlu0 0
      %4528 = vperm.xlu0 %4527, %v4519
      %v4529 = vpop.permute.xlu0 %4528
      %4530 = vset.pattern.permute.xlu0 0
      %4531 = vperm.xlu0 %4530, %v4520
      %v4532 = vpop.permute.xlu0 %4531
      %4533 = vset.pattern.permute.xlu0 0
      %4534 = vperm.xlu0 %4533, %v4521
      %v4535 = vpop.permute.xlu0 %4534
      %4536 = vset.pattern.permute.xlu0 0
      %4537 = vperm.xlu0 %4536, %v4522
      %v4538 = vpop.permute.xlu0 %4537
      %4539 = vset.pattern.permute.xlu0 0
      %4540 = vperm.xlu0 %4539, %v4523
      %v4541 = vpop.permute.xlu0 %4540
      %4542 = vset.pattern.permute.xlu0 0
      %4543 = vperm.xlu0 %4542, %v4524
      %v4544 = vpop.permute.xlu0 %4543
      %4545 = vset.pattern.permute.xlu0 0
      %4546 = vperm.xlu0 %4545, %v4525
      %v4547 = vpop.permute.xlu0 %4546
      %4548 = vset.pattern.permute.xlu0 0
      %4549 = vperm.xlu0 %4548, %v4526
      %v4550 = vpop.permute.xlu0 %4549
      %vm4551 = vcmp.eq.s32.totalorder %v4529, 1
      %vm4552 = vcmp.eq.s32.totalorder %v4532, 1
      %vm4553 = vcmp.eq.s32.totalorder %v4535, 1
      %vm4554 = vcmp.eq.s32.totalorder %v4538, 1
      %vm4555 = vcmp.eq.s32.totalorder %v4541, 1
      %vm4556 = vcmp.eq.s32.totalorder %v4544, 1
      %vm4557 = vcmp.eq.s32.totalorder %v4547, 1
      %vm4558 = vcmp.eq.s32.totalorder %v4550, 1
      %v4559 = vsel %vm4551, %v3163, %v4511
      %v4560 = vsel %vm4552, %v3162, %v4512
      %v4561 = vsel %vm4553, %v3161, %v4513
      %v4562 = vsel %vm4554, %v3160, %v4514
      %v4563 = vsel %vm4555, %v3159, %v4515
      %v4564 = vsel %vm4556, %v3158, %v4516
      %v4565 = vsel %vm4557, %v3165, %v4517
      %v4566 = vsel %vm4558, %v3164, %v4518
      %vm4567 = vmand %vm3791, %vm3367
      %vm4568 = vmand %vm3792, %vm3368
      %vm4569 = vmand %vm3793, %vm3369
      %vm4570 = vmand %vm3794, %vm3370
      %vm4571 = vmand %vm3795, %vm3371
      %vm4572 = vmand %vm3796, %vm3372
      %vm4573 = vmand %vm3797, %vm3373
      %vm4574 = vmand %vm3798, %vm3374
      %vm4575 = vmand %vm4567, %vm3383
      %vm4576 = vmand %vm4568, %vm3384
      %vm4577 = vmand %vm4569, %vm3385
      %vm4578 = vmand %vm4570, %vm3386
      %vm4579 = vmand %vm4571, %vm3387
      %vm4580 = vmand %vm4572, %vm3388
      %vm4581 = vmand %vm4573, %vm3389
      %vm4582 = vmand %vm4574, %vm3390
      %v4583 = vsel %vm4575, 1, 0
      %v4584 = vsel %vm4576, 1, 0
      %v4585 = vsel %vm4577, 1, 0
      %v4586 = vsel %vm4578, 1, 0
      %v4587 = vsel %vm4579, 1, 0
      %v4588 = vsel %vm4580, 1, 0
      %v4589 = vsel %vm4581, 1, 0
      %v4590 = vsel %vm4582, 1, 0
      %v4591 = vcvt.s32.f32 %v4583
      %v4592 = vcvt.s32.f32 %v4584
      %v4593 = vcvt.s32.f32 %v4585
      %v4594 = vcvt.s32.f32 %v4586
      %v4595 = vcvt.s32.f32 %v4587
      %v4596 = vcvt.s32.f32 %v4588
      %v4597 = vcvt.s32.f32 %v4589
      %v4598 = vcvt.s32.f32 %v4590
      %v4599 = vmul.f32 %v4559, %v4591
      %v4600 = vmul.f32 %v4560, %v4592
      %v4601 = vmul.f32 %v4561, %v4593
      %v4602 = vmul.f32 %v4562, %v4594
      %v4603 = vmul.f32 %v4563, %v4595
      %v4604 = vmul.f32 %v4564, %v4596
      %v4605 = vmul.f32 %v4565, %v4597
      %v4606 = vmul.f32 %v4566, %v4598
      %v4607 = vlaneseq
      %v4608 = vshrl.u32 %v4607, 7
      %v4609 = vsub.s32 0, %v4608
      %v4610 = vrot.slane %v3004, %v4609
      %v4611 = vmul.f32 %v4599, %v4610
      %v4612 = vmul.f32 %v4600, %v4610
      %v4613 = vmul.f32 %v4601, %v4610
      %v4614 = vmul.f32 %v4602, %v4610
      %v4615 = vmul.f32 %v4603, %v4610
      %v4616 = vmul.f32 %v4604, %v4610
      %v4617 = vmul.f32 %v4605, %v4610
      %v4618 = vmul.f32 %v4606, %v4610
      %v4619 = vadd.f32 %v4439, %v4611
      %v4620 = vadd.f32 %v4440, %v4612
      %v4621 = vadd.f32 %v4441, %v4613
      %v4622 = vadd.f32 %v4442, %v4614
      %v4623 = vadd.f32 %v4443, %v4615
      %v4624 = vadd.f32 %v4444, %v4616
      %v4625 = vadd.f32 %v4445, %v4617
      %v4626 = vadd.f32 %v4446, %v4618
      %v4627 = vadd.f32 %v3129, -9.0
      %v4628 = vadd.f32 %v3130, -9.0
      %v4629 = vadd.f32 %v3131, -9.0
      %v4630 = vadd.f32 %v3132, -9.0
      %v4631 = vadd.f32 %v3133, -9.0
      %v4632 = vadd.f32 %v3134, -9.0
      %v4633 = vadd.f32 %v3135, -9.0
      %v4634 = vadd.f32 %v3136, -9.0
      %vm4635 = vcmp.eq.f32.partialorder %v3179, %v4627
      %vm4636 = vcmp.eq.f32.partialorder %v3178, %v4628
      %vm4637 = vcmp.eq.f32.partialorder %v3177, %v4629
      %vm4638 = vcmp.eq.f32.partialorder %v3176, %v4630
      %vm4639 = vcmp.eq.f32.partialorder %v3175, %v4631
      %vm4640 = vcmp.eq.f32.partialorder %v3174, %v4632
      %vm4641 = vcmp.eq.f32.partialorder %v3181, %v4633
      %vm4642 = vcmp.eq.f32.partialorder %v3180, %v4634
      %vm4643 = vcmp.eq.f32.partialorder %v3207, %v4627
      %vm4644 = vcmp.eq.f32.partialorder %v3214, %v4628
      %vm4645 = vcmp.eq.f32.partialorder %v3213, %v4629
      %vm4646 = vcmp.eq.f32.partialorder %v3212, %v4630
      %vm4647 = vcmp.eq.f32.partialorder %v3211, %v4631
      %vm4648 = vcmp.eq.f32.partialorder %v3210, %v4632
      %vm4649 = vcmp.eq.f32.partialorder %v3209, %v4633
      %vm4650 = vcmp.eq.f32.partialorder %v3208, %v4634
      %v4651 = vsel %vm4643, 1, 0
      %v4652 = vsel %vm4644, 1, 0
      %v4653 = vsel %vm4645, 1, 0
      %v4654 = vsel %vm4646, 1, 0
      %v4655 = vsel %vm4647, 1, 0
      %v4656 = vsel %vm4648, 1, 0
      %v4657 = vsel %vm4649, 1, 0
      %v4658 = vsel %vm4650, 1, 0
      %4659 = vset.pattern.permute.xlu0 0
      %4660 = vperm.xlu0 %4659, %v4651
      %v4661 = vpop.permute.xlu0 %4660
      %4662 = vset.pattern.permute.xlu0 0
      %4663 = vperm.xlu0 %4662, %v4652
      %v4664 = vpop.permute.xlu0 %4663
      %4665 = vset.pattern.permute.xlu0 0
      %4666 = vperm.xlu0 %4665, %v4653
      %v4667 = vpop.permute.xlu0 %4666
      %4668 = vset.pattern.permute.xlu0 0
      %4669 = vperm.xlu0 %4668, %v4654
      %v4670 = vpop.permute.xlu0 %4669
      %4671 = vset.pattern.permute.xlu0 0
      %4672 = vperm.xlu0 %4671, %v4655
      %v4673 = vpop.permute.xlu0 %4672
      %4674 = vset.pattern.permute.xlu0 0
      %4675 = vperm.xlu0 %4674, %v4656
      %v4676 = vpop.permute.xlu0 %4675
      %4677 = vset.pattern.permute.xlu0 0
      %4678 = vperm.xlu0 %4677, %v4657
      %v4679 = vpop.permute.xlu0 %4678
      %4680 = vset.pattern.permute.xlu0 0
      %4681 = vperm.xlu0 %4680, %v4658
      %v4682 = vpop.permute.xlu0 %4681
      %vm4683 = vcmp.eq.s32.totalorder %v4661, 1
      %vm4684 = vcmp.eq.s32.totalorder %v4664, 1
      %vm4685 = vcmp.eq.s32.totalorder %v4667, 1
      %vm4686 = vcmp.eq.s32.totalorder %v4670, 1
      %vm4687 = vcmp.eq.s32.totalorder %v4673, 1
      %vm4688 = vcmp.eq.s32.totalorder %v4676, 1
      %vm4689 = vcmp.eq.s32.totalorder %v4679, 1
      %vm4690 = vcmp.eq.s32.totalorder %v4682, 1
      %v4691 = vsel %vm4683, %v3191, 0.0
      %v4692 = vsel %vm4684, %v3198, 0.0
      %v4693 = vsel %vm4685, %v3197, 0.0
      %v4694 = vsel %vm4686, %v3196, 0.0
      %v4695 = vsel %vm4687, %v3195, 0.0
      %v4696 = vsel %vm4688, %v3194, 0.0
      %v4697 = vsel %vm4689, %v3193, 0.0
      %v4698 = vsel %vm4690, %v3192, 0.0
      %v4699 = vsel %vm4635, 1, 0
      %v4700 = vsel %vm4636, 1, 0
      %v4701 = vsel %vm4637, 1, 0
      %v4702 = vsel %vm4638, 1, 0
      %v4703 = vsel %vm4639, 1, 0
      %v4704 = vsel %vm4640, 1, 0
      %v4705 = vsel %vm4641, 1, 0
      %v4706 = vsel %vm4642, 1, 0
      %4707 = vset.pattern.permute.xlu0 0
      %4708 = vperm.xlu0 %4707, %v4699
      %v4709 = vpop.permute.xlu0 %4708
      %4710 = vset.pattern.permute.xlu0 0
      %4711 = vperm.xlu0 %4710, %v4700
      %v4712 = vpop.permute.xlu0 %4711
      %4713 = vset.pattern.permute.xlu0 0
      %4714 = vperm.xlu0 %4713, %v4701
      %v4715 = vpop.permute.xlu0 %4714
      %4716 = vset.pattern.permute.xlu0 0
      %4717 = vperm.xlu0 %4716, %v4702
      %v4718 = vpop.permute.xlu0 %4717
      %4719 = vset.pattern.permute.xlu0 0
      %4720 = vperm.xlu0 %4719, %v4703
      %v4721 = vpop.permute.xlu0 %4720
      %4722 = vset.pattern.permute.xlu0 0
      %4723 = vperm.xlu0 %4722, %v4704
      %v4724 = vpop.permute.xlu0 %4723
      %4725 = vset.pattern.permute.xlu0 0
      %4726 = vperm.xlu0 %4725, %v4705
      %v4727 = vpop.permute.xlu0 %4726
      %4728 = vset.pattern.permute.xlu0 0
      %4729 = vperm.xlu0 %4728, %v4706
      %v4730 = vpop.permute.xlu0 %4729
      %vm4731 = vcmp.eq.s32.totalorder %v4709, 1
      %vm4732 = vcmp.eq.s32.totalorder %v4712, 1
      %vm4733 = vcmp.eq.s32.totalorder %v4715, 1
      %vm4734 = vcmp.eq.s32.totalorder %v4718, 1
      %vm4735 = vcmp.eq.s32.totalorder %v4721, 1
      %vm4736 = vcmp.eq.s32.totalorder %v4724, 1
      %vm4737 = vcmp.eq.s32.totalorder %v4727, 1
      %vm4738 = vcmp.eq.s32.totalorder %v4730, 1
      %v4739 = vsel %vm4731, %v3163, %v4691
      %v4740 = vsel %vm4732, %v3162, %v4692
      %v4741 = vsel %vm4733, %v3161, %v4693
      %v4742 = vsel %vm4734, %v3160, %v4694
      %v4743 = vsel %vm4735, %v3159, %v4695
      %v4744 = vsel %vm4736, %v3158, %v4696
      %v4745 = vsel %vm4737, %v3165, %v4697
      %v4746 = vsel %vm4738, %v3164, %v4698
      %vm4747 = vmand %vm4003, %vm3571
      %vm4748 = vmand %vm4004, %vm3572
      %vm4749 = vmand %vm4005, %vm3573
      %vm4750 = vmand %vm4006, %vm3574
      %vm4751 = vmand %vm4007, %vm3575
      %vm4752 = vmand %vm4008, %vm3576
      %vm4753 = vmand %vm4009, %vm3577
      %vm4754 = vmand %vm4010, %vm3578
      %vm4755 = vmand %vm4747, %vm3587
      %vm4756 = vmand %vm4748, %vm3588
      %vm4757 = vmand %vm4749, %vm3589
      %vm4758 = vmand %vm4750, %vm3590
      %vm4759 = vmand %vm4751, %vm3591
      %vm4760 = vmand %vm4752, %vm3592
      %vm4761 = vmand %vm4753, %vm3593
      %vm4762 = vmand %vm4754, %vm3594
      %v4763 = vsel %vm4755, 1, 0
      %v4764 = vsel %vm4756, 1, 0
      %v4765 = vsel %vm4757, 1, 0
      %v4766 = vsel %vm4758, 1, 0
      %v4767 = vsel %vm4759, 1, 0
      %v4768 = vsel %vm4760, 1, 0
      %v4769 = vsel %vm4761, 1, 0
      %v4770 = vsel %vm4762, 1, 0
      %v4771 = vcvt.s32.f32 %v4763
      %v4772 = vcvt.s32.f32 %v4764
      %v4773 = vcvt.s32.f32 %v4765
      %v4774 = vcvt.s32.f32 %v4766
      %v4775 = vcvt.s32.f32 %v4767
      %v4776 = vcvt.s32.f32 %v4768
      %v4777 = vcvt.s32.f32 %v4769
      %v4778 = vcvt.s32.f32 %v4770
      %v4779 = vmul.f32 %v4739, %v4771
      %v4780 = vmul.f32 %v4740, %v4772
      %v4781 = vmul.f32 %v4741, %v4773
      %v4782 = vmul.f32 %v4742, %v4774
      %v4783 = vmul.f32 %v4743, %v4775
      %v4784 = vmul.f32 %v4744, %v4776
      %v4785 = vmul.f32 %v4745, %v4777
      %v4786 = vmul.f32 %v4746, %v4778
      %v4787 = vlaneseq
      %v4788 = vshrl.u32 %v4787, 7
      %v4789 = vsub.s32 0, %v4788
      %v4790 = vrot.slane %v3003, %v4789
      %v4791 = vmul.f32 %v4779, %v4790
      %v4792 = vmul.f32 %v4780, %v4790
      %v4793 = vmul.f32 %v4781, %v4790
      %v4794 = vmul.f32 %v4782, %v4790
      %v4795 = vmul.f32 %v4783, %v4790
      %v4796 = vmul.f32 %v4784, %v4790
      %v4797 = vmul.f32 %v4785, %v4790
      %v4798 = vmul.f32 %v4786, %v4790
      %v4799 = vadd.f32 %v4619, %v4791
      %v4800 = vadd.f32 %v4620, %v4792
      %v4801 = vadd.f32 %v4621, %v4793
      %v4802 = vadd.f32 %v4622, %v4794
      %v4803 = vadd.f32 %v4623, %v4795
      %v4804 = vadd.f32 %v4624, %v4796
      %v4805 = vadd.f32 %v4625, %v4797
      %v4806 = vadd.f32 %v4626, %v4798
      %v4807 = vld [vmem:[%s16] sm:$0x1]
      %v4809 = vlaneseq
      %v4810 = vshrl.u32 %v4809, 7
      %v4811 = vsub.s32 0, %v4810
      %v4812 = vrot.slane %v4807, %v4811
      %v4814 = vadd.f32 %v4799, %v4812
      %v4815 = vadd.f32 %v4800, %v4812
      %v4816 = vadd.f32 %v4801, %v4812
      %v4817 = vadd.f32 %v4802, %v4812
      %v4818 = vadd.f32 %v4803, %v4812
      %v4819 = vadd.f32 %v4804, %v4812
      %v4820 = vadd.f32 %v4805, %v4812
      %v4821 = vadd.f32 %v4806, %v4812
      %v4822 = vmul.f32 %v4814, 0.5
      %v4823 = vmul.f32 %v4815, 0.5
      %v4824 = vmul.f32 %v4816, 0.5
      %v4825 = vmul.f32 %v4817, 0.5
      %v4826 = vmul.f32 %v4818, 0.5
      %v4827 = vmul.f32 %v4819, 0.5
      %v4828 = vmul.f32 %v4820, 0.5
      %v4829 = vmul.f32 %v4821, 0.5
      %v4830 = vmul.f32 %v4814, 0.70710677
      %v4831 = vmul.f32 %v4815, 0.70710677
      %v4832 = vmul.f32 %v4816, 0.70710677
      %v4833 = vmul.f32 %v4817, 0.70710677
      %v4834 = vmul.f32 %v4818, 0.70710677
      %v4835 = vmul.f32 %v4819, 0.70710677
      %v4836 = vmul.f32 %v4820, 0.70710677
      %v4837 = vmul.f32 %v4821, 0.70710677
      %v4838 = vand.u32 2147483647, %v4830
      %v4839 = vand.u32 2147483647, %v4831
      %v4840 = vand.u32 2147483647, %v4832
      %v4841 = vand.u32 2147483647, %v4833
      %v4842 = vand.u32 2147483647, %v4834
      %v4843 = vand.u32 2147483647, %v4835
      %v4844 = vand.u32 2147483647, %v4836
      %v4845 = vand.u32 2147483647, %v4837
      %v4846 = vmul.f32 %v4838, 0.3275911
      %v4847 = vmul.f32 %v4839, 0.3275911
      %v4848 = vmul.f32 %v4840, 0.3275911
      %v4849 = vmul.f32 %v4841, 0.3275911
      %v4850 = vmul.f32 %v4842, 0.3275911
      %v4851 = vmul.f32 %v4843, 0.3275911
      %v4852 = vmul.f32 %v4844, 0.3275911
      %v4853 = vmul.f32 %v4845, 0.3275911
      %v4854 = vadd.f32 %v4846, 1.0
      %v4855 = vadd.f32 %v4847, 1.0
      %v4856 = vadd.f32 %v4848, 1.0
      %v4857 = vadd.f32 %v4849, 1.0
      %v4858 = vadd.f32 %v4850, 1.0
      %v4859 = vadd.f32 %v4851, 1.0
      %v4860 = vadd.f32 %v4852, 1.0
      %v4861 = vadd.f32 %v4853, 1.0
      %v4862 = vrcp.pop %v4854
      %v4863 = vmul.f32 1.0, %v4862
      %v4864 = vrcp.pop %v4855
      %v4865 = vmul.f32 1.0, %v4864
      %v4866 = vrcp.pop %v4856
      %v4867 = vmul.f32 1.0, %v4866
      %v4868 = vrcp.pop %v4857
      %v4869 = vmul.f32 1.0, %v4868
      %v4870 = vrcp.pop %v4858
      %v4871 = vmul.f32 1.0, %v4870
      %v4872 = vrcp.pop %v4859
      %v4873 = vmul.f32 1.0, %v4872
      %v4874 = vrcp.pop %v4860
      %v4875 = vmul.f32 1.0, %v4874
      %v4876 = vrcp.pop %v4861
      %v4877 = vmul.f32 1.0, %v4876
      %v4878 = vmul.f32 %v4863, 1.0614054
      %v4879 = vmul.f32 %v4865, 1.0614054
      %v4880 = vmul.f32 %v4867, 1.0614054
      %v4881 = vmul.f32 %v4869, 1.0614054
      %v4882 = vmul.f32 %v4871, 1.0614054
      %v4883 = vmul.f32 %v4873, 1.0614054
      %v4884 = vmul.f32 %v4875, 1.0614054
      %v4885 = vmul.f32 %v4877, 1.0614054
      %v4886 = vadd.f32 %v4878, -1.4531521
      %v4887 = vadd.f32 %v4879, -1.4531521
      %v4888 = vadd.f32 %v4880, -1.4531521
      %v4889 = vadd.f32 %v4881, -1.4531521
      %v4890 = vadd.f32 %v4882, -1.4531521
      %v4891 = vadd.f32 %v4883, -1.4531521
      %v4892 = vadd.f32 %v4884, -1.4531521
      %v4893 = vadd.f32 %v4885, -1.4531521
      %v4894 = vmul.f32 %v4886, %v4863
      %v4895 = vmul.f32 %v4887, %v4865
      %v4896 = vmul.f32 %v4888, %v4867
      %v4897 = vmul.f32 %v4889, %v4869
      %v4898 = vmul.f32 %v4890, %v4871
      %v4899 = vmul.f32 %v4891, %v4873
      %v4900 = vmul.f32 %v4892, %v4875
      %v4901 = vmul.f32 %v4893, %v4877
      %v4902 = vadd.f32 %v4894, 1.4214138
      %v4903 = vadd.f32 %v4895, 1.4214138
      %v4904 = vadd.f32 %v4896, 1.4214138
      %v4905 = vadd.f32 %v4897, 1.4214138
      %v4906 = vadd.f32 %v4898, 1.4214138
      %v4907 = vadd.f32 %v4899, 1.4214138
      %v4908 = vadd.f32 %v4900, 1.4214138
      %v4909 = vadd.f32 %v4901, 1.4214138
      %v4910 = vmul.f32 %v4902, %v4863
      %v4911 = vmul.f32 %v4903, %v4865
      %v4912 = vmul.f32 %v4904, %v4867
      %v4913 = vmul.f32 %v4905, %v4869
      %v4914 = vmul.f32 %v4906, %v4871
      %v4915 = vmul.f32 %v4907, %v4873
      %v4916 = vmul.f32 %v4908, %v4875
      %v4917 = vmul.f32 %v4909, %v4877
      %v4918 = vadd.f32 %v4910, -0.28449672
      %v4919 = vadd.f32 %v4911, -0.28449672
      %v4920 = vadd.f32 %v4912, -0.28449672
      %v4921 = vadd.f32 %v4913, -0.28449672
      %v4922 = vadd.f32 %v4914, -0.28449672
      %v4923 = vadd.f32 %v4915, -0.28449672
      %v4924 = vadd.f32 %v4916, -0.28449672
      %v4925 = vadd.f32 %v4917, -0.28449672
      %v4926 = vmul.f32 %v4918, %v4863
      %v4927 = vmul.f32 %v4919, %v4865
      %v4928 = vmul.f32 %v4920, %v4867
      %v4929 = vmul.f32 %v4921, %v4869
      %v4930 = vmul.f32 %v4922, %v4871
      %v4931 = vmul.f32 %v4923, %v4873
      %v4932 = vmul.f32 %v4924, %v4875
      %v4933 = vmul.f32 %v4925, %v4877
      %v4934 = vadd.f32 %v4926, 0.2548296
      %v4935 = vadd.f32 %v4927, 0.2548296
      %v4936 = vadd.f32 %v4928, 0.2548296
      %v4937 = vadd.f32 %v4929, 0.2548296
      %v4938 = vadd.f32 %v4930, 0.2548296
      %v4939 = vadd.f32 %v4931, 0.2548296
      %v4940 = vadd.f32 %v4932, 0.2548296
      %v4941 = vadd.f32 %v4933, 0.2548296
      %v4942 = vmul.f32 %v4934, %v4863
      %v4943 = vmul.f32 %v4935, %v4865
      %v4944 = vmul.f32 %v4936, %v4867
      %v4945 = vmul.f32 %v4937, %v4869
      %v4946 = vmul.f32 %v4938, %v4871
      %v4947 = vmul.f32 %v4939, %v4873
      %v4948 = vmul.f32 %v4940, %v4875
      %v4949 = vmul.f32 %v4941, %v4877
      %v4950 = vsub.f32 0.0, %v4838
      %v4951 = vsub.f32 0.0, %v4839
      %v4952 = vsub.f32 0.0, %v4840
      %v4953 = vsub.f32 0.0, %v4841
      %v4954 = vsub.f32 0.0, %v4842
      %v4955 = vsub.f32 0.0, %v4843
      %v4956 = vsub.f32 0.0, %v4844
      %v4957 = vsub.f32 0.0, %v4845
      %v4958 = vmul.f32 %v4950, %v4838
      %v4959 = vmul.f32 %v4951, %v4839
      %v4960 = vmul.f32 %v4952, %v4840
      %v4961 = vmul.f32 %v4953, %v4841
      %v4962 = vmul.f32 %v4954, %v4842
      %v4963 = vmul.f32 %v4955, %v4843
      %v4964 = vmul.f32 %v4956, %v4844
      %v4965 = vmul.f32 %v4957, %v4845
      %v4966 = vmul.f32 %v4958, 1.442695
      %v4967 = vpow.pop %v4966
      %v4968 = vmul.f32 %v4959, 1.442695
      %v4969 = vpow.pop %v4968
      %v4970 = vmul.f32 %v4960, 1.442695
      %v4971 = vpow.pop %v4970
      %v4972 = vmul.f32 %v4961, 1.442695
      %v4973 = vpow.pop %v4972
      %v4974 = vmul.f32 %v4962, 1.442695
      %v4975 = vpow.pop %v4974
      %v4976 = vmul.f32 %v4963, 1.442695
      %v4977 = vpow.pop %v4976
      %v4978 = vmul.f32 %v4964, 1.442695
      %v4979 = vpow.pop %v4978
      %v4980 = vmul.f32 %v4965, 1.442695
      %v4981 = vpow.pop %v4980
      %v4982 = vmul.f32 %v4942, %v4967
      %v4983 = vmul.f32 %v4943, %v4969
      %v4984 = vmul.f32 %v4944, %v4971
      %v4985 = vmul.f32 %v4945, %v4973
      %v4986 = vmul.f32 %v4946, %v4975
      %v4987 = vmul.f32 %v4947, %v4977
      %v4988 = vmul.f32 %v4948, %v4979
      %v4989 = vmul.f32 %v4949, %v4981
      %v4990 = vsub.f32 1.0, %v4982
      %v4991 = vsub.f32 1.0, %v4983
      %v4992 = vsub.f32 1.0, %v4984
      %v4993 = vsub.f32 1.0, %v4985
      %v4994 = vsub.f32 1.0, %v4986
      %v4995 = vsub.f32 1.0, %v4987
      %v4996 = vsub.f32 1.0, %v4988
      %v4997 = vsub.f32 1.0, %v4989
      %vm4998 = vcmp.ge.f32.partialorder %v4830, 0.0
      %vm4999 = vcmp.ge.f32.partialorder %v4831, 0.0
      %vm5000 = vcmp.ge.f32.partialorder %v4832, 0.0
      %vm5001 = vcmp.ge.f32.partialorder %v4833, 0.0
      %vm5002 = vcmp.ge.f32.partialorder %v4834, 0.0
      %vm5003 = vcmp.ge.f32.partialorder %v4835, 0.0
      %vm5004 = vcmp.ge.f32.partialorder %v4836, 0.0
      %vm5005 = vcmp.ge.f32.partialorder %v4837, 0.0
      %v5006 = vsub.f32 0.0, %v4990
      %v5007 = vsub.f32 0.0, %v4991
      %v5008 = vsub.f32 0.0, %v4992
      %v5009 = vsub.f32 0.0, %v4993
      %v5010 = vsub.f32 0.0, %v4994
      %v5011 = vsub.f32 0.0, %v4995
      %v5012 = vsub.f32 0.0, %v4996
      %v5013 = vsub.f32 0.0, %v4997
      %v5014 = vsel %vm4998, %v4990, %v5006
      %v5015 = vsel %vm4999, %v4991, %v5007
      %v5016 = vsel %vm5000, %v4992, %v5008
      %v5017 = vsel %vm5001, %v4993, %v5009
      %v5018 = vsel %vm5002, %v4994, %v5010
      %v5019 = vsel %vm5003, %v4995, %v5011
      %v5020 = vsel %vm5004, %v4996, %v5012
      %v5021 = vsel %vm5005, %v4997, %v5013
      %v5022 = vadd.f32 %v5014, 1.0
      %v5023 = vadd.f32 %v5015, 1.0
      %v5024 = vadd.f32 %v5016, 1.0
      %v5025 = vadd.f32 %v5017, 1.0
      %v5026 = vadd.f32 %v5018, 1.0
      %v5027 = vadd.f32 %v5019, 1.0
      %v5028 = vadd.f32 %v5020, 1.0
      %v5029 = vadd.f32 %v5021, 1.0
      %v5030 = vmul.f32 %v4822, %v5022
      %v5031 = vmul.f32 %v4823, %v5023
      %v5032 = vmul.f32 %v4824, %v5024
      %v5033 = vmul.f32 %v4825, %v5025
      %v5034 = vmul.f32 %v4826, %v5026
      %v5035 = vmul.f32 %v4827, %v5027
      %v5036 = vmul.f32 %v4828, %v5028
      %v5037 = vmul.f32 %v4829, %v5029
      %v5038 = vpack.c.bf16 %v5031, %v5030
      %v5039 = vpack.c.bf16 %v5033, %v5032
      %v5040 = vpack.c.bf16 %v5035, %v5034
      %v5041 = vpack.c.bf16 %v5037, %v5036
      %v5042 = vld [vmem:[%s17] sm:$0xf]
      %v5043 = vld [vmem:[%s17 + $0x4] sm:$0xf]
      %v5044 = vld [vmem:[%s17 + $0x8] sm:$0xf]
      %v5045 = vld [vmem:[%s17 + $0xc] sm:$0xf]
      %v5046 = vld [vmem:[%s17 + $0x10] sm:$0xf]
      %v5047 = vld [vmem:[%s17 + $0x14] sm:$0xf]
      %v5048 = vld [vmem:[%s17 + $0x18] sm:$0xf]
      %v5049 = vld [vmem:[%s17 + $0x1c] sm:$0xf]
      %v5050 = vld [vmem:[%s17 + $0x20] sm:$0xf]
      %v5051 = vld [vmem:[%s17 + $0x24] sm:$0xf]
      %v5052 = vld [vmem:[%s17 + $0x28] sm:$0xf]
      %v5053 = vld [vmem:[%s17 + $0x2c] sm:$0xf]
      %v5054 = vld [vmem:[%s17 + $0x30] sm:$0xf]
      %v5055 = vld [vmem:[%s17 + $0x34] sm:$0xf]
      %v5056 = vld [vmem:[%s17 + $0x38] sm:$0xf]
      %v5057 = vld [vmem:[%s17 + $0x3c] sm:$0xf]
      %v5058 = vld [vmem:[%s18] sm:$0x1]
      %v5060 = vlaneseq
      %v5061 = vshrl.u32 %v5060, 7
      %v5062 = vsub.s32 0, %v5061
      %v5063 = vrot.slane %v5058, %v5062
      %v5081 = vunpack.c.l.b16 %v5042
      %v5082 = vunpack.c.l.b16 %v5043
      %v5083 = vunpack.c.l.b16 %v5044
      %v5084 = vunpack.c.l.b16 %v5045
      %v5085 = vunpack.c.l.b16 %v5046
      %v5086 = vunpack.c.l.b16 %v5047
      %v5087 = vunpack.c.l.b16 %v5048
      %v5088 = vunpack.c.l.b16 %v5049
      %v5089 = vunpack.c.l.b16 %v5050
      %v5090 = vunpack.c.l.b16 %v5051
      %v5091 = vunpack.c.l.b16 %v5052
      %v5092 = vunpack.c.l.b16 %v5053
      %v5093 = vunpack.c.l.b16 %v5054
      %v5094 = vunpack.c.l.b16 %v5055
      %v5095 = vunpack.c.l.b16 %v5056
      %v5096 = vunpack.c.l.b16 %v5057
      %v5097 = vpack.c.b16 %v5082, %v5081
      %v5098 = vpack.c.b16 %v5084, %v5083
      %v5099 = vpack.c.b16 %v5086, %v5085
      %v5100 = vpack.c.b16 %v5088, %v5087
      %v5101 = vpack.c.b16 %v5090, %v5089
      %v5102 = vpack.c.b16 %v5092, %v5091
      %v5103 = vpack.c.b16 %v5094, %v5093
      %v5104 = vpack.c.b16 %v5096, %v5095
      %5113 = vmatprep.subr.bf16.mxu0 0
      %5114 = vmatpush1.bf16.msra.mxu0 %v5097
      %5115 = vmatprep.subr.bf16.mxu0 0
      %5116 = vmatpush1.bf16.msra.mxu0 %v5098
      %5117 = vmatprep.subr.bf16.mxu0 0
      %5118 = vmatpush1.bf16.msra.mxu0 %v5099
      %5119 = vmatprep.subr.bf16.mxu0 0
      %5120 = vmatpush1.bf16.msra.mxu0 %v5100
      %5121 = vmatprep.subr.bf16.mxu0 0
      %5122 = vmatpush1.bf16.msra.mxu0 %v5101
      %5123 = vmatprep.subr.bf16.mxu0 0
      %5124 = vmatpush1.bf16.msra.mxu0 %v5102
      %5125 = vmatprep.subr.bf16.mxu0 0
      %5126 = vmatpush1.bf16.msra.mxu0 %v5103
      %5127 = vmatprep.subr.bf16.mxu0 0
      %5128 = vmatpush1.bf16.msra.mxu0 %v5104
      %5129 = vmatprep.subr.bf16.mxu0 0
      %5130 = vmatpush1.bf16.msra.mxu0 0
      %5131 = vmatprep.subr.bf16.mxu0 0
      %5132 = vmatpush1.bf16.msra.mxu0 0
      %5133 = vmatprep.subr.bf16.mxu0 0
      %5134 = vmatpush1.bf16.msra.mxu0 0
      %5135 = vmatprep.subr.bf16.mxu0 0
      %5136 = vmatpush1.bf16.msra.mxu0 0
      %5137 = vmatprep.subr.bf16.mxu0 0
      %5138 = vmatpush1.bf16.msra.mxu0 0
      %5139 = vmatprep.subr.bf16.mxu0 0
      %5140 = vmatpush1.bf16.msra.mxu0 0
      %5141 = vmatprep.subr.bf16.mxu0 0
      %5142 = vmatpush1.bf16.msra.mxu0 0
      %5143 = vmatprep.subr.bf16.mxu0 0
      %5144 = vmatpush1.bf16.msra.mxu0 0
      %5145 = vmatprep.mubr.bf16.mxu0 0
      %5146 = vmatmul.mubr.bf16.gmra.mrb[0].mxu0 %v5038
      %v5147 = vpop.f32.mrb[0].mxu0
      %v5148 = vadd.f32 %v5063, %v5147
      %v5149 = vpop.f32.mrb[0].mxu0
      %v5150 = vpop.f32.mrb[0].mxu0
      %v5151 = vadd.f32 %v5063, %v5150
      %v5152 = vpop.f32.mrb[0].mxu0
      %5153 = vmatprep.mubr.bf16.mxu0 0
      %5154 = vmatmul.mubr.bf16.gmra.mrb[0].mxu0 %v5039
      %v5155 = vpop.f32.mrb[0].mxu0
      %v5156 = vadd.f32 %v5063, %v5155
      %v5157 = vpop.f32.mrb[0].mxu0
      %v5158 = vpop.f32.mrb[0].mxu0
      %v5159 = vadd.f32 %v5063, %v5158
      %v5160 = vpop.f32.mrb[0].mxu0
      %5161 = vmatprep.mubr.bf16.mxu0 0
      %5162 = vmatmul.mubr.bf16.gmra.mrb[0].mxu0 %v5040
      %v5163 = vpop.f32.mrb[0].mxu0
      %v5164 = vadd.f32 %v5063, %v5163
      %v5165 = vpop.f32.mrb[0].mxu0
      %v5166 = vpop.f32.mrb[0].mxu0
      %v5167 = vadd.f32 %v5063, %v5166
      %v5168 = vpop.f32.mrb[0].mxu0
      %5169 = vmatprep.mubr.bf16.mxu0 0
      %5170 = vmatmul.mubr.bf16.gmra.mrb[0].mxu0 %v5041
      %v5171 = vpop.f32.mrb[0].mxu0
      %v5172 = vadd.f32 %v5063, %v5171
      %v5173 = vpop.f32.mrb[0].mxu0
      %v5174 = vpop.f32.mrb[0].mxu0
      %v5175 = vadd.f32 %v5063, %v5174
      %v5176 = vpop.f32.mrb[0].mxu0
      %5177 = vdwg.mxu0
      %v5178 = vadd.f32 %v2757, %v5148
      %v5179 = vadd.f32 %v2758, %v5151
      %v5180 = vadd.f32 %v2759, %v5156
      %v5181 = vadd.f32 %v2760, %v5159
      %v5182 = vadd.f32 %v2761, %v5164
      %v5183 = vadd.f32 %v2762, %v5167
      %v5184 = vadd.f32 %v2763, %v5172
      %v5185 = vadd.f32 %v2764, %v5175
      %5186 = vst.msk [vmem:[%s602] sm:$0xff] %vm614, %v5178
      %5187 = vst.msk [vmem:[%s602 + $0x8] sm:$0xff] %vm614, %v5179
      %5188 = vst.msk [vmem:[%s602 + $0x10] sm:$0xff] %vm614, %v5180
      %5189 = vst.msk [vmem:[%s602 + $0x18] sm:$0xff] %vm614, %v5181
      %5190 = vst.msk [vmem:[%s602 + $0x20] sm:$0xff] %vm614, %v5182
      %5191 = vst.msk [vmem:[%s602 + $0x28] sm:$0xff] %vm614, %v5183
      %5192 = vst.msk [vmem:[%s602 + $0x30] sm:$0xff] %vm614, %v5184
      %5193 = vst.msk [vmem:[%s602 + $0x38] sm:$0xff] %vm614, %v5185
      %p5194 = scmp.lt.s32.totalorder %s30, 1
      %s5195 = scalar_select %p5194, %s30, 1
      %s5196 = smul.addr %s5195, 8
      %s5197 = smul.addr %s5196, 8
      %s5198 = scalar_lea.vmem %s19, %s5197
      // Predicated region
      $region97: #{segformer_block.1} parent=95 // pred_check
        %p5199 = pneg %p452
      $region98: #{segformer_block.1} parent=95 // pred_check_branch
        %5201 = sbr.rel (%p5199) target = $region100
      $region99: #{segformer_block.1} parent=95 // pred_region
        _
      $region100: #{segformer_block.1} parent=95 // pred_fallthru
        _
    $region96: #{segformer_block.1} parent=5 // pred_fallthru
      _
    %p5202 = scmp.le.s32.totalorder 2, %s25
    // Predicated region
    $region101: #{segformer_block.1} parent=5 // pred_check
      %p5203 = pneg %p5202
    $region102: #{segformer_block.1} parent=5 // pred_check_branch
      %5205 = sbr.rel (%p5203) target = $region104
    $region103: #{segformer_block.1} parent=5 // pred_region
      %s5206 = ssub.s32 %s25, 2
      // Predicated region
      $region105: #{segformer_block.1} parent=103 // pred_check
        %p5207 = pneg %p458
      $region106: #{segformer_block.1} parent=103 // pred_check_branch
        %5209 = sbr.rel (%p5207) target = $region108
      $region107: #{segformer_block.1} parent=103 // pred_region
        %p5210 = scmp.lt.s32.totalorder %s31, 1
        %s5211 = scalar_select %p5210, %s31, 1
        %s5212 = smul.addr %s5211, 8
        %s5213 = smul.addr %s5212, 8
        %s5214 = scalar_lea.vmem %s19, %s5213
      $region108: #{segformer_block.1} parent=103 // pred_fallthru
        _
    $region104: #{segformer_block.1} parent=5 // pred_fallthru
      _
  $region6: #{segformer_block.1} parent=0 // loop_footer
    %s29 = sadd.s32 1, %s25
  $region7: #{segformer_block.1} parent=0 // loop_footer_branch
    %24 = sbr.rel target = $region3
  $region8: #{segformer_block.1} parent=0 // loop_exit
    _

</llo_original>
